<compile_context>
chip_gen: v7x
topology: tpu7x:2x2x1
jax: 0.10.0
libtpu: 0.0.40
codegen_flags: <defaults>
</compile_context>

<pallas_src>
import functools

import jax
import jax.numpy as jnp
from jax.experimental import pallas as pl
from jax.experimental.pallas import tpu as pltpu


# ----------------------------------------------------------------------------
# In-kernel helpers (operate on one image resident in VMEM)
# ----------------------------------------------------------------------------
def _store_zero_padded(pad_ref, x, H, W, C):
    """pad_ref[..., :C] <- zero-pad-1(x); x: (H, W, C) value. Border-only zeroing."""
    x = x.astype(pad_ref.dtype)
    pad_ref[1:H + 1, 1:W + 1, :C] = x
    zrow = jnp.zeros((1, W + 2, C), pad_ref.dtype)
    pad_ref[0:1, :, :C] = zrow
    pad_ref[H + 1:H + 2, :, :C] = zrow
    zcol = jnp.zeros((H + 2, 1, C), pad_ref.dtype)
    pad_ref[:, 0:1, :C] = zcol
    pad_ref[:, W + 1:W + 2, :C] = zcol


def _store_reflect_padded(pad_ref, x, H, W, C):
    """pad_ref[..., :C] <- ReflectionPad2d(1)(x); x: (H, W, C) value (H, W >= 2)."""
    x = x.astype(pad_ref.dtype)
    pad_ref[1:H + 1, 1:W + 1, :C] = x
    # reflect rows: padded row 0 <- x row 1, padded row H+1 <- x row H-2
    pad_ref[0:1, 1:W + 1, :C] = x[1:2]
    pad_ref[H + 1:H + 2, 1:W + 1, :C] = x[H - 2:H - 1]
    # reflect cols (covers corners too): col 0 <- col 2, col W+1 <- col W-1
    pad_ref[:, 0:1, :C] = pad_ref[:, 2:3, :C]
    pad_ref[:, W + 1:W + 2, :C] = pad_ref[:, W - 1:W, :C]


def _pack_cols(pad_ref, col_ref, b, H, W, C):
    """Three wide im2col writes (kh folded into the dots):

       col[b, hp*W + w, kw*C + ci] = pad[hp, w + kw, ci]   for hp in [0, H+2).
    """
    HpW = (H + 2) * W
    for kw in range(3):
        patch = pad_ref[:, kw:kw + W, :C].reshape(HpW, C)
        col_ref[b, :, kw * C:(kw + 1) * C] = patch.astype(col_ref.dtype)


def _conv_from_col(col_ref, b, wk, bias, H, W, C):
    """'Same' 3x3 conv = 3 accumulating MXU dots (K = 3*C each), f32 acc.

    col_ref : (B, (H+2)*W, 3*Cmax) bf16 scratch (filled by _pack_cols)
    wk      : (3, 3*C, Cout) bf16 value, bias : (1, Cout) f32 value
    returns : (H*W, Cout) float32 value
    """
    HW = H * W
    acc = bias + jnp.dot(col_ref[b, 0:HW, :3 * C], wk[0],
                         preferred_element_type=jnp.float32)
    for kh in (1, 2):
        acc = acc + jnp.dot(col_ref[b, kh * W:kh * W + HW, :3 * C], wk[kh],
                            preferred_element_type=jnp.float32)
    return acc


# ----------------------------------------------------------------------------
# Fused MakeDense kernel (B_blk images per grid step)
# ----------------------------------------------------------------------------
def _make_dense_kernel(x_ref, cw_ref, cb_ref, w1_ref, b1_ref, w2_ref, b2_ref,
                       o_ref, pad_ref, col_ref, *, n_blocks, H, W):
    B, HW, Cin = x_ref.shape
    C = o_ref.shape[-1]                       # Cin + growth_rate (= 32)

    cw = cw_ref[...]                          # (3, 3*Cin, G) bf16
    cb = cb_ref[...]                          # (1, G) f32

    # ---- initial conv (zero pad) + ReLU, concat [x, y] in-register ---------
    for b in range(B):
        x_flat = x_ref[b]                                   # (HW, Cin) f32
        _store_zero_padded(pad_ref, x_flat.reshape(H, W, Cin), H, W, Cin)
        _pack_cols(pad_ref, col_ref, b, H, W, Cin)
        y = _conv_from_col(col_ref, b, cw, cb, H, W, Cin)   # (HW, G) f32
        y = jnp.maximum(y, 0.0)
        o_ref[b] = jnp.concatenate([x_flat, y], axis=-1)    # (HW, C) f32

    # ---- residual blocks: reflect conv -> ReLU -> reflect conv -> *0.1+res -
    # o_ref doubles as the resident activation carrier across the loop.
    @pl.loop(0, n_blocks)
    def _(i):
        w1 = w1_ref[i]                                      # (3, 3C, C) bf16
        bias1 = b1_ref[i]                                   # (1, C) f32
        w2 = w2_ref[i]
        bias2 = b2_ref[i]
        for b in range(B):
            res = o_ref[b]                                  # (HW, C) f32
            _store_reflect_padded(pad_ref, res.reshape(H, W, C), H, W, C)
            _pack_cols(pad_ref, col_ref, b, H, W, C)
            h = _conv_from_col(col_ref, b, w1, bias1, H, W, C)
            h = jnp.maximum(h, 0.0)
            _store_reflect_padded(pad_ref, h.reshape(H, W, C), H, W, C)
            _pack_cols(pad_ref, col_ref, b, H, W, C)
            y = _conv_from_col(col_ref, b, w2, bias2, H, W, C)
            o_ref[b] = y * 0.1 + res


# ----------------------------------------------------------------------------
# Wrapper: weight packing + pallas_call plumbing
# ----------------------------------------------------------------------------
def _pick_batch_block(n, max_bb=8):
    """Largest divisor of n (<= max_bb) that keeps the grid at >= 2 steps."""
    best = 1
    for bb in range(1, min(n, max_bb) + 1):
        if n % bb == 0 and n // bb >= 2:
            best = bb
    return best


def make_dense_forward(x, params, *, batch_block=None):
    """x: (N, H, W, in_channels) f32 -> (N, H, W, in_channels + growth_rate)."""
    N, H, W, Cin = x.shape
    assert H >= 2 and W >= 2, "reflection padding needs H, W >= 2"
    cw = params["conv_w"]                     # (3, 3, Cin, G) HWIO
    G = cw.shape[-1]
    C = Cin + G

    blocks = params["res_blocks"]
    nb = len(blocks)
    assert blocks[0]["w1"].shape == (3, 3, C, C), "res blocks expect concat channels"

    if batch_block is None:
        batch_block = _pick_batch_block(N)
    assert N % batch_block == 0
    grid = (N // batch_block,)

    # Weights: per-kh, K ordered (kw, ci), bf16 for the MXU (f32 accumulation
    # happens in-kernel).  Biases stay f32.
    cw_k = cw.reshape(3, 3 * Cin, G).astype(jnp.bfloat16)
    cb = params["conv_b"].reshape(1, G).astype(jnp.float32)
    w1 = jnp.stack([rb["w1"].reshape(3, 3 * C, C) for rb in blocks]).astype(jnp.bfloat16)
    b1 = jnp.stack([rb["b1"].reshape(1, C) for rb in blocks]).astype(jnp.float32)
    w2 = jnp.stack([rb["w2"].reshape(3, 3 * C, C) for rb in blocks]).astype(jnp.bfloat16)
    b2 = jnp.stack([rb["b2"].reshape(1, C) for rb in blocks]).astype(jnp.float32)

    # Kernel-facing activation layout: (N, H*W, C) (free reshapes in XLA).
    x_flat = x.reshape(N, H * W, Cin)

    kernel = functools.partial(_make_dense_kernel, n_blocks=nb, H=H, W=W)

    out_flat = pl.pallas_call(
        kernel,
        out_shape=jax.ShapeDtypeStruct((N, H * W, C), jnp.float32),
        grid=grid,
        in_specs=[
            pl.BlockSpec((batch_block, H * W, Cin), lambda n: (n, 0, 0)),  # x
            pl.BlockSpec((3, 3 * Cin, G), lambda n: (0, 0, 0)),            # conv w
            pl.BlockSpec((1, G), lambda n: (0, 0)),                        # conv b
            pl.BlockSpec((nb, 3, 3 * C, C), lambda n: (0, 0, 0, 0)),       # w1
            pl.BlockSpec((nb, 1, C), lambda n: (0, 0, 0)),                 # b1
            pl.BlockSpec((nb, 3, 3 * C, C), lambda n: (0, 0, 0, 0)),       # w2
            pl.BlockSpec((nb, 1, C), lambda n: (0, 0, 0)),                 # b2
        ],
        out_specs=pl.BlockSpec((batch_block, H * W, C), lambda n: (n, 0, 0)),
        scratch_shapes=[
            pltpu.VMEM((H + 2, W + 2, C), jnp.bfloat16),                   # padded plane
            pltpu.VMEM((batch_block, (H + 2) * W, 3 * C), jnp.bfloat16),   # im2col cols
        ],
        compiler_params=pltpu.CompilerParams(
            dimension_semantics=("parallel",)),
    )(x_flat, cw_k, cb, w1, b1, w2, b2)

    return out_flat.reshape(N, H, W, C)


# ----------------------------------------------------------------------------
# Pure-JAX reference (correctness check)
# ----------------------------------------------------------------------------
def _ref_conv3x3(x, w, b, padding_mode, relu=False):
    if padding_mode == "reflect":
        xp = jnp.pad(x, ((0, 0), (1, 1), (1, 1), (0, 0)), mode="reflect")
        y = jax.lax.conv_general_dilated(
            xp, w, (1, 1), "VALID",
            dimension_numbers=("NHWC", "HWIO", "NHWC"))
    else:
        y = jax.lax.conv_general_dilated(
            x, w, (1, 1), "SAME",
            dimension_numbers=("NHWC", "HWIO", "NHWC"))
    y = y + b
    return jnp.maximum(y, 0.0) if relu else y


def make_dense_reference(x, params):
    out = _ref_conv3x3(x, params["conv_w"], params["conv_b"], "zero", relu=True)
    out = jnp.concatenate([x, out], axis=-1)
    for rb in params["res_blocks"]:
        residual = out
        h = _ref_conv3x3(out, rb["w1"], rb["b1"], "reflect", relu=True)
        out = _ref_conv3x3(h, rb["w2"], rb["b2"], "reflect") * 0.1 + residual
    return out


# ----------------------------------------------------------------------------
# Deterministic parameter init (synthetic weights, shapes from __init__)
# ----------------------------------------------------------------------------
def _conv_init(key, cin, cout):
    kw, kb = jax.random.split(key)
    bound = 1.0 / jnp.sqrt(cin * 9.0)
    w = jax.random.uniform(kw, (3, 3, cin, cout), jnp.float32, -bound, bound)
    b = jax.random.uniform(kb, (cout,), jnp.float32, -bound, bound)
    return w, b


def init_params(key, in_channels, growth_rate, res_blocks=6):
    keys = jax.random.split(key, 1 + (res_blocks - 1) * 2)
    conv_w, conv_b = _conv_init(keys[0], in_channels, growth_rate)
    blocks = []
    ch = 32  # ResidualBlock(32) is hardcoded in the PyTorch module
    for i in range(res_blocks - 1):
        w1, b1 = _conv_init(keys[1 + 2 * i], ch, ch)
        w2, b2 = _conv_init(keys[2 + 2 * i], ch, ch)
        blocks.append({"w1": w1, "b1": b1, "w2": w2, "b2": b2})
    return {"conv_w": conv_w, "conv_b": conv_b, "res_blocks": blocks}


# ----------------------------------------------------------------------------
if __name__ == "__main__":
    # in_channels + growth_rate must be 32 (dehaze blocks hardcode 32 channels)
    N, H, W = 2, 16, 16
    in_channels, growth_rate = 16, 16

    key = jax.random.PRNGKey(0)
    kx, kp = jax.random.split(key)
    x = jax.random.normal(kx, (N, H, W, in_channels), jnp.float32)
    params = init_params(kp, in_channels, growth_rate, res_blocks=6)

    out = jax.block_until_ready(make_dense_forward(x, params))
    ref = jax.block_until_ready(make_dense_reference(x, params))

    assert out.shape == (N, H, W, in_channels + growth_rate), out.shape
    # bf16 MXU inputs over 11 chained convs -> looser tolerance than pure f32
    # (per review: keep f32 accumulation / residual math, loosen the check).
    max_err = float(jnp.max(jnp.abs(out - ref)))
    assert max_err < 5e-2, max_err
    print("KERNEL_OK")
</pallas_src>

<mosaic_0001>
module attributes {stable_mosaic.version = 11 : i64} {
  func.func @_make_dense_kernel(%arg0: i32, %arg1: memref<1x256x16xf32, #tpu.memory_space<vmem>>, %arg2: memref<3x48x16xbf16, #tpu.memory_space<vmem>>, %arg3: memref<1x16xf32, #tpu.memory_space<vmem>>, %arg4: memref<5x3x96x32xbf16, #tpu.memory_space<vmem>>, %arg5: memref<5x1x32xf32, #tpu.memory_space<vmem>>, %arg6: memref<5x3x96x32xbf16, #tpu.memory_space<vmem>>, %arg7: memref<5x1x32xf32, #tpu.memory_space<vmem>>, %arg8: memref<1x256x32xf32, #tpu.memory_space<vmem>>, %arg9: memref<18x18x32xbf16, #tpu.memory_space<vmem>>, %arg10: memref<1x288x96xbf16, #tpu.memory_space<vmem>>) attributes {dimension_semantics = [#tpu.dimension_semantics<parallel>], iteration_bounds = array<i64: 2>, scalar_prefetch = 0 : i64, scratch_operands = 2 : i64, tpu.core_type = #tpu.core_type<tc>, window_params = [{transform_indices = @transform_0, window_bounds = array<i64: 1, 256, 16>}, {pipeline_mode = #tpu.pipeline_mode<synchronous>, transform_indices = @transform_1, window_bounds = array<i64: 3, 48, 16>}, {pipeline_mode = #tpu.pipeline_mode<synchronous>, transform_indices = @transform_2, window_bounds = array<i64: 1, 16>}, {pipeline_mode = #tpu.pipeline_mode<synchronous>, transform_indices = @transform_3, window_bounds = array<i64: 5, 3, 96, 32>}, {pipeline_mode = #tpu.pipeline_mode<synchronous>, transform_indices = @transform_4, window_bounds = array<i64: 5, 1, 32>}, {pipeline_mode = #tpu.pipeline_mode<synchronous>, transform_indices = @transform_5, window_bounds = array<i64: 5, 3, 96, 32>}, {pipeline_mode = #tpu.pipeline_mode<synchronous>, transform_indices = @transform_6, window_bounds = array<i64: 5, 1, 32>}, {transform_indices = @transform_7, window_bounds = array<i64: 1, 256, 32>}]} {
    %c0 = arith.constant 0 : index
    %c0_0 = arith.constant 0 : index
    %c0_1 = arith.constant 0 : index
    %0 = vector.load %arg2[%c0, %c0_0, %c0_1] : memref<3x48x16xbf16, #tpu.memory_space<vmem>>, vector<3x48x16xbf16>
    %c0_2 = arith.constant 0 : index
    %c0_3 = arith.constant 0 : index
    %1 = vector.load %arg3[%c0_2, %c0_3] : memref<1x16xf32, #tpu.memory_space<vmem>>, vector<1x16xf32>
    %c0_4 = arith.constant 0 : index
    %c0_5 = arith.constant 0 : index
    %c0_6 = arith.constant 0 : index
    %2 = vector.load %arg1[%c0_4, %c0_5, %c0_6] : memref<1x256x16xf32, #tpu.memory_space<vmem>>, vector<1x256x16xf32>
    %3 = vector.shape_cast %2 : vector<1x256x16xf32> to vector<256x16xf32>
    %4 = vector.shape_cast %3 : vector<256x16xf32> to vector<16x16x16xf32>
    %5 = arith.truncf %4 : vector<16x16x16xf32> to vector<16x16x16xbf16>
    %c1 = arith.constant 1 : index
    %c1_7 = arith.constant 1 : index
    %c0_8 = arith.constant 0 : index
    %6 = vector.load %arg9[%c1, %c1_7, %c0_8] : memref<18x18x32xbf16, #tpu.memory_space<vmem>>, vector<16x16x16xbf16>
    tpu.vector_store %arg9[%c1, %c1_7, %c0_8], %5 {strides = array<i32>} : memref<18x18x32xbf16, #tpu.memory_space<vmem>>, vector<16x16x16xbf16>,
    %cst = arith.constant 0.000000e+00 : bf16
    %7 = vector.broadcast %cst : bf16 to vector<1x18x16xbf16>
    %c0_9 = arith.constant 0 : index
    %c0_10 = arith.constant 0 : index
    %c0_11 = arith.constant 0 : index
    %8 = vector.load %arg9[%c0_9, %c0_10, %c0_11] : memref<18x18x32xbf16, #tpu.memory_space<vmem>>, vector<1x18x16xbf16>
    tpu.vector_store %arg9[%c0_9, %c0_10, %c0_11], %7 {strides = array<i32>} : memref<18x18x32xbf16, #tpu.memory_space<vmem>>, vector<1x18x16xbf16>,
    %c17 = arith.constant 17 : index
    %c0_12 = arith.constant 0 : index
    %c0_13 = arith.constant 0 : index
    %9 = vector.load %arg9[%c17, %c0_12, %c0_13] : memref<18x18x32xbf16, #tpu.memory_space<vmem>>, vector<1x18x16xbf16>
    tpu.vector_store %arg9[%c17, %c0_12, %c0_13], %7 {strides = array<i32>} : memref<18x18x32xbf16, #tpu.memory_space<vmem>>, vector<1x18x16xbf16>,
    %cst_14 = arith.constant 0.000000e+00 : bf16
    %10 = vector.broadcast %cst_14 : bf16 to vector<18x1x16xbf16>
    %c0_15 = arith.constant 0 : index
    %c0_16 = arith.constant 0 : index
    %c0_17 = arith.constant 0 : index
    %11 = vector.load %arg9[%c0_15, %c0_16, %c0_17] : memref<18x18x32xbf16, #tpu.memory_space<vmem>>, vector<18x1x16xbf16>
    tpu.vector_store %arg9[%c0_15, %c0_16, %c0_17], %10 {strides = array<i32>} : memref<18x18x32xbf16, #tpu.memory_space<vmem>>, vector<18x1x16xbf16>,
    %c0_18 = arith.constant 0 : index
    %c17_19 = arith.constant 17 : index
    %c0_20 = arith.constant 0 : index
    %12 = vector.load %arg9[%c0_18, %c17_19, %c0_20] : memref<18x18x32xbf16, #tpu.memory_space<vmem>>, vector<18x1x16xbf16>
    tpu.vector_store %arg9[%c0_18, %c17_19, %c0_20], %10 {strides = array<i32>} : memref<18x18x32xbf16, #tpu.memory_space<vmem>>, vector<18x1x16xbf16>,
    %c0_21 = arith.constant 0 : index
    %c0_22 = arith.constant 0 : index
    %c0_23 = arith.constant 0 : index
    %13 = vector.load %arg9[%c0_21, %c0_22, %c0_23] : memref<18x18x32xbf16, #tpu.memory_space<vmem>>, vector<18x16x16xbf16>
    %14 = vector.shape_cast %13 : vector<18x16x16xbf16> to vector<288x16xbf16>
    %c0_24 = arith.constant 0 : index
    %c0_25 = arith.constant 0 : index
    %c0_26 = arith.constant 0 : index
    %15 = vector.load %arg10[%c0_24, %c0_25, %c0_26] : memref<1x288x96xbf16, #tpu.memory_space<vmem>>, vector<1x288x16xbf16>
    %16 = vector.shape_cast %15 : vector<1x288x16xbf16> to vector<288x16xbf16>
    %17 = vector.shape_cast %14 : vector<288x16xbf16> to vector<1x288x16xbf16>
    tpu.vector_store %arg10[%c0_24, %c0_25, %c0_26], %17 {strides = array<i32>} : memref<1x288x96xbf16, #tpu.memory_space<vmem>>, vector<1x288x16xbf16>,
    %c0_27 = arith.constant 0 : index
    %c1_28 = arith.constant 1 : index
    %c0_29 = arith.constant 0 : index
    %18 = vector.load %arg9[%c0_27, %c1_28, %c0_29] : memref<18x18x32xbf16, #tpu.memory_space<vmem>>, vector<18x16x16xbf16>
    %19 = vector.shape_cast %18 : vector<18x16x16xbf16> to vector<288x16xbf16>
    %c0_30 = arith.constant 0 : index
    %c0_31 = arith.constant 0 : index
    %c16 = arith.constant 16 : index
    %20 = vector.load %arg10[%c0_30, %c0_31, %c16] : memref<1x288x96xbf16, #tpu.memory_space<vmem>>, vector<1x288x16xbf16>
    %21 = vector.shape_cast %20 : vector<1x288x16xbf16> to vector<288x16xbf16>
    %22 = vector.shape_cast %19 : vector<288x16xbf16> to vector<1x288x16xbf16>
    tpu.vector_store %arg10[%c0_30, %c0_31, %c16], %22 {strides = array<i32>} : memref<1x288x96xbf16, #tpu.memory_space<vmem>>, vector<1x288x16xbf16>,
    %c0_32 = arith.constant 0 : index
    %c2 = arith.constant 2 : index
    %c0_33 = arith.constant 0 : index
    %23 = vector.load %arg9[%c0_32, %c2, %c0_33] : memref<18x18x32xbf16, #tpu.memory_space<vmem>>, vector<18x16x16xbf16>
    %24 = vector.shape_cast %23 : vector<18x16x16xbf16> to vector<288x16xbf16>
    %c0_34 = arith.constant 0 : index
    %c0_35 = arith.constant 0 : index
    %c32 = arith.constant 32 : index
    %25 = vector.load %arg10[%c0_34, %c0_35, %c32] : memref<1x288x96xbf16, #tpu.memory_space<vmem>>, vector<1x288x16xbf16>
    %26 = vector.shape_cast %25 : vector<1x288x16xbf16> to vector<288x16xbf16>
    %27 = vector.shape_cast %24 : vector<288x16xbf16> to vector<1x288x16xbf16>
    tpu.vector_store %arg10[%c0_34, %c0_35, %c32], %27 {strides = array<i32>} : memref<1x288x96xbf16, #tpu.memory_space<vmem>>, vector<1x288x16xbf16>,
    %c0_36 = arith.constant 0 : index
    %c0_37 = arith.constant 0 : index
    %c0_38 = arith.constant 0 : index
    %28 = vector.load %arg10[%c0_36, %c0_37, %c0_38] : memref<1x288x96xbf16, #tpu.memory_space<vmem>>, vector<1x256x48xbf16>
    %29 = vector.shape_cast %28 : vector<1x256x48xbf16> to vector<256x48xbf16>
    %30 = vector.extract_strided_slice %0 {offsets = [0, 0, 0], sizes = [1, 48, 16], strides = [1, 1, 1]} : vector<3x48x16xbf16> to vector<1x48x16xbf16>
    %31 = vector.shape_cast %30 : vector<1x48x16xbf16> to vector<48x16xbf16>
    %cst_39 = arith.constant dense<0.000000e+00> : vector<256x16xf32>
    %32 = tpu.matmul %29, %31, %cst_39 {dimension_numbers = #tpu.dot_dimension_numbers<[1], [0], [0], [1], [0, 0, 1, 1], [], []>} : vector<256x48xbf16>, vector<48x16xbf16>, vector<256x16xf32> -> vector<256x16xf32>
    %33 = vector.broadcast %1 : vector<1x16xf32> to vector<256x16xf32>
    %34 = arith.addf %33, %32 : vector<256x16xf32>
    %c0_40 = arith.constant 0 : index
    %c16_41 = arith.constant 16 : index
    %c0_42 = arith.constant 0 : index
    %35 = vector.load %arg10[%c0_40, %c16_41, %c0_42] : memref<1x288x96xbf16, #tpu.memory_space<vmem>>, vector<1x256x48xbf16>
    %36 = vector.shape_cast %35 : vector<1x256x48xbf16> to vector<256x48xbf16>
    %37 = vector.extract_strided_slice %0 {offsets = [1, 0, 0], sizes = [1, 48, 16], strides = [1, 1, 1]} : vector<3x48x16xbf16> to vector<1x48x16xbf16>
    %38 = vector.shape_cast %37 : vector<1x48x16xbf16> to vector<48x16xbf16>
    %cst_43 = arith.constant dense<0.000000e+00> : vector<256x16xf32>
    %39 = tpu.matmul %36, %38, %cst_43 {dimension_numbers = #tpu.dot_dimension_numbers<[1], [0], [0], [1], [0, 0, 1, 1], [], []>} : vector<256x48xbf16>, vector<48x16xbf16>, vector<256x16xf32> -> vector<256x16xf32>
    %40 = arith.addf %34, %39 : vector<256x16xf32>
    %c0_44 = arith.constant 0 : index
    %c32_45 = arith.constant 32 : index
    %c0_46 = arith.constant 0 : index
    %41 = vector.load %arg10[%c0_44, %c32_45, %c0_46] : memref<1x288x96xbf16, #tpu.memory_space<vmem>>, vector<1x256x48xbf16>
    %42 = vector.shape_cast %41 : vector<1x256x48xbf16> to vector<256x48xbf16>
    %43 = vector.extract_strided_slice %0 {offsets = [2, 0, 0], sizes = [1, 48, 16], strides = [1, 1, 1]} : vector<3x48x16xbf16> to vector<1x48x16xbf16>
    %44 = vector.shape_cast %43 : vector<1x48x16xbf16> to vector<48x16xbf16>
    %cst_47 = arith.constant dense<0.000000e+00> : vector<256x16xf32>
    %45 = tpu.matmul %42, %44, %cst_47 {dimension_numbers = #tpu.dot_dimension_numbers<[1], [0], [0], [1], [0, 0, 1, 1], [], []>} : vector<256x48xbf16>, vector<48x16xbf16>, vector<256x16xf32> -> vector<256x16xf32>
    %46 = arith.addf %40, %45 : vector<256x16xf32>
    %cst_48 = arith.constant 0.000000e+00 : f32
    %47 = vector.broadcast %cst_48 : f32 to vector<256x16xf32>
    %48 = arith.maximumf %46, %47 : vector<256x16xf32>
    %49 = tpu.concatenate %3, %48 in 1 : vector<256x16xf32>, vector<256x16xf32> -> vector<256x32xf32>
    %c0_49 = arith.constant 0 : index
    %c0_50 = arith.constant 0 : index
    %c0_51 = arith.constant 0 : index
    %50 = vector.load %arg8[%c0_49, %c0_50, %c0_51] : memref<1x256x32xf32, #tpu.memory_space<vmem>>, vector<1x256x32xf32>
    %51 = vector.shape_cast %50 : vector<1x256x32xf32> to vector<256x32xf32>
    %52 = vector.shape_cast %49 : vector<256x32xf32> to vector<1x256x32xf32>
    tpu.vector_store %arg8[%c0_49, %c0_50, %c0_51], %52 {strides = array<i32>} : memref<1x256x32xf32, #tpu.memory_space<vmem>>, vector<1x256x32xf32>,
    %c0_i32 = arith.constant 0 : i32
    %c5_i32 = arith.constant 5 : i32
    %53 = arith.addi %c0_i32, %c5_i32 : i32
    %c1_i32 = arith.constant 1 : i32
    scf.for %arg11 = %c0_i32 to %53 step %c1_i32  : i32 {
      %c1_i32_53 = arith.constant 1 : i32
      %54 = arith.muli %arg11, %c1_i32_53 : i32
      %c0_i32_54 = arith.constant 0 : i32
      %55 = arith.addi %c0_i32_54, %54 : i32
      %56 = arith.index_cast %55 : i32 to index
      %c0_55 = arith.constant 0 : index
      %c0_56 = arith.constant 0 : index
      %c0_57 = arith.constant 0 : index
      %57 = vector.load %arg4[%56, %c0_55, %c0_56, %c0_57] : memref<5x3x96x32xbf16, #tpu.memory_space<vmem>>, vector<1x3x96x32xbf16>
      %58 = vector.shape_cast %57 : vector<1x3x96x32xbf16> to vector<3x96x32xbf16>
      %59 = arith.index_cast %55 : i32 to index
      %c0_58 = arith.constant 0 : index
      %c0_59 = arith.constant 0 : index
      %60 = vector.load %arg5[%59, %c0_58, %c0_59] : memref<5x1x32xf32, #tpu.memory_space<vmem>>, vector<1x1x32xf32>
      %61 = vector.shape_cast %60 : vector<1x1x32xf32> to vector<1x32xf32>
      %62 = arith.index_cast %55 : i32 to index
      %c0_60 = arith.constant 0 : index
      %c0_61 = arith.constant 0 : index
      %c0_62 = arith.constant 0 : index
      %63 = vector.load %arg6[%62, %c0_60, %c0_61, %c0_62] : memref<5x3x96x32xbf16, #tpu.memory_space<vmem>>, vector<1x3x96x32xbf16>
      %64 = vector.shape_cast %63 : vector<1x3x96x32xbf16> to vector<3x96x32xbf16>
      %65 = arith.index_cast %55 : i32 to index
      %c0_63 = arith.constant 0 : index
      %c0_64 = arith.constant 0 : index
      %66 = vector.load %arg7[%65, %c0_63, %c0_64] : memref<5x1x32xf32, #tpu.memory_space<vmem>>, vector<1x1x32xf32>
      %67 = vector.shape_cast %66 : vector<1x1x32xf32> to vector<1x32xf32>
      %c0_65 = arith.constant 0 : index
      %c0_66 = arith.constant 0 : index
      %c0_67 = arith.constant 0 : index
      %68 = vector.load %arg8[%c0_65, %c0_66, %c0_67] : memref<1x256x32xf32, #tpu.memory_space<vmem>>, vector<1x256x32xf32>
      %69 = vector.shape_cast %68 : vector<1x256x32xf32> to vector<256x32xf32>
      %70 = vector.shape_cast %69 : vector<256x32xf32> to vector<16x16x32xf32>
      %71 = arith.truncf %70 : vector<16x16x32xf32> to vector<16x16x32xbf16>
      %c1_68 = arith.constant 1 : index
      %c1_69 = arith.constant 1 : index
      %c0_70 = arith.constant 0 : index
      %72 = vector.load %arg9[%c1_68, %c1_69, %c0_70] : memref<18x18x32xbf16, #tpu.memory_space<vmem>>, vector<16x16x32xbf16>
      tpu.vector_store %arg9[%c1_68, %c1_69, %c0_70], %71 {strides = array<i32>} : memref<18x18x32xbf16, #tpu.memory_space<vmem>>, vector<16x16x32xbf16>,
      %73 = vector.extract_strided_slice %71 {offsets = [1, 0, 0], sizes = [1, 16, 32], strides = [1, 1, 1]} : vector<16x16x32xbf16> to vector<1x16x32xbf16>
      %c0_71 = arith.constant 0 : index
      %c1_72 = arith.constant 1 : index
      %c0_73 = arith.constant 0 : index
      %74 = vector.load %arg9[%c0_71, %c1_72, %c0_73] : memref<18x18x32xbf16, #tpu.memory_space<vmem>>, vector<1x16x32xbf16>
      tpu.vector_store %arg9[%c0_71, %c1_72, %c0_73], %73 {strides = array<i32>} : memref<18x18x32xbf16, #tpu.memory_space<vmem>>, vector<1x16x32xbf16>,
      %75 = vector.extract_strided_slice %71 {offsets = [14, 0, 0], sizes = [1, 16, 32], strides = [1, 1, 1]} : vector<16x16x32xbf16> to vector<1x16x32xbf16>
      %c17_74 = arith.constant 17 : index
      %c1_75 = arith.constant 1 : index
      %c0_76 = arith.constant 0 : index
      %76 = vector.load %arg9[%c17_74, %c1_75, %c0_76] : memref<18x18x32xbf16, #tpu.memory_space<vmem>>, vector<1x16x32xbf16>
      tpu.vector_store %arg9[%c17_74, %c1_75, %c0_76], %75 {strides = array<i32>} : memref<18x18x32xbf16, #tpu.memory_space<vmem>>, vector<1x16x32xbf16>,
      %c0_77 = arith.constant 0 : index
      %c2_78 = arith.constant 2 : index
      %c0_79 = arith.constant 0 : index
      %77 = vector.load %arg9[%c0_77, %c2_78, %c0_79] : memref<18x18x32xbf16, #tpu.memory_space<vmem>>, vector<18x1x32xbf16>
      %c0_80 = arith.constant 0 : index
      %c0_81 = arith.constant 0 : index
      %c0_82 = arith.constant 0 : index
      %78 = vector.load %arg9[%c0_80, %c0_81, %c0_82] : memref<18x18x32xbf16, #tpu.memory_space<vmem>>, vector<18x1x32xbf16>
      tpu.vector_store %arg9[%c0_80, %c0_81, %c0_82], %77 {strides = array<i32>} : memref<18x18x32xbf16, #tpu.memory_space<vmem>>, vector<18x1x32xbf16>,
      %c0_83 = arith.constant 0 : index
      %c15 = arith.constant 15 : index
      %c0_84 = arith.constant 0 : index
      %79 = vector.load %arg9[%c0_83, %c15, %c0_84] : memref<18x18x32xbf16, #tpu.memory_space<vmem>>, vector<18x1x32xbf16>
      %c0_85 = arith.constant 0 : index
      %c17_86 = arith.constant 17 : index
      %c0_87 = arith.constant 0 : index
      %80 = vector.load %arg9[%c0_85, %c17_86, %c0_87] : memref<18x18x32xbf16, #tpu.memory_space<vmem>>, vector<18x1x32xbf16>
      tpu.vector_store %arg9[%c0_85, %c17_86, %c0_87], %79 {strides = array<i32>} : memref<18x18x32xbf16, #tpu.memory_space<vmem>>, vector<18x1x32xbf16>,
      %c0_88 = arith.constant 0 : index
      %c0_89 = arith.constant 0 : index
      %c0_90 = arith.constant 0 : index
      %81 = vector.load %arg9[%c0_88, %c0_89, %c0_90] : memref<18x18x32xbf16, #tpu.memory_space<vmem>>, vector<18x16x32xbf16>
      %82 = vector.shape_cast %81 : vector<18x16x32xbf16> to vector<288x32xbf16>
      %c0_91 = arith.constant 0 : index
      %c0_92 = arith.constant 0 : index
      %c0_93 = arith.constant 0 : index
      %83 = vector.load %arg10[%c0_91, %c0_92, %c0_93] : memref<1x288x96xbf16, #tpu.memory_space<vmem>>, vector<1x288x32xbf16>
      %84 = vector.shape_cast %83 : vector<1x288x32xbf16> to vector<288x32xbf16>
      %85 = vector.shape_cast %82 : vector<288x32xbf16> to vector<1x288x32xbf16>
      tpu.vector_store %arg10[%c0_91, %c0_92, %c0_93], %85 {strides = array<i32>} : memref<1x288x96xbf16, #tpu.memory_space<vmem>>, vector<1x288x32xbf16>,
      %c0_94 = arith.constant 0 : index
      %c1_95 = arith.constant 1 : index
      %c0_96 = arith.constant 0 : index
      %86 = vector.load %arg9[%c0_94, %c1_95, %c0_96] : memref<18x18x32xbf16, #tpu.memory_space<vmem>>, vector<18x16x32xbf16>
      %87 = vector.shape_cast %86 : vector<18x16x32xbf16> to vector<288x32xbf16>
      %c0_97 = arith.constant 0 : index
      %c0_98 = arith.constant 0 : index
      %c32_99 = arith.constant 32 : index
      %88 = vector.load %arg10[%c0_97, %c0_98, %c32_99] : memref<1x288x96xbf16, #tpu.memory_space<vmem>>, vector<1x288x32xbf16>
      %89 = vector.shape_cast %88 : vector<1x288x32xbf16> to vector<288x32xbf16>
      %90 = vector.shape_cast %87 : vector<288x32xbf16> to vector<1x288x32xbf16>
      tpu.vector_store %arg10[%c0_97, %c0_98, %c32_99], %90 {strides = array<i32>} : memref<1x288x96xbf16, #tpu.memory_space<vmem>>, vector<1x288x32xbf16>,
      %c0_100 = arith.constant 0 : index
      %c2_101 = arith.constant 2 : index
      %c0_102 = arith.constant 0 : index
      %91 = vector.load %arg9[%c0_100, %c2_101, %c0_102] : memref<18x18x32xbf16, #tpu.memory_space<vmem>>, vector<18x16x32xbf16>
      %92 = vector.shape_cast %91 : vector<18x16x32xbf16> to vector<288x32xbf16>
      %c0_103 = arith.constant 0 : index
      %c0_104 = arith.constant 0 : index
      %c64 = arith.constant 64 : index
      %93 = vector.load %arg10[%c0_103, %c0_104, %c64] : memref<1x288x96xbf16, #tpu.memory_space<vmem>>, vector<1x288x32xbf16>
      %94 = vector.shape_cast %93 : vector<1x288x32xbf16> to vector<288x32xbf16>
      %95 = vector.shape_cast %92 : vector<288x32xbf16> to vector<1x288x32xbf16>
      tpu.vector_store %arg10[%c0_103, %c0_104, %c64], %95 {strides = array<i32>} : memref<1x288x96xbf16, #tpu.memory_space<vmem>>, vector<1x288x32xbf16>,
      %c0_105 = arith.constant 0 : index
      %c0_106 = arith.constant 0 : index
      %c0_107 = arith.constant 0 : index
      %96 = vector.load %arg10[%c0_105, %c0_106, %c0_107] : memref<1x288x96xbf16, #tpu.memory_space<vmem>>, vector<1x256x96xbf16>
      %97 = vector.shape_cast %96 : vector<1x256x96xbf16> to vector<256x96xbf16>
      %98 = vector.extract_strided_slice %58 {offsets = [0, 0, 0], sizes = [1, 96, 32], strides = [1, 1, 1]} : vector<3x96x32xbf16> to vector<1x96x32xbf16>
      %99 = vector.shape_cast %98 : vector<1x96x32xbf16> to vector<96x32xbf16>
      %cst_108 = arith.constant dense<0.000000e+00> : vector<256x32xf32>
      %100 = tpu.matmul %97, %99, %cst_108 {dimension_numbers = #tpu.dot_dimension_numbers<[1], [0], [0], [1], [0, 0, 1, 1], [], []>} : vector<256x96xbf16>, vector<96x32xbf16>, vector<256x32xf32> -> vector<256x32xf32>
      %101 = vector.broadcast %61 : vector<1x32xf32> to vector<256x32xf32>
      %102 = arith.addf %101, %100 : vector<256x32xf32>
      %c0_109 = arith.constant 0 : index
      %c16_110 = arith.constant 16 : index
      %c0_111 = arith.constant 0 : index
      %103 = vector.load %arg10[%c0_109, %c16_110, %c0_111] : memref<1x288x96xbf16, #tpu.memory_space<vmem>>, vector<1x256x96xbf16>
      %104 = vector.shape_cast %103 : vector<1x256x96xbf16> to vector<256x96xbf16>
      %105 = vector.extract_strided_slice %58 {offsets = [1, 0, 0], sizes = [1, 96, 32], strides = [1, 1, 1]} : vector<3x96x32xbf16> to vector<1x96x32xbf16>
      %106 = vector.shape_cast %105 : vector<1x96x32xbf16> to vector<96x32xbf16>
      %cst_112 = arith.constant dense<0.000000e+00> : vector<256x32xf32>
      %107 = tpu.matmul %104, %106, %cst_112 {dimension_numbers = #tpu.dot_dimension_numbers<[1], [0], [0], [1], [0, 0, 1, 1], [], []>} : vector<256x96xbf16>, vector<96x32xbf16>, vector<256x32xf32> -> vector<256x32xf32>
      %108 = arith.addf %102, %107 : vector<256x32xf32>
      %c0_113 = arith.constant 0 : index
      %c32_114 = arith.constant 32 : index
      %c0_115 = arith.constant 0 : index
      %109 = vector.load %arg10[%c0_113, %c32_114, %c0_115] : memref<1x288x96xbf16, #tpu.memory_space<vmem>>, vector<1x256x96xbf16>
      %110 = vector.shape_cast %109 : vector<1x256x96xbf16> to vector<256x96xbf16>
      %111 = vector.extract_strided_slice %58 {offsets = [2, 0, 0], sizes = [1, 96, 32], strides = [1, 1, 1]} : vector<3x96x32xbf16> to vector<1x96x32xbf16>
      %112 = vector.shape_cast %111 : vector<1x96x32xbf16> to vector<96x32xbf16>
      %cst_116 = arith.constant dense<0.000000e+00> : vector<256x32xf32>
      %113 = tpu.matmul %110, %112, %cst_116 {dimension_numbers = #tpu.dot_dimension_numbers<[1], [0], [0], [1], [0, 0, 1, 1], [], []>} : vector<256x96xbf16>, vector<96x32xbf16>, vector<256x32xf32> -> vector<256x32xf32>
      %114 = arith.addf %108, %113 : vector<256x32xf32>
      %cst_117 = arith.constant 0.000000e+00 : f32
      %115 = vector.broadcast %cst_117 : f32 to vector<256x32xf32>
      %116 = arith.maximumf %114, %115 : vector<256x32xf32>
      %117 = vector.shape_cast %116 : vector<256x32xf32> to vector<16x16x32xf32>
      %118 = arith.truncf %117 : vector<16x16x32xf32> to vector<16x16x32xbf16>
      %c1_118 = arith.constant 1 : index
      %c1_119 = arith.constant 1 : index
      %c0_120 = arith.constant 0 : index
      %119 = vector.load %arg9[%c1_118, %c1_119, %c0_120] : memref<18x18x32xbf16, #tpu.memory_space<vmem>>, vector<16x16x32xbf16>
      tpu.vector_store %arg9[%c1_118, %c1_119, %c0_120], %118 {strides = array<i32>} : memref<18x18x32xbf16, #tpu.memory_space<vmem>>, vector<16x16x32xbf16>,
      %120 = vector.extract_strided_slice %118 {offsets = [1, 0, 0], sizes = [1, 16, 32], strides = [1, 1, 1]} : vector<16x16x32xbf16> to vector<1x16x32xbf16>
      %c0_121 = arith.constant 0 : index
      %c1_122 = arith.constant 1 : index
      %c0_123 = arith.constant 0 : index
      %121 = vector.load %arg9[%c0_121, %c1_122, %c0_123] : memref<18x18x32xbf16, #tpu.memory_space<vmem>>, vector<1x16x32xbf16>
      tpu.vector_store %arg9[%c0_121, %c1_122, %c0_123], %120 {strides = array<i32>} : memref<18x18x32xbf16, #tpu.memory_space<vmem>>, vector<1x16x32xbf16>,
      %122 = vector.extract_strided_slice %118 {offsets = [14, 0, 0], sizes = [1, 16, 32], strides = [1, 1, 1]} : vector<16x16x32xbf16> to vector<1x16x32xbf16>
      %c17_124 = arith.constant 17 : index
      %c1_125 = arith.constant 1 : index
      %c0_126 = arith.constant 0 : index
      %123 = vector.load %arg9[%c17_124, %c1_125, %c0_126] : memref<18x18x32xbf16, #tpu.memory_space<vmem>>, vector<1x16x32xbf16>
      tpu.vector_store %arg9[%c17_124, %c1_125, %c0_126], %122 {strides = array<i32>} : memref<18x18x32xbf16, #tpu.memory_space<vmem>>, vector<1x16x32xbf16>,
      %c0_127 = arith.constant 0 : index
      %c2_128 = arith.constant 2 : index
      %c0_129 = arith.constant 0 : index
      %124 = vector.load %arg9[%c0_127, %c2_128, %c0_129] : memref<18x18x32xbf16, #tpu.memory_space<vmem>>, vector<18x1x32xbf16>
      %c0_130 = arith.constant 0 : index
      %c0_131 = arith.constant 0 : index
      %c0_132 = arith.constant 0 : index
      %125 = vector.load %arg9[%c0_130, %c0_131, %c0_132] : memref<18x18x32xbf16, #tpu.memory_space<vmem>>, vector<18x1x32xbf16>
      tpu.vector_store %arg9[%c0_130, %c0_131, %c0_132], %124 {strides = array<i32>} : memref<18x18x32xbf16, #tpu.memory_space<vmem>>, vector<18x1x32xbf16>,
      %c0_133 = arith.constant 0 : index
      %c15_134 = arith.constant 15 : index
      %c0_135 = arith.constant 0 : index
      %126 = vector.load %arg9[%c0_133, %c15_134, %c0_135] : memref<18x18x32xbf16, #tpu.memory_space<vmem>>, vector<18x1x32xbf16>
      %c0_136 = arith.constant 0 : index
      %c17_137 = arith.constant 17 : index
      %c0_138 = arith.constant 0 : index
      %127 = vector.load %arg9[%c0_136, %c17_137, %c0_138] : memref<18x18x32xbf16, #tpu.memory_space<vmem>>, vector<18x1x32xbf16>
      tpu.vector_store %arg9[%c0_136, %c17_137, %c0_138], %126 {strides = array<i32>} : memref<18x18x32xbf16, #tpu.memory_space<vmem>>, vector<18x1x32xbf16>,
      %c0_139 = arith.constant 0 : index
      %c0_140 = arith.constant 0 : index
      %c0_141 = arith.constant 0 : index
      %128 = vector.load %arg9[%c0_139, %c0_140, %c0_141] : memref<18x18x32xbf16, #tpu.memory_space<vmem>>, vector<18x16x32xbf16>
      %129 = vector.shape_cast %128 : vector<18x16x32xbf16> to vector<288x32xbf16>
      %c0_142 = arith.constant 0 : index
      %c0_143 = arith.constant 0 : index
      %c0_144 = arith.constant 0 : index
      %130 = vector.load %arg10[%c0_142, %c0_143, %c0_144] : memref<1x288x96xbf16, #tpu.memory_space<vmem>>, vector<1x288x32xbf16>
      %131 = vector.shape_cast %130 : vector<1x288x32xbf16> to vector<288x32xbf16>
      %132 = vector.shape_cast %129 : vector<288x32xbf16> to vector<1x288x32xbf16>
      tpu.vector_store %arg10[%c0_142, %c0_143, %c0_144], %132 {strides = array<i32>} : memref<1x288x96xbf16, #tpu.memory_space<vmem>>, vector<1x288x32xbf16>,
      %c0_145 = arith.constant 0 : index
      %c1_146 = arith.constant 1 : index
      %c0_147 = arith.constant 0 : index
      %133 = vector.load %arg9[%c0_145, %c1_146, %c0_147] : memref<18x18x32xbf16, #tpu.memory_space<vmem>>, vector<18x16x32xbf16>
      %134 = vector.shape_cast %133 : vector<18x16x32xbf16> to vector<288x32xbf16>
      %c0_148 = arith.constant 0 : index
      %c0_149 = arith.constant 0 : index
      %c32_150 = arith.constant 32 : index
      %135 = vector.load %arg10[%c0_148, %c0_149, %c32_150] : memref<1x288x96xbf16, #tpu.memory_space<vmem>>, vector<1x288x32xbf16>
      %136 = vector.shape_cast %135 : vector<1x288x32xbf16> to vector<288x32xbf16>
      %137 = vector.shape_cast %134 : vector<288x32xbf16> to vector<1x288x32xbf16>
      tpu.vector_store %arg10[%c0_148, %c0_149, %c32_150], %137 {strides = array<i32>} : memref<1x288x96xbf16, #tpu.memory_space<vmem>>, vector<1x288x32xbf16>,
      %c0_151 = arith.constant 0 : index
      %c2_152 = arith.constant 2 : index
      %c0_153 = arith.constant 0 : index
      %138 = vector.load %arg9[%c0_151, %c2_152, %c0_153] : memref<18x18x32xbf16, #tpu.memory_space<vmem>>, vector<18x16x32xbf16>
      %139 = vector.shape_cast %138 : vector<18x16x32xbf16> to vector<288x32xbf16>
      %c0_154 = arith.constant 0 : index
      %c0_155 = arith.constant 0 : index
      %c64_156 = arith.constant 64 : index
      %140 = vector.load %arg10[%c0_154, %c0_155, %c64_156] : memref<1x288x96xbf16, #tpu.memory_space<vmem>>, vector<1x288x32xbf16>
      %141 = vector.shape_cast %140 : vector<1x288x32xbf16> to vector<288x32xbf16>
      %142 = vector.shape_cast %139 : vector<288x32xbf16> to vector<1x288x32xbf16>
      tpu.vector_store %arg10[%c0_154, %c0_155, %c64_156], %142 {strides = array<i32>} : memref<1x288x96xbf16, #tpu.memory_space<vmem>>, vector<1x288x32xbf16>,
      %c0_157 = arith.constant 0 : index
      %c0_158 = arith.constant 0 : index
      %c0_159 = arith.constant 0 : index
      %143 = vector.load %arg10[%c0_157, %c0_158, %c0_159] : memref<1x288x96xbf16, #tpu.memory_space<vmem>>, vector<1x256x96xbf16>
      %144 = vector.shape_cast %143 : vector<1x256x96xbf16> to vector<256x96xbf16>
      %145 = vector.extract_strided_slice %64 {offsets = [0, 0, 0], sizes = [1, 96, 32], strides = [1, 1, 1]} : vector<3x96x32xbf16> to vector<1x96x32xbf16>
      %146 = vector.shape_cast %145 : vector<1x96x32xbf16> to vector<96x32xbf16>
      %cst_160 = arith.constant dense<0.000000e+00> : vector<256x32xf32>
      %147 = tpu.matmul %144, %146, %cst_160 {dimension_numbers = #tpu.dot_dimension_numbers<[1], [0], [0], [1], [0, 0, 1, 1], [], []>} : vector<256x96xbf16>, vector<96x32xbf16>, vector<256x32xf32> -> vector<256x32xf32>
      %148 = vector.broadcast %67 : vector<1x32xf32> to vector<256x32xf32>
      %149 = arith.addf %148, %147 : vector<256x32xf32>
      %c0_161 = arith.constant 0 : index
      %c16_162 = arith.constant 16 : index
      %c0_163 = arith.constant 0 : index
      %150 = vector.load %arg10[%c0_161, %c16_162, %c0_163] : memref<1x288x96xbf16, #tpu.memory_space<vmem>>, vector<1x256x96xbf16>
      %151 = vector.shape_cast %150 : vector<1x256x96xbf16> to vector<256x96xbf16>
      %152 = vector.extract_strided_slice %64 {offsets = [1, 0, 0], sizes = [1, 96, 32], strides = [1, 1, 1]} : vector<3x96x32xbf16> to vector<1x96x32xbf16>
      %153 = vector.shape_cast %152 : vector<1x96x32xbf16> to vector<96x32xbf16>
      %cst_164 = arith.constant dense<0.000000e+00> : vector<256x32xf32>
      %154 = tpu.matmul %151, %153, %cst_164 {dimension_numbers = #tpu.dot_dimension_numbers<[1], [0], [0], [1], [0, 0, 1, 1], [], []>} : vector<256x96xbf16>, vector<96x32xbf16>, vector<256x32xf32> -> vector<256x32xf32>
      %155 = arith.addf %149, %154 : vector<256x32xf32>
      %c0_165 = arith.constant 0 : index
      %c32_166 = arith.constant 32 : index
      %c0_167 = arith.constant 0 : index
      %156 = vector.load %arg10[%c0_165, %c32_166, %c0_167] : memref<1x288x96xbf16, #tpu.memory_space<vmem>>, vector<1x256x96xbf16>
      %157 = vector.shape_cast %156 : vector<1x256x96xbf16> to vector<256x96xbf16>
      %158 = vector.extract_strided_slice %64 {offsets = [2, 0, 0], sizes = [1, 96, 32], strides = [1, 1, 1]} : vector<3x96x32xbf16> to vector<1x96x32xbf16>
      %159 = vector.shape_cast %158 : vector<1x96x32xbf16> to vector<96x32xbf16>
      %cst_168 = arith.constant dense<0.000000e+00> : vector<256x32xf32>
      %160 = tpu.matmul %157, %159, %cst_168 {dimension_numbers = #tpu.dot_dimension_numbers<[1], [0], [0], [1], [0, 0, 1, 1], [], []>} : vector<256x96xbf16>, vector<96x32xbf16>, vector<256x32xf32> -> vector<256x32xf32>
      %161 = arith.addf %155, %160 : vector<256x32xf32>
      %cst_169 = arith.constant 1.000000e-01 : f32
      %162 = vector.broadcast %cst_169 : f32 to vector<256x32xf32>
      %163 = arith.mulf %161, %162 : vector<256x32xf32>
      %164 = arith.addf %163, %69 : vector<256x32xf32>
      %c0_170 = arith.constant 0 : index
      %c0_171 = arith.constant 0 : index
      %c0_172 = arith.constant 0 : index
      %165 = vector.load %arg8[%c0_170, %c0_171, %c0_172] : memref<1x256x32xf32, #tpu.memory_space<vmem>>, vector<1x256x32xf32>
      %166 = vector.shape_cast %165 : vector<1x256x32xf32> to vector<256x32xf32>
      %167 = vector.shape_cast %164 : vector<256x32xf32> to vector<1x256x32xf32>
      tpu.vector_store %arg8[%c0_170, %c0_171, %c0_172], %167 {strides = array<i32>} : memref<1x256x32xf32, #tpu.memory_space<vmem>>, vector<1x256x32xf32>,
    }
    %c5_i32_52 = arith.constant 5 : i32
    return
  }
  func.func @transform_0(%arg0: i32) -> (i32, i32, i32) {
    %c0_i32 = arith.constant 0 : i32
    %c0_i32_0 = arith.constant 0 : i32
    %c0_i32_1 = arith.constant 0 : i32
    return %arg0, %c0_i32, %c0_i32_0 : i32, i32, i32
  }
  func.func @transform_1(%arg0: i32) -> (i32, i32, i32) {
    %c0_i32 = arith.constant 0 : i32
    %c0_i32_0 = arith.constant 0 : i32
    %c0_i32_1 = arith.constant 0 : i32
    %c0_i32_2 = arith.constant 0 : i32
    return %c0_i32, %c0_i32_0, %c0_i32_1 : i32, i32, i32
  }
  func.func @transform_2(%arg0: i32) -> (i32, i32) {
    %c0_i32 = arith.constant 0 : i32
    %c0_i32_0 = arith.constant 0 : i32
    %c0_i32_1 = arith.constant 0 : i32
    return %c0_i32, %c0_i32_0 : i32, i32
  }
  func.func @transform_3(%arg0: i32) -> (i32, i32, i32, i32) {
    %c0_i32 = arith.constant 0 : i32
    %c0_i32_0 = arith.constant 0 : i32
    %c0_i32_1 = arith.constant 0 : i32
    %c0_i32_2 = arith.constant 0 : i32
    %c0_i32_3 = arith.constant 0 : i32
    return %c0_i32, %c0_i32_0, %c0_i32_1, %c0_i32_2 : i32, i32, i32, i32
  }
  func.func @transform_4(%arg0: i32) -> (i32, i32, i32) {
    %c0_i32 = arith.constant 0 : i32
    %c0_i32_0 = arith.constant 0 : i32
    %c0_i32_1 = arith.constant 0 : i32
    %c0_i32_2 = arith.constant 0 : i32
    return %c0_i32, %c0_i32_0, %c0_i32_1 : i32, i32, i32
  }
  func.func @transform_5(%arg0: i32) -> (i32, i32, i32, i32) {
    %c0_i32 = arith.constant 0 : i32
    %c0_i32_0 = arith.constant 0 : i32
    %c0_i32_1 = arith.constant 0 : i32
    %c0_i32_2 = arith.constant 0 : i32
    %c0_i32_3 = arith.constant 0 : i32
    return %c0_i32, %c0_i32_0, %c0_i32_1, %c0_i32_2 : i32, i32, i32, i32
  }
  func.func @transform_6(%arg0: i32) -> (i32, i32, i32) {
    %c0_i32 = arith.constant 0 : i32
    %c0_i32_0 = arith.constant 0 : i32
    %c0_i32_1 = arith.constant 0 : i32
    %c0_i32_2 = arith.constant 0 : i32
    return %c0_i32, %c0_i32_0, %c0_i32_1 : i32, i32, i32
  }
  func.func @transform_7(%arg0: i32) -> (i32, i32, i32) {
    %c0_i32 = arith.constant 0 : i32
    %c0_i32_0 = arith.constant 0 : i32
    %c0_i32_1 = arith.constant 0 : i32
    return %arg0, %c0_i32, %c0_i32_0 : i32, i32, i32
  }
}

</mosaic_0001>

<llo_original>
// kernel: tpu_custom_call.1
$region0: #{tpu_custom_call.1}
  #allocation0 [shape = 'u32[]', space=smem, size = 0x4, offset = 0x4, fixed_abs, tag = 'smem constant byte address 0x4 - core index']
  #allocation1 [shape = 'u32[144,128]{1,0:T(1,128)}', space=vmem, size = 0x12000, scoped, tag = 'internal scratch']
  #allocation2 [shape = 'bf16[18,18,32]{2,1,0:T(8,128)(2,1)}', space=vmem, size = 0x1b000, scoped, tag = 'scratch operand']
  #allocation3 [shape = 'bf16[1,288,96]{2,1,0:T(16,128)(2,1)}', space=vmem, size = 0x12000, scoped, tag = 'scratch operand']
  %s0 = inlined_call_operand.vmem [shape: f32[2,256,16], index: 0, kind: input, shape index: {}]
  %s1 = inlined_call_operand.vmem [shape: bf16[3,48,16], index: 1, kind: input, shape index: {}]
  %s2 = inlined_call_operand.vmem [shape: f32[1,16], index: 2, kind: input, shape index: {}]
  %s3 = inlined_call_operand.vmem [shape: bf16[5,3,96,32], index: 3, kind: input, shape index: {}]
  %s4 = inlined_call_operand.vmem [shape: f32[5,1,32], index: 4, kind: input, shape index: {}]
  %s5 = inlined_call_operand.vmem [shape: bf16[5,3,96,32], index: 5, kind: input, shape index: {}]
  %s6 = inlined_call_operand.vmem [shape: f32[5,1,32], index: 6, kind: input, shape index: {}]
  %s7 = inlined_call_operand.vmem [shape: f32[2,256,32], index: 7, kind: output, shape index: {}]
  %s8 = sld [smem:[#allocation0]]
  $region68: #{tpu_custom_call.1} parent=0
    _
  %s10 = ssub.s32 1, %s8
  %s11 = scalar_select 0, %s10, %s8
  loop: start=0, step=1, limit=4
  $region2: #{tpu_custom_call.1} parent=0 // loop_pre_header
    _
  $region3: #{tpu_custom_call.1} parent=0 // loop_header
    %s13 = sphi 0, %s17
    %p14 = scmp.ge.s32.totalorder %s13, 4
    %s23 = sphi 0, %s25
    %s26 = sphi 0, %s23
    %s27 = sphi 0, %s26
    %s43 = sphi 0, %s27
    %s47 = sphi 0, %s47
    %s49 = sphi 0, %s47
    %s50 = sphi 0, %s49
    %s64 = sphi 0, %s50
    %s68 = sphi 0, %s68
    %s70 = sphi 0, %s68
    %s71 = sphi 0, %s70
    %s85 = sphi 0, %s71
    %s89 = sphi 0, %s89
    %s91 = sphi 0, %s89
    %s92 = sphi 0, %s91
    %s106 = sphi 0, %s92
    %s110 = sphi 0, %s110
    %s112 = sphi 0, %s110
    %s113 = sphi 0, %s112
    %s127 = sphi 0, %s113
    %s131 = sphi 0, %s131
    %s133 = sphi 0, %s131
    %s134 = sphi 0, %s133
    %s148 = sphi 0, %s134
    %s152 = sphi 0, %s152
    %s154 = sphi 0, %s152
    %s155 = sphi 0, %s154
    %s169 = sphi 0, %s155
    %s175 = sphi 0, %s177
    %s178 = sphi 0, %s175
    %s179 = sphi 0, %s178
    %s195 = sphi 0, %s179
  $region4: #{tpu_custom_call.1} parent=0 // loop_header_branch
    %16 = sbr.rel (%p14) target = $region8
  $region5: #{tpu_custom_call.1} parent=0 // loop_body
    %s18 = ssub.s32 %s13, 1
    %s19 = ssub.s32 %s13, 2
    %s20 = sadd.s32 %s13, 1
    %s21 = ssub.s32 %s13, %s20
    %p22 = scmp.eq.s32.totalorder %s21, 0
    %s24 = sadd.s32 %s23, 1
    %s25 = scalar_select %p22, %s23, %s24
    %p28 = pneg %p22
    %p29 = scmp.eq.s32.totalorder %s13, 1
    %p30 = por %p28, %p29
    %p31 = scmp.ne.s32.totalorder %s23, %s26
    %p32 = scmp.eq.s32.totalorder %s13, 0
    %p33 = por %p31, %p32
    %p34 = scmp.ne.s32.totalorder %s23, %s26
    %p35 = scmp.eq.s32.totalorder %s18, 1
    %p36 = por %p34, %p35
    %p37 = scmp.ne.s32.totalorder %s26, %s27
    %p38 = scmp.eq.s32.totalorder %s18, 0
    %p39 = por %p37, %p38
    %p40 = scmp.ne.s32.totalorder %s26, %s27
    %p41 = scmp.eq.s32.totalorder %s19, 1
    %p42 = por %p40, %p41
    %p44 = scmp.ne.s32.totalorder %s27, %s43
    %p45 = scmp.eq.s32.totalorder %s19, 0
    %p46 = por %p44, %p45
    %s48 = sadd.s32 %s47, 1
    %p51 = scmp.eq.s32.totalorder %s13, 1
    %p52 = scmp.ne.s32.totalorder %s47, %s49
    %p53 = scmp.eq.s32.totalorder %s13, 0
    %p54 = por %p52, %p53
    %p55 = scmp.ne.s32.totalorder %s47, %s49
    %p56 = scmp.eq.s32.totalorder %s18, 1
    %p57 = por %p55, %p56
    %p58 = scmp.ne.s32.totalorder %s49, %s50
    %p59 = scmp.eq.s32.totalorder %s18, 0
    %p60 = por %p58, %p59
    %p61 = scmp.ne.s32.totalorder %s49, %s50
    %p62 = scmp.eq.s32.totalorder %s19, 1
    %p63 = por %p61, %p62
    %p65 = scmp.ne.s32.totalorder %s50, %s64
    %p66 = scmp.eq.s32.totalorder %s19, 0
    %p67 = por %p65, %p66
    %s69 = sadd.s32 %s68, 1
    %p72 = scmp.eq.s32.totalorder %s13, 1
    %p73 = scmp.ne.s32.totalorder %s68, %s70
    %p74 = scmp.eq.s32.totalorder %s13, 0
    %p75 = por %p73, %p74
    %p76 = scmp.ne.s32.totalorder %s68, %s70
    %p77 = scmp.eq.s32.totalorder %s18, 1
    %p78 = por %p76, %p77
    %p79 = scmp.ne.s32.totalorder %s70, %s71
    %p80 = scmp.eq.s32.totalorder %s18, 0
    %p81 = por %p79, %p80
    %p82 = scmp.ne.s32.totalorder %s70, %s71
    %p83 = scmp.eq.s32.totalorder %s19, 1
    %p84 = por %p82, %p83
    %p86 = scmp.ne.s32.totalorder %s71, %s85
    %p87 = scmp.eq.s32.totalorder %s19, 0
    %p88 = por %p86, %p87
    %s90 = sadd.s32 %s89, 1
    %p93 = scmp.eq.s32.totalorder %s13, 1
    %p94 = scmp.ne.s32.totalorder %s89, %s91
    %p95 = scmp.eq.s32.totalorder %s13, 0
    %p96 = por %p94, %p95
    %p97 = scmp.ne.s32.totalorder %s89, %s91
    %p98 = scmp.eq.s32.totalorder %s18, 1
    %p99 = por %p97, %p98
    %p100 = scmp.ne.s32.totalorder %s91, %s92
    %p101 = scmp.eq.s32.totalorder %s18, 0
    %p102 = por %p100, %p101
    %p103 = scmp.ne.s32.totalorder %s91, %s92
    %p104 = scmp.eq.s32.totalorder %s19, 1
    %p105 = por %p103, %p104
    %p107 = scmp.ne.s32.totalorder %s92, %s106
    %p108 = scmp.eq.s32.totalorder %s19, 0
    %p109 = por %p107, %p108
    %s111 = sadd.s32 %s110, 1
    %p114 = scmp.eq.s32.totalorder %s13, 1
    %p115 = scmp.ne.s32.totalorder %s110, %s112
    %p116 = scmp.eq.s32.totalorder %s13, 0
    %p117 = por %p115, %p116
    %p118 = scmp.ne.s32.totalorder %s110, %s112
    %p119 = scmp.eq.s32.totalorder %s18, 1
    %p120 = por %p118, %p119
    %p121 = scmp.ne.s32.totalorder %s112, %s113
    %p122 = scmp.eq.s32.totalorder %s18, 0
    %p123 = por %p121, %p122
    %p124 = scmp.ne.s32.totalorder %s112, %s113
    %p125 = scmp.eq.s32.totalorder %s19, 1
    %p126 = por %p124, %p125
    %p128 = scmp.ne.s32.totalorder %s113, %s127
    %p129 = scmp.eq.s32.totalorder %s19, 0
    %p130 = por %p128, %p129
    %s132 = sadd.s32 %s131, 1
    %p135 = scmp.eq.s32.totalorder %s13, 1
    %p136 = scmp.ne.s32.totalorder %s131, %s133
    %p137 = scmp.eq.s32.totalorder %s13, 0
    %p138 = por %p136, %p137
    %p139 = scmp.ne.s32.totalorder %s131, %s133
    %p140 = scmp.eq.s32.totalorder %s18, 1
    %p141 = por %p139, %p140
    %p142 = scmp.ne.s32.totalorder %s133, %s134
    %p143 = scmp.eq.s32.totalorder %s18, 0
    %p144 = por %p142, %p143
    %p145 = scmp.ne.s32.totalorder %s133, %s134
    %p146 = scmp.eq.s32.totalorder %s19, 1
    %p147 = por %p145, %p146
    %p149 = scmp.ne.s32.totalorder %s134, %s148
    %p150 = scmp.eq.s32.totalorder %s19, 0
    %p151 = por %p149, %p150
    %s153 = sadd.s32 %s152, 1
    %p156 = scmp.eq.s32.totalorder %s13, 1
    %p157 = scmp.ne.s32.totalorder %s152, %s154
    %p158 = scmp.eq.s32.totalorder %s13, 0
    %p159 = por %p157, %p158
    %p160 = scmp.ne.s32.totalorder %s152, %s154
    %p161 = scmp.eq.s32.totalorder %s18, 1
    %p162 = por %p160, %p161
    %p163 = scmp.ne.s32.totalorder %s154, %s155
    %p164 = scmp.eq.s32.totalorder %s18, 0
    %p165 = por %p163, %p164
    %p166 = scmp.ne.s32.totalorder %s154, %s155
    %p167 = scmp.eq.s32.totalorder %s19, 1
    %p168 = por %p166, %p167
    %p170 = scmp.ne.s32.totalorder %s155, %s169
    %p171 = scmp.eq.s32.totalorder %s19, 0
    %p172 = por %p170, %p171
    %s173 = ssub.s32 %s13, %s20
    %p174 = scmp.eq.s32.totalorder %s173, 0
    %s176 = sadd.s32 %s175, 1
    %s177 = scalar_select %p174, %s175, %s176
    %p180 = pneg %p174
    %p181 = scmp.eq.s32.totalorder %s13, 1
    %p182 = por %p180, %p181
    %p183 = scmp.ne.s32.totalorder %s175, %s178
    %p184 = scmp.eq.s32.totalorder %s13, 0
    %p185 = por %p183, %p184
    %p186 = scmp.ne.s32.totalorder %s175, %s178
    %p187 = scmp.eq.s32.totalorder %s18, 1
    %p188 = por %p186, %p187
    %p189 = scmp.ne.s32.totalorder %s178, %s179
    %p190 = scmp.eq.s32.totalorder %s18, 0
    %p191 = por %p189, %p190
    %p192 = scmp.ne.s32.totalorder %s178, %s179
    %p193 = scmp.eq.s32.totalorder %s19, 1
    %p194 = por %p192, %p193
    %p196 = scmp.ne.s32.totalorder %s179, %s195
    %p197 = scmp.eq.s32.totalorder %s19, 0
    %p198 = por %p196, %p197
    %p199 = scmp.le.s32.totalorder 1, %s13
    %p200 = scmp.lt.s32.totalorder %s13, 3
    %p201 = pnand %p199, %p200
    %p202 = pneg %p201
    // Predicated region
    $region9: #{tpu_custom_call.1} parent=5 // pred_check
      _
    $region10: #{tpu_custom_call.1} parent=5 // pred_check_branch
      %204 = sbr.rel (%p201) target = $region12
    $region11: #{tpu_custom_call.1} parent=5 // pred_region
      %s205 = ssub.s32 %s13, 1
      // Predicated region
      $region13: #{tpu_custom_call.1} parent=11 // pred_check
        %p206 = pneg %p60
      $region14: #{tpu_custom_call.1} parent=11 // pred_check_branch
        %208 = sbr.rel (%p206) target = $region16
      $region15: #{tpu_custom_call.1} parent=11 // pred_region
        _
      $region16: #{tpu_custom_call.1} parent=11 // pred_fallthru
        _
      // Predicated region
      $region17: #{tpu_custom_call.1} parent=11 // pred_check
        %p209 = pneg %p81
      $region18: #{tpu_custom_call.1} parent=11 // pred_check_branch
        %211 = sbr.rel (%p209) target = $region20
      $region19: #{tpu_custom_call.1} parent=11 // pred_region
        _
      $region20: #{tpu_custom_call.1} parent=11 // pred_fallthru
        _
      // Predicated region
      $region21: #{tpu_custom_call.1} parent=11 // pred_check
        %p212 = pneg %p102
      $region22: #{tpu_custom_call.1} parent=11 // pred_check_branch
        %214 = sbr.rel (%p212) target = $region24
      $region23: #{tpu_custom_call.1} parent=11 // pred_region
        _
      $region24: #{tpu_custom_call.1} parent=11 // pred_fallthru
        _
      // Predicated region
      $region25: #{tpu_custom_call.1} parent=11 // pred_check
        %p215 = pneg %p123
      $region26: #{tpu_custom_call.1} parent=11 // pred_check_branch
        %217 = sbr.rel (%p215) target = $region28
      $region27: #{tpu_custom_call.1} parent=11 // pred_region
        _
      $region28: #{tpu_custom_call.1} parent=11 // pred_fallthru
        _
      // Predicated region
      $region29: #{tpu_custom_call.1} parent=11 // pred_check
        %p218 = pneg %p144
      $region30: #{tpu_custom_call.1} parent=11 // pred_check_branch
        %220 = sbr.rel (%p218) target = $region32
      $region31: #{tpu_custom_call.1} parent=11 // pred_region
        _
      $region32: #{tpu_custom_call.1} parent=11 // pred_fallthru
        _
      // Predicated region
      $region33: #{tpu_custom_call.1} parent=11 // pred_check
        %p221 = pneg %p165
      $region34: #{tpu_custom_call.1} parent=11 // pred_check_branch
        %223 = sbr.rel (%p221) target = $region36
      $region35: #{tpu_custom_call.1} parent=11 // pred_region
        _
      $region36: #{tpu_custom_call.1} parent=11 // pred_fallthru
        _
    $region12: #{tpu_custom_call.1} parent=5 // pred_fallthru
      _
    %p224 = scmp.lt.s32.totalorder %s13, 2
    // Predicated region
    $region37: #{tpu_custom_call.1} parent=5 // pred_check
      %p225 = pneg %p224
    $region38: #{tpu_custom_call.1} parent=5 // pred_check_branch
      %227 = sbr.rel (%p225) target = $region40
    $region39: #{tpu_custom_call.1} parent=5 // pred_region
      // Predicated region
      $region41: #{tpu_custom_call.1} parent=39 // pred_check
        %p228 = pneg %p33
      $region42: #{tpu_custom_call.1} parent=39 // pred_check_branch
        %230 = sbr.rel (%p228) target = $region44
      $region43: #{tpu_custom_call.1} parent=39 // pred_region
        %p231 = scmp.lt.s32.totalorder %s13, 1
        %s232 = scalar_select %p231, %s13, 1
        %s233 = smul.addr %s232, 32
        %s234 = smul.addr %s233, 8
        %s235 = scalar_lea.vmem %s0, %s234
      $region44: #{tpu_custom_call.1} parent=39 // pred_fallthru
        _
    $region40: #{tpu_custom_call.1} parent=5 // pred_fallthru
      _
    %p236 = scmp.le.s32.totalorder 1, %s13
    %p237 = scmp.lt.s32.totalorder %s13, 3
    %p238 = pnand %p236, %p237
    %p239 = pneg %p238
    // Predicated region
    $region45: #{tpu_custom_call.1} parent=5 // pred_check
      _
    $region46: #{tpu_custom_call.1} parent=5 // pred_check_branch
      %241 = sbr.rel (%p238) target = $region48
    $region47: #{tpu_custom_call.1} parent=5 // pred_region
      %s242 = ssub.s32 %s13, 1
      %p243 = scmp.lt.s32.totalorder %s18, 1
      %s244 = scalar_select %p243, %s18, 1
      %s245 = smul.addr %s244, 32
      %s246 = smul.addr %s245, 8
      %s247 = scalar_lea.vmem %s0, %s246
      %p248 = pneg %p39
      %p249 = pneg %p36
      %p250 = pneg %p60
      %p251 = pneg %p57
      %p252 = pneg %p81
      %p253 = pneg %p78
      %p254 = pneg %p102
      %p255 = pneg %p99
      %p256 = pneg %p123
      %p257 = pneg %p120
      %p258 = pneg %p144
      %p259 = pneg %p141
      %p260 = pneg %p165
      %p261 = pneg %p162
      %p262 = pneg %p191
      %p263 = pneg %p188
      %p264 = scmp.lt.s32.totalorder %s18, 1
      %s265 = scalar_select %p264, %s18, 1
      %s266 = smul.addr %s265, 32
      %s267 = smul.addr %s266, 8
      %s268 = scalar_lea.vmem %s7, %s267
      %p269 = scmp.lt.s32.totalorder %s18, 1
      %s270 = scalar_select %p269, %s18, 1
      %s271 = smul.addr %s270, 32
      %s272 = smul.addr %s271, 8
      %s273 = scalar_lea.vmem %s0, %s272
      %p274 = scmp.lt.s32.totalorder %s18, 1
      %s275 = scalar_select %p274, %s18, 1
      %s276 = smul.addr %s275, 32
      %s277 = smul.addr %s276, 8
      %s278 = scalar_lea.vmem %s7, %s277
      %v280 = vld [vmem:[%s1] sm:$0xf]
      %v281 = vld [vmem:[%s1 + $0x4] sm:$0xf]
      %v282 = vld [vmem:[%s1 + $0x8] sm:$0xf]
      %v283 = vld [vmem:[%s1 + $0xc] sm:$0xf]
      %v284 = vld [vmem:[%s1 + $0x10] sm:$0xf]
      %v285 = vld [vmem:[%s1 + $0x14] sm:$0xf]
      %v286 = vld [vmem:[%s1 + $0x18] sm:$0xf]
      %v287 = vld [vmem:[%s1 + $0x1c] sm:$0xf]
      %v288 = vld [vmem:[%s1 + $0x20] sm:$0xf]
      %v289 = vld [vmem:[%s1 + $0x24] sm:$0xf]
      %v290 = vld [vmem:[%s1 + $0x28] sm:$0xf]
      %v291 = vld [vmem:[%s1 + $0x2c] sm:$0xf]
      %v292 = vld [vmem:[%s1 + $0x30] sm:$0xf]
      %v293 = vld [vmem:[%s1 + $0x34] sm:$0xf]
      %v294 = vld [vmem:[%s1 + $0x38] sm:$0xf]
      %v295 = vld [vmem:[%s1 + $0x3c] sm:$0xf]
      %v296 = vld [vmem:[%s1 + $0x40] sm:$0xf]
      %v297 = vld [vmem:[%s1 + $0x44] sm:$0xf]
      %v298 = vld [vmem:[%s2] sm:$0x1]
      %v299 = vld [vmem:[%s273] sm:$0xff]
      %v300 = vld [vmem:[%s273 + $0x8] sm:$0xff]
      %v301 = vld [vmem:[%s273 + $0x10] sm:$0xff]
      %v302 = vld [vmem:[%s273 + $0x18] sm:$0xff]
      %v303 = vld [vmem:[%s273 + $0x20] sm:$0xff]
      %v304 = vld [vmem:[%s273 + $0x28] sm:$0xff]
      %v305 = vld [vmem:[%s273 + $0x30] sm:$0xff]
      %v306 = vld [vmem:[%s273 + $0x38] sm:$0xff]
      %v307 = vld [vmem:[%s273 + $0x40] sm:$0xff]
      %v308 = vld [vmem:[%s273 + $0x48] sm:$0xff]
      %v309 = vld [vmem:[%s273 + $0x50] sm:$0xff]
      %v310 = vld [vmem:[%s273 + $0x58] sm:$0xff]
      %v311 = vld [vmem:[%s273 + $0x60] sm:$0xff]
      %v312 = vld [vmem:[%s273 + $0x68] sm:$0xff]
      %v313 = vld [vmem:[%s273 + $0x70] sm:$0xff]
      %v314 = vld [vmem:[%s273 + $0x78] sm:$0xff]
      %v315 = vld [vmem:[%s273 + $0x80] sm:$0xff]
      %v316 = vld [vmem:[%s273 + $0x88] sm:$0xff]
      %v317 = vld [vmem:[%s273 + $0x90] sm:$0xff]
      %v318 = vld [vmem:[%s273 + $0x98] sm:$0xff]
      %v319 = vld [vmem:[%s273 + $0xa0] sm:$0xff]
      %v320 = vld [vmem:[%s273 + $0xa8] sm:$0xff]
      %v321 = vld [vmem:[%s273 + $0xb0] sm:$0xff]
      %v322 = vld [vmem:[%s273 + $0xb8] sm:$0xff]
      %v323 = vld [vmem:[%s273 + $0xc0] sm:$0xff]
      %v324 = vld [vmem:[%s273 + $0xc8] sm:$0xff]
      %v325 = vld [vmem:[%s273 + $0xd0] sm:$0xff]
      %v326 = vld [vmem:[%s273 + $0xd8] sm:$0xff]
      %v327 = vld [vmem:[%s273 + $0xe0] sm:$0xff]
      %v328 = vld [vmem:[%s273 + $0xe8] sm:$0xff]
      %v329 = vld [vmem:[%s273 + $0xf0] sm:$0xff]
      %v330 = vld [vmem:[%s273 + $0xf8] sm:$0xff]
      %v331 = vpack.c.bf16 %v300, %v299
      %v332 = vpack.c.bf16 %v302, %v301
      %v333 = vpack.c.bf16 %v304, %v303
      %v334 = vpack.c.bf16 %v306, %v305
      %v335 = vpack.c.bf16 %v308, %v307
      %v336 = vpack.c.bf16 %v310, %v309
      %v337 = vpack.c.bf16 %v312, %v311
      %v338 = vpack.c.bf16 %v314, %v313
      %v339 = vpack.c.bf16 %v316, %v315
      %v340 = vpack.c.bf16 %v318, %v317
      %v341 = vpack.c.bf16 %v320, %v319
      %v342 = vpack.c.bf16 %v322, %v321
      %v343 = vpack.c.bf16 %v324, %v323
      %v344 = vpack.c.bf16 %v326, %v325
      %v345 = vpack.c.bf16 %v328, %v327
      %v346 = vpack.c.bf16 %v330, %v329
      %v363 = vunpack.c.l.b16 %v331
      %v364 = vunpack.c.h.b16 %v331
      %v365 = vunpack.c.l.b16 %v332
      %v366 = vunpack.c.h.b16 %v332
      %v367 = vunpack.c.l.b16 %v333
      %v368 = vunpack.c.h.b16 %v333
      %v369 = vunpack.c.l.b16 %v334
      %v370 = vunpack.c.h.b16 %v334
      %v371 = vunpack.c.l.b16 %v335
      %v372 = vunpack.c.h.b16 %v335
      %v373 = vunpack.c.l.b16 %v336
      %v374 = vunpack.c.h.b16 %v336
      %v375 = vunpack.c.l.b16 %v337
      %v376 = vunpack.c.h.b16 %v337
      %v377 = vunpack.c.l.b16 %v338
      %v378 = vunpack.c.h.b16 %v338
      %v379 = vunpack.c.l.b16 %v339
      %v380 = vunpack.c.h.b16 %v339
      %v381 = vunpack.c.l.b16 %v340
      %v382 = vunpack.c.h.b16 %v340
      %v383 = vunpack.c.l.b16 %v341
      %v384 = vunpack.c.h.b16 %v341
      %v385 = vunpack.c.l.b16 %v342
      %v386 = vunpack.c.h.b16 %v342
      %v387 = vunpack.c.l.b16 %v343
      %v388 = vunpack.c.h.b16 %v343
      %v389 = vunpack.c.l.b16 %v344
      %v390 = vunpack.c.h.b16 %v344
      %v391 = vunpack.c.l.b16 %v345
      %v392 = vunpack.c.h.b16 %v345
      %v393 = vunpack.c.l.b16 %v346
      %v394 = vunpack.c.h.b16 %v346
      %v395 = vpack.c.b16 %v363, %v363
      %v396 = vpack.c.b16 %v364, %v364
      %v397 = vpack.c.b16 %v365, %v365
      %v398 = vpack.c.b16 %v366, %v366
      %v399 = vpack.c.b16 %v367, %v367
      %v400 = vpack.c.b16 %v368, %v368
      %v401 = vpack.c.b16 %v369, %v369
      %v402 = vpack.c.b16 %v370, %v370
      %v403 = vpack.c.b16 %v371, %v371
      %v404 = vpack.c.b16 %v372, %v372
      %v405 = vpack.c.b16 %v373, %v373
      %v406 = vpack.c.b16 %v374, %v374
      %v407 = vpack.c.b16 %v375, %v375
      %v408 = vpack.c.b16 %v376, %v376
      %v409 = vpack.c.b16 %v377, %v377
      %v410 = vpack.c.b16 %v378, %v378
      %v411 = vpack.c.b16 %v379, %v379
      %v412 = vpack.c.b16 %v380, %v380
      %v413 = vpack.c.b16 %v381, %v381
      %v414 = vpack.c.b16 %v382, %v382
      %v415 = vpack.c.b16 %v383, %v383
      %v416 = vpack.c.b16 %v384, %v384
      %v417 = vpack.c.b16 %v385, %v385
      %v418 = vpack.c.b16 %v386, %v386
      %v419 = vpack.c.b16 %v387, %v387
      %v420 = vpack.c.b16 %v388, %v388
      %v421 = vpack.c.b16 %v389, %v389
      %v422 = vpack.c.b16 %v390, %v390
      %v423 = vpack.c.b16 %v391, %v391
      %v424 = vpack.c.b16 %v392, %v392
      %v425 = vpack.c.b16 %v393, %v393
      %v426 = vpack.c.b16 %v394, %v394
      %vm427 = vsmask.f32 256
      %vm428 = vsmask.f32 4368
      %vm429 = vmor %vm427, %vm428
      %v431 = vshrl.u32 %v395, 16
      %v433 = vrot.slane %v431, 7
      %v434 = vshll.u32 %v395, 16
      %v436 = vor.u32 %v433, %v434
      %v437 = vrot.slane %v433, 4
      %v439 = vshrl.u32 %v396, 16
      %v441 = vrot.slane %v439, 7
      %v442 = vshll.u32 %v396, 16
      %v444 = vor.u32 %v441, %v442
      %v445 = vsel %vm429, %v437, %v444
      %v446 = vrot.slane %v441, 4
      %v448 = vshrl.u32 %v397, 16
      %v450 = vrot.slane %v448, 7
      %v451 = vshll.u32 %v397, 16
      %v453 = vor.u32 %v450, %v451
      %v454 = vrot.slane %v450, 4
      %v456 = vshrl.u32 %v398, 16
      %v458 = vrot.slane %v456, 7
      %v459 = vshll.u32 %v398, 16
      %v461 = vor.u32 %v458, %v459
      %v462 = vsel %vm429, %v454, %v461
      %v463 = vrot.slane %v458, 4
      %v465 = vshrl.u32 %v399, 16
      %v467 = vrot.slane %v465, 7
      %v468 = vshll.u32 %v399, 16
      %v470 = vor.u32 %v467, %v468
      %v471 = vrot.slane %v467, 4
      %v473 = vshrl.u32 %v400, 16
      %v475 = vrot.slane %v473, 7
      %v476 = vshll.u32 %v400, 16
      %v478 = vor.u32 %v475, %v476
      %v479 = vsel %vm429, %v471, %v478
      %v480 = vrot.slane %v475, 4
      %v482 = vshrl.u32 %v401, 16
      %v484 = vrot.slane %v482, 7
      %v485 = vshll.u32 %v401, 16
      %v487 = vor.u32 %v484, %v485
      %v488 = vrot.slane %v484, 4
      %v490 = vshrl.u32 %v402, 16
      %v492 = vrot.slane %v490, 7
      %v493 = vshll.u32 %v402, 16
      %v495 = vor.u32 %v492, %v493
      %v496 = vsel %vm429, %v488, %v495
      %v497 = vrot.slane %v492, 4
      %v499 = vshrl.u32 %v403, 16
      %v501 = vrot.slane %v499, 7
      %v502 = vshll.u32 %v403, 16
      %v504 = vor.u32 %v501, %v502
      %v505 = vrot.slane %v501, 4
      %v507 = vshrl.u32 %v404, 16
      %v509 = vrot.slane %v507, 7
      %v510 = vshll.u32 %v404, 16
      %v512 = vor.u32 %v509, %v510
      %v513 = vsel %vm429, %v505, %v512
      %v514 = vrot.slane %v509, 4
      %v516 = vshrl.u32 %v405, 16
      %v518 = vrot.slane %v516, 7
      %v519 = vshll.u32 %v405, 16
      %v521 = vor.u32 %v518, %v519
      %v522 = vrot.slane %v518, 4
      %v524 = vshrl.u32 %v406, 16
      %v526 = vrot.slane %v524, 7
      %v527 = vshll.u32 %v406, 16
      %v529 = vor.u32 %v526, %v527
      %v530 = vsel %vm429, %v522, %v529
      %v531 = vrot.slane %v526, 4
      %v533 = vshrl.u32 %v407, 16
      %v535 = vrot.slane %v533, 7
      %v536 = vshll.u32 %v407, 16
      %v538 = vor.u32 %v535, %v536
      %v539 = vrot.slane %v535, 4
      %v541 = vshrl.u32 %v408, 16
      %v543 = vrot.slane %v541, 7
      %v544 = vshll.u32 %v408, 16
      %v546 = vor.u32 %v543, %v544
      %v547 = vsel %vm429, %v539, %v546
      %v548 = vrot.slane %v543, 4
      %v550 = vshrl.u32 %v409, 16
      %v552 = vrot.slane %v550, 7
      %v553 = vshll.u32 %v409, 16
      %v555 = vor.u32 %v552, %v553
      %v556 = vrot.slane %v552, 4
      %v558 = vshrl.u32 %v410, 16
      %v560 = vrot.slane %v558, 7
      %v561 = vshll.u32 %v410, 16
      %v563 = vor.u32 %v560, %v561
      %v564 = vsel %vm429, %v556, %v563
      %v565 = vrot.slane %v560, 4
      %v567 = vshrl.u32 %v411, 16
      %v569 = vrot.slane %v567, 7
      %v570 = vshll.u32 %v411, 16
      %v572 = vor.u32 %v569, %v570
      %v573 = vrot.slane %v569, 4
      %v575 = vshrl.u32 %v412, 16
      %v577 = vrot.slane %v575, 7
      %v578 = vshll.u32 %v412, 16
      %v580 = vor.u32 %v577, %v578
      %v581 = vsel %vm429, %v573, %v580
      %v582 = vrot.slane %v577, 4
      %v584 = vshrl.u32 %v413, 16
      %v586 = vrot.slane %v584, 7
      %v587 = vshll.u32 %v413, 16
      %v589 = vor.u32 %v586, %v587
      %v590 = vrot.slane %v586, 4
      %v592 = vshrl.u32 %v414, 16
      %v594 = vrot.slane %v592, 7
      %v595 = vshll.u32 %v414, 16
      %v597 = vor.u32 %v594, %v595
      %v598 = vsel %vm429, %v590, %v597
      %v599 = vrot.slane %v594, 4
      %v601 = vshrl.u32 %v415, 16
      %v603 = vrot.slane %v601, 7
      %v604 = vshll.u32 %v415, 16
      %v606 = vor.u32 %v603, %v604
      %v607 = vrot.slane %v603, 4
      %v609 = vshrl.u32 %v416, 16
      %v611 = vrot.slane %v609, 7
      %v612 = vshll.u32 %v416, 16
      %v614 = vor.u32 %v611, %v612
      %v615 = vsel %vm429, %v607, %v614
      %v616 = vrot.slane %v611, 4
      %v618 = vshrl.u32 %v417, 16
      %v620 = vrot.slane %v618, 7
      %v621 = vshll.u32 %v417, 16
      %v623 = vor.u32 %v620, %v621
      %v624 = vrot.slane %v620, 4
      %v626 = vshrl.u32 %v418, 16
      %v628 = vrot.slane %v626, 7
      %v629 = vshll.u32 %v418, 16
      %v631 = vor.u32 %v628, %v629
      %v632 = vsel %vm429, %v624, %v631
      %v633 = vrot.slane %v628, 4
      %v635 = vshrl.u32 %v419, 16
      %v637 = vrot.slane %v635, 7
      %v638 = vshll.u32 %v419, 16
      %v640 = vor.u32 %v637, %v638
      %v641 = vrot.slane %v637, 4
      %v643 = vshrl.u32 %v420, 16
      %v645 = vrot.slane %v643, 7
      %v646 = vshll.u32 %v420, 16
      %v648 = vor.u32 %v645, %v646
      %v649 = vsel %vm429, %v641, %v648
      %v650 = vrot.slane %v645, 4
      %v652 = vshrl.u32 %v421, 16
      %v654 = vrot.slane %v652, 7
      %v655 = vshll.u32 %v421, 16
      %v657 = vor.u32 %v654, %v655
      %v658 = vrot.slane %v654, 4
      %v660 = vshrl.u32 %v422, 16
      %v662 = vrot.slane %v660, 7
      %v663 = vshll.u32 %v422, 16
      %v665 = vor.u32 %v662, %v663
      %v666 = vsel %vm429, %v658, %v665
      %v667 = vrot.slane %v662, 4
      %v669 = vshrl.u32 %v423, 16
      %v671 = vrot.slane %v669, 7
      %v672 = vshll.u32 %v423, 16
      %v674 = vor.u32 %v671, %v672
      %v675 = vrot.slane %v671, 4
      %v677 = vshrl.u32 %v424, 16
      %v679 = vrot.slane %v677, 7
      %v680 = vshll.u32 %v424, 16
      %v682 = vor.u32 %v679, %v680
      %v683 = vsel %vm429, %v675, %v682
      %v684 = vrot.slane %v679, 4
      %v686 = vshrl.u32 %v425, 16
      %v688 = vrot.slane %v686, 7
      %v689 = vshll.u32 %v425, 16
      %v691 = vor.u32 %v688, %v689
      %v692 = vrot.slane %v688, 4
      %v694 = vshrl.u32 %v426, 16
      %v696 = vrot.slane %v694, 7
      %v697 = vshll.u32 %v426, 16
      %v699 = vor.u32 %v696, %v697
      %v700 = vsel %vm429, %v692, %v699
      %v701 = vrot.slane %v696, 4
      %s750 = scalar_lea.vmem [#allocation2], 12
      %vm751 = vcmask 125952
      %vm752 = vsmask.f32 7938
      %vm753 = vmand %vm751, %vm752
      %v754 = vld [vmem:[%s750] sm:$0xf]
      %v755 = vsel %vm753, %v436, %v754
      %756 = vst [vmem:[%s750] sm:$0xf] %v755
      %vm757 = vcmask 125952
      %758 = vst.msk [vmem:[%s750 + $0x4] sm:$0xf] %vm757, %v445
      %vm759 = vcmask 122880
      %vm760 = vmand %vm759, %vm427
      %v761 = vld [vmem:[%s750 + $0x8] sm:$0x1]
      %v762 = vsel %vm760, %v446, %v761
      %763 = vst [vmem:[%s750 + $0x8] sm:$0x1] %v762
      %v764 = vld [vmem:[%s750 + $0xc] sm:$0xf]
      %v765 = vsel %vm753, %v453, %v764
      %766 = vst [vmem:[%s750 + $0xc] sm:$0xf] %v765
      %767 = vst.msk [vmem:[%s750 + $0x10] sm:$0xf] %vm757, %v462
      %v768 = vld [vmem:[%s750 + $0x14] sm:$0x1]
      %v769 = vsel %vm760, %v463, %v768
      %770 = vst [vmem:[%s750 + $0x14] sm:$0x1] %v769
      %v771 = vld [vmem:[%s750 + $0x18] sm:$0xf]
      %v772 = vsel %vm753, %v470, %v771
      %773 = vst [vmem:[%s750 + $0x18] sm:$0xf] %v772
      %774 = vst.msk [vmem:[%s750 + $0x1c] sm:$0xf] %vm757, %v479
      %v775 = vld [vmem:[%s750 + $0x20] sm:$0x1]
      %v776 = vsel %vm760, %v480, %v775
      %777 = vst [vmem:[%s750 + $0x20] sm:$0x1] %v776
      %v778 = vld [vmem:[%s750 + $0x24] sm:$0xf]
      %v779 = vsel %vm753, %v487, %v778
      %780 = vst [vmem:[%s750 + $0x24] sm:$0xf] %v779
      %781 = vst.msk [vmem:[%s750 + $0x28] sm:$0xf] %vm757, %v496
      %v782 = vld [vmem:[%s750 + $0x2c] sm:$0x1]
      %v783 = vsel %vm760, %v497, %v782
      %784 = vst [vmem:[%s750 + $0x2c] sm:$0x1] %v783
      %v785 = vld [vmem:[%s750 + $0x30] sm:$0xf]
      %v786 = vsel %vm753, %v504, %v785
      %787 = vst [vmem:[%s750 + $0x30] sm:$0xf] %v786
      %788 = vst.msk [vmem:[%s750 + $0x34] sm:$0xf] %vm757, %v513
      %v789 = vld [vmem:[%s750 + $0x38] sm:$0x1]
      %v790 = vsel %vm760, %v514, %v789
      %791 = vst [vmem:[%s750 + $0x38] sm:$0x1] %v790
      %v792 = vld [vmem:[%s750 + $0x3c] sm:$0xf]
      %v793 = vsel %vm753, %v521, %v792
      %794 = vst [vmem:[%s750 + $0x3c] sm:$0xf] %v793
      %795 = vst.msk [vmem:[%s750 + $0x40] sm:$0xf] %vm757, %v530
      %v796 = vld [vmem:[%s750 + $0x44] sm:$0x1]
      %v797 = vsel %vm760, %v531, %v796
      %798 = vst [vmem:[%s750 + $0x44] sm:$0x1] %v797
      %v799 = vld [vmem:[%s750 + $0x48] sm:$0xf]
      %v800 = vsel %vm753, %v538, %v799
      %801 = vst [vmem:[%s750 + $0x48] sm:$0xf] %v800
      %802 = vst.msk [vmem:[%s750 + $0x4c] sm:$0xf] %vm757, %v547
      %v803 = vld [vmem:[%s750 + $0x50] sm:$0x1]
      %v804 = vsel %vm760, %v548, %v803
      %805 = vst [vmem:[%s750 + $0x50] sm:$0x1] %v804
      %v806 = vld [vmem:[%s750 + $0x54] sm:$0xf]
      %v807 = vsel %vm753, %v555, %v806
      %808 = vst [vmem:[%s750 + $0x54] sm:$0xf] %v807
      %809 = vst.msk [vmem:[%s750 + $0x58] sm:$0xf] %vm757, %v564
      %v810 = vld [vmem:[%s750 + $0x5c] sm:$0x1]
      %v811 = vsel %vm760, %v565, %v810
      %812 = vst [vmem:[%s750 + $0x5c] sm:$0x1] %v811
      %v813 = vld [vmem:[%s750 + $0x60] sm:$0xf]
      %v814 = vsel %vm753, %v572, %v813
      %815 = vst [vmem:[%s750 + $0x60] sm:$0xf] %v814
      %816 = vst.msk [vmem:[%s750 + $0x64] sm:$0xf] %vm757, %v581
      %v817 = vld [vmem:[%s750 + $0x68] sm:$0x1]
      %v818 = vsel %vm760, %v582, %v817
      %819 = vst [vmem:[%s750 + $0x68] sm:$0x1] %v818
      %v820 = vld [vmem:[%s750 + $0x6c] sm:$0xf]
      %v821 = vsel %vm753, %v589, %v820
      %822 = vst [vmem:[%s750 + $0x6c] sm:$0xf] %v821
      %823 = vst.msk [vmem:[%s750 + $0x70] sm:$0xf] %vm757, %v598
      %v824 = vld [vmem:[%s750 + $0x74] sm:$0x1]
      %v825 = vsel %vm760, %v599, %v824
      %826 = vst [vmem:[%s750 + $0x74] sm:$0x1] %v825
      %v827 = vld [vmem:[%s750 + $0x78] sm:$0xf]
      %v828 = vsel %vm753, %v606, %v827
      %829 = vst [vmem:[%s750 + $0x78] sm:$0xf] %v828
      %830 = vst.msk [vmem:[%s750 + $0x7c] sm:$0xf] %vm757, %v615
      %v831 = vld [vmem:[%s750 + $0x80] sm:$0x1]
      %v832 = vsel %vm760, %v616, %v831
      %833 = vst [vmem:[%s750 + $0x80] sm:$0x1] %v832
      %v834 = vld [vmem:[%s750 + $0x84] sm:$0xf]
      %v835 = vsel %vm753, %v623, %v834
      %836 = vst [vmem:[%s750 + $0x84] sm:$0xf] %v835
      %837 = vst.msk [vmem:[%s750 + $0x88] sm:$0xf] %vm757, %v632
      %v838 = vld [vmem:[%s750 + $0x8c] sm:$0x1]
      %v839 = vsel %vm760, %v633, %v838
      %840 = vst [vmem:[%s750 + $0x8c] sm:$0x1] %v839
      %v841 = vld [vmem:[%s750 + $0x90] sm:$0xf]
      %v842 = vsel %vm753, %v640, %v841
      %843 = vst [vmem:[%s750 + $0x90] sm:$0xf] %v842
      %844 = vst.msk [vmem:[%s750 + $0x94] sm:$0xf] %vm757, %v649
      %v845 = vld [vmem:[%s750 + $0x98] sm:$0x1]
      %v846 = vsel %vm760, %v650, %v845
      %847 = vst [vmem:[%s750 + $0x98] sm:$0x1] %v846
      %v848 = vld [vmem:[%s750 + $0x9c] sm:$0xf]
      %v849 = vsel %vm753, %v657, %v848
      %850 = vst [vmem:[%s750 + $0x9c] sm:$0xf] %v849
      %851 = vst.msk [vmem:[%s750 + $0xa0] sm:$0xf] %vm757, %v666
      %v852 = vld [vmem:[%s750 + $0xa4] sm:$0x1]
      %v853 = vsel %vm760, %v667, %v852
      %854 = vst [vmem:[%s750 + $0xa4] sm:$0x1] %v853
      %v855 = vld [vmem:[%s750 + $0xa8] sm:$0xf]
      %v856 = vsel %vm753, %v674, %v855
      %857 = vst [vmem:[%s750 + $0xa8] sm:$0xf] %v856
      %858 = vst.msk [vmem:[%s750 + $0xac] sm:$0xf] %vm757, %v683
      %v859 = vld [vmem:[%s750 + $0xb0] sm:$0x1]
      %v860 = vsel %vm760, %v684, %v859
      %861 = vst [vmem:[%s750 + $0xb0] sm:$0x1] %v860
      %v862 = vld [vmem:[%s750 + $0xb4] sm:$0xf]
      %v863 = vsel %vm753, %v691, %v862
      %864 = vst [vmem:[%s750 + $0xb4] sm:$0xf] %v863
      %865 = vst.msk [vmem:[%s750 + $0xb8] sm:$0xf] %vm757, %v700
      %v866 = vld [vmem:[%s750 + $0xbc] sm:$0x1]
      %v867 = vsel %vm760, %v701, %v866
      %868 = vst [vmem:[%s750 + $0xbc] sm:$0x1] %v867
      %869 = vst.msk [vmem:[#allocation2] sm:$0xf] %vm757, 0
      %870 = vst.msk [vmem:[#allocation2 + $0x4] sm:$0xf] %vm757, 0
      %vm871 = vcmask 122880
      %872 = vst.msk [vmem:[#allocation2 + $0x8] sm:$0x1] %vm871, 0
      %s873 = scalar_lea.vmem [#allocation2], 204
      %874 = vst.msk [vmem:[%s873] sm:$0xf] %vm757, 0
      %875 = vst.msk [vmem:[%s873 + $0x4] sm:$0xf] %vm757, 0
      %876 = vst.msk [vmem:[%s873 + $0x8] sm:$0x1] %vm871, 0
      %v877 = vld [vmem:[#allocation2] sm:$0x1]
      %v878 = vsel %vm760, 0, %v877
      %879 = vst [vmem:[#allocation2] sm:$0x1] %v878
      %v880 = vld [vmem:[#allocation2 + $0xc] sm:$0x1]
      %v881 = vsel %vm760, 0, %v880
      %882 = vst [vmem:[#allocation2 + $0xc] sm:$0x1] %v881
      %v883 = vld [vmem:[#allocation2 + $0x18] sm:$0x1]
      %v884 = vsel %vm760, 0, %v883
      %885 = vst [vmem:[#allocation2 + $0x18] sm:$0x1] %v884
      %v886 = vld [vmem:[#allocation2 + $0x24] sm:$0x1]
      %v887 = vsel %vm760, 0, %v886
      %888 = vst [vmem:[#allocation2 + $0x24] sm:$0x1] %v887
      %v889 = vld [vmem:[#allocation2 + $0x30] sm:$0x1]
      %v890 = vsel %vm760, 0, %v889
      %891 = vst [vmem:[#allocation2 + $0x30] sm:$0x1] %v890
      %v892 = vld [vmem:[#allocation2 + $0x3c] sm:$0x1]
      %v893 = vsel %vm760, 0, %v892
      %894 = vst [vmem:[#allocation2 + $0x3c] sm:$0x1] %v893
      %v895 = vld [vmem:[#allocation2 + $0x48] sm:$0x1]
      %v896 = vsel %vm760, 0, %v895
      %897 = vst [vmem:[#allocation2 + $0x48] sm:$0x1] %v896
      %v898 = vld [vmem:[#allocation2 + $0x54] sm:$0x1]
      %v899 = vsel %vm760, 0, %v898
      %900 = vst [vmem:[#allocation2 + $0x54] sm:$0x1] %v899
      %v901 = vld [vmem:[#allocation2 + $0x60] sm:$0x1]
      %v902 = vsel %vm760, 0, %v901
      %903 = vst [vmem:[#allocation2 + $0x60] sm:$0x1] %v902
      %v904 = vld [vmem:[#allocation2 + $0x6c] sm:$0x1]
      %v905 = vsel %vm760, 0, %v904
      %906 = vst [vmem:[#allocation2 + $0x6c] sm:$0x1] %v905
      %v907 = vld [vmem:[#allocation2 + $0x78] sm:$0x1]
      %v908 = vsel %vm760, 0, %v907
      %909 = vst [vmem:[#allocation2 + $0x78] sm:$0x1] %v908
      %v910 = vld [vmem:[#allocation2 + $0x84] sm:$0x1]
      %v911 = vsel %vm760, 0, %v910
      %912 = vst [vmem:[#allocation2 + $0x84] sm:$0x1] %v911
      %v913 = vld [vmem:[#allocation2 + $0x90] sm:$0x1]
      %v914 = vsel %vm760, 0, %v913
      %915 = vst [vmem:[#allocation2 + $0x90] sm:$0x1] %v914
      %v916 = vld [vmem:[#allocation2 + $0x9c] sm:$0x1]
      %v917 = vsel %vm760, 0, %v916
      %918 = vst [vmem:[#allocation2 + $0x9c] sm:$0x1] %v917
      %v919 = vld [vmem:[#allocation2 + $0xa8] sm:$0x1]
      %v920 = vsel %vm760, 0, %v919
      %921 = vst [vmem:[#allocation2 + $0xa8] sm:$0x1] %v920
      %v922 = vld [vmem:[#allocation2 + $0xb4] sm:$0x1]
      %v923 = vsel %vm760, 0, %v922
      %924 = vst [vmem:[#allocation2 + $0xb4] sm:$0x1] %v923
      %v925 = vld [vmem:[#allocation2 + $0xc0] sm:$0x1]
      %v926 = vsel %vm760, 0, %v925
      %927 = vst [vmem:[#allocation2 + $0xc0] sm:$0x1] %v926
      %v928 = vld [vmem:[#allocation2 + $0xcc] sm:$0x1]
      %v929 = vsel %vm760, 0, %v928
      %930 = vst [vmem:[#allocation2 + $0xcc] sm:$0x1] %v929
      %vm931 = vmand %vm759, %vm752
      %v932 = vld [vmem:[#allocation2 + $0x8] sm:$0x1]
      %v933 = vsel %vm931, 0, %v932
      %934 = vst [vmem:[#allocation2 + $0x8] sm:$0x1] %v933
      %v935 = vld [vmem:[#allocation2 + $0x14] sm:$0x1]
      %v936 = vsel %vm931, 0, %v935
      %937 = vst [vmem:[#allocation2 + $0x14] sm:$0x1] %v936
      %v938 = vld [vmem:[#allocation2 + $0x20] sm:$0x1]
      %v939 = vsel %vm931, 0, %v938
      %940 = vst [vmem:[#allocation2 + $0x20] sm:$0x1] %v939
      %v941 = vld [vmem:[#allocation2 + $0x2c] sm:$0x1]
      %v942 = vsel %vm931, 0, %v941
      %943 = vst [vmem:[#allocation2 + $0x2c] sm:$0x1] %v942
      %v944 = vld [vmem:[#allocation2 + $0x38] sm:$0x1]
      %v945 = vsel %vm931, 0, %v944
      %946 = vst [vmem:[#allocation2 + $0x38] sm:$0x1] %v945
      %v947 = vld [vmem:[#allocation2 + $0x44] sm:$0x1]
      %v948 = vsel %vm931, 0, %v947
      %949 = vst [vmem:[#allocation2 + $0x44] sm:$0x1] %v948
      %v950 = vld [vmem:[#allocation2 + $0x50] sm:$0x1]
      %v951 = vsel %vm931, 0, %v950
      %952 = vst [vmem:[#allocation2 + $0x50] sm:$0x1] %v951
      %v953 = vld [vmem:[#allocation2 + $0x5c] sm:$0x1]
      %v954 = vsel %vm931, 0, %v953
      %955 = vst [vmem:[#allocation2 + $0x5c] sm:$0x1] %v954
      %v956 = vld [vmem:[#allocation2 + $0x68] sm:$0x1]
      %v957 = vsel %vm931, 0, %v956
      %958 = vst [vmem:[#allocation2 + $0x68] sm:$0x1] %v957
      %v959 = vld [vmem:[#allocation2 + $0x74] sm:$0x1]
      %v960 = vsel %vm931, 0, %v959
      %961 = vst [vmem:[#allocation2 + $0x74] sm:$0x1] %v960
      %v962 = vld [vmem:[#allocation2 + $0x80] sm:$0x1]
      %v963 = vsel %vm931, 0, %v962
      %964 = vst [vmem:[#allocation2 + $0x80] sm:$0x1] %v963
      %v965 = vld [vmem:[#allocation2 + $0x8c] sm:$0x1]
      %v966 = vsel %vm931, 0, %v965
      %967 = vst [vmem:[#allocation2 + $0x8c] sm:$0x1] %v966
      %v968 = vld [vmem:[#allocation2 + $0x98] sm:$0x1]
      %v969 = vsel %vm931, 0, %v968
      %970 = vst [vmem:[#allocation2 + $0x98] sm:$0x1] %v969
      %v971 = vld [vmem:[#allocation2 + $0xa4] sm:$0x1]
      %v972 = vsel %vm931, 0, %v971
      %973 = vst [vmem:[#allocation2 + $0xa4] sm:$0x1] %v972
      %v974 = vld [vmem:[#allocation2 + $0xb0] sm:$0x1]
      %v975 = vsel %vm931, 0, %v974
      %976 = vst [vmem:[#allocation2 + $0xb0] sm:$0x1] %v975
      %v977 = vld [vmem:[#allocation2 + $0xbc] sm:$0x1]
      %v978 = vsel %vm931, 0, %v977
      %979 = vst [vmem:[#allocation2 + $0xbc] sm:$0x1] %v978
      %v980 = vld [vmem:[#allocation2 + $0xc8] sm:$0x1]
      %v981 = vsel %vm931, 0, %v980
      %982 = vst [vmem:[#allocation2 + $0xc8] sm:$0x1] %v981
      %v983 = vld [vmem:[#allocation2 + $0xd4] sm:$0x1]
      %v984 = vsel %vm931, 0, %v983
      %985 = vst [vmem:[#allocation2 + $0xd4] sm:$0x1] %v984
      %v986 = vld [vmem:[#allocation2] sm:$0xf]
      %v987 = vld [vmem:[#allocation2 + $0x4] sm:$0xf]
      %v988 = vld [vmem:[#allocation2 + $0xc] sm:$0xf]
      %v989 = vld [vmem:[#allocation2 + $0x10] sm:$0xf]
      %v990 = vld [vmem:[#allocation2 + $0x18] sm:$0xf]
      %v991 = vld [vmem:[#allocation2 + $0x1c] sm:$0xf]
      %v992 = vld [vmem:[#allocation2 + $0x24] sm:$0xf]
      %v993 = vld [vmem:[#allocation2 + $0x28] sm:$0xf]
      %v994 = vld [vmem:[#allocation2 + $0x30] sm:$0xf]
      %v995 = vld [vmem:[#allocation2 + $0x34] sm:$0xf]
      %v996 = vld [vmem:[#allocation2 + $0x3c] sm:$0xf]
      %v997 = vld [vmem:[#allocation2 + $0x40] sm:$0xf]
      %v998 = vld [vmem:[#allocation2 + $0x48] sm:$0xf]
      %v999 = vld [vmem:[#allocation2 + $0x4c] sm:$0xf]
      %v1000 = vld [vmem:[#allocation2 + $0x54] sm:$0xf]
      %v1001 = vld [vmem:[#allocation2 + $0x58] sm:$0xf]
      %v1002 = vld [vmem:[#allocation2 + $0x60] sm:$0xf]
      %v1003 = vld [vmem:[#allocation2 + $0x64] sm:$0xf]
      %v1004 = vld [vmem:[#allocation2 + $0x6c] sm:$0xf]
      %v1005 = vld [vmem:[#allocation2 + $0x70] sm:$0xf]
      %v1006 = vld [vmem:[#allocation2 + $0x78] sm:$0xf]
      %v1007 = vld [vmem:[#allocation2 + $0x7c] sm:$0xf]
      %v1008 = vld [vmem:[#allocation2 + $0x84] sm:$0xf]
      %v1009 = vld [vmem:[#allocation2 + $0x88] sm:$0xf]
      %v1010 = vld [vmem:[#allocation2 + $0x90] sm:$0xf]
      %v1011 = vld [vmem:[#allocation2 + $0x94] sm:$0xf]
      %v1012 = vld [vmem:[#allocation2 + $0x9c] sm:$0xf]
      %v1013 = vld [vmem:[#allocation2 + $0xa0] sm:$0xf]
      %v1014 = vld [vmem:[#allocation2 + $0xa8] sm:$0xf]
      %v1015 = vld [vmem:[#allocation2 + $0xac] sm:$0xf]
      %v1016 = vld [vmem:[#allocation2 + $0xb4] sm:$0xf]
      %v1017 = vld [vmem:[#allocation2 + $0xb8] sm:$0xf]
      %v1018 = vld [vmem:[#allocation2 + $0xc0] sm:$0xf]
      %v1019 = vld [vmem:[#allocation2 + $0xc4] sm:$0xf]
      %v1020 = vld [vmem:[#allocation2 + $0xcc] sm:$0xf]
      %v1021 = vld [vmem:[#allocation2 + $0xd0] sm:$0xf]
      %v1058 = vunpack.c.l.b16 %v986
      %v1059 = vunpack.c.l.b16 %v987
      %v1060 = vunpack.c.l.b16 %v988
      %v1061 = vunpack.c.l.b16 %v989
      %v1062 = vunpack.c.l.b16 %v990
      %v1063 = vunpack.c.l.b16 %v991
      %v1064 = vunpack.c.l.b16 %v992
      %v1065 = vunpack.c.l.b16 %v993
      %v1066 = vunpack.c.l.b16 %v994
      %v1067 = vunpack.c.l.b16 %v995
      %v1068 = vunpack.c.l.b16 %v996
      %v1069 = vunpack.c.l.b16 %v997
      %v1070 = vunpack.c.l.b16 %v998
      %v1071 = vunpack.c.l.b16 %v999
      %v1072 = vunpack.c.l.b16 %v1000
      %v1073 = vunpack.c.l.b16 %v1001
      %v1074 = vunpack.c.l.b16 %v1002
      %v1075 = vunpack.c.l.b16 %v1003
      %v1076 = vunpack.c.l.b16 %v1004
      %v1077 = vunpack.c.l.b16 %v1005
      %v1078 = vunpack.c.l.b16 %v1006
      %v1079 = vunpack.c.l.b16 %v1007
      %v1080 = vunpack.c.l.b16 %v1008
      %v1081 = vunpack.c.l.b16 %v1009
      %v1082 = vunpack.c.l.b16 %v1010
      %v1083 = vunpack.c.l.b16 %v1011
      %v1084 = vunpack.c.l.b16 %v1012
      %v1085 = vunpack.c.l.b16 %v1013
      %v1086 = vunpack.c.l.b16 %v1014
      %v1087 = vunpack.c.l.b16 %v1015
      %v1088 = vunpack.c.l.b16 %v1016
      %v1089 = vunpack.c.l.b16 %v1017
      %v1090 = vunpack.c.l.b16 %v1018
      %v1091 = vunpack.c.l.b16 %v1019
      %v1092 = vunpack.c.l.b16 %v1020
      %v1093 = vunpack.c.l.b16 %v1021
      %v1094 = vpack.c.b16 %v1059, %v1058
      %v1095 = vpack.c.b16 %v1061, %v1060
      %v1096 = vpack.c.b16 %v1063, %v1062
      %v1097 = vpack.c.b16 %v1065, %v1064
      %v1098 = vpack.c.b16 %v1067, %v1066
      %v1099 = vpack.c.b16 %v1069, %v1068
      %v1100 = vpack.c.b16 %v1071, %v1070
      %v1101 = vpack.c.b16 %v1073, %v1072
      %v1102 = vpack.c.b16 %v1075, %v1074
      %v1103 = vpack.c.b16 %v1077, %v1076
      %v1104 = vpack.c.b16 %v1079, %v1078
      %v1105 = vpack.c.b16 %v1081, %v1080
      %v1106 = vpack.c.b16 %v1083, %v1082
      %v1107 = vpack.c.b16 %v1085, %v1084
      %v1108 = vpack.c.b16 %v1087, %v1086
      %v1109 = vpack.c.b16 %v1089, %v1088
      %v1110 = vpack.c.b16 %v1091, %v1090
      %v1111 = vpack.c.b16 %v1093, %v1092
      %vm1130 = vcmask 130048
      %1131 = vst.msk [vmem:[#allocation3] sm:$0xff] %vm1130, %v1094
      %1132 = vst.msk [vmem:[#allocation3 + $0x8] sm:$0xff] %vm1130, %v1095
      %1133 = vst.msk [vmem:[#allocation3 + $0x10] sm:$0xff] %vm1130, %v1096
      %1134 = vst.msk [vmem:[#allocation3 + $0x18] sm:$0xff] %vm1130, %v1097
      %1135 = vst.msk [vmem:[#allocation3 + $0x20] sm:$0xff] %vm1130, %v1098
      %1136 = vst.msk [vmem:[#allocation3 + $0x28] sm:$0xff] %vm1130, %v1099
      %1137 = vst.msk [vmem:[#allocation3 + $0x30] sm:$0xff] %vm1130, %v1100
      %1138 = vst.msk [vmem:[#allocation3 + $0x38] sm:$0xff] %vm1130, %v1101
      %1139 = vst.msk [vmem:[#allocation3 + $0x40] sm:$0xff] %vm1130, %v1102
      %1140 = vst.msk [vmem:[#allocation3 + $0x48] sm:$0xff] %vm1130, %v1103
      %1141 = vst.msk [vmem:[#allocation3 + $0x50] sm:$0xff] %vm1130, %v1104
      %1142 = vst.msk [vmem:[#allocation3 + $0x58] sm:$0xff] %vm1130, %v1105
      %1143 = vst.msk [vmem:[#allocation3 + $0x60] sm:$0xff] %vm1130, %v1106
      %1144 = vst.msk [vmem:[#allocation3 + $0x68] sm:$0xff] %vm1130, %v1107
      %1145 = vst.msk [vmem:[#allocation3 + $0x70] sm:$0xff] %vm1130, %v1108
      %1146 = vst.msk [vmem:[#allocation3 + $0x78] sm:$0xff] %vm1130, %v1109
      %1147 = vst.msk [vmem:[#allocation3 + $0x80] sm:$0xff] %vm1130, %v1110
      %1148 = vst.msk [vmem:[#allocation3 + $0x88] sm:$0xff] %vm1130, %v1111
      %v1149 = vld [vmem:[#allocation2] sm:$0xf]
      %v1150 = vld [vmem:[#allocation2 + $0x4] sm:$0xf]
      %v1151 = vld [vmem:[#allocation2 + $0x8] sm:$0x1]
      %v1152 = vld [vmem:[#allocation2 + $0xc] sm:$0xf]
      %v1153 = vld [vmem:[#allocation2 + $0x10] sm:$0xf]
      %v1154 = vld [vmem:[#allocation2 + $0x14] sm:$0x1]
      %v1155 = vld [vmem:[#allocation2 + $0x18] sm:$0xf]
      %v1156 = vld [vmem:[#allocation2 + $0x1c] sm:$0xf]
      %v1157 = vld [vmem:[#allocation2 + $0x20] sm:$0x1]
      %v1158 = vld [vmem:[#allocation2 + $0x24] sm:$0xf]
      %v1159 = vld [vmem:[#allocation2 + $0x28] sm:$0xf]
      %v1160 = vld [vmem:[#allocation2 + $0x2c] sm:$0x1]
      %v1161 = vld [vmem:[#allocation2 + $0x30] sm:$0xf]
      %v1162 = vld [vmem:[#allocation2 + $0x34] sm:$0xf]
      %v1163 = vld [vmem:[#allocation2 + $0x38] sm:$0x1]
      %v1164 = vld [vmem:[#allocation2 + $0x3c] sm:$0xf]
      %v1165 = vld [vmem:[#allocation2 + $0x40] sm:$0xf]
      %v1166 = vld [vmem:[#allocation2 + $0x44] sm:$0x1]
      %v1167 = vld [vmem:[#allocation2 + $0x48] sm:$0xf]
      %v1168 = vld [vmem:[#allocation2 + $0x4c] sm:$0xf]
      %v1169 = vld [vmem:[#allocation2 + $0x50] sm:$0x1]
      %v1170 = vld [vmem:[#allocation2 + $0x54] sm:$0xf]
      %v1171 = vld [vmem:[#allocation2 + $0x58] sm:$0xf]
      %v1172 = vld [vmem:[#allocation2 + $0x5c] sm:$0x1]
      %v1173 = vld [vmem:[#allocation2 + $0x60] sm:$0xf]
      %v1174 = vld [vmem:[#allocation2 + $0x64] sm:$0xf]
      %v1175 = vld [vmem:[#allocation2 + $0x68] sm:$0x1]
      %v1176 = vld [vmem:[#allocation2 + $0x6c] sm:$0xf]
      %v1177 = vld [vmem:[#allocation2 + $0x70] sm:$0xf]
      %v1178 = vld [vmem:[#allocation2 + $0x74] sm:$0x1]
      %v1179 = vld [vmem:[#allocation2 + $0x78] sm:$0xf]
      %v1180 = vld [vmem:[#allocation2 + $0x7c] sm:$0xf]
      %v1181 = vld [vmem:[#allocation2 + $0x80] sm:$0x1]
      %v1182 = vld [vmem:[#allocation2 + $0x84] sm:$0xf]
      %v1183 = vld [vmem:[#allocation2 + $0x88] sm:$0xf]
      %v1184 = vld [vmem:[#allocation2 + $0x8c] sm:$0x1]
      %v1185 = vld [vmem:[#allocation2 + $0x90] sm:$0xf]
      %v1186 = vld [vmem:[#allocation2 + $0x94] sm:$0xf]
      %v1187 = vld [vmem:[#allocation2 + $0x98] sm:$0x1]
      %v1188 = vld [vmem:[#allocation2 + $0x9c] sm:$0xf]
      %v1189 = vld [vmem:[#allocation2 + $0xa0] sm:$0xf]
      %v1190 = vld [vmem:[#allocation2 + $0xa4] sm:$0x1]
      %v1191 = vld [vmem:[#allocation2 + $0xa8] sm:$0xf]
      %v1192 = vld [vmem:[#allocation2 + $0xac] sm:$0xf]
      %v1193 = vld [vmem:[#allocation2 + $0xb0] sm:$0x1]
      %v1194 = vld [vmem:[#allocation2 + $0xb4] sm:$0xf]
      %v1195 = vld [vmem:[#allocation2 + $0xb8] sm:$0xf]
      %v1196 = vld [vmem:[#allocation2 + $0xbc] sm:$0x1]
      %v1197 = vld [vmem:[#allocation2 + $0xc0] sm:$0xf]
      %v1198 = vld [vmem:[#allocation2 + $0xc4] sm:$0xf]
      %v1199 = vld [vmem:[#allocation2 + $0xc8] sm:$0x1]
      %v1200 = vld [vmem:[#allocation2 + $0xcc] sm:$0xf]
      %v1201 = vld [vmem:[#allocation2 + $0xd0] sm:$0xf]
      %v1202 = vld [vmem:[#allocation2 + $0xd4] sm:$0x1]
      %vm1203 = vsmask.f32 3328
      %vm1204 = vsmask.f32 7440
      %vm1205 = vmor %vm1203, %vm1204
      %v1207 = vshrl.u32 %v1149, 16
      %v1209 = vrot.slane %v1207, 4
      %v1210 = vshll.u32 %v1149, 16
      %v1212 = vrot.slane %v1210, 5
      %v1213 = vor.u32 %v1209, %v1212
      %v1214 = vrot.slane %v1213, 4
      %v1216 = vshll.u32 %v1150, 16
      %v1218 = vrot.slane %v1216, 5
      %v1219 = vsel %vm1205, %v1214, %v1218
      %v1220 = vshrl.u32 %v1150, 16
      %v1222 = vrot.slane %v1220, 4
      %v1223 = vor.u32 %v1222, %v1218
      %v1224 = vrot.slane %v1223, 4
      %v1226 = vshll.u32 %v1151, 16
      %v1228 = vrot.slane %v1226, 5
      %v1229 = vsel %vm1205, %v1224, %v1228
      %v1231 = vshrl.u32 %v1152, 16
      %v1233 = vrot.slane %v1231, 4
      %v1234 = vshll.u32 %v1152, 16
      %v1236 = vrot.slane %v1234, 5
      %v1237 = vor.u32 %v1233, %v1236
      %v1238 = vrot.slane %v1237, 4
      %v1240 = vshll.u32 %v1153, 16
      %v1242 = vrot.slane %v1240, 5
      %v1243 = vsel %vm1205, %v1238, %v1242
      %v1244 = vshrl.u32 %v1153, 16
      %v1246 = vrot.slane %v1244, 4
      %v1247 = vor.u32 %v1246, %v1242
      %v1248 = vrot.slane %v1247, 4
      %v1250 = vshll.u32 %v1154, 16
      %v1252 = vrot.slane %v1250, 5
      %v1253 = vsel %vm1205, %v1248, %v1252
      %v1255 = vshrl.u32 %v1155, 16
      %v1257 = vrot.slane %v1255, 4
      %v1258 = vshll.u32 %v1155, 16
      %v1260 = vrot.slane %v1258, 5
      %v1261 = vor.u32 %v1257, %v1260
      %v1262 = vrot.slane %v1261, 4
      %v1264 = vshll.u32 %v1156, 16
      %v1266 = vrot.slane %v1264, 5
      %v1267 = vsel %vm1205, %v1262, %v1266
      %v1268 = vshrl.u32 %v1156, 16
      %v1270 = vrot.slane %v1268, 4
      %v1271 = vor.u32 %v1270, %v1266
      %v1272 = vrot.slane %v1271, 4
      %v1274 = vshll.u32 %v1157, 16
      %v1276 = vrot.slane %v1274, 5
      %v1277 = vsel %vm1205, %v1272, %v1276
      %v1279 = vshrl.u32 %v1158, 16
      %v1281 = vrot.slane %v1279, 4
      %v1282 = vshll.u32 %v1158, 16
      %v1284 = vrot.slane %v1282, 5
      %v1285 = vor.u32 %v1281, %v1284
      %v1286 = vrot.slane %v1285, 4
      %v1288 = vshll.u32 %v1159, 16
      %v1290 = vrot.slane %v1288, 5
      %v1291 = vsel %vm1205, %v1286, %v1290
      %v1292 = vshrl.u32 %v1159, 16
      %v1294 = vrot.slane %v1292, 4
      %v1295 = vor.u32 %v1294, %v1290
      %v1296 = vrot.slane %v1295, 4
      %v1298 = vshll.u32 %v1160, 16
      %v1300 = vrot.slane %v1298, 5
      %v1301 = vsel %vm1205, %v1296, %v1300
      %v1303 = vshrl.u32 %v1161, 16
      %v1305 = vrot.slane %v1303, 4
      %v1306 = vshll.u32 %v1161, 16
      %v1308 = vrot.slane %v1306, 5
      %v1309 = vor.u32 %v1305, %v1308
      %v1310 = vrot.slane %v1309, 4
      %v1312 = vshll.u32 %v1162, 16
      %v1314 = vrot.slane %v1312, 5
      %v1315 = vsel %vm1205, %v1310, %v1314
      %v1316 = vshrl.u32 %v1162, 16
      %v1318 = vrot.slane %v1316, 4
      %v1319 = vor.u32 %v1318, %v1314
      %v1320 = vrot.slane %v1319, 4
      %v1322 = vshll.u32 %v1163, 16
      %v1324 = vrot.slane %v1322, 5
      %v1325 = vsel %vm1205, %v1320, %v1324
      %v1327 = vshrl.u32 %v1164, 16
      %v1329 = vrot.slane %v1327, 4
      %v1330 = vshll.u32 %v1164, 16
      %v1332 = vrot.slane %v1330, 5
      %v1333 = vor.u32 %v1329, %v1332
      %v1334 = vrot.slane %v1333, 4
      %v1336 = vshll.u32 %v1165, 16
      %v1338 = vrot.slane %v1336, 5
      %v1339 = vsel %vm1205, %v1334, %v1338
      %v1340 = vshrl.u32 %v1165, 16
      %v1342 = vrot.slane %v1340, 4
      %v1343 = vor.u32 %v1342, %v1338
      %v1344 = vrot.slane %v1343, 4
      %v1346 = vshll.u32 %v1166, 16
      %v1348 = vrot.slane %v1346, 5
      %v1349 = vsel %vm1205, %v1344, %v1348
      %v1351 = vshrl.u32 %v1167, 16
      %v1353 = vrot.slane %v1351, 4
      %v1354 = vshll.u32 %v1167, 16
      %v1356 = vrot.slane %v1354, 5
      %v1357 = vor.u32 %v1353, %v1356
      %v1358 = vrot.slane %v1357, 4
      %v1360 = vshll.u32 %v1168, 16
      %v1362 = vrot.slane %v1360, 5
      %v1363 = vsel %vm1205, %v1358, %v1362
      %v1364 = vshrl.u32 %v1168, 16
      %v1366 = vrot.slane %v1364, 4
      %v1367 = vor.u32 %v1366, %v1362
      %v1368 = vrot.slane %v1367, 4
      %v1370 = vshll.u32 %v1169, 16
      %v1372 = vrot.slane %v1370, 5
      %v1373 = vsel %vm1205, %v1368, %v1372
      %v1375 = vshrl.u32 %v1170, 16
      %v1377 = vrot.slane %v1375, 4
      %v1378 = vshll.u32 %v1170, 16
      %v1380 = vrot.slane %v1378, 5
      %v1381 = vor.u32 %v1377, %v1380
      %v1382 = vrot.slane %v1381, 4
      %v1384 = vshll.u32 %v1171, 16
      %v1386 = vrot.slane %v1384, 5
      %v1387 = vsel %vm1205, %v1382, %v1386
      %v1388 = vshrl.u32 %v1171, 16
      %v1390 = vrot.slane %v1388, 4
      %v1391 = vor.u32 %v1390, %v1386
      %v1392 = vrot.slane %v1391, 4
      %v1394 = vshll.u32 %v1172, 16
      %v1396 = vrot.slane %v1394, 5
      %v1397 = vsel %vm1205, %v1392, %v1396
      %v1399 = vshrl.u32 %v1173, 16
      %v1401 = vrot.slane %v1399, 4
      %v1402 = vshll.u32 %v1173, 16
      %v1404 = vrot.slane %v1402, 5
      %v1405 = vor.u32 %v1401, %v1404
      %v1406 = vrot.slane %v1405, 4
      %v1408 = vshll.u32 %v1174, 16
      %v1410 = vrot.slane %v1408, 5
      %v1411 = vsel %vm1205, %v1406, %v1410
      %v1412 = vshrl.u32 %v1174, 16
      %v1414 = vrot.slane %v1412, 4
      %v1415 = vor.u32 %v1414, %v1410
      %v1416 = vrot.slane %v1415, 4
      %v1418 = vshll.u32 %v1175, 16
      %v1420 = vrot.slane %v1418, 5
      %v1421 = vsel %vm1205, %v1416, %v1420
      %v1423 = vshrl.u32 %v1176, 16
      %v1425 = vrot.slane %v1423, 4
      %v1426 = vshll.u32 %v1176, 16
      %v1428 = vrot.slane %v1426, 5
      %v1429 = vor.u32 %v1425, %v1428
      %v1430 = vrot.slane %v1429, 4
      %v1432 = vshll.u32 %v1177, 16
      %v1434 = vrot.slane %v1432, 5
      %v1435 = vsel %vm1205, %v1430, %v1434
      %v1436 = vshrl.u32 %v1177, 16
      %v1438 = vrot.slane %v1436, 4
      %v1439 = vor.u32 %v1438, %v1434
      %v1440 = vrot.slane %v1439, 4
      %v1442 = vshll.u32 %v1178, 16
      %v1444 = vrot.slane %v1442, 5
      %v1445 = vsel %vm1205, %v1440, %v1444
      %v1447 = vshrl.u32 %v1179, 16
      %v1449 = vrot.slane %v1447, 4
      %v1450 = vshll.u32 %v1179, 16
      %v1452 = vrot.slane %v1450, 5
      %v1453 = vor.u32 %v1449, %v1452
      %v1454 = vrot.slane %v1453, 4
      %v1456 = vshll.u32 %v1180, 16
      %v1458 = vrot.slane %v1456, 5
      %v1459 = vsel %vm1205, %v1454, %v1458
      %v1460 = vshrl.u32 %v1180, 16
      %v1462 = vrot.slane %v1460, 4
      %v1463 = vor.u32 %v1462, %v1458
      %v1464 = vrot.slane %v1463, 4
      %v1466 = vshll.u32 %v1181, 16
      %v1468 = vrot.slane %v1466, 5
      %v1469 = vsel %vm1205, %v1464, %v1468
      %v1471 = vshrl.u32 %v1182, 16
      %v1473 = vrot.slane %v1471, 4
      %v1474 = vshll.u32 %v1182, 16
      %v1476 = vrot.slane %v1474, 5
      %v1477 = vor.u32 %v1473, %v1476
      %v1478 = vrot.slane %v1477, 4
      %v1480 = vshll.u32 %v1183, 16
      %v1482 = vrot.slane %v1480, 5
      %v1483 = vsel %vm1205, %v1478, %v1482
      %v1484 = vshrl.u32 %v1183, 16
      %v1486 = vrot.slane %v1484, 4
      %v1487 = vor.u32 %v1486, %v1482
      %v1488 = vrot.slane %v1487, 4
      %v1490 = vshll.u32 %v1184, 16
      %v1492 = vrot.slane %v1490, 5
      %v1493 = vsel %vm1205, %v1488, %v1492
      %v1495 = vshrl.u32 %v1185, 16
      %v1497 = vrot.slane %v1495, 4
      %v1498 = vshll.u32 %v1185, 16
      %v1500 = vrot.slane %v1498, 5
      %v1501 = vor.u32 %v1497, %v1500
      %v1502 = vrot.slane %v1501, 4
      %v1504 = vshll.u32 %v1186, 16
      %v1506 = vrot.slane %v1504, 5
      %v1507 = vsel %vm1205, %v1502, %v1506
      %v1508 = vshrl.u32 %v1186, 16
      %v1510 = vrot.slane %v1508, 4
      %v1511 = vor.u32 %v1510, %v1506
      %v1512 = vrot.slane %v1511, 4
      %v1514 = vshll.u32 %v1187, 16
      %v1516 = vrot.slane %v1514, 5
      %v1517 = vsel %vm1205, %v1512, %v1516
      %v1519 = vshrl.u32 %v1188, 16
      %v1521 = vrot.slane %v1519, 4
      %v1522 = vshll.u32 %v1188, 16
      %v1524 = vrot.slane %v1522, 5
      %v1525 = vor.u32 %v1521, %v1524
      %v1526 = vrot.slane %v1525, 4
      %v1528 = vshll.u32 %v1189, 16
      %v1530 = vrot.slane %v1528, 5
      %v1531 = vsel %vm1205, %v1526, %v1530
      %v1532 = vshrl.u32 %v1189, 16
      %v1534 = vrot.slane %v1532, 4
      %v1535 = vor.u32 %v1534, %v1530
      %v1536 = vrot.slane %v1535, 4
      %v1538 = vshll.u32 %v1190, 16
      %v1540 = vrot.slane %v1538, 5
      %v1541 = vsel %vm1205, %v1536, %v1540
      %v1543 = vshrl.u32 %v1191, 16
      %v1545 = vrot.slane %v1543, 4
      %v1546 = vshll.u32 %v1191, 16
      %v1548 = vrot.slane %v1546, 5
      %v1549 = vor.u32 %v1545, %v1548
      %v1550 = vrot.slane %v1549, 4
      %v1552 = vshll.u32 %v1192, 16
      %v1554 = vrot.slane %v1552, 5
      %v1555 = vsel %vm1205, %v1550, %v1554
      %v1556 = vshrl.u32 %v1192, 16
      %v1558 = vrot.slane %v1556, 4
      %v1559 = vor.u32 %v1558, %v1554
      %v1560 = vrot.slane %v1559, 4
      %v1562 = vshll.u32 %v1193, 16
      %v1564 = vrot.slane %v1562, 5
      %v1565 = vsel %vm1205, %v1560, %v1564
      %v1567 = vshrl.u32 %v1194, 16
      %v1569 = vrot.slane %v1567, 4
      %v1570 = vshll.u32 %v1194, 16
      %v1572 = vrot.slane %v1570, 5
      %v1573 = vor.u32 %v1569, %v1572
      %v1574 = vrot.slane %v1573, 4
      %v1576 = vshll.u32 %v1195, 16
      %v1578 = vrot.slane %v1576, 5
      %v1579 = vsel %vm1205, %v1574, %v1578
      %v1580 = vshrl.u32 %v1195, 16
      %v1582 = vrot.slane %v1580, 4
      %v1583 = vor.u32 %v1582, %v1578
      %v1584 = vrot.slane %v1583, 4
      %v1586 = vshll.u32 %v1196, 16
      %v1588 = vrot.slane %v1586, 5
      %v1589 = vsel %vm1205, %v1584, %v1588
      %v1591 = vshrl.u32 %v1197, 16
      %v1593 = vrot.slane %v1591, 4
      %v1594 = vshll.u32 %v1197, 16
      %v1596 = vrot.slane %v1594, 5
      %v1597 = vor.u32 %v1593, %v1596
      %v1598 = vrot.slane %v1597, 4
      %v1600 = vshll.u32 %v1198, 16
      %v1602 = vrot.slane %v1600, 5
      %v1603 = vsel %vm1205, %v1598, %v1602
      %v1604 = vshrl.u32 %v1198, 16
      %v1606 = vrot.slane %v1604, 4
      %v1607 = vor.u32 %v1606, %v1602
      %v1608 = vrot.slane %v1607, 4
      %v1610 = vshll.u32 %v1199, 16
      %v1612 = vrot.slane %v1610, 5
      %v1613 = vsel %vm1205, %v1608, %v1612
      %v1615 = vshrl.u32 %v1200, 16
      %v1617 = vrot.slane %v1615, 4
      %v1618 = vshll.u32 %v1200, 16
      %v1620 = vrot.slane %v1618, 5
      %v1621 = vor.u32 %v1617, %v1620
      %v1622 = vrot.slane %v1621, 4
      %v1624 = vshll.u32 %v1201, 16
      %v1626 = vrot.slane %v1624, 5
      %v1627 = vsel %vm1205, %v1622, %v1626
      %v1628 = vshrl.u32 %v1201, 16
      %v1630 = vrot.slane %v1628, 4
      %v1631 = vor.u32 %v1630, %v1626
      %v1632 = vrot.slane %v1631, 4
      %v1634 = vshll.u32 %v1202, 16
      %v1636 = vrot.slane %v1634, 5
      %v1637 = vsel %vm1205, %v1632, %v1636
      %v1638 = vunpack.c.l.b16 %v1219
      %v1639 = vunpack.c.l.b16 %v1229
      %v1640 = vunpack.c.l.b16 %v1243
      %v1641 = vunpack.c.l.b16 %v1253
      %v1642 = vunpack.c.l.b16 %v1267
      %v1643 = vunpack.c.l.b16 %v1277
      %v1644 = vunpack.c.l.b16 %v1291
      %v1645 = vunpack.c.l.b16 %v1301
      %v1646 = vunpack.c.l.b16 %v1315
      %v1647 = vunpack.c.l.b16 %v1325
      %v1648 = vunpack.c.l.b16 %v1339
      %v1649 = vunpack.c.l.b16 %v1349
      %v1650 = vunpack.c.l.b16 %v1363
      %v1651 = vunpack.c.l.b16 %v1373
      %v1652 = vunpack.c.l.b16 %v1387
      %v1653 = vunpack.c.l.b16 %v1397
      %v1654 = vunpack.c.l.b16 %v1411
      %v1655 = vunpack.c.l.b16 %v1421
      %v1656 = vunpack.c.l.b16 %v1435
      %v1657 = vunpack.c.l.b16 %v1445
      %v1658 = vunpack.c.l.b16 %v1459
      %v1659 = vunpack.c.l.b16 %v1469
      %v1660 = vunpack.c.l.b16 %v1483
      %v1661 = vunpack.c.l.b16 %v1493
      %v1662 = vunpack.c.l.b16 %v1507
      %v1663 = vunpack.c.l.b16 %v1517
      %v1664 = vunpack.c.l.b16 %v1531
      %v1665 = vunpack.c.l.b16 %v1541
      %v1666 = vunpack.c.l.b16 %v1555
      %v1667 = vunpack.c.l.b16 %v1565
      %v1668 = vunpack.c.l.b16 %v1579
      %v1669 = vunpack.c.l.b16 %v1589
      %v1670 = vunpack.c.l.b16 %v1603
      %v1671 = vunpack.c.l.b16 %v1613
      %v1672 = vunpack.c.l.b16 %v1627
      %v1673 = vunpack.c.l.b16 %v1637
      %v1674 = vpack.c.b16 %v1639, %v1638
      %v1675 = vpack.c.b16 %v1641, %v1640
      %v1676 = vpack.c.b16 %v1643, %v1642
      %v1677 = vpack.c.b16 %v1645, %v1644
      %v1678 = vpack.c.b16 %v1647, %v1646
      %v1679 = vpack.c.b16 %v1649, %v1648
      %v1680 = vpack.c.b16 %v1651, %v1650
      %v1681 = vpack.c.b16 %v1653, %v1652
      %v1682 = vpack.c.b16 %v1655, %v1654
      %v1683 = vpack.c.b16 %v1657, %v1656
      %v1684 = vpack.c.b16 %v1659, %v1658
      %v1685 = vpack.c.b16 %v1661, %v1660
      %v1686 = vpack.c.b16 %v1663, %v1662
      %v1687 = vpack.c.b16 %v1665, %v1664
      %v1688 = vpack.c.b16 %v1667, %v1666
      %v1689 = vpack.c.b16 %v1669, %v1668
      %v1690 = vpack.c.b16 %v1671, %v1670
      %v1691 = vpack.c.b16 %v1673, %v1672
      %1692 = vrot.lane.b32.xlu0 %v1674, 16
      %v1693 = vpop.permute.xlu0 %1692
      %1694 = vrot.lane.b32.xlu0 %v1675, 16
      %v1695 = vpop.permute.xlu0 %1694
      %1696 = vrot.lane.b32.xlu0 %v1676, 16
      %v1697 = vpop.permute.xlu0 %1696
      %1698 = vrot.lane.b32.xlu0 %v1677, 16
      %v1699 = vpop.permute.xlu0 %1698
      %1700 = vrot.lane.b32.xlu0 %v1678, 16
      %v1701 = vpop.permute.xlu0 %1700
      %1702 = vrot.lane.b32.xlu0 %v1679, 16
      %v1703 = vpop.permute.xlu0 %1702
      %1704 = vrot.lane.b32.xlu0 %v1680, 16
      %v1705 = vpop.permute.xlu0 %1704
      %1706 = vrot.lane.b32.xlu0 %v1681, 16
      %v1707 = vpop.permute.xlu0 %1706
      %1708 = vrot.lane.b32.xlu0 %v1682, 16
      %v1709 = vpop.permute.xlu0 %1708
      %1710 = vrot.lane.b32.xlu0 %v1683, 16
      %v1711 = vpop.permute.xlu0 %1710
      %1712 = vrot.lane.b32.xlu0 %v1684, 16
      %v1713 = vpop.permute.xlu0 %1712
      %1714 = vrot.lane.b32.xlu0 %v1685, 16
      %v1715 = vpop.permute.xlu0 %1714
      %1716 = vrot.lane.b32.xlu0 %v1686, 16
      %v1717 = vpop.permute.xlu0 %1716
      %1718 = vrot.lane.b32.xlu0 %v1687, 16
      %v1719 = vpop.permute.xlu0 %1718
      %1720 = vrot.lane.b32.xlu0 %v1688, 16
      %v1721 = vpop.permute.xlu0 %1720
      %1722 = vrot.lane.b32.xlu0 %v1689, 16
      %v1723 = vpop.permute.xlu0 %1722
      %1724 = vrot.lane.b32.xlu0 %v1690, 16
      %v1725 = vpop.permute.xlu0 %1724
      %1726 = vrot.lane.b32.xlu0 %v1691, 16
      %v1727 = vpop.permute.xlu0 %1726
      %vm1746 = vcmask 261248
      %1747 = vst.msk [vmem:[#allocation3] sm:$0xff] %vm1746, %v1693
      %1748 = vst.msk [vmem:[#allocation3 + $0x8] sm:$0xff] %vm1746, %v1695
      %1749 = vst.msk [vmem:[#allocation3 + $0x10] sm:$0xff] %vm1746, %v1697
      %1750 = vst.msk [vmem:[#allocation3 + $0x18] sm:$0xff] %vm1746, %v1699
      %1751 = vst.msk [vmem:[#allocation3 + $0x20] sm:$0xff] %vm1746, %v1701
      %1752 = vst.msk [vmem:[#allocation3 + $0x28] sm:$0xff] %vm1746, %v1703
      %1753 = vst.msk [vmem:[#allocation3 + $0x30] sm:$0xff] %vm1746, %v1705
      %1754 = vst.msk [vmem:[#allocation3 + $0x38] sm:$0xff] %vm1746, %v1707
      %1755 = vst.msk [vmem:[#allocation3 + $0x40] sm:$0xff] %vm1746, %v1709
      %1756 = vst.msk [vmem:[#allocation3 + $0x48] sm:$0xff] %vm1746, %v1711
      %1757 = vst.msk [vmem:[#allocation3 + $0x50] sm:$0xff] %vm1746, %v1713
      %1758 = vst.msk [vmem:[#allocation3 + $0x58] sm:$0xff] %vm1746, %v1715
      %1759 = vst.msk [vmem:[#allocation3 + $0x60] sm:$0xff] %vm1746, %v1717
      %1760 = vst.msk [vmem:[#allocation3 + $0x68] sm:$0xff] %vm1746, %v1719
      %1761 = vst.msk [vmem:[#allocation3 + $0x70] sm:$0xff] %vm1746, %v1721
      %1762 = vst.msk [vmem:[#allocation3 + $0x78] sm:$0xff] %vm1746, %v1723
      %1763 = vst.msk [vmem:[#allocation3 + $0x80] sm:$0xff] %vm1746, %v1725
      %1764 = vst.msk [vmem:[#allocation3 + $0x88] sm:$0xff] %vm1746, %v1727
      %v1765 = vld [vmem:[#allocation2] sm:$0xe]
      %v1766 = vld [vmem:[#allocation2 + $0x4] sm:$0xf]
      %v1767 = vld [vmem:[#allocation2 + $0x8] sm:$0x1]
      %v1768 = vld [vmem:[#allocation2 + $0xc] sm:$0xe]
      %v1769 = vld [vmem:[#allocation2 + $0x10] sm:$0xf]
      %v1770 = vld [vmem:[#allocation2 + $0x14] sm:$0x1]
      %v1771 = vld [vmem:[#allocation2 + $0x18] sm:$0xe]
      %v1772 = vld [vmem:[#allocation2 + $0x1c] sm:$0xf]
      %v1773 = vld [vmem:[#allocation2 + $0x20] sm:$0x1]
      %v1774 = vld [vmem:[#allocation2 + $0x24] sm:$0xe]
      %v1775 = vld [vmem:[#allocation2 + $0x28] sm:$0xf]
      %v1776 = vld [vmem:[#allocation2 + $0x2c] sm:$0x1]
      %v1777 = vld [vmem:[#allocation2 + $0x30] sm:$0xe]
      %v1778 = vld [vmem:[#allocation2 + $0x34] sm:$0xf]
      %v1779 = vld [vmem:[#allocation2 + $0x38] sm:$0x1]
      %v1780 = vld [vmem:[#allocation2 + $0x3c] sm:$0xe]
      %v1781 = vld [vmem:[#allocation2 + $0x40] sm:$0xf]
      %v1782 = vld [vmem:[#allocation2 + $0x44] sm:$0x1]
      %v1783 = vld [vmem:[#allocation2 + $0x48] sm:$0xe]
      %v1784 = vld [vmem:[#allocation2 + $0x4c] sm:$0xf]
      %v1785 = vld [vmem:[#allocation2 + $0x50] sm:$0x1]
      %v1786 = vld [vmem:[#allocation2 + $0x54] sm:$0xe]
      %v1787 = vld [vmem:[#allocation2 + $0x58] sm:$0xf]
      %v1788 = vld [vmem:[#allocation2 + $0x5c] sm:$0x1]
      %v1789 = vld [vmem:[#allocation2 + $0x60] sm:$0xe]
      %v1790 = vld [vmem:[#allocation2 + $0x64] sm:$0xf]
      %v1791 = vld [vmem:[#allocation2 + $0x68] sm:$0x1]
      %v1792 = vld [vmem:[#allocation2 + $0x6c] sm:$0xe]
      %v1793 = vld [vmem:[#allocation2 + $0x70] sm:$0xf]
      %v1794 = vld [vmem:[#allocation2 + $0x74] sm:$0x1]
      %v1795 = vld [vmem:[#allocation2 + $0x78] sm:$0xe]
      %v1796 = vld [vmem:[#allocation2 + $0x7c] sm:$0xf]
      %v1797 = vld [vmem:[#allocation2 + $0x80] sm:$0x1]
      %v1798 = vld [vmem:[#allocation2 + $0x84] sm:$0xe]
      %v1799 = vld [vmem:[#allocation2 + $0x88] sm:$0xf]
      %v1800 = vld [vmem:[#allocation2 + $0x8c] sm:$0x1]
      %v1801 = vld [vmem:[#allocation2 + $0x90] sm:$0xe]
      %v1802 = vld [vmem:[#allocation2 + $0x94] sm:$0xf]
      %v1803 = vld [vmem:[#allocation2 + $0x98] sm:$0x1]
      %v1804 = vld [vmem:[#allocation2 + $0x9c] sm:$0xe]
      %v1805 = vld [vmem:[#allocation2 + $0xa0] sm:$0xf]
      %v1806 = vld [vmem:[#allocation2 + $0xa4] sm:$0x1]
      %v1807 = vld [vmem:[#allocation2 + $0xa8] sm:$0xe]
      %v1808 = vld [vmem:[#allocation2 + $0xac] sm:$0xf]
      %v1809 = vld [vmem:[#allocation2 + $0xb0] sm:$0x1]
      %v1810 = vld [vmem:[#allocation2 + $0xb4] sm:$0xe]
      %v1811 = vld [vmem:[#allocation2 + $0xb8] sm:$0xf]
      %v1812 = vld [vmem:[#allocation2 + $0xbc] sm:$0x1]
      %v1813 = vld [vmem:[#allocation2 + $0xc0] sm:$0xe]
      %v1814 = vld [vmem:[#allocation2 + $0xc4] sm:$0xf]
      %v1815 = vld [vmem:[#allocation2 + $0xc8] sm:$0x1]
      %v1816 = vld [vmem:[#allocation2 + $0xcc] sm:$0xe]
      %v1817 = vld [vmem:[#allocation2 + $0xd0] sm:$0xf]
      %v1818 = vld [vmem:[#allocation2 + $0xd4] sm:$0x1]
      %vm1873 = vcmask 1042432
      %vm1874 = vcmask 1046532
      %vm1875 = vmor %vm1873, %vm1874
      %v1876 = vrot.slane %v1765, 5
      %v1877 = vrot.slane %v1876, 4
      %v1878 = vrot.slane %v1766, 5
      %v1879 = vsel %vm1875, %v1877, %v1878
      %v1880 = vrot.slane %v1878, 4
      %v1881 = vrot.slane %v1767, 5
      %v1882 = vsel %vm1875, %v1880, %v1881
      %v1883 = vrot.slane %v1768, 5
      %v1884 = vrot.slane %v1883, 4
      %v1885 = vrot.slane %v1769, 5
      %v1886 = vsel %vm1875, %v1884, %v1885
      %v1887 = vrot.slane %v1885, 4
      %v1888 = vrot.slane %v1770, 5
      %v1889 = vsel %vm1875, %v1887, %v1888
      %v1890 = vrot.slane %v1771, 5
      %v1891 = vrot.slane %v1890, 4
      %v1892 = vrot.slane %v1772, 5
      %v1893 = vsel %vm1875, %v1891, %v1892
      %v1894 = vrot.slane %v1892, 4
      %v1895 = vrot.slane %v1773, 5
      %v1896 = vsel %vm1875, %v1894, %v1895
      %v1897 = vrot.slane %v1774, 5
      %v1898 = vrot.slane %v1897, 4
      %v1899 = vrot.slane %v1775, 5
      %v1900 = vsel %vm1875, %v1898, %v1899
      %v1901 = vrot.slane %v1899, 4
      %v1902 = vrot.slane %v1776, 5
      %v1903 = vsel %vm1875, %v1901, %v1902
      %v1904 = vrot.slane %v1777, 5
      %v1905 = vrot.slane %v1904, 4
      %v1906 = vrot.slane %v1778, 5
      %v1907 = vsel %vm1875, %v1905, %v1906
      %v1908 = vrot.slane %v1906, 4
      %v1909 = vrot.slane %v1779, 5
      %v1910 = vsel %vm1875, %v1908, %v1909
      %v1911 = vrot.slane %v1780, 5
      %v1912 = vrot.slane %v1911, 4
      %v1913 = vrot.slane %v1781, 5
      %v1914 = vsel %vm1875, %v1912, %v1913
      %v1915 = vrot.slane %v1913, 4
      %v1916 = vrot.slane %v1782, 5
      %v1917 = vsel %vm1875, %v1915, %v1916
      %v1918 = vrot.slane %v1783, 5
      %v1919 = vrot.slane %v1918, 4
      %v1920 = vrot.slane %v1784, 5
      %v1921 = vsel %vm1875, %v1919, %v1920
      %v1922 = vrot.slane %v1920, 4
      %v1923 = vrot.slane %v1785, 5
      %v1924 = vsel %vm1875, %v1922, %v1923
      %v1925 = vrot.slane %v1786, 5
      %v1926 = vrot.slane %v1925, 4
      %v1927 = vrot.slane %v1787, 5
      %v1928 = vsel %vm1875, %v1926, %v1927
      %v1929 = vrot.slane %v1927, 4
      %v1930 = vrot.slane %v1788, 5
      %v1931 = vsel %vm1875, %v1929, %v1930
      %v1932 = vrot.slane %v1789, 5
      %v1933 = vrot.slane %v1932, 4
      %v1934 = vrot.slane %v1790, 5
      %v1935 = vsel %vm1875, %v1933, %v1934
      %v1936 = vrot.slane %v1934, 4
      %v1937 = vrot.slane %v1791, 5
      %v1938 = vsel %vm1875, %v1936, %v1937
      %v1939 = vrot.slane %v1792, 5
      %v1940 = vrot.slane %v1939, 4
      %v1941 = vrot.slane %v1793, 5
      %v1942 = vsel %vm1875, %v1940, %v1941
      %v1943 = vrot.slane %v1941, 4
      %v1944 = vrot.slane %v1794, 5
      %v1945 = vsel %vm1875, %v1943, %v1944
      %v1946 = vrot.slane %v1795, 5
      %v1947 = vrot.slane %v1946, 4
      %v1948 = vrot.slane %v1796, 5
      %v1949 = vsel %vm1875, %v1947, %v1948
      %v1950 = vrot.slane %v1948, 4
      %v1951 = vrot.slane %v1797, 5
      %v1952 = vsel %vm1875, %v1950, %v1951
      %v1953 = vrot.slane %v1798, 5
      %v1954 = vrot.slane %v1953, 4
      %v1955 = vrot.slane %v1799, 5
      %v1956 = vsel %vm1875, %v1954, %v1955
      %v1957 = vrot.slane %v1955, 4
      %v1958 = vrot.slane %v1800, 5
      %v1959 = vsel %vm1875, %v1957, %v1958
      %v1960 = vrot.slane %v1801, 5
      %v1961 = vrot.slane %v1960, 4
      %v1962 = vrot.slane %v1802, 5
      %v1963 = vsel %vm1875, %v1961, %v1962
      %v1964 = vrot.slane %v1962, 4
      %v1965 = vrot.slane %v1803, 5
      %v1966 = vsel %vm1875, %v1964, %v1965
      %v1967 = vrot.slane %v1804, 5
      %v1968 = vrot.slane %v1967, 4
      %v1969 = vrot.slane %v1805, 5
      %v1970 = vsel %vm1875, %v1968, %v1969
      %v1971 = vrot.slane %v1969, 4
      %v1972 = vrot.slane %v1806, 5
      %v1973 = vsel %vm1875, %v1971, %v1972
      %v1974 = vrot.slane %v1807, 5
      %v1975 = vrot.slane %v1974, 4
      %v1976 = vrot.slane %v1808, 5
      %v1977 = vsel %vm1875, %v1975, %v1976
      %v1978 = vrot.slane %v1976, 4
      %v1979 = vrot.slane %v1809, 5
      %v1980 = vsel %vm1875, %v1978, %v1979
      %v1981 = vrot.slane %v1810, 5
      %v1982 = vrot.slane %v1981, 4
      %v1983 = vrot.slane %v1811, 5
      %v1984 = vsel %vm1875, %v1982, %v1983
      %v1985 = vrot.slane %v1983, 4
      %v1986 = vrot.slane %v1812, 5
      %v1987 = vsel %vm1875, %v1985, %v1986
      %v1988 = vrot.slane %v1813, 5
      %v1989 = vrot.slane %v1988, 4
      %v1990 = vrot.slane %v1814, 5
      %v1991 = vsel %vm1875, %v1989, %v1990
      %v1992 = vrot.slane %v1990, 4
      %v1993 = vrot.slane %v1815, 5
      %v1994 = vsel %vm1875, %v1992, %v1993
      %v1995 = vrot.slane %v1816, 5
      %v1996 = vrot.slane %v1995, 4
      %v1997 = vrot.slane %v1817, 5
      %v1998 = vsel %vm1875, %v1996, %v1997
      %v1999 = vrot.slane %v1997, 4
      %v2000 = vrot.slane %v1818, 5
      %v2001 = vsel %vm1875, %v1999, %v2000
      %v2002 = vunpack.c.l.b16 %v1879
      %v2003 = vunpack.c.l.b16 %v1882
      %v2004 = vunpack.c.l.b16 %v1886
      %v2005 = vunpack.c.l.b16 %v1889
      %v2006 = vunpack.c.l.b16 %v1893
      %v2007 = vunpack.c.l.b16 %v1896
      %v2008 = vunpack.c.l.b16 %v1900
      %v2009 = vunpack.c.l.b16 %v1903
      %v2010 = vunpack.c.l.b16 %v1907
      %v2011 = vunpack.c.l.b16 %v1910
      %v2012 = vunpack.c.l.b16 %v1914
      %v2013 = vunpack.c.l.b16 %v1917
      %v2014 = vunpack.c.l.b16 %v1921
      %v2015 = vunpack.c.l.b16 %v1924
      %v2016 = vunpack.c.l.b16 %v1928
      %v2017 = vunpack.c.l.b16 %v1931
      %v2018 = vunpack.c.l.b16 %v1935
      %v2019 = vunpack.c.l.b16 %v1938
      %v2020 = vunpack.c.l.b16 %v1942
      %v2021 = vunpack.c.l.b16 %v1945
      %v2022 = vunpack.c.l.b16 %v1949
      %v2023 = vunpack.c.l.b16 %v1952
      %v2024 = vunpack.c.l.b16 %v1956
      %v2025 = vunpack.c.l.b16 %v1959
      %v2026 = vunpack.c.l.b16 %v1963
      %v2027 = vunpack.c.l.b16 %v1966
      %v2028 = vunpack.c.l.b16 %v1970
      %v2029 = vunpack.c.l.b16 %v1973
      %v2030 = vunpack.c.l.b16 %v1977
      %v2031 = vunpack.c.l.b16 %v1980
      %v2032 = vunpack.c.l.b16 %v1984
      %v2033 = vunpack.c.l.b16 %v1987
      %v2034 = vunpack.c.l.b16 %v1991
      %v2035 = vunpack.c.l.b16 %v1994
      %v2036 = vunpack.c.l.b16 %v1998
      %v2037 = vunpack.c.l.b16 %v2001
      %v2038 = vpack.c.b16 %v2003, %v2002
      %v2039 = vpack.c.b16 %v2005, %v2004
      %v2040 = vpack.c.b16 %v2007, %v2006
      %v2041 = vpack.c.b16 %v2009, %v2008
      %v2042 = vpack.c.b16 %v2011, %v2010
      %v2043 = vpack.c.b16 %v2013, %v2012
      %v2044 = vpack.c.b16 %v2015, %v2014
      %v2045 = vpack.c.b16 %v2017, %v2016
      %v2046 = vpack.c.b16 %v2019, %v2018
      %v2047 = vpack.c.b16 %v2021, %v2020
      %v2048 = vpack.c.b16 %v2023, %v2022
      %v2049 = vpack.c.b16 %v2025, %v2024
      %v2050 = vpack.c.b16 %v2027, %v2026
      %v2051 = vpack.c.b16 %v2029, %v2028
      %v2052 = vpack.c.b16 %v2031, %v2030
      %v2053 = vpack.c.b16 %v2033, %v2032
      %v2054 = vpack.c.b16 %v2035, %v2034
      %v2055 = vpack.c.b16 %v2037, %v2036
      %2056 = vrot.lane.b32.xlu0 %v2038, 32
      %v2057 = vpop.permute.xlu0 %2056
      %2058 = vrot.lane.b32.xlu0 %v2039, 32
      %v2059 = vpop.permute.xlu0 %2058
      %2060 = vrot.lane.b32.xlu0 %v2040, 32
      %v2061 = vpop.permute.xlu0 %2060
      %2062 = vrot.lane.b32.xlu0 %v2041, 32
      %v2063 = vpop.permute.xlu0 %2062
      %2064 = vrot.lane.b32.xlu0 %v2042, 32
      %v2065 = vpop.permute.xlu0 %2064
      %2066 = vrot.lane.b32.xlu0 %v2043, 32
      %v2067 = vpop.permute.xlu0 %2066
      %2068 = vrot.lane.b32.xlu0 %v2044, 32
      %v2069 = vpop.permute.xlu0 %2068
      %2070 = vrot.lane.b32.xlu0 %v2045, 32
      %v2071 = vpop.permute.xlu0 %2070
      %2072 = vrot.lane.b32.xlu0 %v2046, 32
      %v2073 = vpop.permute.xlu0 %2072
      %2074 = vrot.lane.b32.xlu0 %v2047, 32
      %v2075 = vpop.permute.xlu0 %2074
      %2076 = vrot.lane.b32.xlu0 %v2048, 32
      %v2077 = vpop.permute.xlu0 %2076
      %2078 = vrot.lane.b32.xlu0 %v2049, 32
      %v2079 = vpop.permute.xlu0 %2078
      %2080 = vrot.lane.b32.xlu0 %v2050, 32
      %v2081 = vpop.permute.xlu0 %2080
      %2082 = vrot.lane.b32.xlu0 %v2051, 32
      %v2083 = vpop.permute.xlu0 %2082
      %2084 = vrot.lane.b32.xlu0 %v2052, 32
      %v2085 = vpop.permute.xlu0 %2084
      %2086 = vrot.lane.b32.xlu0 %v2053, 32
      %v2087 = vpop.permute.xlu0 %2086
      %2088 = vrot.lane.b32.xlu0 %v2054, 32
      %v2089 = vpop.permute.xlu0 %2088
      %2090 = vrot.lane.b32.xlu0 %v2055, 32
      %v2091 = vpop.permute.xlu0 %2090
      %vm2110 = vcmask 392448
      %2111 = vst.msk [vmem:[#allocation3] sm:$0xff] %vm2110, %v2057
      %2112 = vst.msk [vmem:[#allocation3 + $0x8] sm:$0xff] %vm2110, %v2059
      %2113 = vst.msk [vmem:[#allocation3 + $0x10] sm:$0xff] %vm2110, %v2061
      %2114 = vst.msk [vmem:[#allocation3 + $0x18] sm:$0xff] %vm2110, %v2063
      %2115 = vst.msk [vmem:[#allocation3 + $0x20] sm:$0xff] %vm2110, %v2065
      %2116 = vst.msk [vmem:[#allocation3 + $0x28] sm:$0xff] %vm2110, %v2067
      %2117 = vst.msk [vmem:[#allocation3 + $0x30] sm:$0xff] %vm2110, %v2069
      %2118 = vst.msk [vmem:[#allocation3 + $0x38] sm:$0xff] %vm2110, %v2071
      %2119 = vst.msk [vmem:[#allocation3 + $0x40] sm:$0xff] %vm2110, %v2073
      %2120 = vst.msk [vmem:[#allocation3 + $0x48] sm:$0xff] %vm2110, %v2075
      %2121 = vst.msk [vmem:[#allocation3 + $0x50] sm:$0xff] %vm2110, %v2077
      %2122 = vst.msk [vmem:[#allocation3 + $0x58] sm:$0xff] %vm2110, %v2079
      %2123 = vst.msk [vmem:[#allocation3 + $0x60] sm:$0xff] %vm2110, %v2081
      %2124 = vst.msk [vmem:[#allocation3 + $0x68] sm:$0xff] %vm2110, %v2083
      %2125 = vst.msk [vmem:[#allocation3 + $0x70] sm:$0xff] %vm2110, %v2085
      %2126 = vst.msk [vmem:[#allocation3 + $0x78] sm:$0xff] %vm2110, %v2087
      %2127 = vst.msk [vmem:[#allocation3 + $0x80] sm:$0xff] %vm2110, %v2089
      %2128 = vst.msk [vmem:[#allocation3 + $0x88] sm:$0xff] %vm2110, %v2091
      %v2129 = vld [vmem:[#allocation3] sm:$0xff]
      %v2130 = vld [vmem:[#allocation3 + $0x8] sm:$0xff]
      %v2131 = vld [vmem:[#allocation3 + $0x10] sm:$0xff]
      %v2132 = vld [vmem:[#allocation3 + $0x18] sm:$0xff]
      %v2133 = vld [vmem:[#allocation3 + $0x20] sm:$0xff]
      %v2134 = vld [vmem:[#allocation3 + $0x28] sm:$0xff]
      %v2135 = vld [vmem:[#allocation3 + $0x30] sm:$0xff]
      %v2136 = vld [vmem:[#allocation3 + $0x38] sm:$0xff]
      %v2137 = vld [vmem:[#allocation3 + $0x40] sm:$0xff]
      %v2138 = vld [vmem:[#allocation3 + $0x48] sm:$0xff]
      %v2139 = vld [vmem:[#allocation3 + $0x50] sm:$0xff]
      %v2140 = vld [vmem:[#allocation3 + $0x58] sm:$0xff]
      %v2141 = vld [vmem:[#allocation3 + $0x60] sm:$0xff]
      %v2142 = vld [vmem:[#allocation3 + $0x68] sm:$0xff]
      %v2143 = vld [vmem:[#allocation3 + $0x70] sm:$0xff]
      %v2144 = vld [vmem:[#allocation3 + $0x78] sm:$0xff]
      %v2151 = vunpack.c.l.b16 %v280
      %v2152 = vunpack.c.l.b16 %v281
      %v2153 = vunpack.c.l.b16 %v282
      %v2154 = vunpack.c.l.b16 %v283
      %v2155 = vunpack.c.l.b16 %v284
      %v2156 = vunpack.c.l.b16 %v285
      %v2157 = vpack.c.b16 %v2152, %v2151
      %v2158 = vpack.c.b16 %v2154, %v2153
      %v2159 = vpack.c.b16 %v2156, %v2155
      %vm2163 = vcmask 392192
      %v2165 = vsel %vm2163, %v2129, 0
      %v2168 = vsel %vm2163, %v2130, 0
      %v2171 = vsel %vm2163, %v2131, 0
      %v2174 = vsel %vm2163, %v2132, 0
      %v2177 = vsel %vm2163, %v2133, 0
      %v2180 = vsel %vm2163, %v2134, 0
      %v2183 = vsel %vm2163, %v2135, 0
      %v2186 = vsel %vm2163, %v2136, 0
      %v2189 = vsel %vm2163, %v2137, 0
      %v2192 = vsel %vm2163, %v2138, 0
      %v2195 = vsel %vm2163, %v2139, 0
      %v2198 = vsel %vm2163, %v2140, 0
      %v2201 = vsel %vm2163, %v2141, 0
      %v2204 = vsel %vm2163, %v2142, 0
      %v2207 = vsel %vm2163, %v2143, 0
      %v2210 = vsel %vm2163, %v2144, 0
      %2212 = vmatprep.subr.bf16.mxu0 0
      %2213 = vmatpush1.bf16.msra.mxu0 %v2157
      %2214 = vmatprep.subr.bf16.mxu0 0
      %2215 = vmatpush1.bf16.msra.mxu0 %v2158
      %2216 = vmatprep.subr.bf16.mxu0 0
      %2217 = vmatpush1.bf16.msra.mxu0 %v2159
      %2218 = vmatprep.subr.bf16.mxu0 0
      %2219 = vmatpush1.bf16.msra.mxu0 0
      %2220 = vmatprep.subr.bf16.mxu0 0
      %2221 = vmatpush1.bf16.msra.mxu0 0
      %2222 = vmatprep.subr.bf16.mxu0 0
      %2223 = vmatpush1.bf16.msra.mxu0 0
      %2224 = vmatprep.subr.bf16.mxu0 0
      %2225 = vmatpush1.bf16.msra.mxu0 0
      %2226 = vmatprep.subr.bf16.mxu0 0
      %2227 = vmatpush1.bf16.msra.mxu0 0
      %2228 = vmatprep.subr.bf16.mxu0 0
      %2229 = vmatpush1.bf16.msra.mxu0 0
      %2230 = vmatprep.subr.bf16.mxu0 0
      %2231 = vmatpush1.bf16.msra.mxu0 0
      %2232 = vmatprep.subr.bf16.mxu0 0
      %2233 = vmatpush1.bf16.msra.mxu0 0
      %2234 = vmatprep.subr.bf16.mxu0 0
      %2235 = vmatpush1.bf16.msra.mxu0 0
      %2236 = vmatprep.subr.bf16.mxu0 0
      %2237 = vmatpush1.bf16.msra.mxu0 0
      %2238 = vmatprep.subr.bf16.mxu0 0
      %2239 = vmatpush1.bf16.msra.mxu0 0
      %2240 = vmatprep.subr.bf16.mxu0 0
      %2241 = vmatpush1.bf16.msra.mxu0 0
      %2242 = vmatprep.subr.bf16.mxu0 0
      %2243 = vmatpush1.bf16.msra.mxu0 0
      %2244 = vmatprep.mubr.bf16.mxu0 0
      %2245 = vmatmul.mubr.bf16.gmra.mrb[0].mxu0 %v2165
      %v2246 = vpop.f32.mrb[0].mxu0
      %v2247 = vadd.f32 0.0, %v2246
      %v2248 = vpop.f32.mrb[0].mxu0
      %v2249 = vpop.f32.mrb[0].mxu0
      %v2250 = vadd.f32 0.0, %v2249
      %v2251 = vpop.f32.mrb[0].mxu0
      %2252 = vmatprep.mubr.bf16.mxu0 0
      %2253 = vmatmul.mubr.bf16.gmra.mrb[0].mxu0 %v2168
      %v2254 = vpop.f32.mrb[0].mxu0
      %v2255 = vadd.f32 0.0, %v2254
      %v2256 = vpop.f32.mrb[0].mxu0
      %v2257 = vpop.f32.mrb[0].mxu0
      %v2258 = vadd.f32 0.0, %v2257
      %v2259 = vpop.f32.mrb[0].mxu0
      %2260 = vmatprep.mubr.bf16.mxu0 0
      %2261 = vmatmul.mubr.bf16.gmra.mrb[0].mxu0 %v2171
      %v2262 = vpop.f32.mrb[0].mxu0
      %v2263 = vadd.f32 0.0, %v2262
      %v2264 = vpop.f32.mrb[0].mxu0
      %v2265 = vpop.f32.mrb[0].mxu0
      %v2266 = vadd.f32 0.0, %v2265
      %v2267 = vpop.f32.mrb[0].mxu0
      %2268 = vmatprep.mubr.bf16.mxu0 0
      %2269 = vmatmul.mubr.bf16.gmra.mrb[0].mxu0 %v2174
      %v2270 = vpop.f32.mrb[0].mxu0
      %v2271 = vadd.f32 0.0, %v2270
      %v2272 = vpop.f32.mrb[0].mxu0
      %v2273 = vpop.f32.mrb[0].mxu0
      %v2274 = vadd.f32 0.0, %v2273
      %v2275 = vpop.f32.mrb[0].mxu0
      %2276 = vmatprep.mubr.bf16.mxu0 0
      %2277 = vmatmul.mubr.bf16.gmra.mrb[0].mxu0 %v2177
      %v2278 = vpop.f32.mrb[0].mxu0
      %v2279 = vadd.f32 0.0, %v2278
      %v2280 = vpop.f32.mrb[0].mxu0
      %v2281 = vpop.f32.mrb[0].mxu0
      %v2282 = vadd.f32 0.0, %v2281
      %v2283 = vpop.f32.mrb[0].mxu0
      %2284 = vmatprep.mubr.bf16.mxu0 0
      %2285 = vmatmul.mubr.bf16.gmra.mrb[0].mxu0 %v2180
      %v2286 = vpop.f32.mrb[0].mxu0
      %v2287 = vadd.f32 0.0, %v2286
      %v2288 = vpop.f32.mrb[0].mxu0
      %v2289 = vpop.f32.mrb[0].mxu0
      %v2290 = vadd.f32 0.0, %v2289
      %v2291 = vpop.f32.mrb[0].mxu0
      %2292 = vmatprep.mubr.bf16.mxu0 0
      %2293 = vmatmul.mubr.bf16.gmra.mrb[0].mxu0 %v2183
      %v2294 = vpop.f32.mrb[0].mxu0
      %v2295 = vadd.f32 0.0, %v2294
      %v2296 = vpop.f32.mrb[0].mxu0
      %v2297 = vpop.f32.mrb[0].mxu0
      %v2298 = vadd.f32 0.0, %v2297
      %v2299 = vpop.f32.mrb[0].mxu0
      %2300 = vmatprep.mubr.bf16.mxu0 0
      %2301 = vmatmul.mubr.bf16.gmra.mrb[0].mxu0 %v2186
      %v2302 = vpop.f32.mrb[0].mxu0
      %v2303 = vadd.f32 0.0, %v2302
      %v2304 = vpop.f32.mrb[0].mxu0
      %v2305 = vpop.f32.mrb[0].mxu0
      %v2306 = vadd.f32 0.0, %v2305
      %v2307 = vpop.f32.mrb[0].mxu0
      %2308 = vmatprep.mubr.bf16.mxu0 0
      %2309 = vmatmul.mubr.bf16.gmra.mrb[0].mxu0 %v2189
      %v2310 = vpop.f32.mrb[0].mxu0
      %v2311 = vadd.f32 0.0, %v2310
      %v2312 = vpop.f32.mrb[0].mxu0
      %v2313 = vpop.f32.mrb[0].mxu0
      %v2314 = vadd.f32 0.0, %v2313
      %v2315 = vpop.f32.mrb[0].mxu0
      %2316 = vmatprep.mubr.bf16.mxu0 0
      %2317 = vmatmul.mubr.bf16.gmra.mrb[0].mxu0 %v2192
      %v2318 = vpop.f32.mrb[0].mxu0
      %v2319 = vadd.f32 0.0, %v2318
      %v2320 = vpop.f32.mrb[0].mxu0
      %v2321 = vpop.f32.mrb[0].mxu0
      %v2322 = vadd.f32 0.0, %v2321
      %v2323 = vpop.f32.mrb[0].mxu0
      %2324 = vmatprep.mubr.bf16.mxu0 0
      %2325 = vmatmul.mubr.bf16.gmra.mrb[0].mxu0 %v2195
      %v2326 = vpop.f32.mrb[0].mxu0
      %v2327 = vadd.f32 0.0, %v2326
      %v2328 = vpop.f32.mrb[0].mxu0
      %v2329 = vpop.f32.mrb[0].mxu0
      %v2330 = vadd.f32 0.0, %v2329
      %v2331 = vpop.f32.mrb[0].mxu0
      %2332 = vmatprep.mubr.bf16.mxu0 0
      %2333 = vmatmul.mubr.bf16.gmra.mrb[0].mxu0 %v2198
      %v2334 = vpop.f32.mrb[0].mxu0
      %v2335 = vadd.f32 0.0, %v2334
      %v2336 = vpop.f32.mrb[0].mxu0
      %v2337 = vpop.f32.mrb[0].mxu0
      %v2338 = vadd.f32 0.0, %v2337
      %v2339 = vpop.f32.mrb[0].mxu0
      %2340 = vmatprep.mubr.bf16.mxu0 0
      %2341 = vmatmul.mubr.bf16.gmra.mrb[0].mxu0 %v2201
      %v2342 = vpop.f32.mrb[0].mxu0
      %v2343 = vadd.f32 0.0, %v2342
      %v2344 = vpop.f32.mrb[0].mxu0
      %v2345 = vpop.f32.mrb[0].mxu0
      %v2346 = vadd.f32 0.0, %v2345
      %v2347 = vpop.f32.mrb[0].mxu0
      %2348 = vmatprep.mubr.bf16.mxu0 0
      %2349 = vmatmul.mubr.bf16.gmra.mrb[0].mxu0 %v2204
      %v2350 = vpop.f32.mrb[0].mxu0
      %v2351 = vadd.f32 0.0, %v2350
      %v2352 = vpop.f32.mrb[0].mxu0
      %v2353 = vpop.f32.mrb[0].mxu0
      %v2354 = vadd.f32 0.0, %v2353
      %v2355 = vpop.f32.mrb[0].mxu0
      %2356 = vmatprep.mubr.bf16.mxu0 0
      %2357 = vmatmul.mubr.bf16.gmra.mrb[0].mxu0 %v2207
      %v2358 = vpop.f32.mrb[0].mxu0
      %v2359 = vadd.f32 0.0, %v2358
      %v2360 = vpop.f32.mrb[0].mxu0
      %v2361 = vpop.f32.mrb[0].mxu0
      %v2362 = vadd.f32 0.0, %v2361
      %v2363 = vpop.f32.mrb[0].mxu0
      %2364 = vmatprep.mubr.bf16.mxu0 0
      %2365 = vmatmul.mubr.bf16.gmra.mrb[0].mxu0 %v2210
      %v2366 = vpop.f32.mrb[0].mxu0
      %v2367 = vadd.f32 0.0, %v2366
      %v2368 = vpop.f32.mrb[0].mxu0
      %v2369 = vpop.f32.mrb[0].mxu0
      %v2370 = vadd.f32 0.0, %v2369
      %v2371 = vpop.f32.mrb[0].mxu0
      %2372 = vdwg.mxu0
      %v2374 = vlaneseq
      %v2375 = vshrl.u32 %v2374, 7
      %v2376 = vsub.s32 0, %v2375
      %v2377 = vrot.slane %v298, %v2376
      %v2379 = vadd.f32 %v2377, %v2247
      %v2380 = vadd.f32 %v2377, %v2250
      %v2381 = vadd.f32 %v2377, %v2255
      %v2382 = vadd.f32 %v2377, %v2258
      %v2383 = vadd.f32 %v2377, %v2263
      %v2384 = vadd.f32 %v2377, %v2266
      %v2385 = vadd.f32 %v2377, %v2271
      %v2386 = vadd.f32 %v2377, %v2274
      %v2387 = vadd.f32 %v2377, %v2279
      %v2388 = vadd.f32 %v2377, %v2282
      %v2389 = vadd.f32 %v2377, %v2287
      %v2390 = vadd.f32 %v2377, %v2290
      %v2391 = vadd.f32 %v2377, %v2295
      %v2392 = vadd.f32 %v2377, %v2298
      %v2393 = vadd.f32 %v2377, %v2303
      %v2394 = vadd.f32 %v2377, %v2306
      %v2395 = vadd.f32 %v2377, %v2311
      %v2396 = vadd.f32 %v2377, %v2314
      %v2397 = vadd.f32 %v2377, %v2319
      %v2398 = vadd.f32 %v2377, %v2322
      %v2399 = vadd.f32 %v2377, %v2327
      %v2400 = vadd.f32 %v2377, %v2330
      %v2401 = vadd.f32 %v2377, %v2335
      %v2402 = vadd.f32 %v2377, %v2338
      %v2403 = vadd.f32 %v2377, %v2343
      %v2404 = vadd.f32 %v2377, %v2346
      %v2405 = vadd.f32 %v2377, %v2351
      %v2406 = vadd.f32 %v2377, %v2354
      %v2407 = vadd.f32 %v2377, %v2359
      %v2408 = vadd.f32 %v2377, %v2362
      %v2409 = vadd.f32 %v2377, %v2367
      %v2410 = vadd.f32 %v2377, %v2370
      %v2411 = vld [vmem:[#allocation3 + $0x8] sm:$0xff]
      %v2412 = vld [vmem:[#allocation3 + $0x10] sm:$0xff]
      %v2413 = vld [vmem:[#allocation3 + $0x18] sm:$0xff]
      %v2414 = vld [vmem:[#allocation3 + $0x20] sm:$0xff]
      %v2415 = vld [vmem:[#allocation3 + $0x28] sm:$0xff]
      %v2416 = vld [vmem:[#allocation3 + $0x30] sm:$0xff]
      %v2417 = vld [vmem:[#allocation3 + $0x38] sm:$0xff]
      %v2418 = vld [vmem:[#allocation3 + $0x40] sm:$0xff]
      %v2419 = vld [vmem:[#allocation3 + $0x48] sm:$0xff]
      %v2420 = vld [vmem:[#allocation3 + $0x50] sm:$0xff]
      %v2421 = vld [vmem:[#allocation3 + $0x58] sm:$0xff]
      %v2422 = vld [vmem:[#allocation3 + $0x60] sm:$0xff]
      %v2423 = vld [vmem:[#allocation3 + $0x68] sm:$0xff]
      %v2424 = vld [vmem:[#allocation3 + $0x70] sm:$0xff]
      %v2425 = vld [vmem:[#allocation3 + $0x78] sm:$0xff]
      %v2426 = vld [vmem:[#allocation3 + $0x80] sm:$0xff]
      %v2433 = vunpack.c.l.b16 %v286
      %v2434 = vunpack.c.l.b16 %v287
      %v2435 = vunpack.c.l.b16 %v288
      %v2436 = vunpack.c.l.b16 %v289
      %v2437 = vunpack.c.l.b16 %v290
      %v2438 = vunpack.c.l.b16 %v291
      %v2439 = vpack.c.b16 %v2434, %v2433
      %v2440 = vpack.c.b16 %v2436, %v2435
      %v2441 = vpack.c.b16 %v2438, %v2437
      %v2446 = vsel %vm2163, %v2411, 0
      %v2449 = vsel %vm2163, %v2412, 0
      %v2452 = vsel %vm2163, %v2413, 0
      %v2455 = vsel %vm2163, %v2414, 0
      %v2458 = vsel %vm2163, %v2415, 0
      %v2461 = vsel %vm2163, %v2416, 0
      %v2464 = vsel %vm2163, %v2417, 0
      %v2467 = vsel %vm2163, %v2418, 0
      %v2470 = vsel %vm2163, %v2419, 0
      %v2473 = vsel %vm2163, %v2420, 0
      %v2476 = vsel %vm2163, %v2421, 0
      %v2479 = vsel %vm2163, %v2422, 0
      %v2482 = vsel %vm2163, %v2423, 0
      %v2485 = vsel %vm2163, %v2424, 0
      %v2488 = vsel %vm2163, %v2425, 0
      %v2491 = vsel %vm2163, %v2426, 0
      %2493 = vmatprep.subr.bf16.mxu0 0
      %2494 = vmatpush1.bf16.msra.mxu0 %v2439
      %2495 = vmatprep.subr.bf16.mxu0 0
      %2496 = vmatpush1.bf16.msra.mxu0 %v2440
      %2497 = vmatprep.subr.bf16.mxu0 0
      %2498 = vmatpush1.bf16.msra.mxu0 %v2441
      %2499 = vmatprep.subr.bf16.mxu0 0
      %2500 = vmatpush1.bf16.msra.mxu0 0
      %2501 = vmatprep.subr.bf16.mxu0 0
      %2502 = vmatpush1.bf16.msra.mxu0 0
      %2503 = vmatprep.subr.bf16.mxu0 0
      %2504 = vmatpush1.bf16.msra.mxu0 0
      %2505 = vmatprep.subr.bf16.mxu0 0
      %2506 = vmatpush1.bf16.msra.mxu0 0
      %2507 = vmatprep.subr.bf16.mxu0 0
      %2508 = vmatpush1.bf16.msra.mxu0 0
      %2509 = vmatprep.subr.bf16.mxu0 0
      %2510 = vmatpush1.bf16.msra.mxu0 0
      %2511 = vmatprep.subr.bf16.mxu0 0
      %2512 = vmatpush1.bf16.msra.mxu0 0
      %2513 = vmatprep.subr.bf16.mxu0 0
      %2514 = vmatpush1.bf16.msra.mxu0 0
      %2515 = vmatprep.subr.bf16.mxu0 0
      %2516 = vmatpush1.bf16.msra.mxu0 0
      %2517 = vmatprep.subr.bf16.mxu0 0
      %2518 = vmatpush1.bf16.msra.mxu0 0
      %2519 = vmatprep.subr.bf16.mxu0 0
      %2520 = vmatpush1.bf16.msra.mxu0 0
      %2521 = vmatprep.subr.bf16.mxu0 0
      %2522 = vmatpush1.bf16.msra.mxu0 0
      %2523 = vmatprep.subr.bf16.mxu0 0
      %2524 = vmatpush1.bf16.msra.mxu0 0
      %2525 = vmatprep.mubr.bf16.mxu0 0
      %2526 = vmatmul.mubr.bf16.gmra.mrb[0].mxu0 %v2446
      %v2527 = vpop.f32.mrb[0].mxu0
      %v2528 = vadd.f32 0.0, %v2527
      %v2529 = vpop.f32.mrb[0].mxu0
      %v2530 = vpop.f32.mrb[0].mxu0
      %v2531 = vadd.f32 0.0, %v2530
      %v2532 = vpop.f32.mrb[0].mxu0
      %2533 = vmatprep.mubr.bf16.mxu0 0
      %2534 = vmatmul.mubr.bf16.gmra.mrb[0].mxu0 %v2449
      %v2535 = vpop.f32.mrb[0].mxu0
      %v2536 = vadd.f32 0.0, %v2535
      %v2537 = vpop.f32.mrb[0].mxu0
      %v2538 = vpop.f32.mrb[0].mxu0
      %v2539 = vadd.f32 0.0, %v2538
      %v2540 = vpop.f32.mrb[0].mxu0
      %2541 = vmatprep.mubr.bf16.mxu0 0
      %2542 = vmatmul.mubr.bf16.gmra.mrb[0].mxu0 %v2452
      %v2543 = vpop.f32.mrb[0].mxu0
      %v2544 = vadd.f32 0.0, %v2543
      %v2545 = vpop.f32.mrb[0].mxu0
      %v2546 = vpop.f32.mrb[0].mxu0
      %v2547 = vadd.f32 0.0, %v2546
      %v2548 = vpop.f32.mrb[0].mxu0
      %2549 = vmatprep.mubr.bf16.mxu0 0
      %2550 = vmatmul.mubr.bf16.gmra.mrb[0].mxu0 %v2455
      %v2551 = vpop.f32.mrb[0].mxu0
      %v2552 = vadd.f32 0.0, %v2551
      %v2553 = vpop.f32.mrb[0].mxu0
      %v2554 = vpop.f32.mrb[0].mxu0
      %v2555 = vadd.f32 0.0, %v2554
      %v2556 = vpop.f32.mrb[0].mxu0
      %2557 = vmatprep.mubr.bf16.mxu0 0
      %2558 = vmatmul.mubr.bf16.gmra.mrb[0].mxu0 %v2458
      %v2559 = vpop.f32.mrb[0].mxu0
      %v2560 = vadd.f32 0.0, %v2559
      %v2561 = vpop.f32.mrb[0].mxu0
      %v2562 = vpop.f32.mrb[0].mxu0
      %v2563 = vadd.f32 0.0, %v2562
      %v2564 = vpop.f32.mrb[0].mxu0
      %2565 = vmatprep.mubr.bf16.mxu0 0
      %2566 = vmatmul.mubr.bf16.gmra.mrb[0].mxu0 %v2461
      %v2567 = vpop.f32.mrb[0].mxu0
      %v2568 = vadd.f32 0.0, %v2567
      %v2569 = vpop.f32.mrb[0].mxu0
      %v2570 = vpop.f32.mrb[0].mxu0
      %v2571 = vadd.f32 0.0, %v2570
      %v2572 = vpop.f32.mrb[0].mxu0
      %2573 = vmatprep.mubr.bf16.mxu0 0
      %2574 = vmatmul.mubr.bf16.gmra.mrb[0].mxu0 %v2464
      %v2575 = vpop.f32.mrb[0].mxu0
      %v2576 = vadd.f32 0.0, %v2575
      %v2577 = vpop.f32.mrb[0].mxu0
      %v2578 = vpop.f32.mrb[0].mxu0
      %v2579 = vadd.f32 0.0, %v2578
      %v2580 = vpop.f32.mrb[0].mxu0
      %2581 = vmatprep.mubr.bf16.mxu0 0
      %2582 = vmatmul.mubr.bf16.gmra.mrb[0].mxu0 %v2467
      %v2583 = vpop.f32.mrb[0].mxu0
      %v2584 = vadd.f32 0.0, %v2583
      %v2585 = vpop.f32.mrb[0].mxu0
      %v2586 = vpop.f32.mrb[0].mxu0
      %v2587 = vadd.f32 0.0, %v2586
      %v2588 = vpop.f32.mrb[0].mxu0
      %2589 = vmatprep.mubr.bf16.mxu0 0
      %2590 = vmatmul.mubr.bf16.gmra.mrb[0].mxu0 %v2470
      %v2591 = vpop.f32.mrb[0].mxu0
      %v2592 = vadd.f32 0.0, %v2591
      %v2593 = vpop.f32.mrb[0].mxu0
      %v2594 = vpop.f32.mrb[0].mxu0
      %v2595 = vadd.f32 0.0, %v2594
      %v2596 = vpop.f32.mrb[0].mxu0
      %2597 = vmatprep.mubr.bf16.mxu0 0
      %2598 = vmatmul.mubr.bf16.gmra.mrb[0].mxu0 %v2473
      %v2599 = vpop.f32.mrb[0].mxu0
      %v2600 = vadd.f32 0.0, %v2599
      %v2601 = vpop.f32.mrb[0].mxu0
      %v2602 = vpop.f32.mrb[0].mxu0
      %v2603 = vadd.f32 0.0, %v2602
      %v2604 = vpop.f32.mrb[0].mxu0
      %2605 = vmatprep.mubr.bf16.mxu0 0
      %2606 = vmatmul.mubr.bf16.gmra.mrb[0].mxu0 %v2476
      %v2607 = vpop.f32.mrb[0].mxu0
      %v2608 = vadd.f32 0.0, %v2607
      %v2609 = vpop.f32.mrb[0].mxu0
      %v2610 = vpop.f32.mrb[0].mxu0
      %v2611 = vadd.f32 0.0, %v2610
      %v2612 = vpop.f32.mrb[0].mxu0
      %2613 = vmatprep.mubr.bf16.mxu0 0
      %2614 = vmatmul.mubr.bf16.gmra.mrb[0].mxu0 %v2479
      %v2615 = vpop.f32.mrb[0].mxu0
      %v2616 = vadd.f32 0.0, %v2615
      %v2617 = vpop.f32.mrb[0].mxu0
      %v2618 = vpop.f32.mrb[0].mxu0
      %v2619 = vadd.f32 0.0, %v2618
      %v2620 = vpop.f32.mrb[0].mxu0
      %2621 = vmatprep.mubr.bf16.mxu0 0
      %2622 = vmatmul.mubr.bf16.gmra.mrb[0].mxu0 %v2482
      %v2623 = vpop.f32.mrb[0].mxu0
      %v2624 = vadd.f32 0.0, %v2623
      %v2625 = vpop.f32.mrb[0].mxu0
      %v2626 = vpop.f32.mrb[0].mxu0
      %v2627 = vadd.f32 0.0, %v2626
      %v2628 = vpop.f32.mrb[0].mxu0
      %2629 = vmatprep.mubr.bf16.mxu0 0
      %2630 = vmatmul.mubr.bf16.gmra.mrb[0].mxu0 %v2485
      %v2631 = vpop.f32.mrb[0].mxu0
      %v2632 = vadd.f32 0.0, %v2631
      %v2633 = vpop.f32.mrb[0].mxu0
      %v2634 = vpop.f32.mrb[0].mxu0
      %v2635 = vadd.f32 0.0, %v2634
      %v2636 = vpop.f32.mrb[0].mxu0
      %2637 = vmatprep.mubr.bf16.mxu0 0
      %2638 = vmatmul.mubr.bf16.gmra.mrb[0].mxu0 %v2488
      %v2639 = vpop.f32.mrb[0].mxu0
      %v2640 = vadd.f32 0.0, %v2639
      %v2641 = vpop.f32.mrb[0].mxu0
      %v2642 = vpop.f32.mrb[0].mxu0
      %v2643 = vadd.f32 0.0, %v2642
      %v2644 = vpop.f32.mrb[0].mxu0
      %2645 = vmatprep.mubr.bf16.mxu0 0
      %2646 = vmatmul.mubr.bf16.gmra.mrb[0].mxu0 %v2491
      %v2647 = vpop.f32.mrb[0].mxu0
      %v2648 = vadd.f32 0.0, %v2647
      %v2649 = vpop.f32.mrb[0].mxu0
      %v2650 = vpop.f32.mrb[0].mxu0
      %v2651 = vadd.f32 0.0, %v2650
      %v2652 = vpop.f32.mrb[0].mxu0
      %2653 = vdwg.mxu0
      %v2654 = vadd.f32 %v2379, %v2528
      %v2655 = vadd.f32 %v2380, %v2531
      %v2656 = vadd.f32 %v2381, %v2536
      %v2657 = vadd.f32 %v2382, %v2539
      %v2658 = vadd.f32 %v2383, %v2544
      %v2659 = vadd.f32 %v2384, %v2547
      %v2660 = vadd.f32 %v2385, %v2552
      %v2661 = vadd.f32 %v2386, %v2555
      %v2662 = vadd.f32 %v2387, %v2560
      %v2663 = vadd.f32 %v2388, %v2563
      %v2664 = vadd.f32 %v2389, %v2568
      %v2665 = vadd.f32 %v2390, %v2571
      %v2666 = vadd.f32 %v2391, %v2576
      %v2667 = vadd.f32 %v2392, %v2579
      %v2668 = vadd.f32 %v2393, %v2584
      %v2669 = vadd.f32 %v2394, %v2587
      %v2670 = vadd.f32 %v2395, %v2592
      %v2671 = vadd.f32 %v2396, %v2595
      %v2672 = vadd.f32 %v2397, %v2600
      %v2673 = vadd.f32 %v2398, %v2603
      %v2674 = vadd.f32 %v2399, %v2608
      %v2675 = vadd.f32 %v2400, %v2611
      %v2676 = vadd.f32 %v2401, %v2616
      %v2677 = vadd.f32 %v2402, %v2619
      %v2678 = vadd.f32 %v2403, %v2624
      %v2679 = vadd.f32 %v2404, %v2627
      %v2680 = vadd.f32 %v2405, %v2632
      %v2681 = vadd.f32 %v2406, %v2635
      %v2682 = vadd.f32 %v2407, %v2640
      %v2683 = vadd.f32 %v2408, %v2643
      %v2684 = vadd.f32 %v2409, %v2648
      %v2685 = vadd.f32 %v2410, %v2651
      %v2686 = vld [vmem:[#allocation3 + $0x10] sm:$0xff]
      %v2687 = vld [vmem:[#allocation3 + $0x18] sm:$0xff]
      %v2688 = vld [vmem:[#allocation3 + $0x20] sm:$0xff]
      %v2689 = vld [vmem:[#allocation3 + $0x28] sm:$0xff]
      %v2690 = vld [vmem:[#allocation3 + $0x30] sm:$0xff]
      %v2691 = vld [vmem:[#allocation3 + $0x38] sm:$0xff]
      %v2692 = vld [vmem:[#allocation3 + $0x40] sm:$0xff]
      %v2693 = vld [vmem:[#allocation3 + $0x48] sm:$0xff]
      %v2694 = vld [vmem:[#allocation3 + $0x50] sm:$0xff]
      %v2695 = vld [vmem:[#allocation3 + $0x58] sm:$0xff]
      %v2696 = vld [vmem:[#allocation3 + $0x60] sm:$0xff]
      %v2697 = vld [vmem:[#allocation3 + $0x68] sm:$0xff]
      %v2698 = vld [vmem:[#allocation3 + $0x70] sm:$0xff]
      %v2699 = vld [vmem:[#allocation3 + $0x78] sm:$0xff]
      %v2700 = vld [vmem:[#allocation3 + $0x80] sm:$0xff]
      %v2701 = vld [vmem:[#allocation3 + $0x88] sm:$0xff]
      %v2708 = vunpack.c.l.b16 %v292
      %v2709 = vunpack.c.l.b16 %v293
      %v2710 = vunpack.c.l.b16 %v294
      %v2711 = vunpack.c.l.b16 %v295
      %v2712 = vunpack.c.l.b16 %v296
      %v2713 = vunpack.c.l.b16 %v297
      %v2714 = vpack.c.b16 %v2709, %v2708
      %v2715 = vpack.c.b16 %v2711, %v2710
      %v2716 = vpack.c.b16 %v2713, %v2712
      %v2721 = vsel %vm2163, %v2686, 0
      %v2724 = vsel %vm2163, %v2687, 0
      %v2727 = vsel %vm2163, %v2688, 0
      %v2730 = vsel %vm2163, %v2689, 0
      %v2733 = vsel %vm2163, %v2690, 0
      %v2736 = vsel %vm2163, %v2691, 0
      %v2739 = vsel %vm2163, %v2692, 0
      %v2742 = vsel %vm2163, %v2693, 0
      %v2745 = vsel %vm2163, %v2694, 0
      %v2748 = vsel %vm2163, %v2695, 0
      %v2751 = vsel %vm2163, %v2696, 0
      %v2754 = vsel %vm2163, %v2697, 0
      %v2757 = vsel %vm2163, %v2698, 0
      %v2760 = vsel %vm2163, %v2699, 0
      %v2763 = vsel %vm2163, %v2700, 0
      %v2766 = vsel %vm2163, %v2701, 0
      %2768 = vmatprep.subr.bf16.mxu0 0
      %2769 = vmatpush1.bf16.msra.mxu0 %v2714
      %2770 = vmatprep.subr.bf16.mxu0 0
      %2771 = vmatpush1.bf16.msra.mxu0 %v2715
      %2772 = vmatprep.subr.bf16.mxu0 0
      %2773 = vmatpush1.bf16.msra.mxu0 %v2716
      %2774 = vmatprep.subr.bf16.mxu0 0
      %2775 = vmatpush1.bf16.msra.mxu0 0
      %2776 = vmatprep.subr.bf16.mxu0 0
      %2777 = vmatpush1.bf16.msra.mxu0 0
      %2778 = vmatprep.subr.bf16.mxu0 0
      %2779 = vmatpush1.bf16.msra.mxu0 0
      %2780 = vmatprep.subr.bf16.mxu0 0
      %2781 = vmatpush1.bf16.msra.mxu0 0
      %2782 = vmatprep.subr.bf16.mxu0 0
      %2783 = vmatpush1.bf16.msra.mxu0 0
      %2784 = vmatprep.subr.bf16.mxu0 0
      %2785 = vmatpush1.bf16.msra.mxu0 0
      %2786 = vmatprep.subr.bf16.mxu0 0
      %2787 = vmatpush1.bf16.msra.mxu0 0
      %2788 = vmatprep.subr.bf16.mxu0 0
      %2789 = vmatpush1.bf16.msra.mxu0 0
      %2790 = vmatprep.subr.bf16.mxu0 0
      %2791 = vmatpush1.bf16.msra.mxu0 0
      %2792 = vmatprep.subr.bf16.mxu0 0
      %2793 = vmatpush1.bf16.msra.mxu0 0
      %2794 = vmatprep.subr.bf16.mxu0 0
      %2795 = vmatpush1.bf16.msra.mxu0 0
      %2796 = vmatprep.subr.bf16.mxu0 0
      %2797 = vmatpush1.bf16.msra.mxu0 0
      %2798 = vmatprep.subr.bf16.mxu0 0
      %2799 = vmatpush1.bf16.msra.mxu0 0
      %2800 = vmatprep.mubr.bf16.mxu0 0
      %2801 = vmatmul.mubr.bf16.gmra.mrb[0].mxu0 %v2721
      %v2802 = vpop.f32.mrb[0].mxu0
      %v2803 = vadd.f32 0.0, %v2802
      %v2804 = vpop.f32.mrb[0].mxu0
      %v2805 = vpop.f32.mrb[0].mxu0
      %v2806 = vadd.f32 0.0, %v2805
      %v2807 = vpop.f32.mrb[0].mxu0
      %2808 = vmatprep.mubr.bf16.mxu0 0
      %2809 = vmatmul.mubr.bf16.gmra.mrb[0].mxu0 %v2724
      %v2810 = vpop.f32.mrb[0].mxu0
      %v2811 = vadd.f32 0.0, %v2810
      %v2812 = vpop.f32.mrb[0].mxu0
      %v2813 = vpop.f32.mrb[0].mxu0
      %v2814 = vadd.f32 0.0, %v2813
      %v2815 = vpop.f32.mrb[0].mxu0
      %2816 = vmatprep.mubr.bf16.mxu0 0
      %2817 = vmatmul.mubr.bf16.gmra.mrb[0].mxu0 %v2727
      %v2818 = vpop.f32.mrb[0].mxu0
      %v2819 = vadd.f32 0.0, %v2818
      %v2820 = vpop.f32.mrb[0].mxu0
      %v2821 = vpop.f32.mrb[0].mxu0
      %v2822 = vadd.f32 0.0, %v2821
      %v2823 = vpop.f32.mrb[0].mxu0
      %2824 = vmatprep.mubr.bf16.mxu0 0
      %2825 = vmatmul.mubr.bf16.gmra.mrb[0].mxu0 %v2730
      %v2826 = vpop.f32.mrb[0].mxu0
      %v2827 = vadd.f32 0.0, %v2826
      %v2828 = vpop.f32.mrb[0].mxu0
      %v2829 = vpop.f32.mrb[0].mxu0
      %v2830 = vadd.f32 0.0, %v2829
      %v2831 = vpop.f32.mrb[0].mxu0
      %2832 = vmatprep.mubr.bf16.mxu0 0
      %2833 = vmatmul.mubr.bf16.gmra.mrb[0].mxu0 %v2733
      %v2834 = vpop.f32.mrb[0].mxu0
      %v2835 = vadd.f32 0.0, %v2834
      %v2836 = vpop.f32.mrb[0].mxu0
      %v2837 = vpop.f32.mrb[0].mxu0
      %v2838 = vadd.f32 0.0, %v2837
      %v2839 = vpop.f32.mrb[0].mxu0
      %2840 = vmatprep.mubr.bf16.mxu0 0
      %2841 = vmatmul.mubr.bf16.gmra.mrb[0].mxu0 %v2736
      %v2842 = vpop.f32.mrb[0].mxu0
      %v2843 = vadd.f32 0.0, %v2842
      %v2844 = vpop.f32.mrb[0].mxu0
      %v2845 = vpop.f32.mrb[0].mxu0
      %v2846 = vadd.f32 0.0, %v2845
      %v2847 = vpop.f32.mrb[0].mxu0
      %2848 = vmatprep.mubr.bf16.mxu0 0
      %2849 = vmatmul.mubr.bf16.gmra.mrb[0].mxu0 %v2739
      %v2850 = vpop.f32.mrb[0].mxu0
      %v2851 = vadd.f32 0.0, %v2850
      %v2852 = vpop.f32.mrb[0].mxu0
      %v2853 = vpop.f32.mrb[0].mxu0
      %v2854 = vadd.f32 0.0, %v2853
      %v2855 = vpop.f32.mrb[0].mxu0
      %2856 = vmatprep.mubr.bf16.mxu0 0
      %2857 = vmatmul.mubr.bf16.gmra.mrb[0].mxu0 %v2742
      %v2858 = vpop.f32.mrb[0].mxu0
      %v2859 = vadd.f32 0.0, %v2858
      %v2860 = vpop.f32.mrb[0].mxu0
      %v2861 = vpop.f32.mrb[0].mxu0
      %v2862 = vadd.f32 0.0, %v2861
      %v2863 = vpop.f32.mrb[0].mxu0
      %2864 = vmatprep.mubr.bf16.mxu0 0
      %2865 = vmatmul.mubr.bf16.gmra.mrb[0].mxu0 %v2745
      %v2866 = vpop.f32.mrb[0].mxu0
      %v2867 = vadd.f32 0.0, %v2866
      %v2868 = vpop.f32.mrb[0].mxu0
      %v2869 = vpop.f32.mrb[0].mxu0
      %v2870 = vadd.f32 0.0, %v2869
      %v2871 = vpop.f32.mrb[0].mxu0
      %2872 = vmatprep.mubr.bf16.mxu0 0
      %2873 = vmatmul.mubr.bf16.gmra.mrb[0].mxu0 %v2748
      %v2874 = vpop.f32.mrb[0].mxu0
      %v2875 = vadd.f32 0.0, %v2874
      %v2876 = vpop.f32.mrb[0].mxu0
      %v2877 = vpop.f32.mrb[0].mxu0
      %v2878 = vadd.f32 0.0, %v2877
      %v2879 = vpop.f32.mrb[0].mxu0
      %2880 = vmatprep.mubr.bf16.mxu0 0
      %2881 = vmatmul.mubr.bf16.gmra.mrb[0].mxu0 %v2751
      %v2882 = vpop.f32.mrb[0].mxu0
      %v2883 = vadd.f32 0.0, %v2882
      %v2884 = vpop.f32.mrb[0].mxu0
      %v2885 = vpop.f32.mrb[0].mxu0
      %v2886 = vadd.f32 0.0, %v2885
      %v2887 = vpop.f32.mrb[0].mxu0
      %2888 = vmatprep.mubr.bf16.mxu0 0
      %2889 = vmatmul.mubr.bf16.gmra.mrb[0].mxu0 %v2754
      %v2890 = vpop.f32.mrb[0].mxu0
      %v2891 = vadd.f32 0.0, %v2890
      %v2892 = vpop.f32.mrb[0].mxu0
      %v2893 = vpop.f32.mrb[0].mxu0
      %v2894 = vadd.f32 0.0, %v2893
      %v2895 = vpop.f32.mrb[0].mxu0
      %2896 = vmatprep.mubr.bf16.mxu0 0
      %2897 = vmatmul.mubr.bf16.gmra.mrb[0].mxu0 %v2757
      %v2898 = vpop.f32.mrb[0].mxu0
      %v2899 = vadd.f32 0.0, %v2898
      %v2900 = vpop.f32.mrb[0].mxu0
      %v2901 = vpop.f32.mrb[0].mxu0
      %v2902 = vadd.f32 0.0, %v2901
      %v2903 = vpop.f32.mrb[0].mxu0
      %2904 = vmatprep.mubr.bf16.mxu0 0
      %2905 = vmatmul.mubr.bf16.gmra.mrb[0].mxu0 %v2760
      %v2906 = vpop.f32.mrb[0].mxu0
      %v2907 = vadd.f32 0.0, %v2906
      %v2908 = vpop.f32.mrb[0].mxu0
      %v2909 = vpop.f32.mrb[0].mxu0
      %v2910 = vadd.f32 0.0, %v2909
      %v2911 = vpop.f32.mrb[0].mxu0
      %2912 = vmatprep.mubr.bf16.mxu0 0
      %2913 = vmatmul.mubr.bf16.gmra.mrb[0].mxu0 %v2763
      %v2914 = vpop.f32.mrb[0].mxu0
      %v2915 = vadd.f32 0.0, %v2914
      %v2916 = vpop.f32.mrb[0].mxu0
      %v2917 = vpop.f32.mrb[0].mxu0
      %v2918 = vadd.f32 0.0, %v2917
      %v2919 = vpop.f32.mrb[0].mxu0
      %2920 = vmatprep.mubr.bf16.mxu0 0
      %2921 = vmatmul.mubr.bf16.gmra.mrb[0].mxu0 %v2766
      %v2922 = vpop.f32.mrb[0].mxu0
      %v2923 = vadd.f32 0.0, %v2922
      %v2924 = vpop.f32.mrb[0].mxu0
      %v2925 = vpop.f32.mrb[0].mxu0
      %v2926 = vadd.f32 0.0, %v2925
      %v2927 = vpop.f32.mrb[0].mxu0
      %2928 = vdwg.mxu0
      %v2929 = vadd.f32 %v2654, %v2803
      %v2930 = vadd.f32 %v2655, %v2806
      %v2931 = vadd.f32 %v2656, %v2811
      %v2932 = vadd.f32 %v2657, %v2814
      %v2933 = vadd.f32 %v2658, %v2819
      %v2934 = vadd.f32 %v2659, %v2822
      %v2935 = vadd.f32 %v2660, %v2827
      %v2936 = vadd.f32 %v2661, %v2830
      %v2937 = vadd.f32 %v2662, %v2835
      %v2938 = vadd.f32 %v2663, %v2838
      %v2939 = vadd.f32 %v2664, %v2843
      %v2940 = vadd.f32 %v2665, %v2846
      %v2941 = vadd.f32 %v2666, %v2851
      %v2942 = vadd.f32 %v2667, %v2854
      %v2943 = vadd.f32 %v2668, %v2859
      %v2944 = vadd.f32 %v2669, %v2862
      %v2945 = vadd.f32 %v2670, %v2867
      %v2946 = vadd.f32 %v2671, %v2870
      %v2947 = vadd.f32 %v2672, %v2875
      %v2948 = vadd.f32 %v2673, %v2878
      %v2949 = vadd.f32 %v2674, %v2883
      %v2950 = vadd.f32 %v2675, %v2886
      %v2951 = vadd.f32 %v2676, %v2891
      %v2952 = vadd.f32 %v2677, %v2894
      %v2953 = vadd.f32 %v2678, %v2899
      %v2954 = vadd.f32 %v2679, %v2902
      %v2955 = vadd.f32 %v2680, %v2907
      %v2956 = vadd.f32 %v2681, %v2910
      %v2957 = vadd.f32 %v2682, %v2915
      %v2958 = vadd.f32 %v2683, %v2918
      %v2959 = vadd.f32 %v2684, %v2923
      %v2960 = vadd.f32 %v2685, %v2926
      %v2961 = vmax.f32 %v2929, 0.0
      %v2962 = vmax.f32 %v2930, 0.0
      %v2963 = vmax.f32 %v2931, 0.0
      %v2964 = vmax.f32 %v2932, 0.0
      %v2965 = vmax.f32 %v2933, 0.0
      %v2966 = vmax.f32 %v2934, 0.0
      %v2967 = vmax.f32 %v2935, 0.0
      %v2968 = vmax.f32 %v2936, 0.0
      %v2969 = vmax.f32 %v2937, 0.0
      %v2970 = vmax.f32 %v2938, 0.0
      %v2971 = vmax.f32 %v2939, 0.0
      %v2972 = vmax.f32 %v2940, 0.0
      %v2973 = vmax.f32 %v2941, 0.0
      %v2974 = vmax.f32 %v2942, 0.0
      %v2975 = vmax.f32 %v2943, 0.0
      %v2976 = vmax.f32 %v2944, 0.0
      %v2977 = vmax.f32 %v2945, 0.0
      %v2978 = vmax.f32 %v2946, 0.0
      %v2979 = vmax.f32 %v2947, 0.0
      %v2980 = vmax.f32 %v2948, 0.0
      %v2981 = vmax.f32 %v2949, 0.0
      %v2982 = vmax.f32 %v2950, 0.0
      %v2983 = vmax.f32 %v2951, 0.0
      %v2984 = vmax.f32 %v2952, 0.0
      %v2985 = vmax.f32 %v2953, 0.0
      %v2986 = vmax.f32 %v2954, 0.0
      %v2987 = vmax.f32 %v2955, 0.0
      %v2988 = vmax.f32 %v2956, 0.0
      %v2989 = vmax.f32 %v2957, 0.0
      %v2990 = vmax.f32 %v2958, 0.0
      %v2991 = vmax.f32 %v2959, 0.0
      %v2992 = vmax.f32 %v2960, 0.0
      %3025 = vrot.lane.b32.xlu0 %v2961, 16
      %v3026 = vpop.permute.xlu0 %3025
      %3027 = vrot.lane.b32.xlu0 %v2962, 16
      %v3028 = vpop.permute.xlu0 %3027
      %3029 = vrot.lane.b32.xlu0 %v2963, 16
      %v3030 = vpop.permute.xlu0 %3029
      %3031 = vrot.lane.b32.xlu0 %v2964, 16
      %v3032 = vpop.permute.xlu0 %3031
      %3033 = vrot.lane.b32.xlu0 %v2965, 16
      %v3034 = vpop.permute.xlu0 %3033
      %3035 = vrot.lane.b32.xlu0 %v2966, 16
      %v3036 = vpop.permute.xlu0 %3035
      %3037 = vrot.lane.b32.xlu0 %v2967, 16
      %v3038 = vpop.permute.xlu0 %3037
      %3039 = vrot.lane.b32.xlu0 %v2968, 16
      %v3040 = vpop.permute.xlu0 %3039
      %3041 = vrot.lane.b32.xlu0 %v2969, 16
      %v3042 = vpop.permute.xlu0 %3041
      %3043 = vrot.lane.b32.xlu0 %v2970, 16
      %v3044 = vpop.permute.xlu0 %3043
      %3045 = vrot.lane.b32.xlu0 %v2971, 16
      %v3046 = vpop.permute.xlu0 %3045
      %3047 = vrot.lane.b32.xlu0 %v2972, 16
      %v3048 = vpop.permute.xlu0 %3047
      %3049 = vrot.lane.b32.xlu0 %v2973, 16
      %v3050 = vpop.permute.xlu0 %3049
      %3051 = vrot.lane.b32.xlu0 %v2974, 16
      %v3052 = vpop.permute.xlu0 %3051
      %3053 = vrot.lane.b32.xlu0 %v2975, 16
      %v3054 = vpop.permute.xlu0 %3053
      %3055 = vrot.lane.b32.xlu0 %v2976, 16
      %v3056 = vpop.permute.xlu0 %3055
      %3057 = vrot.lane.b32.xlu0 %v2977, 16
      %v3058 = vpop.permute.xlu0 %3057
      %3059 = vrot.lane.b32.xlu0 %v2978, 16
      %v3060 = vpop.permute.xlu0 %3059
      %3061 = vrot.lane.b32.xlu0 %v2979, 16
      %v3062 = vpop.permute.xlu0 %3061
      %3063 = vrot.lane.b32.xlu0 %v2980, 16
      %v3064 = vpop.permute.xlu0 %3063
      %3065 = vrot.lane.b32.xlu0 %v2981, 16
      %v3066 = vpop.permute.xlu0 %3065
      %3067 = vrot.lane.b32.xlu0 %v2982, 16
      %v3068 = vpop.permute.xlu0 %3067
      %3069 = vrot.lane.b32.xlu0 %v2983, 16
      %v3070 = vpop.permute.xlu0 %3069
      %3071 = vrot.lane.b32.xlu0 %v2984, 16
      %v3072 = vpop.permute.xlu0 %3071
      %3073 = vrot.lane.b32.xlu0 %v2985, 16
      %v3074 = vpop.permute.xlu0 %3073
      %3075 = vrot.lane.b32.xlu0 %v2986, 16
      %v3076 = vpop.permute.xlu0 %3075
      %3077 = vrot.lane.b32.xlu0 %v2987, 16
      %v3078 = vpop.permute.xlu0 %3077
      %3079 = vrot.lane.b32.xlu0 %v2988, 16
      %v3080 = vpop.permute.xlu0 %3079
      %3081 = vrot.lane.b32.xlu0 %v2989, 16
      %v3082 = vpop.permute.xlu0 %3081
      %3083 = vrot.lane.b32.xlu0 %v2990, 16
      %v3084 = vpop.permute.xlu0 %3083
      %3085 = vrot.lane.b32.xlu0 %v2991, 16
      %v3086 = vpop.permute.xlu0 %3085
      %3087 = vrot.lane.b32.xlu0 %v2992, 16
      %v3088 = vpop.permute.xlu0 %3087
      %v3121 = vsel %vm1130, %v299, %v3026
      %v3122 = vsel %vm1130, %v300, %v3028
      %v3123 = vsel %vm1130, %v301, %v3030
      %v3124 = vsel %vm1130, %v302, %v3032
      %v3125 = vsel %vm1130, %v303, %v3034
      %v3126 = vsel %vm1130, %v304, %v3036
      %v3127 = vsel %vm1130, %v305, %v3038
      %v3128 = vsel %vm1130, %v306, %v3040
      %v3129 = vsel %vm1130, %v307, %v3042
      %v3130 = vsel %vm1130, %v308, %v3044
      %v3131 = vsel %vm1130, %v309, %v3046
      %v3132 = vsel %vm1130, %v310, %v3048
      %v3133 = vsel %vm1130, %v311, %v3050
      %v3134 = vsel %vm1130, %v312, %v3052
      %v3135 = vsel %vm1130, %v313, %v3054
      %v3136 = vsel %vm1130, %v314, %v3056
      %v3137 = vsel %vm1130, %v315, %v3058
      %v3138 = vsel %vm1130, %v316, %v3060
      %v3139 = vsel %vm1130, %v317, %v3062
      %v3140 = vsel %vm1130, %v318, %v3064
      %v3141 = vsel %vm1130, %v319, %v3066
      %v3142 = vsel %vm1130, %v320, %v3068
      %v3143 = vsel %vm1130, %v321, %v3070
      %v3144 = vsel %vm1130, %v322, %v3072
      %v3145 = vsel %vm1130, %v323, %v3074
      %v3146 = vsel %vm1130, %v324, %v3076
      %v3147 = vsel %vm1130, %v325, %v3078
      %v3148 = vsel %vm1130, %v326, %v3080
      %v3149 = vsel %vm1130, %v327, %v3082
      %v3150 = vsel %vm1130, %v328, %v3084
      %v3151 = vsel %vm1130, %v329, %v3086
      %v3152 = vsel %vm1130, %v330, %v3088
      %vm3153 = vcmask 261120
      %3154 = vst.msk [vmem:[%s278] sm:$0xff] %vm3153, %v3121
      %3155 = vst.msk [vmem:[%s278 + $0x8] sm:$0xff] %vm3153, %v3122
      %3156 = vst.msk [vmem:[%s278 + $0x10] sm:$0xff] %vm3153, %v3123
      %3157 = vst.msk [vmem:[%s278 + $0x18] sm:$0xff] %vm3153, %v3124
      %3158 = vst.msk [vmem:[%s278 + $0x20] sm:$0xff] %vm3153, %v3125
      %3159 = vst.msk [vmem:[%s278 + $0x28] sm:$0xff] %vm3153, %v3126
      %3160 = vst.msk [vmem:[%s278 + $0x30] sm:$0xff] %vm3153, %v3127
      %3161 = vst.msk [vmem:[%s278 + $0x38] sm:$0xff] %vm3153, %v3128
      %3162 = vst.msk [vmem:[%s278 + $0x40] sm:$0xff] %vm3153, %v3129
      %3163 = vst.msk [vmem:[%s278 + $0x48] sm:$0xff] %vm3153, %v3130
      %3164 = vst.msk [vmem:[%s278 + $0x50] sm:$0xff] %vm3153, %v3131
      %3165 = vst.msk [vmem:[%s278 + $0x58] sm:$0xff] %vm3153, %v3132
      %3166 = vst.msk [vmem:[%s278 + $0x60] sm:$0xff] %vm3153, %v3133
      %3167 = vst.msk [vmem:[%s278 + $0x68] sm:$0xff] %vm3153, %v3134
      %3168 = vst.msk [vmem:[%s278 + $0x70] sm:$0xff] %vm3153, %v3135
      %3169 = vst.msk [vmem:[%s278 + $0x78] sm:$0xff] %vm3153, %v3136
      %3170 = vst.msk [vmem:[%s278 + $0x80] sm:$0xff] %vm3153, %v3137
      %3171 = vst.msk [vmem:[%s278 + $0x88] sm:$0xff] %vm3153, %v3138
      %3172 = vst.msk [vmem:[%s278 + $0x90] sm:$0xff] %vm3153, %v3139
      %3173 = vst.msk [vmem:[%s278 + $0x98] sm:$0xff] %vm3153, %v3140
      %3174 = vst.msk [vmem:[%s278 + $0xa0] sm:$0xff] %vm3153, %v3141
      %3175 = vst.msk [vmem:[%s278 + $0xa8] sm:$0xff] %vm3153, %v3142
      %3176 = vst.msk [vmem:[%s278 + $0xb0] sm:$0xff] %vm3153, %v3143
      %3177 = vst.msk [vmem:[%s278 + $0xb8] sm:$0xff] %vm3153, %v3144
      %3178 = vst.msk [vmem:[%s278 + $0xc0] sm:$0xff] %vm3153, %v3145
      %3179 = vst.msk [vmem:[%s278 + $0xc8] sm:$0xff] %vm3153, %v3146
      %3180 = vst.msk [vmem:[%s278 + $0xd0] sm:$0xff] %vm3153, %v3147
      %3181 = vst.msk [vmem:[%s278 + $0xd8] sm:$0xff] %vm3153, %v3148
      %3182 = vst.msk [vmem:[%s278 + $0xe0] sm:$0xff] %vm3153, %v3149
      %3183 = vst.msk [vmem:[%s278 + $0xe8] sm:$0xff] %vm3153, %v3150
      %3184 = vst.msk [vmem:[%s278 + $0xf0] sm:$0xff] %vm3153, %v3151
      %3185 = vst.msk [vmem:[%s278 + $0xf8] sm:$0xff] %vm3153, %v3152
      loop: start=0, step=1, limit=5
      $region49: #{tpu_custom_call.1} parent=47 // loop_pre_header
        _
      $region50: #{tpu_custom_call.1} parent=47 // loop_header
        %s3187 = sphi 0, %s3191
        %p3188 = scmp.ge.s32.totalorder %s3187, 5
      $region51: #{tpu_custom_call.1} parent=47 // loop_header_branch
        %3190 = sbr.rel (%p3188) target = $region55
      $region52: #{tpu_custom_call.1} parent=47 // loop_body
        %s3192 = smul.u32 %s3187, 36
        %s3193 = smul.addr %s3192, 4
        %s3194 = scalar_lea.vmem %s3, %s3193
        %v3195 = vld [vmem:[%s3194] sm:$0xf]
        %v3196 = vld [vmem:[%s3194 + $0x4] sm:$0xf]
        %v3197 = vld [vmem:[%s3194 + $0x8] sm:$0xf]
        %v3198 = vld [vmem:[%s3194 + $0xc] sm:$0xf]
        %v3199 = vld [vmem:[%s3194 + $0x10] sm:$0xf]
        %v3200 = vld [vmem:[%s3194 + $0x14] sm:$0xf]
        %v3201 = vld [vmem:[%s3194 + $0x18] sm:$0xf]
        %v3202 = vld [vmem:[%s3194 + $0x1c] sm:$0xf]
        %v3203 = vld [vmem:[%s3194 + $0x20] sm:$0xf]
        %v3204 = vld [vmem:[%s3194 + $0x24] sm:$0xf]
        %v3205 = vld [vmem:[%s3194 + $0x28] sm:$0xf]
        %v3206 = vld [vmem:[%s3194 + $0x2c] sm:$0xf]
        %v3207 = vld [vmem:[%s3194 + $0x30] sm:$0xf]
        %v3208 = vld [vmem:[%s3194 + $0x34] sm:$0xf]
        %v3209 = vld [vmem:[%s3194 + $0x38] sm:$0xf]
        %v3210 = vld [vmem:[%s3194 + $0x3c] sm:$0xf]
        %v3211 = vld [vmem:[%s3194 + $0x40] sm:$0xf]
        %v3212 = vld [vmem:[%s3194 + $0x44] sm:$0xf]
        %v3213 = vld [vmem:[%s3194 + $0x48] sm:$0xf]
        %v3214 = vld [vmem:[%s3194 + $0x4c] sm:$0xf]
        %v3215 = vld [vmem:[%s3194 + $0x50] sm:$0xf]
        %v3216 = vld [vmem:[%s3194 + $0x54] sm:$0xf]
        %v3217 = vld [vmem:[%s3194 + $0x58] sm:$0xf]
        %v3218 = vld [vmem:[%s3194 + $0x5c] sm:$0xf]
        %v3219 = vld [vmem:[%s3194 + $0x60] sm:$0xf]
        %v3220 = vld [vmem:[%s3194 + $0x64] sm:$0xf]
        %v3221 = vld [vmem:[%s3194 + $0x68] sm:$0xf]
        %v3222 = vld [vmem:[%s3194 + $0x6c] sm:$0xf]
        %v3223 = vld [vmem:[%s3194 + $0x70] sm:$0xf]
        %v3224 = vld [vmem:[%s3194 + $0x74] sm:$0xf]
        %v3225 = vld [vmem:[%s3194 + $0x78] sm:$0xf]
        %v3226 = vld [vmem:[%s3194 + $0x7c] sm:$0xf]
        %v3227 = vld [vmem:[%s3194 + $0x80] sm:$0xf]
        %v3228 = vld [vmem:[%s3194 + $0x84] sm:$0xf]
        %v3229 = vld [vmem:[%s3194 + $0x88] sm:$0xf]
        %v3230 = vld [vmem:[%s3194 + $0x8c] sm:$0xf]
        %s3231 = scalar_lea.vmem %s4, %s3187
        %v3232 = vld [vmem:[%s3231] sm:$0x1]
        %s3233 = smul.addr %s3192, 4
        %s3234 = scalar_lea.vmem %s5, %s3233
        %v3235 = vld [vmem:[%s3234] sm:$0xf]
        %v3236 = vld [vmem:[%s3234 + $0x4] sm:$0xf]
        %v3237 = vld [vmem:[%s3234 + $0x8] sm:$0xf]
        %v3238 = vld [vmem:[%s3234 + $0xc] sm:$0xf]
        %v3239 = vld [vmem:[%s3234 + $0x10] sm:$0xf]
        %v3240 = vld [vmem:[%s3234 + $0x14] sm:$0xf]
        %v3241 = vld [vmem:[%s3234 + $0x18] sm:$0xf]
        %v3242 = vld [vmem:[%s3234 + $0x1c] sm:$0xf]
        %v3243 = vld [vmem:[%s3234 + $0x20] sm:$0xf]
        %v3244 = vld [vmem:[%s3234 + $0x24] sm:$0xf]
        %v3245 = vld [vmem:[%s3234 + $0x28] sm:$0xf]
        %v3246 = vld [vmem:[%s3234 + $0x2c] sm:$0xf]
        %v3247 = vld [vmem:[%s3234 + $0x30] sm:$0xf]
        %v3248 = vld [vmem:[%s3234 + $0x34] sm:$0xf]
        %v3249 = vld [vmem:[%s3234 + $0x38] sm:$0xf]
        %v3250 = vld [vmem:[%s3234 + $0x3c] sm:$0xf]
        %v3251 = vld [vmem:[%s3234 + $0x40] sm:$0xf]
        %v3252 = vld [vmem:[%s3234 + $0x44] sm:$0xf]
        %v3253 = vld [vmem:[%s3234 + $0x48] sm:$0xf]
        %v3254 = vld [vmem:[%s3234 + $0x4c] sm:$0xf]
        %v3255 = vld [vmem:[%s3234 + $0x50] sm:$0xf]
        %v3256 = vld [vmem:[%s3234 + $0x54] sm:$0xf]
        %v3257 = vld [vmem:[%s3234 + $0x58] sm:$0xf]
        %v3258 = vld [vmem:[%s3234 + $0x5c] sm:$0xf]
        %v3259 = vld [vmem:[%s3234 + $0x60] sm:$0xf]
        %v3260 = vld [vmem:[%s3234 + $0x64] sm:$0xf]
        %v3261 = vld [vmem:[%s3234 + $0x68] sm:$0xf]
        %v3262 = vld [vmem:[%s3234 + $0x6c] sm:$0xf]
        %v3263 = vld [vmem:[%s3234 + $0x70] sm:$0xf]
        %v3264 = vld [vmem:[%s3234 + $0x74] sm:$0xf]
        %v3265 = vld [vmem:[%s3234 + $0x78] sm:$0xf]
        %v3266 = vld [vmem:[%s3234 + $0x7c] sm:$0xf]
        %v3267 = vld [vmem:[%s3234 + $0x80] sm:$0xf]
        %v3268 = vld [vmem:[%s3234 + $0x84] sm:$0xf]
        %v3269 = vld [vmem:[%s3234 + $0x88] sm:$0xf]
        %v3270 = vld [vmem:[%s3234 + $0x8c] sm:$0xf]
        %s3271 = scalar_lea.vmem %s6, %s3187
        %v3272 = vld [vmem:[%s3271] sm:$0x1]
        %v3273 = vld [vmem:[%s278] sm:$0xff]
        %v3274 = vld [vmem:[%s278 + $0x8] sm:$0xff]
        %v3275 = vld [vmem:[%s278 + $0x10] sm:$0xff]
        %v3276 = vld [vmem:[%s278 + $0x18] sm:$0xff]
        %v3277 = vld [vmem:[%s278 + $0x20] sm:$0xff]
        %v3278 = vld [vmem:[%s278 + $0x28] sm:$0xff]
        %v3279 = vld [vmem:[%s278 + $0x30] sm:$0xff]
        %v3280 = vld [vmem:[%s278 + $0x38] sm:$0xff]
        %v3281 = vld [vmem:[%s278 + $0x40] sm:$0xff]
        %v3282 = vld [vmem:[%s278 + $0x48] sm:$0xff]
        %v3283 = vld [vmem:[%s278 + $0x50] sm:$0xff]
        %v3284 = vld [vmem:[%s278 + $0x58] sm:$0xff]
        %v3285 = vld [vmem:[%s278 + $0x60] sm:$0xff]
        %v3286 = vld [vmem:[%s278 + $0x68] sm:$0xff]
        %v3287 = vld [vmem:[%s278 + $0x70] sm:$0xff]
        %v3288 = vld [vmem:[%s278 + $0x78] sm:$0xff]
        %v3289 = vld [vmem:[%s278 + $0x80] sm:$0xff]
        %v3290 = vld [vmem:[%s278 + $0x88] sm:$0xff]
        %v3291 = vld [vmem:[%s278 + $0x90] sm:$0xff]
        %v3292 = vld [vmem:[%s278 + $0x98] sm:$0xff]
        %v3293 = vld [vmem:[%s278 + $0xa0] sm:$0xff]
        %v3294 = vld [vmem:[%s278 + $0xa8] sm:$0xff]
        %v3295 = vld [vmem:[%s278 + $0xb0] sm:$0xff]
        %v3296 = vld [vmem:[%s278 + $0xb8] sm:$0xff]
        %v3297 = vld [vmem:[%s278 + $0xc0] sm:$0xff]
        %v3298 = vld [vmem:[%s278 + $0xc8] sm:$0xff]
        %v3299 = vld [vmem:[%s278 + $0xd0] sm:$0xff]
        %v3300 = vld [vmem:[%s278 + $0xd8] sm:$0xff]
        %v3301 = vld [vmem:[%s278 + $0xe0] sm:$0xff]
        %v3302 = vld [vmem:[%s278 + $0xe8] sm:$0xff]
        %v3303 = vld [vmem:[%s278 + $0xf0] sm:$0xff]
        %v3304 = vld [vmem:[%s278 + $0xf8] sm:$0xff]
        %v3305 = vpack.c.bf16 %v3274, %v3273
        %v3306 = vpack.c.bf16 %v3276, %v3275
        %v3307 = vpack.c.bf16 %v3278, %v3277
        %v3308 = vpack.c.bf16 %v3280, %v3279
        %v3309 = vpack.c.bf16 %v3282, %v3281
        %v3310 = vpack.c.bf16 %v3284, %v3283
        %v3311 = vpack.c.bf16 %v3286, %v3285
        %v3312 = vpack.c.bf16 %v3288, %v3287
        %v3313 = vpack.c.bf16 %v3290, %v3289
        %v3314 = vpack.c.bf16 %v3292, %v3291
        %v3315 = vpack.c.bf16 %v3294, %v3293
        %v3316 = vpack.c.bf16 %v3296, %v3295
        %v3317 = vpack.c.bf16 %v3298, %v3297
        %v3318 = vpack.c.bf16 %v3300, %v3299
        %v3319 = vpack.c.bf16 %v3302, %v3301
        %v3320 = vpack.c.bf16 %v3304, %v3303
        %v3337 = vunpack.c.l.b16 %v3305
        %v3338 = vunpack.c.h.b16 %v3305
        %v3339 = vunpack.c.l.b16 %v3306
        %v3340 = vunpack.c.h.b16 %v3306
        %v3341 = vunpack.c.l.b16 %v3307
        %v3342 = vunpack.c.h.b16 %v3307
        %v3343 = vunpack.c.l.b16 %v3308
        %v3344 = vunpack.c.h.b16 %v3308
        %v3345 = vunpack.c.l.b16 %v3309
        %v3346 = vunpack.c.h.b16 %v3309
        %v3347 = vunpack.c.l.b16 %v3310
        %v3348 = vunpack.c.h.b16 %v3310
        %v3349 = vunpack.c.l.b16 %v3311
        %v3350 = vunpack.c.h.b16 %v3311
        %v3351 = vunpack.c.l.b16 %v3312
        %v3352 = vunpack.c.h.b16 %v3312
        %v3353 = vunpack.c.l.b16 %v3313
        %v3354 = vunpack.c.h.b16 %v3313
        %v3355 = vunpack.c.l.b16 %v3314
        %v3356 = vunpack.c.h.b16 %v3314
        %v3357 = vunpack.c.l.b16 %v3315
        %v3358 = vunpack.c.h.b16 %v3315
        %v3359 = vunpack.c.l.b16 %v3316
        %v3360 = vunpack.c.h.b16 %v3316
        %v3361 = vunpack.c.l.b16 %v3317
        %v3362 = vunpack.c.h.b16 %v3317
        %v3363 = vunpack.c.l.b16 %v3318
        %v3364 = vunpack.c.h.b16 %v3318
        %v3365 = vunpack.c.l.b16 %v3319
        %v3366 = vunpack.c.h.b16 %v3319
        %v3367 = vunpack.c.l.b16 %v3320
        %v3368 = vunpack.c.h.b16 %v3320
        %v3369 = vpack.c.b16 %v3337, %v3337
        %v3370 = vpack.c.b16 %v3338, %v3338
        %v3371 = vpack.c.b16 %v3339, %v3339
        %v3372 = vpack.c.b16 %v3340, %v3340
        %v3373 = vpack.c.b16 %v3341, %v3341
        %v3374 = vpack.c.b16 %v3342, %v3342
        %v3375 = vpack.c.b16 %v3343, %v3343
        %v3376 = vpack.c.b16 %v3344, %v3344
        %v3377 = vpack.c.b16 %v3345, %v3345
        %v3378 = vpack.c.b16 %v3346, %v3346
        %v3379 = vpack.c.b16 %v3347, %v3347
        %v3380 = vpack.c.b16 %v3348, %v3348
        %v3381 = vpack.c.b16 %v3349, %v3349
        %v3382 = vpack.c.b16 %v3350, %v3350
        %v3383 = vpack.c.b16 %v3351, %v3351
        %v3384 = vpack.c.b16 %v3352, %v3352
        %v3385 = vpack.c.b16 %v3353, %v3353
        %v3386 = vpack.c.b16 %v3354, %v3354
        %v3387 = vpack.c.b16 %v3355, %v3355
        %v3388 = vpack.c.b16 %v3356, %v3356
        %v3389 = vpack.c.b16 %v3357, %v3357
        %v3390 = vpack.c.b16 %v3358, %v3358
        %v3391 = vpack.c.b16 %v3359, %v3359
        %v3392 = vpack.c.b16 %v3360, %v3360
        %v3393 = vpack.c.b16 %v3361, %v3361
        %v3394 = vpack.c.b16 %v3362, %v3362
        %v3395 = vpack.c.b16 %v3363, %v3363
        %v3396 = vpack.c.b16 %v3364, %v3364
        %v3397 = vpack.c.b16 %v3365, %v3365
        %v3398 = vpack.c.b16 %v3366, %v3366
        %v3399 = vpack.c.b16 %v3367, %v3367
        %v3400 = vpack.c.b16 %v3368, %v3368
        %v3402 = vshrl.u32 %v3369, 16
        %v3404 = vrot.slane %v3402, 7
        %v3405 = vshll.u32 %v3369, 16
        %v3407 = vor.u32 %v3404, %v3405
        %v3408 = vrot.slane %v3404, 4
        %v3410 = vshrl.u32 %v3370, 16
        %v3412 = vrot.slane %v3410, 7
        %v3413 = vshll.u32 %v3370, 16
        %v3415 = vor.u32 %v3412, %v3413
        %v3416 = vsel %vm429, %v3408, %v3415
        %v3417 = vrot.slane %v3412, 4
        %v3419 = vshrl.u32 %v3371, 16
        %v3421 = vrot.slane %v3419, 7
        %v3422 = vshll.u32 %v3371, 16
        %v3424 = vor.u32 %v3421, %v3422
        %v3425 = vrot.slane %v3421, 4
        %v3427 = vshrl.u32 %v3372, 16
        %v3429 = vrot.slane %v3427, 7
        %v3430 = vshll.u32 %v3372, 16
        %v3432 = vor.u32 %v3429, %v3430
        %v3433 = vsel %vm429, %v3425, %v3432
        %v3434 = vrot.slane %v3429, 4
        %v3436 = vshrl.u32 %v3373, 16
        %v3438 = vrot.slane %v3436, 7
        %v3439 = vshll.u32 %v3373, 16
        %v3441 = vor.u32 %v3438, %v3439
        %v3442 = vrot.slane %v3438, 4
        %v3444 = vshrl.u32 %v3374, 16
        %v3446 = vrot.slane %v3444, 7
        %v3447 = vshll.u32 %v3374, 16
        %v3449 = vor.u32 %v3446, %v3447
        %v3450 = vsel %vm429, %v3442, %v3449
        %v3451 = vrot.slane %v3446, 4
        %v3453 = vshrl.u32 %v3375, 16
        %v3455 = vrot.slane %v3453, 7
        %v3456 = vshll.u32 %v3375, 16
        %v3458 = vor.u32 %v3455, %v3456
        %v3459 = vrot.slane %v3455, 4
        %v3461 = vshrl.u32 %v3376, 16
        %v3463 = vrot.slane %v3461, 7
        %v3464 = vshll.u32 %v3376, 16
        %v3466 = vor.u32 %v3463, %v3464
        %v3467 = vsel %vm429, %v3459, %v3466
        %v3468 = vrot.slane %v3463, 4
        %v3470 = vshrl.u32 %v3377, 16
        %v3472 = vrot.slane %v3470, 7
        %v3473 = vshll.u32 %v3377, 16
        %v3475 = vor.u32 %v3472, %v3473
        %v3476 = vrot.slane %v3472, 4
        %v3478 = vshrl.u32 %v3378, 16
        %v3480 = vrot.slane %v3478, 7
        %v3481 = vshll.u32 %v3378, 16
        %v3483 = vor.u32 %v3480, %v3481
        %v3484 = vsel %vm429, %v3476, %v3483
        %v3485 = vrot.slane %v3480, 4
        %v3487 = vshrl.u32 %v3379, 16
        %v3489 = vrot.slane %v3487, 7
        %v3490 = vshll.u32 %v3379, 16
        %v3492 = vor.u32 %v3489, %v3490
        %v3493 = vrot.slane %v3489, 4
        %v3495 = vshrl.u32 %v3380, 16
        %v3497 = vrot.slane %v3495, 7
        %v3498 = vshll.u32 %v3380, 16
        %v3500 = vor.u32 %v3497, %v3498
        %v3501 = vsel %vm429, %v3493, %v3500
        %v3502 = vrot.slane %v3497, 4
        %v3504 = vshrl.u32 %v3381, 16
        %v3506 = vrot.slane %v3504, 7
        %v3507 = vshll.u32 %v3381, 16
        %v3509 = vor.u32 %v3506, %v3507
        %v3510 = vrot.slane %v3506, 4
        %v3512 = vshrl.u32 %v3382, 16
        %v3514 = vrot.slane %v3512, 7
        %v3515 = vshll.u32 %v3382, 16
        %v3517 = vor.u32 %v3514, %v3515
        %v3518 = vsel %vm429, %v3510, %v3517
        %v3519 = vrot.slane %v3514, 4
        %v3521 = vshrl.u32 %v3383, 16
        %v3523 = vrot.slane %v3521, 7
        %v3524 = vshll.u32 %v3383, 16
        %v3526 = vor.u32 %v3523, %v3524
        %v3527 = vrot.slane %v3523, 4
        %v3529 = vshrl.u32 %v3384, 16
        %v3531 = vrot.slane %v3529, 7
        %v3532 = vshll.u32 %v3384, 16
        %v3534 = vor.u32 %v3531, %v3532
        %v3535 = vsel %vm429, %v3527, %v3534
        %v3536 = vrot.slane %v3531, 4
        %v3538 = vshrl.u32 %v3385, 16
        %v3540 = vrot.slane %v3538, 7
        %v3541 = vshll.u32 %v3385, 16
        %v3543 = vor.u32 %v3540, %v3541
        %v3544 = vrot.slane %v3540, 4
        %v3546 = vshrl.u32 %v3386, 16
        %v3548 = vrot.slane %v3546, 7
        %v3549 = vshll.u32 %v3386, 16
        %v3551 = vor.u32 %v3548, %v3549
        %v3552 = vsel %vm429, %v3544, %v3551
        %v3553 = vrot.slane %v3548, 4
        %v3555 = vshrl.u32 %v3387, 16
        %v3557 = vrot.slane %v3555, 7
        %v3558 = vshll.u32 %v3387, 16
        %v3560 = vor.u32 %v3557, %v3558
        %v3561 = vrot.slane %v3557, 4
        %v3563 = vshrl.u32 %v3388, 16
        %v3565 = vrot.slane %v3563, 7
        %v3566 = vshll.u32 %v3388, 16
        %v3568 = vor.u32 %v3565, %v3566
        %v3569 = vsel %vm429, %v3561, %v3568
        %v3570 = vrot.slane %v3565, 4
        %v3572 = vshrl.u32 %v3389, 16
        %v3574 = vrot.slane %v3572, 7
        %v3575 = vshll.u32 %v3389, 16
        %v3577 = vor.u32 %v3574, %v3575
        %v3578 = vrot.slane %v3574, 4
        %v3580 = vshrl.u32 %v3390, 16
        %v3582 = vrot.slane %v3580, 7
        %v3583 = vshll.u32 %v3390, 16
        %v3585 = vor.u32 %v3582, %v3583
        %v3586 = vsel %vm429, %v3578, %v3585
        %v3587 = vrot.slane %v3582, 4
        %v3589 = vshrl.u32 %v3391, 16
        %v3591 = vrot.slane %v3589, 7
        %v3592 = vshll.u32 %v3391, 16
        %v3594 = vor.u32 %v3591, %v3592
        %v3595 = vrot.slane %v3591, 4
        %v3597 = vshrl.u32 %v3392, 16
        %v3599 = vrot.slane %v3597, 7
        %v3600 = vshll.u32 %v3392, 16
        %v3602 = vor.u32 %v3599, %v3600
        %v3603 = vsel %vm429, %v3595, %v3602
        %v3604 = vrot.slane %v3599, 4
        %v3606 = vshrl.u32 %v3393, 16
        %v3608 = vrot.slane %v3606, 7
        %v3609 = vshll.u32 %v3393, 16
        %v3611 = vor.u32 %v3608, %v3609
        %v3612 = vrot.slane %v3608, 4
        %v3614 = vshrl.u32 %v3394, 16
        %v3616 = vrot.slane %v3614, 7
        %v3617 = vshll.u32 %v3394, 16
        %v3619 = vor.u32 %v3616, %v3617
        %v3620 = vsel %vm429, %v3612, %v3619
        %v3621 = vrot.slane %v3616, 4
        %v3623 = vshrl.u32 %v3395, 16
        %v3625 = vrot.slane %v3623, 7
        %v3626 = vshll.u32 %v3395, 16
        %v3628 = vor.u32 %v3625, %v3626
        %v3629 = vrot.slane %v3625, 4
        %v3631 = vshrl.u32 %v3396, 16
        %v3633 = vrot.slane %v3631, 7
        %v3634 = vshll.u32 %v3396, 16
        %v3636 = vor.u32 %v3633, %v3634
        %v3637 = vsel %vm429, %v3629, %v3636
        %v3638 = vrot.slane %v3633, 4
        %v3640 = vshrl.u32 %v3397, 16
        %v3642 = vrot.slane %v3640, 7
        %v3643 = vshll.u32 %v3397, 16
        %v3645 = vor.u32 %v3642, %v3643
        %v3646 = vrot.slane %v3642, 4
        %v3648 = vshrl.u32 %v3398, 16
        %v3650 = vrot.slane %v3648, 7
        %v3651 = vshll.u32 %v3398, 16
        %v3653 = vor.u32 %v3650, %v3651
        %v3654 = vsel %vm429, %v3646, %v3653
        %v3655 = vrot.slane %v3650, 4
        %v3657 = vshrl.u32 %v3399, 16
        %v3659 = vrot.slane %v3657, 7
        %v3660 = vshll.u32 %v3399, 16
        %v3662 = vor.u32 %v3659, %v3660
        %v3663 = vrot.slane %v3659, 4
        %v3665 = vshrl.u32 %v3400, 16
        %v3667 = vrot.slane %v3665, 7
        %v3668 = vshll.u32 %v3400, 16
        %v3670 = vor.u32 %v3667, %v3668
        %v3671 = vsel %vm429, %v3663, %v3670
        %v3672 = vrot.slane %v3667, 4
        %vm3721 = vcmask 257024
        %vm3722 = vmand %vm3721, %vm752
        %v3723 = vld [vmem:[%s750] sm:$0xf]
        %v3724 = vsel %vm3722, %v3407, %v3723
        %3725 = vst [vmem:[%s750] sm:$0xf] %v3724
        %vm3726 = vcmask 257024
        %3727 = vst.msk [vmem:[%s750 + $0x4] sm:$0xf] %vm3726, %v3416
        %vm3728 = vcmask 253952
        %vm3729 = vmand %vm3728, %vm427
        %v3730 = vld [vmem:[%s750 + $0x8] sm:$0x1]
        %v3731 = vsel %vm3729, %v3417, %v3730
        %3732 = vst [vmem:[%s750 + $0x8] sm:$0x1] %v3731
        %v3733 = vld [vmem:[%s750 + $0xc] sm:$0xf]
        %v3734 = vsel %vm3722, %v3424, %v3733
        %3735 = vst [vmem:[%s750 + $0xc] sm:$0xf] %v3734
        %3736 = vst.msk [vmem:[%s750 + $0x10] sm:$0xf] %vm3726, %v3433
        %v3737 = vld [vmem:[%s750 + $0x14] sm:$0x1]
        %v3738 = vsel %vm3729, %v3434, %v3737
        %3739 = vst [vmem:[%s750 + $0x14] sm:$0x1] %v3738
        %v3740 = vld [vmem:[%s750 + $0x18] sm:$0xf]
        %v3741 = vsel %vm3722, %v3441, %v3740
        %3742 = vst [vmem:[%s750 + $0x18] sm:$0xf] %v3741
        %3743 = vst.msk [vmem:[%s750 + $0x1c] sm:$0xf] %vm3726, %v3450
        %v3744 = vld [vmem:[%s750 + $0x20] sm:$0x1]
        %v3745 = vsel %vm3729, %v3451, %v3744
        %3746 = vst [vmem:[%s750 + $0x20] sm:$0x1] %v3745
        %v3747 = vld [vmem:[%s750 + $0x24] sm:$0xf]
        %v3748 = vsel %vm3722, %v3458, %v3747
        %3749 = vst [vmem:[%s750 + $0x24] sm:$0xf] %v3748
        %3750 = vst.msk [vmem:[%s750 + $0x28] sm:$0xf] %vm3726, %v3467
        %v3751 = vld [vmem:[%s750 + $0x2c] sm:$0x1]
        %v3752 = vsel %vm3729, %v3468, %v3751
        %3753 = vst [vmem:[%s750 + $0x2c] sm:$0x1] %v3752
        %v3754 = vld [vmem:[%s750 + $0x30] sm:$0xf]
        %v3755 = vsel %vm3722, %v3475, %v3754
        %3756 = vst [vmem:[%s750 + $0x30] sm:$0xf] %v3755
        %3757 = vst.msk [vmem:[%s750 + $0x34] sm:$0xf] %vm3726, %v3484
        %v3758 = vld [vmem:[%s750 + $0x38] sm:$0x1]
        %v3759 = vsel %vm3729, %v3485, %v3758
        %3760 = vst [vmem:[%s750 + $0x38] sm:$0x1] %v3759
        %v3761 = vld [vmem:[%s750 + $0x3c] sm:$0xf]
        %v3762 = vsel %vm3722, %v3492, %v3761
        %3763 = vst [vmem:[%s750 + $0x3c] sm:$0xf] %v3762
        %3764 = vst.msk [vmem:[%s750 + $0x40] sm:$0xf] %vm3726, %v3501
        %v3765 = vld [vmem:[%s750 + $0x44] sm:$0x1]
        %v3766 = vsel %vm3729, %v3502, %v3765
        %3767 = vst [vmem:[%s750 + $0x44] sm:$0x1] %v3766
        %v3768 = vld [vmem:[%s750 + $0x48] sm:$0xf]
        %v3769 = vsel %vm3722, %v3509, %v3768
        %3770 = vst [vmem:[%s750 + $0x48] sm:$0xf] %v3769
        %3771 = vst.msk [vmem:[%s750 + $0x4c] sm:$0xf] %vm3726, %v3518
        %v3772 = vld [vmem:[%s750 + $0x50] sm:$0x1]
        %v3773 = vsel %vm3729, %v3519, %v3772
        %3774 = vst [vmem:[%s750 + $0x50] sm:$0x1] %v3773
        %v3775 = vld [vmem:[%s750 + $0x54] sm:$0xf]
        %v3776 = vsel %vm3722, %v3526, %v3775
        %3777 = vst [vmem:[%s750 + $0x54] sm:$0xf] %v3776
        %3778 = vst.msk [vmem:[%s750 + $0x58] sm:$0xf] %vm3726, %v3535
        %v3779 = vld [vmem:[%s750 + $0x5c] sm:$0x1]
        %v3780 = vsel %vm3729, %v3536, %v3779
        %3781 = vst [vmem:[%s750 + $0x5c] sm:$0x1] %v3780
        %v3782 = vld [vmem:[%s750 + $0x60] sm:$0xf]
        %v3783 = vsel %vm3722, %v3543, %v3782
        %3784 = vst [vmem:[%s750 + $0x60] sm:$0xf] %v3783
        %3785 = vst.msk [vmem:[%s750 + $0x64] sm:$0xf] %vm3726, %v3552
        %v3786 = vld [vmem:[%s750 + $0x68] sm:$0x1]
        %v3787 = vsel %vm3729, %v3553, %v3786
        %3788 = vst [vmem:[%s750 + $0x68] sm:$0x1] %v3787
        %v3789 = vld [vmem:[%s750 + $0x6c] sm:$0xf]
        %v3790 = vsel %vm3722, %v3560, %v3789
        %3791 = vst [vmem:[%s750 + $0x6c] sm:$0xf] %v3790
        %3792 = vst.msk [vmem:[%s750 + $0x70] sm:$0xf] %vm3726, %v3569
        %v3793 = vld [vmem:[%s750 + $0x74] sm:$0x1]
        %v3794 = vsel %vm3729, %v3570, %v3793
        %3795 = vst [vmem:[%s750 + $0x74] sm:$0x1] %v3794
        %v3796 = vld [vmem:[%s750 + $0x78] sm:$0xf]
        %v3797 = vsel %vm3722, %v3577, %v3796
        %3798 = vst [vmem:[%s750 + $0x78] sm:$0xf] %v3797
        %3799 = vst.msk [vmem:[%s750 + $0x7c] sm:$0xf] %vm3726, %v3586
        %v3800 = vld [vmem:[%s750 + $0x80] sm:$0x1]
        %v3801 = vsel %vm3729, %v3587, %v3800
        %3802 = vst [vmem:[%s750 + $0x80] sm:$0x1] %v3801
        %v3803 = vld [vmem:[%s750 + $0x84] sm:$0xf]
        %v3804 = vsel %vm3722, %v3594, %v3803
        %3805 = vst [vmem:[%s750 + $0x84] sm:$0xf] %v3804
        %3806 = vst.msk [vmem:[%s750 + $0x88] sm:$0xf] %vm3726, %v3603
        %v3807 = vld [vmem:[%s750 + $0x8c] sm:$0x1]
        %v3808 = vsel %vm3729, %v3604, %v3807
        %3809 = vst [vmem:[%s750 + $0x8c] sm:$0x1] %v3808
        %v3810 = vld [vmem:[%s750 + $0x90] sm:$0xf]
        %v3811 = vsel %vm3722, %v3611, %v3810
        %3812 = vst [vmem:[%s750 + $0x90] sm:$0xf] %v3811
        %3813 = vst.msk [vmem:[%s750 + $0x94] sm:$0xf] %vm3726, %v3620
        %v3814 = vld [vmem:[%s750 + $0x98] sm:$0x1]
        %v3815 = vsel %vm3729, %v3621, %v3814
        %3816 = vst [vmem:[%s750 + $0x98] sm:$0x1] %v3815
        %v3817 = vld [vmem:[%s750 + $0x9c] sm:$0xf]
        %v3818 = vsel %vm3722, %v3628, %v3817
        %3819 = vst [vmem:[%s750 + $0x9c] sm:$0xf] %v3818
        %3820 = vst.msk [vmem:[%s750 + $0xa0] sm:$0xf] %vm3726, %v3637
        %v3821 = vld [vmem:[%s750 + $0xa4] sm:$0x1]
        %v3822 = vsel %vm3729, %v3638, %v3821
        %3823 = vst [vmem:[%s750 + $0xa4] sm:$0x1] %v3822
        %v3824 = vld [vmem:[%s750 + $0xa8] sm:$0xf]
        %v3825 = vsel %vm3722, %v3645, %v3824
        %3826 = vst [vmem:[%s750 + $0xa8] sm:$0xf] %v3825
        %3827 = vst.msk [vmem:[%s750 + $0xac] sm:$0xf] %vm3726, %v3654
        %v3828 = vld [vmem:[%s750 + $0xb0] sm:$0x1]
        %v3829 = vsel %vm3729, %v3655, %v3828
        %3830 = vst [vmem:[%s750 + $0xb0] sm:$0x1] %v3829
        %v3831 = vld [vmem:[%s750 + $0xb4] sm:$0xf]
        %v3832 = vsel %vm3722, %v3662, %v3831
        %3833 = vst [vmem:[%s750 + $0xb4] sm:$0xf] %v3832
        %3834 = vst.msk [vmem:[%s750 + $0xb8] sm:$0xf] %vm3726, %v3671
        %v3835 = vld [vmem:[%s750 + $0xbc] sm:$0x1]
        %v3836 = vsel %vm3729, %v3672, %v3835
        %3837 = vst [vmem:[%s750 + $0xbc] sm:$0x1] %v3836
        %v3838 = vld [vmem:[#allocation2] sm:$0xf]
        %v3839 = vsel %vm3722, %v3424, %v3838
        %3840 = vst [vmem:[#allocation2] sm:$0xf] %v3839
        %3841 = vst.msk [vmem:[#allocation2 + $0x4] sm:$0xf] %vm3726, %v3433
        %v3842 = vld [vmem:[#allocation2 + $0x8] sm:$0x1]
        %v3843 = vsel %vm3729, %v3434, %v3842
        %3844 = vst [vmem:[#allocation2 + $0x8] sm:$0x1] %v3843
        %v3845 = vld [vmem:[%s873] sm:$0xf]
        %v3846 = vsel %vm3722, %v3645, %v3845
        %3847 = vst [vmem:[%s873] sm:$0xf] %v3846
        %3848 = vst.msk [vmem:[%s873 + $0x4] sm:$0xf] %vm3726, %v3654
        %v3849 = vld [vmem:[%s873 + $0x8] sm:$0x1]
        %v3850 = vsel %vm3729, %v3655, %v3849
        %3851 = vst [vmem:[%s873 + $0x8] sm:$0x1] %v3850
        %v3852 = vld [vmem:[#allocation2] sm:$0x2]
        %v3853 = vld [vmem:[#allocation2 + $0xc] sm:$0x2]
        %v3854 = vld [vmem:[#allocation2 + $0x18] sm:$0x2]
        %v3855 = vld [vmem:[#allocation2 + $0x24] sm:$0x2]
        %v3856 = vld [vmem:[#allocation2 + $0x30] sm:$0x2]
        %v3857 = vld [vmem:[#allocation2 + $0x3c] sm:$0x2]
        %v3858 = vld [vmem:[#allocation2 + $0x48] sm:$0x2]
        %v3859 = vld [vmem:[#allocation2 + $0x54] sm:$0x2]
        %v3860 = vld [vmem:[#allocation2 + $0x60] sm:$0x2]
        %v3861 = vld [vmem:[#allocation2 + $0x6c] sm:$0x2]
        %v3862 = vld [vmem:[#allocation2 + $0x78] sm:$0x2]
        %v3863 = vld [vmem:[#allocation2 + $0x84] sm:$0x2]
        %v3864 = vld [vmem:[#allocation2 + $0x90] sm:$0x2]
        %v3865 = vld [vmem:[#allocation2 + $0x9c] sm:$0x2]
        %v3866 = vld [vmem:[#allocation2 + $0xa8] sm:$0x2]
        %v3867 = vld [vmem:[#allocation2 + $0xb4] sm:$0x2]
        %v3868 = vld [vmem:[#allocation2 + $0xc0] sm:$0x2]
        %v3869 = vld [vmem:[#allocation2 + $0xcc] sm:$0x2]
        %v3888 = vrot.slane %v3852, 5
        %v3889 = vrot.slane %v3888, 4
        %v3890 = vrot.slane %v3853, 5
        %v3891 = vrot.slane %v3890, 4
        %v3892 = vrot.slane %v3854, 5
        %v3893 = vrot.slane %v3892, 4
        %v3894 = vrot.slane %v3855, 5
        %v3895 = vrot.slane %v3894, 4
        %v3896 = vrot.slane %v3856, 5
        %v3897 = vrot.slane %v3896, 4
        %v3898 = vrot.slane %v3857, 5
        %v3899 = vrot.slane %v3898, 4
        %v3900 = vrot.slane %v3858, 5
        %v3901 = vrot.slane %v3900, 4
        %v3902 = vrot.slane %v3859, 5
        %v3903 = vrot.slane %v3902, 4
        %v3904 = vrot.slane %v3860, 5
        %v3905 = vrot.slane %v3904, 4
        %v3906 = vrot.slane %v3861, 5
        %v3907 = vrot.slane %v3906, 4
        %v3908 = vrot.slane %v3862, 5
        %v3909 = vrot.slane %v3908, 4
        %v3910 = vrot.slane %v3863, 5
        %v3911 = vrot.slane %v3910, 4
        %v3912 = vrot.slane %v3864, 5
        %v3913 = vrot.slane %v3912, 4
        %v3914 = vrot.slane %v3865, 5
        %v3915 = vrot.slane %v3914, 4
        %v3916 = vrot.slane %v3866, 5
        %v3917 = vrot.slane %v3916, 4
        %v3918 = vrot.slane %v3867, 5
        %v3919 = vrot.slane %v3918, 4
        %v3920 = vrot.slane %v3868, 5
        %v3921 = vrot.slane %v3920, 4
        %v3922 = vrot.slane %v3869, 5
        %v3923 = vrot.slane %v3922, 4
        %v3942 = vld [vmem:[#allocation2] sm:$0x1]
        %v3943 = vsel %vm3729, %v3889, %v3942
        %3944 = vst [vmem:[#allocation2] sm:$0x1] %v3943
        %v3945 = vld [vmem:[#allocation2 + $0xc] sm:$0x1]
        %v3946 = vsel %vm3729, %v3891, %v3945
        %3947 = vst [vmem:[#allocation2 + $0xc] sm:$0x1] %v3946
        %v3948 = vld [vmem:[#allocation2 + $0x18] sm:$0x1]
        %v3949 = vsel %vm3729, %v3893, %v3948
        %3950 = vst [vmem:[#allocation2 + $0x18] sm:$0x1] %v3949
        %v3951 = vld [vmem:[#allocation2 + $0x24] sm:$0x1]
        %v3952 = vsel %vm3729, %v3895, %v3951
        %3953 = vst [vmem:[#allocation2 + $0x24] sm:$0x1] %v3952
        %v3954 = vld [vmem:[#allocation2 + $0x30] sm:$0x1]
        %v3955 = vsel %vm3729, %v3897, %v3954
        %3956 = vst [vmem:[#allocation2 + $0x30] sm:$0x1] %v3955
        %v3957 = vld [vmem:[#allocation2 + $0x3c] sm:$0x1]
        %v3958 = vsel %vm3729, %v3899, %v3957
        %3959 = vst [vmem:[#allocation2 + $0x3c] sm:$0x1] %v3958
        %v3960 = vld [vmem:[#allocation2 + $0x48] sm:$0x1]
        %v3961 = vsel %vm3729, %v3901, %v3960
        %3962 = vst [vmem:[#allocation2 + $0x48] sm:$0x1] %v3961
        %v3963 = vld [vmem:[#allocation2 + $0x54] sm:$0x1]
        %v3964 = vsel %vm3729, %v3903, %v3963
        %3965 = vst [vmem:[#allocation2 + $0x54] sm:$0x1] %v3964
        %v3966 = vld [vmem:[#allocation2 + $0x60] sm:$0x1]
        %v3967 = vsel %vm3729, %v3905, %v3966
        %3968 = vst [vmem:[#allocation2 + $0x60] sm:$0x1] %v3967
        %v3969 = vld [vmem:[#allocation2 + $0x6c] sm:$0x1]
        %v3970 = vsel %vm3729, %v3907, %v3969
        %3971 = vst [vmem:[#allocation2 + $0x6c] sm:$0x1] %v3970
        %v3972 = vld [vmem:[#allocation2 + $0x78] sm:$0x1]
        %v3973 = vsel %vm3729, %v3909, %v3972
        %3974 = vst [vmem:[#allocation2 + $0x78] sm:$0x1] %v3973
        %v3975 = vld [vmem:[#allocation2 + $0x84] sm:$0x1]
        %v3976 = vsel %vm3729, %v3911, %v3975
        %3977 = vst [vmem:[#allocation2 + $0x84] sm:$0x1] %v3976
        %v3978 = vld [vmem:[#allocation2 + $0x90] sm:$0x1]
        %v3979 = vsel %vm3729, %v3913, %v3978
        %3980 = vst [vmem:[#allocation2 + $0x90] sm:$0x1] %v3979
        %v3981 = vld [vmem:[#allocation2 + $0x9c] sm:$0x1]
        %v3982 = vsel %vm3729, %v3915, %v3981
        %3983 = vst [vmem:[#allocation2 + $0x9c] sm:$0x1] %v3982
        %v3984 = vld [vmem:[#allocation2 + $0xa8] sm:$0x1]
        %v3985 = vsel %vm3729, %v3917, %v3984
        %3986 = vst [vmem:[#allocation2 + $0xa8] sm:$0x1] %v3985
        %v3987 = vld [vmem:[#allocation2 + $0xb4] sm:$0x1]
        %v3988 = vsel %vm3729, %v3919, %v3987
        %3989 = vst [vmem:[#allocation2 + $0xb4] sm:$0x1] %v3988
        %v3990 = vld [vmem:[#allocation2 + $0xc0] sm:$0x1]
        %v3991 = vsel %vm3729, %v3921, %v3990
        %3992 = vst [vmem:[#allocation2 + $0xc0] sm:$0x1] %v3991
        %v3993 = vld [vmem:[#allocation2 + $0xcc] sm:$0x1]
        %v3994 = vsel %vm3729, %v3923, %v3993
        %3995 = vst [vmem:[#allocation2 + $0xcc] sm:$0x1] %v3994
        %v3996 = vld [vmem:[#allocation2 + $0x4] sm:$0x8]
        %v3997 = vld [vmem:[#allocation2 + $0x10] sm:$0x8]
        %v3998 = vld [vmem:[#allocation2 + $0x1c] sm:$0x8]
        %v3999 = vld [vmem:[#allocation2 + $0x28] sm:$0x8]
        %v4000 = vld [vmem:[#allocation2 + $0x34] sm:$0x8]
        %v4001 = vld [vmem:[#allocation2 + $0x40] sm:$0x8]
        %v4002 = vld [vmem:[#allocation2 + $0x4c] sm:$0x8]
        %v4003 = vld [vmem:[#allocation2 + $0x58] sm:$0x8]
        %v4004 = vld [vmem:[#allocation2 + $0x64] sm:$0x8]
        %v4005 = vld [vmem:[#allocation2 + $0x70] sm:$0x8]
        %v4006 = vld [vmem:[#allocation2 + $0x7c] sm:$0x8]
        %v4007 = vld [vmem:[#allocation2 + $0x88] sm:$0x8]
        %v4008 = vld [vmem:[#allocation2 + $0x94] sm:$0x8]
        %v4009 = vld [vmem:[#allocation2 + $0xa0] sm:$0x8]
        %v4010 = vld [vmem:[#allocation2 + $0xac] sm:$0x8]
        %v4011 = vld [vmem:[#allocation2 + $0xb8] sm:$0x8]
        %v4012 = vld [vmem:[#allocation2 + $0xc4] sm:$0x8]
        %v4013 = vld [vmem:[#allocation2 + $0xd0] sm:$0x8]
        %v4032 = vrot.slane %v3996, 7
        %v4033 = vrot.slane %v4032, 4
        %v4034 = vrot.slane %v3997, 7
        %v4035 = vrot.slane %v4034, 4
        %v4036 = vrot.slane %v3998, 7
        %v4037 = vrot.slane %v4036, 4
        %v4038 = vrot.slane %v3999, 7
        %v4039 = vrot.slane %v4038, 4
        %v4040 = vrot.slane %v4000, 7
        %v4041 = vrot.slane %v4040, 4
        %v4042 = vrot.slane %v4001, 7
        %v4043 = vrot.slane %v4042, 4
        %v4044 = vrot.slane %v4002, 7
        %v4045 = vrot.slane %v4044, 4
        %v4046 = vrot.slane %v4003, 7
        %v4047 = vrot.slane %v4046, 4
        %v4048 = vrot.slane %v4004, 7
        %v4049 = vrot.slane %v4048, 4
        %v4050 = vrot.slane %v4005, 7
        %v4051 = vrot.slane %v4050, 4
        %v4052 = vrot.slane %v4006, 7
        %v4053 = vrot.slane %v4052, 4
        %v4054 = vrot.slane %v4007, 7
        %v4055 = vrot.slane %v4054, 4
        %v4056 = vrot.slane %v4008, 7
        %v4057 = vrot.slane %v4056, 4
        %v4058 = vrot.slane %v4009, 7
        %v4059 = vrot.slane %v4058, 4
        %v4060 = vrot.slane %v4010, 7
        %v4061 = vrot.slane %v4060, 4
        %v4062 = vrot.slane %v4011, 7
        %v4063 = vrot.slane %v4062, 4
        %v4064 = vrot.slane %v4012, 7
        %v4065 = vrot.slane %v4064, 4
        %v4066 = vrot.slane %v4013, 7
        %v4067 = vrot.slane %v4066, 4
        %vm4086 = vmand %vm3728, %vm752
        %v4087 = vld [vmem:[#allocation2 + $0x8] sm:$0x1]
        %v4088 = vsel %vm4086, %v4033, %v4087
        %4089 = vst [vmem:[#allocation2 + $0x8] sm:$0x1] %v4088
        %v4090 = vld [vmem:[#allocation2 + $0x14] sm:$0x1]
        %v4091 = vsel %vm4086, %v4035, %v4090
        %4092 = vst [vmem:[#allocation2 + $0x14] sm:$0x1] %v4091
        %v4093 = vld [vmem:[#allocation2 + $0x20] sm:$0x1]
        %v4094 = vsel %vm4086, %v4037, %v4093
        %4095 = vst [vmem:[#allocation2 + $0x20] sm:$0x1] %v4094
        %v4096 = vld [vmem:[#allocation2 + $0x2c] sm:$0x1]
        %v4097 = vsel %vm4086, %v4039, %v4096
        %4098 = vst [vmem:[#allocation2 + $0x2c] sm:$0x1] %v4097
        %v4099 = vld [vmem:[#allocation2 + $0x38] sm:$0x1]
        %v4100 = vsel %vm4086, %v4041, %v4099
        %4101 = vst [vmem:[#allocation2 + $0x38] sm:$0x1] %v4100
        %v4102 = vld [vmem:[#allocation2 + $0x44] sm:$0x1]
        %v4103 = vsel %vm4086, %v4043, %v4102
        %4104 = vst [vmem:[#allocation2 + $0x44] sm:$0x1] %v4103
        %v4105 = vld [vmem:[#allocation2 + $0x50] sm:$0x1]
        %v4106 = vsel %vm4086, %v4045, %v4105
        %4107 = vst [vmem:[#allocation2 + $0x50] sm:$0x1] %v4106
        %v4108 = vld [vmem:[#allocation2 + $0x5c] sm:$0x1]
        %v4109 = vsel %vm4086, %v4047, %v4108
        %4110 = vst [vmem:[#allocation2 + $0x5c] sm:$0x1] %v4109
        %v4111 = vld [vmem:[#allocation2 + $0x68] sm:$0x1]
        %v4112 = vsel %vm4086, %v4049, %v4111
        %4113 = vst [vmem:[#allocation2 + $0x68] sm:$0x1] %v4112
        %v4114 = vld [vmem:[#allocation2 + $0x74] sm:$0x1]
        %v4115 = vsel %vm4086, %v4051, %v4114
        %4116 = vst [vmem:[#allocation2 + $0x74] sm:$0x1] %v4115
        %v4117 = vld [vmem:[#allocation2 + $0x80] sm:$0x1]
        %v4118 = vsel %vm4086, %v4053, %v4117
        %4119 = vst [vmem:[#allocation2 + $0x80] sm:$0x1] %v4118
        %v4120 = vld [vmem:[#allocation2 + $0x8c] sm:$0x1]
        %v4121 = vsel %vm4086, %v4055, %v4120
        %4122 = vst [vmem:[#allocation2 + $0x8c] sm:$0x1] %v4121
        %v4123 = vld [vmem:[#allocation2 + $0x98] sm:$0x1]
        %v4124 = vsel %vm4086, %v4057, %v4123
        %4125 = vst [vmem:[#allocation2 + $0x98] sm:$0x1] %v4124
        %v4126 = vld [vmem:[#allocation2 + $0xa4] sm:$0x1]
        %v4127 = vsel %vm4086, %v4059, %v4126
        %4128 = vst [vmem:[#allocation2 + $0xa4] sm:$0x1] %v4127
        %v4129 = vld [vmem:[#allocation2 + $0xb0] sm:$0x1]
        %v4130 = vsel %vm4086, %v4061, %v4129
        %4131 = vst [vmem:[#allocation2 + $0xb0] sm:$0x1] %v4130
        %v4132 = vld [vmem:[#allocation2 + $0xbc] sm:$0x1]
        %v4133 = vsel %vm4086, %v4063, %v4132
        %4134 = vst [vmem:[#allocation2 + $0xbc] sm:$0x1] %v4133
        %v4135 = vld [vmem:[#allocation2 + $0xc8] sm:$0x1]
        %v4136 = vsel %vm4086, %v4065, %v4135
        %4137 = vst [vmem:[#allocation2 + $0xc8] sm:$0x1] %v4136
        %v4138 = vld [vmem:[#allocation2 + $0xd4] sm:$0x1]
        %v4139 = vsel %vm4086, %v4067, %v4138
        %4140 = vst [vmem:[#allocation2 + $0xd4] sm:$0x1] %v4139
        %v4141 = vld [vmem:[#allocation2] sm:$0xf]
        %v4142 = vld [vmem:[#allocation2 + $0x4] sm:$0xf]
        %v4143 = vld [vmem:[#allocation2 + $0xc] sm:$0xf]
        %v4144 = vld [vmem:[#allocation2 + $0x10] sm:$0xf]
        %v4145 = vld [vmem:[#allocation2 + $0x18] sm:$0xf]
        %v4146 = vld [vmem:[#allocation2 + $0x1c] sm:$0xf]
        %v4147 = vld [vmem:[#allocation2 + $0x24] sm:$0xf]
        %v4148 = vld [vmem:[#allocation2 + $0x28] sm:$0xf]
        %v4149 = vld [vmem:[#allocation2 + $0x30] sm:$0xf]
        %v4150 = vld [vmem:[#allocation2 + $0x34] sm:$0xf]
        %v4151 = vld [vmem:[#allocation2 + $0x3c] sm:$0xf]
        %v4152 = vld [vmem:[#allocation2 + $0x40] sm:$0xf]
        %v4153 = vld [vmem:[#allocation2 + $0x48] sm:$0xf]
        %v4154 = vld [vmem:[#allocation2 + $0x4c] sm:$0xf]
        %v4155 = vld [vmem:[#allocation2 + $0x54] sm:$0xf]
        %v4156 = vld [vmem:[#allocation2 + $0x58] sm:$0xf]
        %v4157 = vld [vmem:[#allocation2 + $0x60] sm:$0xf]
        %v4158 = vld [vmem:[#allocation2 + $0x64] sm:$0xf]
        %v4159 = vld [vmem:[#allocation2 + $0x6c] sm:$0xf]
        %v4160 = vld [vmem:[#allocation2 + $0x70] sm:$0xf]
        %v4161 = vld [vmem:[#allocation2 + $0x78] sm:$0xf]
        %v4162 = vld [vmem:[#allocation2 + $0x7c] sm:$0xf]
        %v4163 = vld [vmem:[#allocation2 + $0x84] sm:$0xf]
        %v4164 = vld [vmem:[#allocation2 + $0x88] sm:$0xf]
        %v4165 = vld [vmem:[#allocation2 + $0x90] sm:$0xf]
        %v4166 = vld [vmem:[#allocation2 + $0x94] sm:$0xf]
        %v4167 = vld [vmem:[#allocation2 + $0x9c] sm:$0xf]
        %v4168 = vld [vmem:[#allocation2 + $0xa0] sm:$0xf]
        %v4169 = vld [vmem:[#allocation2 + $0xa8] sm:$0xf]
        %v4170 = vld [vmem:[#allocation2 + $0xac] sm:$0xf]
        %v4171 = vld [vmem:[#allocation2 + $0xb4] sm:$0xf]
        %v4172 = vld [vmem:[#allocation2 + $0xb8] sm:$0xf]
        %v4173 = vld [vmem:[#allocation2 + $0xc0] sm:$0xf]
        %v4174 = vld [vmem:[#allocation2 + $0xc4] sm:$0xf]
        %v4175 = vld [vmem:[#allocation2 + $0xcc] sm:$0xf]
        %v4176 = vld [vmem:[#allocation2 + $0xd0] sm:$0xf]
        %v4213 = vunpack.c.l.b16 %v4141
        %v4214 = vunpack.c.l.b16 %v4142
        %v4215 = vunpack.c.l.b16 %v4143
        %v4216 = vunpack.c.l.b16 %v4144
        %v4217 = vunpack.c.l.b16 %v4145
        %v4218 = vunpack.c.l.b16 %v4146
        %v4219 = vunpack.c.l.b16 %v4147
        %v4220 = vunpack.c.l.b16 %v4148
        %v4221 = vunpack.c.l.b16 %v4149
        %v4222 = vunpack.c.l.b16 %v4150
        %v4223 = vunpack.c.l.b16 %v4151
        %v4224 = vunpack.c.l.b16 %v4152
        %v4225 = vunpack.c.l.b16 %v4153
        %v4226 = vunpack.c.l.b16 %v4154
        %v4227 = vunpack.c.l.b16 %v4155
        %v4228 = vunpack.c.l.b16 %v4156
        %v4229 = vunpack.c.l.b16 %v4157
        %v4230 = vunpack.c.l.b16 %v4158
        %v4231 = vunpack.c.l.b16 %v4159
        %v4232 = vunpack.c.l.b16 %v4160
        %v4233 = vunpack.c.l.b16 %v4161
        %v4234 = vunpack.c.l.b16 %v4162
        %v4235 = vunpack.c.l.b16 %v4163
        %v4236 = vunpack.c.l.b16 %v4164
        %v4237 = vunpack.c.l.b16 %v4165
        %v4238 = vunpack.c.l.b16 %v4166
        %v4239 = vunpack.c.l.b16 %v4167
        %v4240 = vunpack.c.l.b16 %v4168
        %v4241 = vunpack.c.l.b16 %v4169
        %v4242 = vunpack.c.l.b16 %v4170
        %v4243 = vunpack.c.l.b16 %v4171
        %v4244 = vunpack.c.l.b16 %v4172
        %v4245 = vunpack.c.l.b16 %v4173
        %v4246 = vunpack.c.l.b16 %v4174
        %v4247 = vunpack.c.l.b16 %v4175
        %v4248 = vunpack.c.l.b16 %v4176
        %v4249 = vpack.c.b16 %v4214, %v4213
        %v4250 = vpack.c.b16 %v4216, %v4215
        %v4251 = vpack.c.b16 %v4218, %v4217
        %v4252 = vpack.c.b16 %v4220, %v4219
        %v4253 = vpack.c.b16 %v4222, %v4221
        %v4254 = vpack.c.b16 %v4224, %v4223
        %v4255 = vpack.c.b16 %v4226, %v4225
        %v4256 = vpack.c.b16 %v4228, %v4227
        %v4257 = vpack.c.b16 %v4230, %v4229
        %v4258 = vpack.c.b16 %v4232, %v4231
        %v4259 = vpack.c.b16 %v4234, %v4233
        %v4260 = vpack.c.b16 %v4236, %v4235
        %v4261 = vpack.c.b16 %v4238, %v4237
        %v4262 = vpack.c.b16 %v4240, %v4239
        %v4263 = vpack.c.b16 %v4242, %v4241
        %v4264 = vpack.c.b16 %v4244, %v4243
        %v4265 = vpack.c.b16 %v4246, %v4245
        %v4266 = vpack.c.b16 %v4248, %v4247
        %4285 = vst.msk [vmem:[#allocation3] sm:$0xff] %vm3153, %v4249
        %4286 = vst.msk [vmem:[#allocation3 + $0x8] sm:$0xff] %vm3153, %v4250
        %4287 = vst.msk [vmem:[#allocation3 + $0x10] sm:$0xff] %vm3153, %v4251
        %4288 = vst.msk [vmem:[#allocation3 + $0x18] sm:$0xff] %vm3153, %v4252
        %4289 = vst.msk [vmem:[#allocation3 + $0x20] sm:$0xff] %vm3153, %v4253
        %4290 = vst.msk [vmem:[#allocation3 + $0x28] sm:$0xff] %vm3153, %v4254
        %4291 = vst.msk [vmem:[#allocation3 + $0x30] sm:$0xff] %vm3153, %v4255
        %4292 = vst.msk [vmem:[#allocation3 + $0x38] sm:$0xff] %vm3153, %v4256
        %4293 = vst.msk [vmem:[#allocation3 + $0x40] sm:$0xff] %vm3153, %v4257
        %4294 = vst.msk [vmem:[#allocation3 + $0x48] sm:$0xff] %vm3153, %v4258
        %4295 = vst.msk [vmem:[#allocation3 + $0x50] sm:$0xff] %vm3153, %v4259
        %4296 = vst.msk [vmem:[#allocation3 + $0x58] sm:$0xff] %vm3153, %v4260
        %4297 = vst.msk [vmem:[#allocation3 + $0x60] sm:$0xff] %vm3153, %v4261
        %4298 = vst.msk [vmem:[#allocation3 + $0x68] sm:$0xff] %vm3153, %v4262
        %4299 = vst.msk [vmem:[#allocation3 + $0x70] sm:$0xff] %vm3153, %v4263
        %4300 = vst.msk [vmem:[#allocation3 + $0x78] sm:$0xff] %vm3153, %v4264
        %4301 = vst.msk [vmem:[#allocation3 + $0x80] sm:$0xff] %vm3153, %v4265
        %4302 = vst.msk [vmem:[#allocation3 + $0x88] sm:$0xff] %vm3153, %v4266
        %v4303 = vld [vmem:[#allocation2] sm:$0xf]
        %v4304 = vld [vmem:[#allocation2 + $0x4] sm:$0xf]
        %v4305 = vld [vmem:[#allocation2 + $0x8] sm:$0x1]
        %v4306 = vld [vmem:[#allocation2 + $0xc] sm:$0xf]
        %v4307 = vld [vmem:[#allocation2 + $0x10] sm:$0xf]
        %v4308 = vld [vmem:[#allocation2 + $0x14] sm:$0x1]
        %v4309 = vld [vmem:[#allocation2 + $0x18] sm:$0xf]
        %v4310 = vld [vmem:[#allocation2 + $0x1c] sm:$0xf]
        %v4311 = vld [vmem:[#allocation2 + $0x20] sm:$0x1]
        %v4312 = vld [vmem:[#allocation2 + $0x24] sm:$0xf]
        %v4313 = vld [vmem:[#allocation2 + $0x28] sm:$0xf]
        %v4314 = vld [vmem:[#allocation2 + $0x2c] sm:$0x1]
        %v4315 = vld [vmem:[#allocation2 + $0x30] sm:$0xf]
        %v4316 = vld [vmem:[#allocation2 + $0x34] sm:$0xf]
        %v4317 = vld [vmem:[#allocation2 + $0x38] sm:$0x1]
        %v4318 = vld [vmem:[#allocation2 + $0x3c] sm:$0xf]
        %v4319 = vld [vmem:[#allocation2 + $0x40] sm:$0xf]
        %v4320 = vld [vmem:[#allocation2 + $0x44] sm:$0x1]
        %v4321 = vld [vmem:[#allocation2 + $0x48] sm:$0xf]
        %v4322 = vld [vmem:[#allocation2 + $0x4c] sm:$0xf]
        %v4323 = vld [vmem:[#allocation2 + $0x50] sm:$0x1]
        %v4324 = vld [vmem:[#allocation2 + $0x54] sm:$0xf]
        %v4325 = vld [vmem:[#allocation2 + $0x58] sm:$0xf]
        %v4326 = vld [vmem:[#allocation2 + $0x5c] sm:$0x1]
        %v4327 = vld [vmem:[#allocation2 + $0x60] sm:$0xf]
        %v4328 = vld [vmem:[#allocation2 + $0x64] sm:$0xf]
        %v4329 = vld [vmem:[#allocation2 + $0x68] sm:$0x1]
        %v4330 = vld [vmem:[#allocation2 + $0x6c] sm:$0xf]
        %v4331 = vld [vmem:[#allocation2 + $0x70] sm:$0xf]
        %v4332 = vld [vmem:[#allocation2 + $0x74] sm:$0x1]
        %v4333 = vld [vmem:[#allocation2 + $0x78] sm:$0xf]
        %v4334 = vld [vmem:[#allocation2 + $0x7c] sm:$0xf]
        %v4335 = vld [vmem:[#allocation2 + $0x80] sm:$0x1]
        %v4336 = vld [vmem:[#allocation2 + $0x84] sm:$0xf]
        %v4337 = vld [vmem:[#allocation2 + $0x88] sm:$0xf]
        %v4338 = vld [vmem:[#allocation2 + $0x8c] sm:$0x1]
        %v4339 = vld [vmem:[#allocation2 + $0x90] sm:$0xf]
        %v4340 = vld [vmem:[#allocation2 + $0x94] sm:$0xf]
        %v4341 = vld [vmem:[#allocation2 + $0x98] sm:$0x1]
        %v4342 = vld [vmem:[#allocation2 + $0x9c] sm:$0xf]
        %v4343 = vld [vmem:[#allocation2 + $0xa0] sm:$0xf]
        %v4344 = vld [vmem:[#allocation2 + $0xa4] sm:$0x1]
        %v4345 = vld [vmem:[#allocation2 + $0xa8] sm:$0xf]
        %v4346 = vld [vmem:[#allocation2 + $0xac] sm:$0xf]
        %v4347 = vld [vmem:[#allocation2 + $0xb0] sm:$0x1]
        %v4348 = vld [vmem:[#allocation2 + $0xb4] sm:$0xf]
        %v4349 = vld [vmem:[#allocation2 + $0xb8] sm:$0xf]
        %v4350 = vld [vmem:[#allocation2 + $0xbc] sm:$0x1]
        %v4351 = vld [vmem:[#allocation2 + $0xc0] sm:$0xf]
        %v4352 = vld [vmem:[#allocation2 + $0xc4] sm:$0xf]
        %v4353 = vld [vmem:[#allocation2 + $0xc8] sm:$0x1]
        %v4354 = vld [vmem:[#allocation2 + $0xcc] sm:$0xf]
        %v4355 = vld [vmem:[#allocation2 + $0xd0] sm:$0xf]
        %v4356 = vld [vmem:[#allocation2 + $0xd4] sm:$0x1]
        %v4358 = vshrl.u32 %v4303, 16
        %v4360 = vrot.slane %v4358, 4
        %v4361 = vshll.u32 %v4303, 16
        %v4363 = vrot.slane %v4361, 5
        %v4364 = vor.u32 %v4360, %v4363
        %v4365 = vrot.slane %v4364, 4
        %v4367 = vshll.u32 %v4304, 16
        %v4369 = vrot.slane %v4367, 5
        %v4370 = vsel %vm1205, %v4365, %v4369
        %v4371 = vshrl.u32 %v4304, 16
        %v4373 = vrot.slane %v4371, 4
        %v4374 = vor.u32 %v4373, %v4369
        %v4375 = vrot.slane %v4374, 4
        %v4377 = vshll.u32 %v4305, 16
        %v4379 = vrot.slane %v4377, 5
        %v4380 = vsel %vm1205, %v4375, %v4379
        %v4382 = vshrl.u32 %v4306, 16
        %v4384 = vrot.slane %v4382, 4
        %v4385 = vshll.u32 %v4306, 16
        %v4387 = vrot.slane %v4385, 5
        %v4388 = vor.u32 %v4384, %v4387
        %v4389 = vrot.slane %v4388, 4
        %v4391 = vshll.u32 %v4307, 16
        %v4393 = vrot.slane %v4391, 5
        %v4394 = vsel %vm1205, %v4389, %v4393
        %v4395 = vshrl.u32 %v4307, 16
        %v4397 = vrot.slane %v4395, 4
        %v4398 = vor.u32 %v4397, %v4393
        %v4399 = vrot.slane %v4398, 4
        %v4401 = vshll.u32 %v4308, 16
        %v4403 = vrot.slane %v4401, 5
        %v4404 = vsel %vm1205, %v4399, %v4403
        %v4406 = vshrl.u32 %v4309, 16
        %v4408 = vrot.slane %v4406, 4
        %v4409 = vshll.u32 %v4309, 16
        %v4411 = vrot.slane %v4409, 5
        %v4412 = vor.u32 %v4408, %v4411
        %v4413 = vrot.slane %v4412, 4
        %v4415 = vshll.u32 %v4310, 16
        %v4417 = vrot.slane %v4415, 5
        %v4418 = vsel %vm1205, %v4413, %v4417
        %v4419 = vshrl.u32 %v4310, 16
        %v4421 = vrot.slane %v4419, 4
        %v4422 = vor.u32 %v4421, %v4417
        %v4423 = vrot.slane %v4422, 4
        %v4425 = vshll.u32 %v4311, 16
        %v4427 = vrot.slane %v4425, 5
        %v4428 = vsel %vm1205, %v4423, %v4427
        %v4430 = vshrl.u32 %v4312, 16
        %v4432 = vrot.slane %v4430, 4
        %v4433 = vshll.u32 %v4312, 16
        %v4435 = vrot.slane %v4433, 5
        %v4436 = vor.u32 %v4432, %v4435
        %v4437 = vrot.slane %v4436, 4
        %v4439 = vshll.u32 %v4313, 16
        %v4441 = vrot.slane %v4439, 5
        %v4442 = vsel %vm1205, %v4437, %v4441
        %v4443 = vshrl.u32 %v4313, 16
        %v4445 = vrot.slane %v4443, 4
        %v4446 = vor.u32 %v4445, %v4441
        %v4447 = vrot.slane %v4446, 4
        %v4449 = vshll.u32 %v4314, 16
        %v4451 = vrot.slane %v4449, 5
        %v4452 = vsel %vm1205, %v4447, %v4451
        %v4454 = vshrl.u32 %v4315, 16
        %v4456 = vrot.slane %v4454, 4
        %v4457 = vshll.u32 %v4315, 16
        %v4459 = vrot.slane %v4457, 5
        %v4460 = vor.u32 %v4456, %v4459
        %v4461 = vrot.slane %v4460, 4
        %v4463 = vshll.u32 %v4316, 16
        %v4465 = vrot.slane %v4463, 5
        %v4466 = vsel %vm1205, %v4461, %v4465
        %v4467 = vshrl.u32 %v4316, 16
        %v4469 = vrot.slane %v4467, 4
        %v4470 = vor.u32 %v4469, %v4465
        %v4471 = vrot.slane %v4470, 4
        %v4473 = vshll.u32 %v4317, 16
        %v4475 = vrot.slane %v4473, 5
        %v4476 = vsel %vm1205, %v4471, %v4475
        %v4478 = vshrl.u32 %v4318, 16
        %v4480 = vrot.slane %v4478, 4
        %v4481 = vshll.u32 %v4318, 16
        %v4483 = vrot.slane %v4481, 5
        %v4484 = vor.u32 %v4480, %v4483
        %v4485 = vrot.slane %v4484, 4
        %v4487 = vshll.u32 %v4319, 16
        %v4489 = vrot.slane %v4487, 5
        %v4490 = vsel %vm1205, %v4485, %v4489
        %v4491 = vshrl.u32 %v4319, 16
        %v4493 = vrot.slane %v4491, 4
        %v4494 = vor.u32 %v4493, %v4489
        %v4495 = vrot.slane %v4494, 4
        %v4497 = vshll.u32 %v4320, 16
        %v4499 = vrot.slane %v4497, 5
        %v4500 = vsel %vm1205, %v4495, %v4499
        %v4502 = vshrl.u32 %v4321, 16
        %v4504 = vrot.slane %v4502, 4
        %v4505 = vshll.u32 %v4321, 16
        %v4507 = vrot.slane %v4505, 5
        %v4508 = vor.u32 %v4504, %v4507
        %v4509 = vrot.slane %v4508, 4
        %v4511 = vshll.u32 %v4322, 16
        %v4513 = vrot.slane %v4511, 5
        %v4514 = vsel %vm1205, %v4509, %v4513
        %v4515 = vshrl.u32 %v4322, 16
        %v4517 = vrot.slane %v4515, 4
        %v4518 = vor.u32 %v4517, %v4513
        %v4519 = vrot.slane %v4518, 4
        %v4521 = vshll.u32 %v4323, 16
        %v4523 = vrot.slane %v4521, 5
        %v4524 = vsel %vm1205, %v4519, %v4523
        %v4526 = vshrl.u32 %v4324, 16
        %v4528 = vrot.slane %v4526, 4
        %v4529 = vshll.u32 %v4324, 16
        %v4531 = vrot.slane %v4529, 5
        %v4532 = vor.u32 %v4528, %v4531
        %v4533 = vrot.slane %v4532, 4
        %v4535 = vshll.u32 %v4325, 16
        %v4537 = vrot.slane %v4535, 5
        %v4538 = vsel %vm1205, %v4533, %v4537
        %v4539 = vshrl.u32 %v4325, 16
        %v4541 = vrot.slane %v4539, 4
        %v4542 = vor.u32 %v4541, %v4537
        %v4543 = vrot.slane %v4542, 4
        %v4545 = vshll.u32 %v4326, 16
        %v4547 = vrot.slane %v4545, 5
        %v4548 = vsel %vm1205, %v4543, %v4547
        %v4550 = vshrl.u32 %v4327, 16
        %v4552 = vrot.slane %v4550, 4
        %v4553 = vshll.u32 %v4327, 16
        %v4555 = vrot.slane %v4553, 5
        %v4556 = vor.u32 %v4552, %v4555
        %v4557 = vrot.slane %v4556, 4
        %v4559 = vshll.u32 %v4328, 16
        %v4561 = vrot.slane %v4559, 5
        %v4562 = vsel %vm1205, %v4557, %v4561
        %v4563 = vshrl.u32 %v4328, 16
        %v4565 = vrot.slane %v4563, 4
        %v4566 = vor.u32 %v4565, %v4561
        %v4567 = vrot.slane %v4566, 4
        %v4569 = vshll.u32 %v4329, 16
        %v4571 = vrot.slane %v4569, 5
        %v4572 = vsel %vm1205, %v4567, %v4571
        %v4574 = vshrl.u32 %v4330, 16
        %v4576 = vrot.slane %v4574, 4
        %v4577 = vshll.u32 %v4330, 16
        %v4579 = vrot.slane %v4577, 5
        %v4580 = vor.u32 %v4576, %v4579
        %v4581 = vrot.slane %v4580, 4
        %v4583 = vshll.u32 %v4331, 16
        %v4585 = vrot.slane %v4583, 5
        %v4586 = vsel %vm1205, %v4581, %v4585
        %v4587 = vshrl.u32 %v4331, 16
        %v4589 = vrot.slane %v4587, 4
        %v4590 = vor.u32 %v4589, %v4585
        %v4591 = vrot.slane %v4590, 4
        %v4593 = vshll.u32 %v4332, 16
        %v4595 = vrot.slane %v4593, 5
        %v4596 = vsel %vm1205, %v4591, %v4595
        %v4598 = vshrl.u32 %v4333, 16
        %v4600 = vrot.slane %v4598, 4
        %v4601 = vshll.u32 %v4333, 16
        %v4603 = vrot.slane %v4601, 5
        %v4604 = vor.u32 %v4600, %v4603
        %v4605 = vrot.slane %v4604, 4
        %v4607 = vshll.u32 %v4334, 16
        %v4609 = vrot.slane %v4607, 5
        %v4610 = vsel %vm1205, %v4605, %v4609
        %v4611 = vshrl.u32 %v4334, 16
        %v4613 = vrot.slane %v4611, 4
        %v4614 = vor.u32 %v4613, %v4609
        %v4615 = vrot.slane %v4614, 4
        %v4617 = vshll.u32 %v4335, 16
        %v4619 = vrot.slane %v4617, 5
        %v4620 = vsel %vm1205, %v4615, %v4619
        %v4622 = vshrl.u32 %v4336, 16
        %v4624 = vrot.slane %v4622, 4
        %v4625 = vshll.u32 %v4336, 16
        %v4627 = vrot.slane %v4625, 5
        %v4628 = vor.u32 %v4624, %v4627
        %v4629 = vrot.slane %v4628, 4
        %v4631 = vshll.u32 %v4337, 16
        %v4633 = vrot.slane %v4631, 5
        %v4634 = vsel %vm1205, %v4629, %v4633
        %v4635 = vshrl.u32 %v4337, 16
        %v4637 = vrot.slane %v4635, 4
        %v4638 = vor.u32 %v4637, %v4633
        %v4639 = vrot.slane %v4638, 4
        %v4641 = vshll.u32 %v4338, 16
        %v4643 = vrot.slane %v4641, 5
        %v4644 = vsel %vm1205, %v4639, %v4643
        %v4646 = vshrl.u32 %v4339, 16
        %v4648 = vrot.slane %v4646, 4
        %v4649 = vshll.u32 %v4339, 16
        %v4651 = vrot.slane %v4649, 5
        %v4652 = vor.u32 %v4648, %v4651
        %v4653 = vrot.slane %v4652, 4
        %v4655 = vshll.u32 %v4340, 16
        %v4657 = vrot.slane %v4655, 5
        %v4658 = vsel %vm1205, %v4653, %v4657
        %v4659 = vshrl.u32 %v4340, 16
        %v4661 = vrot.slane %v4659, 4
        %v4662 = vor.u32 %v4661, %v4657
        %v4663 = vrot.slane %v4662, 4
        %v4665 = vshll.u32 %v4341, 16
        %v4667 = vrot.slane %v4665, 5
        %v4668 = vsel %vm1205, %v4663, %v4667
        %v4670 = vshrl.u32 %v4342, 16
        %v4672 = vrot.slane %v4670, 4
        %v4673 = vshll.u32 %v4342, 16
        %v4675 = vrot.slane %v4673, 5
        %v4676 = vor.u32 %v4672, %v4675
        %v4677 = vrot.slane %v4676, 4
        %v4679 = vshll.u32 %v4343, 16
        %v4681 = vrot.slane %v4679, 5
        %v4682 = vsel %vm1205, %v4677, %v4681
        %v4683 = vshrl.u32 %v4343, 16
        %v4685 = vrot.slane %v4683, 4
        %v4686 = vor.u32 %v4685, %v4681
        %v4687 = vrot.slane %v4686, 4
        %v4689 = vshll.u32 %v4344, 16
        %v4691 = vrot.slane %v4689, 5
        %v4692 = vsel %vm1205, %v4687, %v4691
        %v4694 = vshrl.u32 %v4345, 16
        %v4696 = vrot.slane %v4694, 4
        %v4697 = vshll.u32 %v4345, 16
        %v4699 = vrot.slane %v4697, 5
        %v4700 = vor.u32 %v4696, %v4699
        %v4701 = vrot.slane %v4700, 4
        %v4703 = vshll.u32 %v4346, 16
        %v4705 = vrot.slane %v4703, 5
        %v4706 = vsel %vm1205, %v4701, %v4705
        %v4707 = vshrl.u32 %v4346, 16
        %v4709 = vrot.slane %v4707, 4
        %v4710 = vor.u32 %v4709, %v4705
        %v4711 = vrot.slane %v4710, 4
        %v4713 = vshll.u32 %v4347, 16
        %v4715 = vrot.slane %v4713, 5
        %v4716 = vsel %vm1205, %v4711, %v4715
        %v4718 = vshrl.u32 %v4348, 16
        %v4720 = vrot.slane %v4718, 4
        %v4721 = vshll.u32 %v4348, 16
        %v4723 = vrot.slane %v4721, 5
        %v4724 = vor.u32 %v4720, %v4723
        %v4725 = vrot.slane %v4724, 4
        %v4727 = vshll.u32 %v4349, 16
        %v4729 = vrot.slane %v4727, 5
        %v4730 = vsel %vm1205, %v4725, %v4729
        %v4731 = vshrl.u32 %v4349, 16
        %v4733 = vrot.slane %v4731, 4
        %v4734 = vor.u32 %v4733, %v4729
        %v4735 = vrot.slane %v4734, 4
        %v4737 = vshll.u32 %v4350, 16
        %v4739 = vrot.slane %v4737, 5
        %v4740 = vsel %vm1205, %v4735, %v4739
        %v4742 = vshrl.u32 %v4351, 16
        %v4744 = vrot.slane %v4742, 4
        %v4745 = vshll.u32 %v4351, 16
        %v4747 = vrot.slane %v4745, 5
        %v4748 = vor.u32 %v4744, %v4747
        %v4749 = vrot.slane %v4748, 4
        %v4751 = vshll.u32 %v4352, 16
        %v4753 = vrot.slane %v4751, 5
        %v4754 = vsel %vm1205, %v4749, %v4753
        %v4755 = vshrl.u32 %v4352, 16
        %v4757 = vrot.slane %v4755, 4
        %v4758 = vor.u32 %v4757, %v4753
        %v4759 = vrot.slane %v4758, 4
        %v4761 = vshll.u32 %v4353, 16
        %v4763 = vrot.slane %v4761, 5
        %v4764 = vsel %vm1205, %v4759, %v4763
        %v4766 = vshrl.u32 %v4354, 16
        %v4768 = vrot.slane %v4766, 4
        %v4769 = vshll.u32 %v4354, 16
        %v4771 = vrot.slane %v4769, 5
        %v4772 = vor.u32 %v4768, %v4771
        %v4773 = vrot.slane %v4772, 4
        %v4775 = vshll.u32 %v4355, 16
        %v4777 = vrot.slane %v4775, 5
        %v4778 = vsel %vm1205, %v4773, %v4777
        %v4779 = vshrl.u32 %v4355, 16
        %v4781 = vrot.slane %v4779, 4
        %v4782 = vor.u32 %v4781, %v4777
        %v4783 = vrot.slane %v4782, 4
        %v4785 = vshll.u32 %v4356, 16
        %v4787 = vrot.slane %v4785, 5
        %v4788 = vsel %vm1205, %v4783, %v4787
        %v4789 = vunpack.c.l.b16 %v4370
        %v4790 = vunpack.c.l.b16 %v4380
        %v4791 = vunpack.c.l.b16 %v4394
        %v4792 = vunpack.c.l.b16 %v4404
        %v4793 = vunpack.c.l.b16 %v4418
        %v4794 = vunpack.c.l.b16 %v4428
        %v4795 = vunpack.c.l.b16 %v4442
        %v4796 = vunpack.c.l.b16 %v4452
        %v4797 = vunpack.c.l.b16 %v4466
        %v4798 = vunpack.c.l.b16 %v4476
        %v4799 = vunpack.c.l.b16 %v4490
        %v4800 = vunpack.c.l.b16 %v4500
        %v4801 = vunpack.c.l.b16 %v4514
        %v4802 = vunpack.c.l.b16 %v4524
        %v4803 = vunpack.c.l.b16 %v4538
        %v4804 = vunpack.c.l.b16 %v4548
        %v4805 = vunpack.c.l.b16 %v4562
        %v4806 = vunpack.c.l.b16 %v4572
        %v4807 = vunpack.c.l.b16 %v4586
        %v4808 = vunpack.c.l.b16 %v4596
        %v4809 = vunpack.c.l.b16 %v4610
        %v4810 = vunpack.c.l.b16 %v4620
        %v4811 = vunpack.c.l.b16 %v4634
        %v4812 = vunpack.c.l.b16 %v4644
        %v4813 = vunpack.c.l.b16 %v4658
        %v4814 = vunpack.c.l.b16 %v4668
        %v4815 = vunpack.c.l.b16 %v4682
        %v4816 = vunpack.c.l.b16 %v4692
        %v4817 = vunpack.c.l.b16 %v4706
        %v4818 = vunpack.c.l.b16 %v4716
        %v4819 = vunpack.c.l.b16 %v4730
        %v4820 = vunpack.c.l.b16 %v4740
        %v4821 = vunpack.c.l.b16 %v4754
        %v4822 = vunpack.c.l.b16 %v4764
        %v4823 = vunpack.c.l.b16 %v4778
        %v4824 = vunpack.c.l.b16 %v4788
        %v4825 = vpack.c.b16 %v4790, %v4789
        %v4826 = vpack.c.b16 %v4792, %v4791
        %v4827 = vpack.c.b16 %v4794, %v4793
        %v4828 = vpack.c.b16 %v4796, %v4795
        %v4829 = vpack.c.b16 %v4798, %v4797
        %v4830 = vpack.c.b16 %v4800, %v4799
        %v4831 = vpack.c.b16 %v4802, %v4801
        %v4832 = vpack.c.b16 %v4804, %v4803
        %v4833 = vpack.c.b16 %v4806, %v4805
        %v4834 = vpack.c.b16 %v4808, %v4807
        %v4835 = vpack.c.b16 %v4810, %v4809
        %v4836 = vpack.c.b16 %v4812, %v4811
        %v4837 = vpack.c.b16 %v4814, %v4813
        %v4838 = vpack.c.b16 %v4816, %v4815
        %v4839 = vpack.c.b16 %v4818, %v4817
        %v4840 = vpack.c.b16 %v4820, %v4819
        %v4841 = vpack.c.b16 %v4822, %v4821
        %v4842 = vpack.c.b16 %v4824, %v4823
        %4843 = vrot.lane.b32.xlu0 %v4825, 32
        %v4844 = vpop.permute.xlu0 %4843
        %4845 = vrot.lane.b32.xlu0 %v4826, 32
        %v4846 = vpop.permute.xlu0 %4845
        %4847 = vrot.lane.b32.xlu0 %v4827, 32
        %v4848 = vpop.permute.xlu0 %4847
        %4849 = vrot.lane.b32.xlu0 %v4828, 32
        %v4850 = vpop.permute.xlu0 %4849
        %4851 = vrot.lane.b32.xlu0 %v4829, 32
        %v4852 = vpop.permute.xlu0 %4851
        %4853 = vrot.lane.b32.xlu0 %v4830, 32
        %v4854 = vpop.permute.xlu0 %4853
        %4855 = vrot.lane.b32.xlu0 %v4831, 32
        %v4856 = vpop.permute.xlu0 %4855
        %4857 = vrot.lane.b32.xlu0 %v4832, 32
        %v4858 = vpop.permute.xlu0 %4857
        %4859 = vrot.lane.b32.xlu0 %v4833, 32
        %v4860 = vpop.permute.xlu0 %4859
        %4861 = vrot.lane.b32.xlu0 %v4834, 32
        %v4862 = vpop.permute.xlu0 %4861
        %4863 = vrot.lane.b32.xlu0 %v4835, 32
        %v4864 = vpop.permute.xlu0 %4863
        %4865 = vrot.lane.b32.xlu0 %v4836, 32
        %v4866 = vpop.permute.xlu0 %4865
        %4867 = vrot.lane.b32.xlu0 %v4837, 32
        %v4868 = vpop.permute.xlu0 %4867
        %4869 = vrot.lane.b32.xlu0 %v4838, 32
        %v4870 = vpop.permute.xlu0 %4869
        %4871 = vrot.lane.b32.xlu0 %v4839, 32
        %v4872 = vpop.permute.xlu0 %4871
        %4873 = vrot.lane.b32.xlu0 %v4840, 32
        %v4874 = vpop.permute.xlu0 %4873
        %4875 = vrot.lane.b32.xlu0 %v4841, 32
        %v4876 = vpop.permute.xlu0 %4875
        %4877 = vrot.lane.b32.xlu0 %v4842, 32
        %v4878 = vpop.permute.xlu0 %4877
        %vm4897 = vcmask 523520
        %4898 = vst.msk [vmem:[#allocation3] sm:$0xff] %vm4897, %v4844
        %4899 = vst.msk [vmem:[#allocation3 + $0x8] sm:$0xff] %vm4897, %v4846
        %4900 = vst.msk [vmem:[#allocation3 + $0x10] sm:$0xff] %vm4897, %v4848
        %4901 = vst.msk [vmem:[#allocation3 + $0x18] sm:$0xff] %vm4897, %v4850
        %4902 = vst.msk [vmem:[#allocation3 + $0x20] sm:$0xff] %vm4897, %v4852
        %4903 = vst.msk [vmem:[#allocation3 + $0x28] sm:$0xff] %vm4897, %v4854
        %4904 = vst.msk [vmem:[#allocation3 + $0x30] sm:$0xff] %vm4897, %v4856
        %4905 = vst.msk [vmem:[#allocation3 + $0x38] sm:$0xff] %vm4897, %v4858
        %4906 = vst.msk [vmem:[#allocation3 + $0x40] sm:$0xff] %vm4897, %v4860
        %4907 = vst.msk [vmem:[#allocation3 + $0x48] sm:$0xff] %vm4897, %v4862
        %4908 = vst.msk [vmem:[#allocation3 + $0x50] sm:$0xff] %vm4897, %v4864
        %4909 = vst.msk [vmem:[#allocation3 + $0x58] sm:$0xff] %vm4897, %v4866
        %4910 = vst.msk [vmem:[#allocation3 + $0x60] sm:$0xff] %vm4897, %v4868
        %4911 = vst.msk [vmem:[#allocation3 + $0x68] sm:$0xff] %vm4897, %v4870
        %4912 = vst.msk [vmem:[#allocation3 + $0x70] sm:$0xff] %vm4897, %v4872
        %4913 = vst.msk [vmem:[#allocation3 + $0x78] sm:$0xff] %vm4897, %v4874
        %4914 = vst.msk [vmem:[#allocation3 + $0x80] sm:$0xff] %vm4897, %v4876
        %4915 = vst.msk [vmem:[#allocation3 + $0x88] sm:$0xff] %vm4897, %v4878
        %v4916 = vld [vmem:[#allocation2] sm:$0xe]
        %v4917 = vld [vmem:[#allocation2 + $0x4] sm:$0xf]
        %v4918 = vld [vmem:[#allocation2 + $0x8] sm:$0x1]
        %v4919 = vld [vmem:[#allocation2 + $0xc] sm:$0xe]
        %v4920 = vld [vmem:[#allocation2 + $0x10] sm:$0xf]
        %v4921 = vld [vmem:[#allocation2 + $0x14] sm:$0x1]
        %v4922 = vld [vmem:[#allocation2 + $0x18] sm:$0xe]
        %v4923 = vld [vmem:[#allocation2 + $0x1c] sm:$0xf]
        %v4924 = vld [vmem:[#allocation2 + $0x20] sm:$0x1]
        %v4925 = vld [vmem:[#allocation2 + $0x24] sm:$0xe]
        %v4926 = vld [vmem:[#allocation2 + $0x28] sm:$0xf]
        %v4927 = vld [vmem:[#allocation2 + $0x2c] sm:$0x1]
        %v4928 = vld [vmem:[#allocation2 + $0x30] sm:$0xe]
        %v4929 = vld [vmem:[#allocation2 + $0x34] sm:$0xf]
        %v4930 = vld [vmem:[#allocation2 + $0x38] sm:$0x1]
        %v4931 = vld [vmem:[#allocation2 + $0x3c] sm:$0xe]
        %v4932 = vld [vmem:[#allocation2 + $0x40] sm:$0xf]
        %v4933 = vld [vmem:[#allocation2 + $0x44] sm:$0x1]
        %v4934 = vld [vmem:[#allocation2 + $0x48] sm:$0xe]
        %v4935 = vld [vmem:[#allocation2 + $0x4c] sm:$0xf]
        %v4936 = vld [vmem:[#allocation2 + $0x50] sm:$0x1]
        %v4937 = vld [vmem:[#allocation2 + $0x54] sm:$0xe]
        %v4938 = vld [vmem:[#allocation2 + $0x58] sm:$0xf]
        %v4939 = vld [vmem:[#allocation2 + $0x5c] sm:$0x1]
        %v4940 = vld [vmem:[#allocation2 + $0x60] sm:$0xe]
        %v4941 = vld [vmem:[#allocation2 + $0x64] sm:$0xf]
        %v4942 = vld [vmem:[#allocation2 + $0x68] sm:$0x1]
        %v4943 = vld [vmem:[#allocation2 + $0x6c] sm:$0xe]
        %v4944 = vld [vmem:[#allocation2 + $0x70] sm:$0xf]
        %v4945 = vld [vmem:[#allocation2 + $0x74] sm:$0x1]
        %v4946 = vld [vmem:[#allocation2 + $0x78] sm:$0xe]
        %v4947 = vld [vmem:[#allocation2 + $0x7c] sm:$0xf]
        %v4948 = vld [vmem:[#allocation2 + $0x80] sm:$0x1]
        %v4949 = vld [vmem:[#allocation2 + $0x84] sm:$0xe]
        %v4950 = vld [vmem:[#allocation2 + $0x88] sm:$0xf]
        %v4951 = vld [vmem:[#allocation2 + $0x8c] sm:$0x1]
        %v4952 = vld [vmem:[#allocation2 + $0x90] sm:$0xe]
        %v4953 = vld [vmem:[#allocation2 + $0x94] sm:$0xf]
        %v4954 = vld [vmem:[#allocation2 + $0x98] sm:$0x1]
        %v4955 = vld [vmem:[#allocation2 + $0x9c] sm:$0xe]
        %v4956 = vld [vmem:[#allocation2 + $0xa0] sm:$0xf]
        %v4957 = vld [vmem:[#allocation2 + $0xa4] sm:$0x1]
        %v4958 = vld [vmem:[#allocation2 + $0xa8] sm:$0xe]
        %v4959 = vld [vmem:[#allocation2 + $0xac] sm:$0xf]
        %v4960 = vld [vmem:[#allocation2 + $0xb0] sm:$0x1]
        %v4961 = vld [vmem:[#allocation2 + $0xb4] sm:$0xe]
        %v4962 = vld [vmem:[#allocation2 + $0xb8] sm:$0xf]
        %v4963 = vld [vmem:[#allocation2 + $0xbc] sm:$0x1]
        %v4964 = vld [vmem:[#allocation2 + $0xc0] sm:$0xe]
        %v4965 = vld [vmem:[#allocation2 + $0xc4] sm:$0xf]
        %v4966 = vld [vmem:[#allocation2 + $0xc8] sm:$0x1]
        %v4967 = vld [vmem:[#allocation2 + $0xcc] sm:$0xe]
        %v4968 = vld [vmem:[#allocation2 + $0xd0] sm:$0xf]
        %v4969 = vld [vmem:[#allocation2 + $0xd4] sm:$0x1]
        %v5024 = vrot.slane %v4916, 5
        %v5025 = vrot.slane %v5024, 4
        %v5026 = vrot.slane %v4917, 5
        %v5027 = vsel %vm1875, %v5025, %v5026
        %v5028 = vrot.slane %v5026, 4
        %v5029 = vrot.slane %v4918, 5
        %v5030 = vsel %vm1875, %v5028, %v5029
        %v5031 = vrot.slane %v4919, 5
        %v5032 = vrot.slane %v5031, 4
        %v5033 = vrot.slane %v4920, 5
        %v5034 = vsel %vm1875, %v5032, %v5033
        %v5035 = vrot.slane %v5033, 4
        %v5036 = vrot.slane %v4921, 5
        %v5037 = vsel %vm1875, %v5035, %v5036
        %v5038 = vrot.slane %v4922, 5
        %v5039 = vrot.slane %v5038, 4
        %v5040 = vrot.slane %v4923, 5
        %v5041 = vsel %vm1875, %v5039, %v5040
        %v5042 = vrot.slane %v5040, 4
        %v5043 = vrot.slane %v4924, 5
        %v5044 = vsel %vm1875, %v5042, %v5043
        %v5045 = vrot.slane %v4925, 5
        %v5046 = vrot.slane %v5045, 4
        %v5047 = vrot.slane %v4926, 5
        %v5048 = vsel %vm1875, %v5046, %v5047
        %v5049 = vrot.slane %v5047, 4
        %v5050 = vrot.slane %v4927, 5
        %v5051 = vsel %vm1875, %v5049, %v5050
        %v5052 = vrot.slane %v4928, 5
        %v5053 = vrot.slane %v5052, 4
        %v5054 = vrot.slane %v4929, 5
        %v5055 = vsel %vm1875, %v5053, %v5054
        %v5056 = vrot.slane %v5054, 4
        %v5057 = vrot.slane %v4930, 5
        %v5058 = vsel %vm1875, %v5056, %v5057
        %v5059 = vrot.slane %v4931, 5
        %v5060 = vrot.slane %v5059, 4
        %v5061 = vrot.slane %v4932, 5
        %v5062 = vsel %vm1875, %v5060, %v5061
        %v5063 = vrot.slane %v5061, 4
        %v5064 = vrot.slane %v4933, 5
        %v5065 = vsel %vm1875, %v5063, %v5064
        %v5066 = vrot.slane %v4934, 5
        %v5067 = vrot.slane %v5066, 4
        %v5068 = vrot.slane %v4935, 5
        %v5069 = vsel %vm1875, %v5067, %v5068
        %v5070 = vrot.slane %v5068, 4
        %v5071 = vrot.slane %v4936, 5
        %v5072 = vsel %vm1875, %v5070, %v5071
        %v5073 = vrot.slane %v4937, 5
        %v5074 = vrot.slane %v5073, 4
        %v5075 = vrot.slane %v4938, 5
        %v5076 = vsel %vm1875, %v5074, %v5075
        %v5077 = vrot.slane %v5075, 4
        %v5078 = vrot.slane %v4939, 5
        %v5079 = vsel %vm1875, %v5077, %v5078
        %v5080 = vrot.slane %v4940, 5
        %v5081 = vrot.slane %v5080, 4
        %v5082 = vrot.slane %v4941, 5
        %v5083 = vsel %vm1875, %v5081, %v5082
        %v5084 = vrot.slane %v5082, 4
        %v5085 = vrot.slane %v4942, 5
        %v5086 = vsel %vm1875, %v5084, %v5085
        %v5087 = vrot.slane %v4943, 5
        %v5088 = vrot.slane %v5087, 4
        %v5089 = vrot.slane %v4944, 5
        %v5090 = vsel %vm1875, %v5088, %v5089
        %v5091 = vrot.slane %v5089, 4
        %v5092 = vrot.slane %v4945, 5
        %v5093 = vsel %vm1875, %v5091, %v5092
        %v5094 = vrot.slane %v4946, 5
        %v5095 = vrot.slane %v5094, 4
        %v5096 = vrot.slane %v4947, 5
        %v5097 = vsel %vm1875, %v5095, %v5096
        %v5098 = vrot.slane %v5096, 4
        %v5099 = vrot.slane %v4948, 5
        %v5100 = vsel %vm1875, %v5098, %v5099
        %v5101 = vrot.slane %v4949, 5
        %v5102 = vrot.slane %v5101, 4
        %v5103 = vrot.slane %v4950, 5
        %v5104 = vsel %vm1875, %v5102, %v5103
        %v5105 = vrot.slane %v5103, 4
        %v5106 = vrot.slane %v4951, 5
        %v5107 = vsel %vm1875, %v5105, %v5106
        %v5108 = vrot.slane %v4952, 5
        %v5109 = vrot.slane %v5108, 4
        %v5110 = vrot.slane %v4953, 5
        %v5111 = vsel %vm1875, %v5109, %v5110
        %v5112 = vrot.slane %v5110, 4
        %v5113 = vrot.slane %v4954, 5
        %v5114 = vsel %vm1875, %v5112, %v5113
        %v5115 = vrot.slane %v4955, 5
        %v5116 = vrot.slane %v5115, 4
        %v5117 = vrot.slane %v4956, 5
        %v5118 = vsel %vm1875, %v5116, %v5117
        %v5119 = vrot.slane %v5117, 4
        %v5120 = vrot.slane %v4957, 5
        %v5121 = vsel %vm1875, %v5119, %v5120
        %v5122 = vrot.slane %v4958, 5
        %v5123 = vrot.slane %v5122, 4
        %v5124 = vrot.slane %v4959, 5
        %v5125 = vsel %vm1875, %v5123, %v5124
        %v5126 = vrot.slane %v5124, 4
        %v5127 = vrot.slane %v4960, 5
        %v5128 = vsel %vm1875, %v5126, %v5127
        %v5129 = vrot.slane %v4961, 5
        %v5130 = vrot.slane %v5129, 4
        %v5131 = vrot.slane %v4962, 5
        %v5132 = vsel %vm1875, %v5130, %v5131
        %v5133 = vrot.slane %v5131, 4
        %v5134 = vrot.slane %v4963, 5
        %v5135 = vsel %vm1875, %v5133, %v5134
        %v5136 = vrot.slane %v4964, 5
        %v5137 = vrot.slane %v5136, 4
        %v5138 = vrot.slane %v4965, 5
        %v5139 = vsel %vm1875, %v5137, %v5138
        %v5140 = vrot.slane %v5138, 4
        %v5141 = vrot.slane %v4966, 5
        %v5142 = vsel %vm1875, %v5140, %v5141
        %v5143 = vrot.slane %v4967, 5
        %v5144 = vrot.slane %v5143, 4
        %v5145 = vrot.slane %v4968, 5
        %v5146 = vsel %vm1875, %v5144, %v5145
        %v5147 = vrot.slane %v5145, 4
        %v5148 = vrot.slane %v4969, 5
        %v5149 = vsel %vm1875, %v5147, %v5148
        %v5150 = vunpack.c.l.b16 %v5027
        %v5151 = vunpack.c.l.b16 %v5030
        %v5152 = vunpack.c.l.b16 %v5034
        %v5153 = vunpack.c.l.b16 %v5037
        %v5154 = vunpack.c.l.b16 %v5041
        %v5155 = vunpack.c.l.b16 %v5044
        %v5156 = vunpack.c.l.b16 %v5048
        %v5157 = vunpack.c.l.b16 %v5051
        %v5158 = vunpack.c.l.b16 %v5055
        %v5159 = vunpack.c.l.b16 %v5058
        %v5160 = vunpack.c.l.b16 %v5062
        %v5161 = vunpack.c.l.b16 %v5065
        %v5162 = vunpack.c.l.b16 %v5069
        %v5163 = vunpack.c.l.b16 %v5072
        %v5164 = vunpack.c.l.b16 %v5076
        %v5165 = vunpack.c.l.b16 %v5079
        %v5166 = vunpack.c.l.b16 %v5083
        %v5167 = vunpack.c.l.b16 %v5086
        %v5168 = vunpack.c.l.b16 %v5090
        %v5169 = vunpack.c.l.b16 %v5093
        %v5170 = vunpack.c.l.b16 %v5097
        %v5171 = vunpack.c.l.b16 %v5100
        %v5172 = vunpack.c.l.b16 %v5104
        %v5173 = vunpack.c.l.b16 %v5107
        %v5174 = vunpack.c.l.b16 %v5111
        %v5175 = vunpack.c.l.b16 %v5114
        %v5176 = vunpack.c.l.b16 %v5118
        %v5177 = vunpack.c.l.b16 %v5121
        %v5178 = vunpack.c.l.b16 %v5125
        %v5179 = vunpack.c.l.b16 %v5128
        %v5180 = vunpack.c.l.b16 %v5132
        %v5181 = vunpack.c.l.b16 %v5135
        %v5182 = vunpack.c.l.b16 %v5139
        %v5183 = vunpack.c.l.b16 %v5142
        %v5184 = vunpack.c.l.b16 %v5146
        %v5185 = vunpack.c.l.b16 %v5149
        %v5186 = vpack.c.b16 %v5151, %v5150
        %v5187 = vpack.c.b16 %v5153, %v5152
        %v5188 = vpack.c.b16 %v5155, %v5154
        %v5189 = vpack.c.b16 %v5157, %v5156
        %v5190 = vpack.c.b16 %v5159, %v5158
        %v5191 = vpack.c.b16 %v5161, %v5160
        %v5192 = vpack.c.b16 %v5163, %v5162
        %v5193 = vpack.c.b16 %v5165, %v5164
        %v5194 = vpack.c.b16 %v5167, %v5166
        %v5195 = vpack.c.b16 %v5169, %v5168
        %v5196 = vpack.c.b16 %v5171, %v5170
        %v5197 = vpack.c.b16 %v5173, %v5172
        %v5198 = vpack.c.b16 %v5175, %v5174
        %v5199 = vpack.c.b16 %v5177, %v5176
        %v5200 = vpack.c.b16 %v5179, %v5178
        %v5201 = vpack.c.b16 %v5181, %v5180
        %v5202 = vpack.c.b16 %v5183, %v5182
        %v5203 = vpack.c.b16 %v5185, %v5184
        %5204 = vrot.lane.b32.xlu0 %v5186, 64
        %v5205 = vpop.permute.xlu0 %5204
        %5206 = vrot.lane.b32.xlu0 %v5187, 64
        %v5207 = vpop.permute.xlu0 %5206
        %5208 = vrot.lane.b32.xlu0 %v5188, 64
        %v5209 = vpop.permute.xlu0 %5208
        %5210 = vrot.lane.b32.xlu0 %v5189, 64
        %v5211 = vpop.permute.xlu0 %5210
        %5212 = vrot.lane.b32.xlu0 %v5190, 64
        %v5213 = vpop.permute.xlu0 %5212
        %5214 = vrot.lane.b32.xlu0 %v5191, 64
        %v5215 = vpop.permute.xlu0 %5214
        %5216 = vrot.lane.b32.xlu0 %v5192, 64
        %v5217 = vpop.permute.xlu0 %5216
        %5218 = vrot.lane.b32.xlu0 %v5193, 64
        %v5219 = vpop.permute.xlu0 %5218
        %5220 = vrot.lane.b32.xlu0 %v5194, 64
        %v5221 = vpop.permute.xlu0 %5220
        %5222 = vrot.lane.b32.xlu0 %v5195, 64
        %v5223 = vpop.permute.xlu0 %5222
        %5224 = vrot.lane.b32.xlu0 %v5196, 64
        %v5225 = vpop.permute.xlu0 %5224
        %5226 = vrot.lane.b32.xlu0 %v5197, 64
        %v5227 = vpop.permute.xlu0 %5226
        %5228 = vrot.lane.b32.xlu0 %v5198, 64
        %v5229 = vpop.permute.xlu0 %5228
        %5230 = vrot.lane.b32.xlu0 %v5199, 64
        %v5231 = vpop.permute.xlu0 %5230
        %5232 = vrot.lane.b32.xlu0 %v5200, 64
        %v5233 = vpop.permute.xlu0 %5232
        %5234 = vrot.lane.b32.xlu0 %v5201, 64
        %v5235 = vpop.permute.xlu0 %5234
        %5236 = vrot.lane.b32.xlu0 %v5202, 64
        %v5237 = vpop.permute.xlu0 %5236
        %5238 = vrot.lane.b32.xlu0 %v5203, 64
        %v5239 = vpop.permute.xlu0 %5238
        %vm5258 = vcmask 785920
        %5259 = vst.msk [vmem:[#allocation3] sm:$0xff] %vm5258, %v5205
        %5260 = vst.msk [vmem:[#allocation3 + $0x8] sm:$0xff] %vm5258, %v5207
        %5261 = vst.msk [vmem:[#allocation3 + $0x10] sm:$0xff] %vm5258, %v5209
        %5262 = vst.msk [vmem:[#allocation3 + $0x18] sm:$0xff] %vm5258, %v5211
        %5263 = vst.msk [vmem:[#allocation3 + $0x20] sm:$0xff] %vm5258, %v5213
        %5264 = vst.msk [vmem:[#allocation3 + $0x28] sm:$0xff] %vm5258, %v5215
        %5265 = vst.msk [vmem:[#allocation3 + $0x30] sm:$0xff] %vm5258, %v5217
        %5266 = vst.msk [vmem:[#allocation3 + $0x38] sm:$0xff] %vm5258, %v5219
        %5267 = vst.msk [vmem:[#allocation3 + $0x40] sm:$0xff] %vm5258, %v5221
        %5268 = vst.msk [vmem:[#allocation3 + $0x48] sm:$0xff] %vm5258, %v5223
        %5269 = vst.msk [vmem:[#allocation3 + $0x50] sm:$0xff] %vm5258, %v5225
        %5270 = vst.msk [vmem:[#allocation3 + $0x58] sm:$0xff] %vm5258, %v5227
        %5271 = vst.msk [vmem:[#allocation3 + $0x60] sm:$0xff] %vm5258, %v5229
        %5272 = vst.msk [vmem:[#allocation3 + $0x68] sm:$0xff] %vm5258, %v5231
        %5273 = vst.msk [vmem:[#allocation3 + $0x70] sm:$0xff] %vm5258, %v5233
        %5274 = vst.msk [vmem:[#allocation3 + $0x78] sm:$0xff] %vm5258, %v5235
        %5275 = vst.msk [vmem:[#allocation3 + $0x80] sm:$0xff] %vm5258, %v5237
        %5276 = vst.msk [vmem:[#allocation3 + $0x88] sm:$0xff] %vm5258, %v5239
        %v5277 = vld [vmem:[#allocation3] sm:$0xff]
        %v5278 = vld [vmem:[#allocation3 + $0x8] sm:$0xff]
        %v5279 = vld [vmem:[#allocation3 + $0x10] sm:$0xff]
        %v5280 = vld [vmem:[#allocation3 + $0x18] sm:$0xff]
        %v5281 = vld [vmem:[#allocation3 + $0x20] sm:$0xff]
        %v5282 = vld [vmem:[#allocation3 + $0x28] sm:$0xff]
        %v5283 = vld [vmem:[#allocation3 + $0x30] sm:$0xff]
        %v5284 = vld [vmem:[#allocation3 + $0x38] sm:$0xff]
        %v5285 = vld [vmem:[#allocation3 + $0x40] sm:$0xff]
        %v5286 = vld [vmem:[#allocation3 + $0x48] sm:$0xff]
        %v5287 = vld [vmem:[#allocation3 + $0x50] sm:$0xff]
        %v5288 = vld [vmem:[#allocation3 + $0x58] sm:$0xff]
        %v5289 = vld [vmem:[#allocation3 + $0x60] sm:$0xff]
        %v5290 = vld [vmem:[#allocation3 + $0x68] sm:$0xff]
        %v5291 = vld [vmem:[#allocation3 + $0x70] sm:$0xff]
        %v5292 = vld [vmem:[#allocation3 + $0x78] sm:$0xff]
        %v5305 = vunpack.c.l.b16 %v3195
        %v5306 = vunpack.c.l.b16 %v3196
        %v5307 = vunpack.c.l.b16 %v3197
        %v5308 = vunpack.c.l.b16 %v3198
        %v5309 = vunpack.c.l.b16 %v3199
        %v5310 = vunpack.c.l.b16 %v3200
        %v5311 = vunpack.c.l.b16 %v3201
        %v5312 = vunpack.c.l.b16 %v3202
        %v5313 = vunpack.c.l.b16 %v3203
        %v5314 = vunpack.c.l.b16 %v3204
        %v5315 = vunpack.c.l.b16 %v3205
        %v5316 = vunpack.c.l.b16 %v3206
        %v5317 = vpack.c.b16 %v5306, %v5305
        %v5318 = vpack.c.b16 %v5308, %v5307
        %v5319 = vpack.c.b16 %v5310, %v5309
        %v5320 = vpack.c.b16 %v5312, %v5311
        %v5321 = vpack.c.b16 %v5314, %v5313
        %v5322 = vpack.c.b16 %v5316, %v5315
        %vm5329 = vcmask 785408
        %v5331 = vsel %vm5329, %v5277, 0
        %v5334 = vsel %vm5329, %v5278, 0
        %v5337 = vsel %vm5329, %v5279, 0
        %v5340 = vsel %vm5329, %v5280, 0
        %v5343 = vsel %vm5329, %v5281, 0
        %v5346 = vsel %vm5329, %v5282, 0
        %v5349 = vsel %vm5329, %v5283, 0
        %v5352 = vsel %vm5329, %v5284, 0
        %v5355 = vsel %vm5329, %v5285, 0
        %v5358 = vsel %vm5329, %v5286, 0
        %v5361 = vsel %vm5329, %v5287, 0
        %v5364 = vsel %vm5329, %v5288, 0
        %v5367 = vsel %vm5329, %v5289, 0
        %v5370 = vsel %vm5329, %v5290, 0
        %v5373 = vsel %vm5329, %v5291, 0
        %v5376 = vsel %vm5329, %v5292, 0
        %5378 = vmatprep.subr.bf16.mxu0 0
        %5379 = vmatpush1.bf16.msra.mxu0 %v5317
        %5380 = vmatprep.subr.bf16.mxu0 0
        %5381 = vmatpush1.bf16.msra.mxu0 %v5318
        %5382 = vmatprep.subr.bf16.mxu0 0
        %5383 = vmatpush1.bf16.msra.mxu0 %v5319
        %5384 = vmatprep.subr.bf16.mxu0 0
        %5385 = vmatpush1.bf16.msra.mxu0 %v5320
        %5386 = vmatprep.subr.bf16.mxu0 0
        %5387 = vmatpush1.bf16.msra.mxu0 %v5321
        %5388 = vmatprep.subr.bf16.mxu0 0
        %5389 = vmatpush1.bf16.msra.mxu0 %v5322
        %5390 = vmatprep.subr.bf16.mxu0 0
        %5391 = vmatpush1.bf16.msra.mxu0 0
        %5392 = vmatprep.subr.bf16.mxu0 0
        %5393 = vmatpush1.bf16.msra.mxu0 0
        %5394 = vmatprep.subr.bf16.mxu0 0
        %5395 = vmatpush1.bf16.msra.mxu0 0
        %5396 = vmatprep.subr.bf16.mxu0 0
        %5397 = vmatpush1.bf16.msra.mxu0 0
        %5398 = vmatprep.subr.bf16.mxu0 0
        %5399 = vmatpush1.bf16.msra.mxu0 0
        %5400 = vmatprep.subr.bf16.mxu0 0
        %5401 = vmatpush1.bf16.msra.mxu0 0
        %5402 = vmatprep.subr.bf16.mxu0 0
        %5403 = vmatpush1.bf16.msra.mxu0 0
        %5404 = vmatprep.subr.bf16.mxu0 0
        %5405 = vmatpush1.bf16.msra.mxu0 0
        %5406 = vmatprep.subr.bf16.mxu0 0
        %5407 = vmatpush1.bf16.msra.mxu0 0
        %5408 = vmatprep.subr.bf16.mxu0 0
        %5409 = vmatpush1.bf16.msra.mxu0 0
        %5410 = vmatprep.mubr.bf16.mxu0 0
        %5411 = vmatmul.mubr.bf16.gmra.mrb[0].mxu0 %v5331
        %v5412 = vpop.f32.mrb[0].mxu0
        %v5413 = vadd.f32 0.0, %v5412
        %v5414 = vpop.f32.mrb[0].mxu0
        %v5415 = vpop.f32.mrb[0].mxu0
        %v5416 = vadd.f32 0.0, %v5415
        %v5417 = vpop.f32.mrb[0].mxu0
        %5418 = vmatprep.mubr.bf16.mxu0 0
        %5419 = vmatmul.mubr.bf16.gmra.mrb[0].mxu0 %v5334
        %v5420 = vpop.f32.mrb[0].mxu0
        %v5421 = vadd.f32 0.0, %v5420
        %v5422 = vpop.f32.mrb[0].mxu0
        %v5423 = vpop.f32.mrb[0].mxu0
        %v5424 = vadd.f32 0.0, %v5423
        %v5425 = vpop.f32.mrb[0].mxu0
        %5426 = vmatprep.mubr.bf16.mxu0 0
        %5427 = vmatmul.mubr.bf16.gmra.mrb[0].mxu0 %v5337
        %v5428 = vpop.f32.mrb[0].mxu0
        %v5429 = vadd.f32 0.0, %v5428
        %v5430 = vpop.f32.mrb[0].mxu0
        %v5431 = vpop.f32.mrb[0].mxu0
        %v5432 = vadd.f32 0.0, %v5431
        %v5433 = vpop.f32.mrb[0].mxu0
        %5434 = vmatprep.mubr.bf16.mxu0 0
        %5435 = vmatmul.mubr.bf16.gmra.mrb[0].mxu0 %v5340
        %v5436 = vpop.f32.mrb[0].mxu0
        %v5437 = vadd.f32 0.0, %v5436
        %v5438 = vpop.f32.mrb[0].mxu0
        %v5439 = vpop.f32.mrb[0].mxu0
        %v5440 = vadd.f32 0.0, %v5439
        %v5441 = vpop.f32.mrb[0].mxu0
        %5442 = vmatprep.mubr.bf16.mxu0 0
        %5443 = vmatmul.mubr.bf16.gmra.mrb[0].mxu0 %v5343
        %v5444 = vpop.f32.mrb[0].mxu0
        %v5445 = vadd.f32 0.0, %v5444
        %v5446 = vpop.f32.mrb[0].mxu0
        %v5447 = vpop.f32.mrb[0].mxu0
        %v5448 = vadd.f32 0.0, %v5447
        %v5449 = vpop.f32.mrb[0].mxu0
        %5450 = vmatprep.mubr.bf16.mxu0 0
        %5451 = vmatmul.mubr.bf16.gmra.mrb[0].mxu0 %v5346
        %v5452 = vpop.f32.mrb[0].mxu0
        %v5453 = vadd.f32 0.0, %v5452
        %v5454 = vpop.f32.mrb[0].mxu0
        %v5455 = vpop.f32.mrb[0].mxu0
        %v5456 = vadd.f32 0.0, %v5455
        %v5457 = vpop.f32.mrb[0].mxu0
        %5458 = vmatprep.mubr.bf16.mxu0 0
        %5459 = vmatmul.mubr.bf16.gmra.mrb[0].mxu0 %v5349
        %v5460 = vpop.f32.mrb[0].mxu0
        %v5461 = vadd.f32 0.0, %v5460
        %v5462 = vpop.f32.mrb[0].mxu0
        %v5463 = vpop.f32.mrb[0].mxu0
        %v5464 = vadd.f32 0.0, %v5463
        %v5465 = vpop.f32.mrb[0].mxu0
        %5466 = vmatprep.mubr.bf16.mxu0 0
        %5467 = vmatmul.mubr.bf16.gmra.mrb[0].mxu0 %v5352
        %v5468 = vpop.f32.mrb[0].mxu0
        %v5469 = vadd.f32 0.0, %v5468
        %v5470 = vpop.f32.mrb[0].mxu0
        %v5471 = vpop.f32.mrb[0].mxu0
        %v5472 = vadd.f32 0.0, %v5471
        %v5473 = vpop.f32.mrb[0].mxu0
        %5474 = vmatprep.mubr.bf16.mxu0 0
        %5475 = vmatmul.mubr.bf16.gmra.mrb[0].mxu0 %v5355
        %v5476 = vpop.f32.mrb[0].mxu0
        %v5477 = vadd.f32 0.0, %v5476
        %v5478 = vpop.f32.mrb[0].mxu0
        %v5479 = vpop.f32.mrb[0].mxu0
        %v5480 = vadd.f32 0.0, %v5479
        %v5481 = vpop.f32.mrb[0].mxu0
        %5482 = vmatprep.mubr.bf16.mxu0 0
        %5483 = vmatmul.mubr.bf16.gmra.mrb[0].mxu0 %v5358
        %v5484 = vpop.f32.mrb[0].mxu0
        %v5485 = vadd.f32 0.0, %v5484
        %v5486 = vpop.f32.mrb[0].mxu0
        %v5487 = vpop.f32.mrb[0].mxu0
        %v5488 = vadd.f32 0.0, %v5487
        %v5489 = vpop.f32.mrb[0].mxu0
        %5490 = vmatprep.mubr.bf16.mxu0 0
        %5491 = vmatmul.mubr.bf16.gmra.mrb[0].mxu0 %v5361
        %v5492 = vpop.f32.mrb[0].mxu0
        %v5493 = vadd.f32 0.0, %v5492
        %v5494 = vpop.f32.mrb[0].mxu0
        %v5495 = vpop.f32.mrb[0].mxu0
        %v5496 = vadd.f32 0.0, %v5495
        %v5497 = vpop.f32.mrb[0].mxu0
        %5498 = vmatprep.mubr.bf16.mxu0 0
        %5499 = vmatmul.mubr.bf16.gmra.mrb[0].mxu0 %v5364
        %v5500 = vpop.f32.mrb[0].mxu0
        %v5501 = vadd.f32 0.0, %v5500
        %v5502 = vpop.f32.mrb[0].mxu0
        %v5503 = vpop.f32.mrb[0].mxu0
        %v5504 = vadd.f32 0.0, %v5503
        %v5505 = vpop.f32.mrb[0].mxu0
        %5506 = vmatprep.mubr.bf16.mxu0 0
        %5507 = vmatmul.mubr.bf16.gmra.mrb[0].mxu0 %v5367
        %v5508 = vpop.f32.mrb[0].mxu0
        %v5509 = vadd.f32 0.0, %v5508
        %v5510 = vpop.f32.mrb[0].mxu0
        %v5511 = vpop.f32.mrb[0].mxu0
        %v5512 = vadd.f32 0.0, %v5511
        %v5513 = vpop.f32.mrb[0].mxu0
        %5514 = vmatprep.mubr.bf16.mxu0 0
        %5515 = vmatmul.mubr.bf16.gmra.mrb[0].mxu0 %v5370
        %v5516 = vpop.f32.mrb[0].mxu0
        %v5517 = vadd.f32 0.0, %v5516
        %v5518 = vpop.f32.mrb[0].mxu0
        %v5519 = vpop.f32.mrb[0].mxu0
        %v5520 = vadd.f32 0.0, %v5519
        %v5521 = vpop.f32.mrb[0].mxu0
        %5522 = vmatprep.mubr.bf16.mxu0 0
        %5523 = vmatmul.mubr.bf16.gmra.mrb[0].mxu0 %v5373
        %v5524 = vpop.f32.mrb[0].mxu0
        %v5525 = vadd.f32 0.0, %v5524
        %v5526 = vpop.f32.mrb[0].mxu0
        %v5527 = vpop.f32.mrb[0].mxu0
        %v5528 = vadd.f32 0.0, %v5527
        %v5529 = vpop.f32.mrb[0].mxu0
        %5530 = vmatprep.mubr.bf16.mxu0 0
        %5531 = vmatmul.mubr.bf16.gmra.mrb[0].mxu0 %v5376
        %v5532 = vpop.f32.mrb[0].mxu0
        %v5533 = vadd.f32 0.0, %v5532
        %v5534 = vpop.f32.mrb[0].mxu0
        %v5535 = vpop.f32.mrb[0].mxu0
        %v5536 = vadd.f32 0.0, %v5535
        %v5537 = vpop.f32.mrb[0].mxu0
        %5538 = vdwg.mxu0
        %v5540 = vlaneseq
        %v5541 = vshrl.u32 %v5540, 7
        %v5542 = vsub.s32 0, %v5541
        %v5543 = vrot.slane %v3232, %v5542
        %v5545 = vadd.f32 %v5543, %v5413
        %v5546 = vadd.f32 %v5543, %v5416
        %v5547 = vadd.f32 %v5543, %v5421
        %v5548 = vadd.f32 %v5543, %v5424
        %v5549 = vadd.f32 %v5543, %v5429
        %v5550 = vadd.f32 %v5543, %v5432
        %v5551 = vadd.f32 %v5543, %v5437
        %v5552 = vadd.f32 %v5543, %v5440
        %v5553 = vadd.f32 %v5543, %v5445
        %v5554 = vadd.f32 %v5543, %v5448
        %v5555 = vadd.f32 %v5543, %v5453
        %v5556 = vadd.f32 %v5543, %v5456
        %v5557 = vadd.f32 %v5543, %v5461
        %v5558 = vadd.f32 %v5543, %v5464
        %v5559 = vadd.f32 %v5543, %v5469
        %v5560 = vadd.f32 %v5543, %v5472
        %v5561 = vadd.f32 %v5543, %v5477
        %v5562 = vadd.f32 %v5543, %v5480
        %v5563 = vadd.f32 %v5543, %v5485
        %v5564 = vadd.f32 %v5543, %v5488
        %v5565 = vadd.f32 %v5543, %v5493
        %v5566 = vadd.f32 %v5543, %v5496
        %v5567 = vadd.f32 %v5543, %v5501
        %v5568 = vadd.f32 %v5543, %v5504
        %v5569 = vadd.f32 %v5543, %v5509
        %v5570 = vadd.f32 %v5543, %v5512
        %v5571 = vadd.f32 %v5543, %v5517
        %v5572 = vadd.f32 %v5543, %v5520
        %v5573 = vadd.f32 %v5543, %v5525
        %v5574 = vadd.f32 %v5543, %v5528
        %v5575 = vadd.f32 %v5543, %v5533
        %v5576 = vadd.f32 %v5543, %v5536
        %v5577 = vld [vmem:[#allocation3 + $0x8] sm:$0xff]
        %v5578 = vld [vmem:[#allocation3 + $0x10] sm:$0xff]
        %v5579 = vld [vmem:[#allocation3 + $0x18] sm:$0xff]
        %v5580 = vld [vmem:[#allocation3 + $0x20] sm:$0xff]
        %v5581 = vld [vmem:[#allocation3 + $0x28] sm:$0xff]
        %v5582 = vld [vmem:[#allocation3 + $0x30] sm:$0xff]
        %v5583 = vld [vmem:[#allocation3 + $0x38] sm:$0xff]
        %v5584 = vld [vmem:[#allocation3 + $0x40] sm:$0xff]
        %v5585 = vld [vmem:[#allocation3 + $0x48] sm:$0xff]
        %v5586 = vld [vmem:[#allocation3 + $0x50] sm:$0xff]
        %v5587 = vld [vmem:[#allocation3 + $0x58] sm:$0xff]
        %v5588 = vld [vmem:[#allocation3 + $0x60] sm:$0xff]
        %v5589 = vld [vmem:[#allocation3 + $0x68] sm:$0xff]
        %v5590 = vld [vmem:[#allocation3 + $0x70] sm:$0xff]
        %v5591 = vld [vmem:[#allocation3 + $0x78] sm:$0xff]
        %v5592 = vld [vmem:[#allocation3 + $0x80] sm:$0xff]
        %v5605 = vunpack.c.l.b16 %v3207
        %v5606 = vunpack.c.l.b16 %v3208
        %v5607 = vunpack.c.l.b16 %v3209
        %v5608 = vunpack.c.l.b16 %v3210
        %v5609 = vunpack.c.l.b16 %v3211
        %v5610 = vunpack.c.l.b16 %v3212
        %v5611 = vunpack.c.l.b16 %v3213
        %v5612 = vunpack.c.l.b16 %v3214
        %v5613 = vunpack.c.l.b16 %v3215
        %v5614 = vunpack.c.l.b16 %v3216
        %v5615 = vunpack.c.l.b16 %v3217
        %v5616 = vunpack.c.l.b16 %v3218
        %v5617 = vpack.c.b16 %v5606, %v5605
        %v5618 = vpack.c.b16 %v5608, %v5607
        %v5619 = vpack.c.b16 %v5610, %v5609
        %v5620 = vpack.c.b16 %v5612, %v5611
        %v5621 = vpack.c.b16 %v5614, %v5613
        %v5622 = vpack.c.b16 %v5616, %v5615
        %v5630 = vsel %vm5329, %v5577, 0
        %v5633 = vsel %vm5329, %v5578, 0
        %v5636 = vsel %vm5329, %v5579, 0
        %v5639 = vsel %vm5329, %v5580, 0
        %v5642 = vsel %vm5329, %v5581, 0
        %v5645 = vsel %vm5329, %v5582, 0
        %v5648 = vsel %vm5329, %v5583, 0
        %v5651 = vsel %vm5329, %v5584, 0
        %v5654 = vsel %vm5329, %v5585, 0
        %v5657 = vsel %vm5329, %v5586, 0
        %v5660 = vsel %vm5329, %v5587, 0
        %v5663 = vsel %vm5329, %v5588, 0
        %v5666 = vsel %vm5329, %v5589, 0
        %v5669 = vsel %vm5329, %v5590, 0
        %v5672 = vsel %vm5329, %v5591, 0
        %v5675 = vsel %vm5329, %v5592, 0
        %5677 = vmatprep.subr.bf16.mxu0 0
        %5678 = vmatpush1.bf16.msra.mxu0 %v5617
        %5679 = vmatprep.subr.bf16.mxu0 0
        %5680 = vmatpush1.bf16.msra.mxu0 %v5618
        %5681 = vmatprep.subr.bf16.mxu0 0
        %5682 = vmatpush1.bf16.msra.mxu0 %v5619
        %5683 = vmatprep.subr.bf16.mxu0 0
        %5684 = vmatpush1.bf16.msra.mxu0 %v5620
        %5685 = vmatprep.subr.bf16.mxu0 0
        %5686 = vmatpush1.bf16.msra.mxu0 %v5621
        %5687 = vmatprep.subr.bf16.mxu0 0
        %5688 = vmatpush1.bf16.msra.mxu0 %v5622
        %5689 = vmatprep.subr.bf16.mxu0 0
        %5690 = vmatpush1.bf16.msra.mxu0 0
        %5691 = vmatprep.subr.bf16.mxu0 0
        %5692 = vmatpush1.bf16.msra.mxu0 0
        %5693 = vmatprep.subr.bf16.mxu0 0
        %5694 = vmatpush1.bf16.msra.mxu0 0
        %5695 = vmatprep.subr.bf16.mxu0 0
        %5696 = vmatpush1.bf16.msra.mxu0 0
        %5697 = vmatprep.subr.bf16.mxu0 0
        %5698 = vmatpush1.bf16.msra.mxu0 0
        %5699 = vmatprep.subr.bf16.mxu0 0
        %5700 = vmatpush1.bf16.msra.mxu0 0
        %5701 = vmatprep.subr.bf16.mxu0 0
        %5702 = vmatpush1.bf16.msra.mxu0 0
        %5703 = vmatprep.subr.bf16.mxu0 0
        %5704 = vmatpush1.bf16.msra.mxu0 0
        %5705 = vmatprep.subr.bf16.mxu0 0
        %5706 = vmatpush1.bf16.msra.mxu0 0
        %5707 = vmatprep.subr.bf16.mxu0 0
        %5708 = vmatpush1.bf16.msra.mxu0 0
        %5709 = vmatprep.mubr.bf16.mxu0 0
        %5710 = vmatmul.mubr.bf16.gmra.mrb[0].mxu0 %v5630
        %v5711 = vpop.f32.mrb[0].mxu0
        %v5712 = vadd.f32 0.0, %v5711
        %v5713 = vpop.f32.mrb[0].mxu0
        %v5714 = vpop.f32.mrb[0].mxu0
        %v5715 = vadd.f32 0.0, %v5714
        %v5716 = vpop.f32.mrb[0].mxu0
        %5717 = vmatprep.mubr.bf16.mxu0 0
        %5718 = vmatmul.mubr.bf16.gmra.mrb[0].mxu0 %v5633
        %v5719 = vpop.f32.mrb[0].mxu0
        %v5720 = vadd.f32 0.0, %v5719
        %v5721 = vpop.f32.mrb[0].mxu0
        %v5722 = vpop.f32.mrb[0].mxu0
        %v5723 = vadd.f32 0.0, %v5722
        %v5724 = vpop.f32.mrb[0].mxu0
        %5725 = vmatprep.mubr.bf16.mxu0 0
        %5726 = vmatmul.mubr.bf16.gmra.mrb[0].mxu0 %v5636
        %v5727 = vpop.f32.mrb[0].mxu0
        %v5728 = vadd.f32 0.0, %v5727
        %v5729 = vpop.f32.mrb[0].mxu0
        %v5730 = vpop.f32.mrb[0].mxu0
        %v5731 = vadd.f32 0.0, %v5730
        %v5732 = vpop.f32.mrb[0].mxu0
        %5733 = vmatprep.mubr.bf16.mxu0 0
        %5734 = vmatmul.mubr.bf16.gmra.mrb[0].mxu0 %v5639
        %v5735 = vpop.f32.mrb[0].mxu0
        %v5736 = vadd.f32 0.0, %v5735
        %v5737 = vpop.f32.mrb[0].mxu0
        %v5738 = vpop.f32.mrb[0].mxu0
        %v5739 = vadd.f32 0.0, %v5738
        %v5740 = vpop.f32.mrb[0].mxu0
        %5741 = vmatprep.mubr.bf16.mxu0 0
        %5742 = vmatmul.mubr.bf16.gmra.mrb[0].mxu0 %v5642
        %v5743 = vpop.f32.mrb[0].mxu0
        %v5744 = vadd.f32 0.0, %v5743
        %v5745 = vpop.f32.mrb[0].mxu0
        %v5746 = vpop.f32.mrb[0].mxu0
        %v5747 = vadd.f32 0.0, %v5746
        %v5748 = vpop.f32.mrb[0].mxu0
        %5749 = vmatprep.mubr.bf16.mxu0 0
        %5750 = vmatmul.mubr.bf16.gmra.mrb[0].mxu0 %v5645
        %v5751 = vpop.f32.mrb[0].mxu0
        %v5752 = vadd.f32 0.0, %v5751
        %v5753 = vpop.f32.mrb[0].mxu0
        %v5754 = vpop.f32.mrb[0].mxu0
        %v5755 = vadd.f32 0.0, %v5754
        %v5756 = vpop.f32.mrb[0].mxu0
        %5757 = vmatprep.mubr.bf16.mxu0 0
        %5758 = vmatmul.mubr.bf16.gmra.mrb[0].mxu0 %v5648
        %v5759 = vpop.f32.mrb[0].mxu0
        %v5760 = vadd.f32 0.0, %v5759
        %v5761 = vpop.f32.mrb[0].mxu0
        %v5762 = vpop.f32.mrb[0].mxu0
        %v5763 = vadd.f32 0.0, %v5762
        %v5764 = vpop.f32.mrb[0].mxu0
        %5765 = vmatprep.mubr.bf16.mxu0 0
        %5766 = vmatmul.mubr.bf16.gmra.mrb[0].mxu0 %v5651
        %v5767 = vpop.f32.mrb[0].mxu0
        %v5768 = vadd.f32 0.0, %v5767
        %v5769 = vpop.f32.mrb[0].mxu0
        %v5770 = vpop.f32.mrb[0].mxu0
        %v5771 = vadd.f32 0.0, %v5770
        %v5772 = vpop.f32.mrb[0].mxu0
        %5773 = vmatprep.mubr.bf16.mxu0 0
        %5774 = vmatmul.mubr.bf16.gmra.mrb[0].mxu0 %v5654
        %v5775 = vpop.f32.mrb[0].mxu0
        %v5776 = vadd.f32 0.0, %v5775
        %v5777 = vpop.f32.mrb[0].mxu0
        %v5778 = vpop.f32.mrb[0].mxu0
        %v5779 = vadd.f32 0.0, %v5778
        %v5780 = vpop.f32.mrb[0].mxu0
        %5781 = vmatprep.mubr.bf16.mxu0 0
        %5782 = vmatmul.mubr.bf16.gmra.mrb[0].mxu0 %v5657
        %v5783 = vpop.f32.mrb[0].mxu0
        %v5784 = vadd.f32 0.0, %v5783
        %v5785 = vpop.f32.mrb[0].mxu0
        %v5786 = vpop.f32.mrb[0].mxu0
        %v5787 = vadd.f32 0.0, %v5786
        %v5788 = vpop.f32.mrb[0].mxu0
        %5789 = vmatprep.mubr.bf16.mxu0 0
        %5790 = vmatmul.mubr.bf16.gmra.mrb[0].mxu0 %v5660
        %v5791 = vpop.f32.mrb[0].mxu0
        %v5792 = vadd.f32 0.0, %v5791
        %v5793 = vpop.f32.mrb[0].mxu0
        %v5794 = vpop.f32.mrb[0].mxu0
        %v5795 = vadd.f32 0.0, %v5794
        %v5796 = vpop.f32.mrb[0].mxu0
        %5797 = vmatprep.mubr.bf16.mxu0 0
        %5798 = vmatmul.mubr.bf16.gmra.mrb[0].mxu0 %v5663
        %v5799 = vpop.f32.mrb[0].mxu0
        %v5800 = vadd.f32 0.0, %v5799
        %v5801 = vpop.f32.mrb[0].mxu0
        %v5802 = vpop.f32.mrb[0].mxu0
        %v5803 = vadd.f32 0.0, %v5802
        %v5804 = vpop.f32.mrb[0].mxu0
        %5805 = vmatprep.mubr.bf16.mxu0 0
        %5806 = vmatmul.mubr.bf16.gmra.mrb[0].mxu0 %v5666
        %v5807 = vpop.f32.mrb[0].mxu0
        %v5808 = vadd.f32 0.0, %v5807
        %v5809 = vpop.f32.mrb[0].mxu0
        %v5810 = vpop.f32.mrb[0].mxu0
        %v5811 = vadd.f32 0.0, %v5810
        %v5812 = vpop.f32.mrb[0].mxu0
        %5813 = vmatprep.mubr.bf16.mxu0 0
        %5814 = vmatmul.mubr.bf16.gmra.mrb[0].mxu0 %v5669
        %v5815 = vpop.f32.mrb[0].mxu0
        %v5816 = vadd.f32 0.0, %v5815
        %v5817 = vpop.f32.mrb[0].mxu0
        %v5818 = vpop.f32.mrb[0].mxu0
        %v5819 = vadd.f32 0.0, %v5818
        %v5820 = vpop.f32.mrb[0].mxu0
        %5821 = vmatprep.mubr.bf16.mxu0 0
        %5822 = vmatmul.mubr.bf16.gmra.mrb[0].mxu0 %v5672
        %v5823 = vpop.f32.mrb[0].mxu0
        %v5824 = vadd.f32 0.0, %v5823
        %v5825 = vpop.f32.mrb[0].mxu0
        %v5826 = vpop.f32.mrb[0].mxu0
        %v5827 = vadd.f32 0.0, %v5826
        %v5828 = vpop.f32.mrb[0].mxu0
        %5829 = vmatprep.mubr.bf16.mxu0 0
        %5830 = vmatmul.mubr.bf16.gmra.mrb[0].mxu0 %v5675
        %v5831 = vpop.f32.mrb[0].mxu0
        %v5832 = vadd.f32 0.0, %v5831
        %v5833 = vpop.f32.mrb[0].mxu0
        %v5834 = vpop.f32.mrb[0].mxu0
        %v5835 = vadd.f32 0.0, %v5834
        %v5836 = vpop.f32.mrb[0].mxu0
        %5837 = vdwg.mxu0
        %v5838 = vadd.f32 %v5545, %v5712
        %v5839 = vadd.f32 %v5546, %v5715
        %v5840 = vadd.f32 %v5547, %v5720
        %v5841 = vadd.f32 %v5548, %v5723
        %v5842 = vadd.f32 %v5549, %v5728
        %v5843 = vadd.f32 %v5550, %v5731
        %v5844 = vadd.f32 %v5551, %v5736
        %v5845 = vadd.f32 %v5552, %v5739
        %v5846 = vadd.f32 %v5553, %v5744
        %v5847 = vadd.f32 %v5554, %v5747
        %v5848 = vadd.f32 %v5555, %v5752
        %v5849 = vadd.f32 %v5556, %v5755
        %v5850 = vadd.f32 %v5557, %v5760
        %v5851 = vadd.f32 %v5558, %v5763
        %v5852 = vadd.f32 %v5559, %v5768
        %v5853 = vadd.f32 %v5560, %v5771
        %v5854 = vadd.f32 %v5561, %v5776
        %v5855 = vadd.f32 %v5562, %v5779
        %v5856 = vadd.f32 %v5563, %v5784
        %v5857 = vadd.f32 %v5564, %v5787
        %v5858 = vadd.f32 %v5565, %v5792
        %v5859 = vadd.f32 %v5566, %v5795
        %v5860 = vadd.f32 %v5567, %v5800
        %v5861 = vadd.f32 %v5568, %v5803
        %v5862 = vadd.f32 %v5569, %v5808
        %v5863 = vadd.f32 %v5570, %v5811
        %v5864 = vadd.f32 %v5571, %v5816
        %v5865 = vadd.f32 %v5572, %v5819
        %v5866 = vadd.f32 %v5573, %v5824
        %v5867 = vadd.f32 %v5574, %v5827
        %v5868 = vadd.f32 %v5575, %v5832
        %v5869 = vadd.f32 %v5576, %v5835
        %v5870 = vld [vmem:[#allocation3 + $0x10] sm:$0xff]
        %v5871 = vld [vmem:[#allocation3 + $0x18] sm:$0xff]
        %v5872 = vld [vmem:[#allocation3 + $0x20] sm:$0xff]
        %v5873 = vld [vmem:[#allocation3 + $0x28] sm:$0xff]
        %v5874 = vld [vmem:[#allocation3 + $0x30] sm:$0xff]
        %v5875 = vld [vmem:[#allocation3 + $0x38] sm:$0xff]
        %v5876 = vld [vmem:[#allocation3 + $0x40] sm:$0xff]
        %v5877 = vld [vmem:[#allocation3 + $0x48] sm:$0xff]
        %v5878 = vld [vmem:[#allocation3 + $0x50] sm:$0xff]
        %v5879 = vld [vmem:[#allocation3 + $0x58] sm:$0xff]
        %v5880 = vld [vmem:[#allocation3 + $0x60] sm:$0xff]
        %v5881 = vld [vmem:[#allocation3 + $0x68] sm:$0xff]
        %v5882 = vld [vmem:[#allocation3 + $0x70] sm:$0xff]
        %v5883 = vld [vmem:[#allocation3 + $0x78] sm:$0xff]
        %v5884 = vld [vmem:[#allocation3 + $0x80] sm:$0xff]
        %v5885 = vld [vmem:[#allocation3 + $0x88] sm:$0xff]
        %v5898 = vunpack.c.l.b16 %v3219
        %v5899 = vunpack.c.l.b16 %v3220
        %v5900 = vunpack.c.l.b16 %v3221
        %v5901 = vunpack.c.l.b16 %v3222
        %v5902 = vunpack.c.l.b16 %v3223
        %v5903 = vunpack.c.l.b16 %v3224
        %v5904 = vunpack.c.l.b16 %v3225
        %v5905 = vunpack.c.l.b16 %v3226
        %v5906 = vunpack.c.l.b16 %v3227
        %v5907 = vunpack.c.l.b16 %v3228
        %v5908 = vunpack.c.l.b16 %v3229
        %v5909 = vunpack.c.l.b16 %v3230
        %v5910 = vpack.c.b16 %v5899, %v5898
        %v5911 = vpack.c.b16 %v5901, %v5900
        %v5912 = vpack.c.b16 %v5903, %v5902
        %v5913 = vpack.c.b16 %v5905, %v5904
        %v5914 = vpack.c.b16 %v5907, %v5906
        %v5915 = vpack.c.b16 %v5909, %v5908
        %v5923 = vsel %vm5329, %v5870, 0
        %v5926 = vsel %vm5329, %v5871, 0
        %v5929 = vsel %vm5329, %v5872, 0
        %v5932 = vsel %vm5329, %v5873, 0
        %v5935 = vsel %vm5329, %v5874, 0
        %v5938 = vsel %vm5329, %v5875, 0
        %v5941 = vsel %vm5329, %v5876, 0
        %v5944 = vsel %vm5329, %v5877, 0
        %v5947 = vsel %vm5329, %v5878, 0
        %v5950 = vsel %vm5329, %v5879, 0
        %v5953 = vsel %vm5329, %v5880, 0
        %v5956 = vsel %vm5329, %v5881, 0
        %v5959 = vsel %vm5329, %v5882, 0
        %v5962 = vsel %vm5329, %v5883, 0
        %v5965 = vsel %vm5329, %v5884, 0
        %v5968 = vsel %vm5329, %v5885, 0
        %5970 = vmatprep.subr.bf16.mxu0 0
        %5971 = vmatpush1.bf16.msra.mxu0 %v5910
        %5972 = vmatprep.subr.bf16.mxu0 0
        %5973 = vmatpush1.bf16.msra.mxu0 %v5911
        %5974 = vmatprep.subr.bf16.mxu0 0
        %5975 = vmatpush1.bf16.msra.mxu0 %v5912
        %5976 = vmatprep.subr.bf16.mxu0 0
        %5977 = vmatpush1.bf16.msra.mxu0 %v5913
        %5978 = vmatprep.subr.bf16.mxu0 0
        %5979 = vmatpush1.bf16.msra.mxu0 %v5914
        %5980 = vmatprep.subr.bf16.mxu0 0
        %5981 = vmatpush1.bf16.msra.mxu0 %v5915
        %5982 = vmatprep.subr.bf16.mxu0 0
        %5983 = vmatpush1.bf16.msra.mxu0 0
        %5984 = vmatprep.subr.bf16.mxu0 0
        %5985 = vmatpush1.bf16.msra.mxu0 0
        %5986 = vmatprep.subr.bf16.mxu0 0
        %5987 = vmatpush1.bf16.msra.mxu0 0
        %5988 = vmatprep.subr.bf16.mxu0 0
        %5989 = vmatpush1.bf16.msra.mxu0 0
        %5990 = vmatprep.subr.bf16.mxu0 0
        %5991 = vmatpush1.bf16.msra.mxu0 0
        %5992 = vmatprep.subr.bf16.mxu0 0
        %5993 = vmatpush1.bf16.msra.mxu0 0
        %5994 = vmatprep.subr.bf16.mxu0 0
        %5995 = vmatpush1.bf16.msra.mxu0 0
        %5996 = vmatprep.subr.bf16.mxu0 0
        %5997 = vmatpush1.bf16.msra.mxu0 0
        %5998 = vmatprep.subr.bf16.mxu0 0
        %5999 = vmatpush1.bf16.msra.mxu0 0
        %6000 = vmatprep.subr.bf16.mxu0 0
        %6001 = vmatpush1.bf16.msra.mxu0 0
        %6002 = vmatprep.mubr.bf16.mxu0 0
        %6003 = vmatmul.mubr.bf16.gmra.mrb[0].mxu0 %v5923
        %v6004 = vpop.f32.mrb[0].mxu0
        %v6005 = vadd.f32 0.0, %v6004
        %v6006 = vpop.f32.mrb[0].mxu0
        %v6007 = vpop.f32.mrb[0].mxu0
        %v6008 = vadd.f32 0.0, %v6007
        %v6009 = vpop.f32.mrb[0].mxu0
        %6010 = vmatprep.mubr.bf16.mxu0 0
        %6011 = vmatmul.mubr.bf16.gmra.mrb[0].mxu0 %v5926
        %v6012 = vpop.f32.mrb[0].mxu0
        %v6013 = vadd.f32 0.0, %v6012
        %v6014 = vpop.f32.mrb[0].mxu0
        %v6015 = vpop.f32.mrb[0].mxu0
        %v6016 = vadd.f32 0.0, %v6015
        %v6017 = vpop.f32.mrb[0].mxu0
        %6018 = vmatprep.mubr.bf16.mxu0 0
        %6019 = vmatmul.mubr.bf16.gmra.mrb[0].mxu0 %v5929
        %v6020 = vpop.f32.mrb[0].mxu0
        %v6021 = vadd.f32 0.0, %v6020
        %v6022 = vpop.f32.mrb[0].mxu0
        %v6023 = vpop.f32.mrb[0].mxu0
        %v6024 = vadd.f32 0.0, %v6023
        %v6025 = vpop.f32.mrb[0].mxu0
        %6026 = vmatprep.mubr.bf16.mxu0 0
        %6027 = vmatmul.mubr.bf16.gmra.mrb[0].mxu0 %v5932
        %v6028 = vpop.f32.mrb[0].mxu0
        %v6029 = vadd.f32 0.0, %v6028
        %v6030 = vpop.f32.mrb[0].mxu0
        %v6031 = vpop.f32.mrb[0].mxu0
        %v6032 = vadd.f32 0.0, %v6031
        %v6033 = vpop.f32.mrb[0].mxu0
        %6034 = vmatprep.mubr.bf16.mxu0 0
        %6035 = vmatmul.mubr.bf16.gmra.mrb[0].mxu0 %v5935
        %v6036 = vpop.f32.mrb[0].mxu0
        %v6037 = vadd.f32 0.0, %v6036
        %v6038 = vpop.f32.mrb[0].mxu0
        %v6039 = vpop.f32.mrb[0].mxu0
        %v6040 = vadd.f32 0.0, %v6039
        %v6041 = vpop.f32.mrb[0].mxu0
        %6042 = vmatprep.mubr.bf16.mxu0 0
        %6043 = vmatmul.mubr.bf16.gmra.mrb[0].mxu0 %v5938
        %v6044 = vpop.f32.mrb[0].mxu0
        %v6045 = vadd.f32 0.0, %v6044
        %v6046 = vpop.f32.mrb[0].mxu0
        %v6047 = vpop.f32.mrb[0].mxu0
        %v6048 = vadd.f32 0.0, %v6047
        %v6049 = vpop.f32.mrb[0].mxu0
        %6050 = vmatprep.mubr.bf16.mxu0 0
        %6051 = vmatmul.mubr.bf16.gmra.mrb[0].mxu0 %v5941
        %v6052 = vpop.f32.mrb[0].mxu0
        %v6053 = vadd.f32 0.0, %v6052
        %v6054 = vpop.f32.mrb[0].mxu0
        %v6055 = vpop.f32.mrb[0].mxu0
        %v6056 = vadd.f32 0.0, %v6055
        %v6057 = vpop.f32.mrb[0].mxu0
        %6058 = vmatprep.mubr.bf16.mxu0 0
        %6059 = vmatmul.mubr.bf16.gmra.mrb[0].mxu0 %v5944
        %v6060 = vpop.f32.mrb[0].mxu0
        %v6061 = vadd.f32 0.0, %v6060
        %v6062 = vpop.f32.mrb[0].mxu0
        %v6063 = vpop.f32.mrb[0].mxu0
        %v6064 = vadd.f32 0.0, %v6063
        %v6065 = vpop.f32.mrb[0].mxu0
        %6066 = vmatprep.mubr.bf16.mxu0 0
        %6067 = vmatmul.mubr.bf16.gmra.mrb[0].mxu0 %v5947
        %v6068 = vpop.f32.mrb[0].mxu0
        %v6069 = vadd.f32 0.0, %v6068
        %v6070 = vpop.f32.mrb[0].mxu0
        %v6071 = vpop.f32.mrb[0].mxu0
        %v6072 = vadd.f32 0.0, %v6071
        %v6073 = vpop.f32.mrb[0].mxu0
        %6074 = vmatprep.mubr.bf16.mxu0 0
        %6075 = vmatmul.mubr.bf16.gmra.mrb[0].mxu0 %v5950
        %v6076 = vpop.f32.mrb[0].mxu0
        %v6077 = vadd.f32 0.0, %v6076
        %v6078 = vpop.f32.mrb[0].mxu0
        %v6079 = vpop.f32.mrb[0].mxu0
        %v6080 = vadd.f32 0.0, %v6079
        %v6081 = vpop.f32.mrb[0].mxu0
        %6082 = vmatprep.mubr.bf16.mxu0 0
        %6083 = vmatmul.mubr.bf16.gmra.mrb[0].mxu0 %v5953
        %v6084 = vpop.f32.mrb[0].mxu0
        %v6085 = vadd.f32 0.0, %v6084
        %v6086 = vpop.f32.mrb[0].mxu0
        %v6087 = vpop.f32.mrb[0].mxu0
        %v6088 = vadd.f32 0.0, %v6087
        %v6089 = vpop.f32.mrb[0].mxu0
        %6090 = vmatprep.mubr.bf16.mxu0 0
        %6091 = vmatmul.mubr.bf16.gmra.mrb[0].mxu0 %v5956
        %v6092 = vpop.f32.mrb[0].mxu0
        %v6093 = vadd.f32 0.0, %v6092
        %v6094 = vpop.f32.mrb[0].mxu0
        %v6095 = vpop.f32.mrb[0].mxu0
        %v6096 = vadd.f32 0.0, %v6095
        %v6097 = vpop.f32.mrb[0].mxu0
        %6098 = vmatprep.mubr.bf16.mxu0 0
        %6099 = vmatmul.mubr.bf16.gmra.mrb[0].mxu0 %v5959
        %v6100 = vpop.f32.mrb[0].mxu0
        %v6101 = vadd.f32 0.0, %v6100
        %v6102 = vpop.f32.mrb[0].mxu0
        %v6103 = vpop.f32.mrb[0].mxu0
        %v6104 = vadd.f32 0.0, %v6103
        %v6105 = vpop.f32.mrb[0].mxu0
        %6106 = vmatprep.mubr.bf16.mxu0 0
        %6107 = vmatmul.mubr.bf16.gmra.mrb[0].mxu0 %v5962
        %v6108 = vpop.f32.mrb[0].mxu0
        %v6109 = vadd.f32 0.0, %v6108
        %v6110 = vpop.f32.mrb[0].mxu0
        %v6111 = vpop.f32.mrb[0].mxu0
        %v6112 = vadd.f32 0.0, %v6111
        %v6113 = vpop.f32.mrb[0].mxu0
        %6114 = vmatprep.mubr.bf16.mxu0 0
        %6115 = vmatmul.mubr.bf16.gmra.mrb[0].mxu0 %v5965
        %v6116 = vpop.f32.mrb[0].mxu0
        %v6117 = vadd.f32 0.0, %v6116
        %v6118 = vpop.f32.mrb[0].mxu0
        %v6119 = vpop.f32.mrb[0].mxu0
        %v6120 = vadd.f32 0.0, %v6119
        %v6121 = vpop.f32.mrb[0].mxu0
        %6122 = vmatprep.mubr.bf16.mxu0 0
        %6123 = vmatmul.mubr.bf16.gmra.mrb[0].mxu0 %v5968
        %v6124 = vpop.f32.mrb[0].mxu0
        %v6125 = vadd.f32 0.0, %v6124
        %v6126 = vpop.f32.mrb[0].mxu0
        %v6127 = vpop.f32.mrb[0].mxu0
        %v6128 = vadd.f32 0.0, %v6127
        %v6129 = vpop.f32.mrb[0].mxu0
        %6130 = vdwg.mxu0
        %v6131 = vadd.f32 %v5838, %v6005
        %v6132 = vadd.f32 %v5839, %v6008
        %v6133 = vadd.f32 %v5840, %v6013
        %v6134 = vadd.f32 %v5841, %v6016
        %v6135 = vadd.f32 %v5842, %v6021
        %v6136 = vadd.f32 %v5843, %v6024
        %v6137 = vadd.f32 %v5844, %v6029
        %v6138 = vadd.f32 %v5845, %v6032
        %v6139 = vadd.f32 %v5846, %v6037
        %v6140 = vadd.f32 %v5847, %v6040
        %v6141 = vadd.f32 %v5848, %v6045
        %v6142 = vadd.f32 %v5849, %v6048
        %v6143 = vadd.f32 %v5850, %v6053
        %v6144 = vadd.f32 %v5851, %v6056
        %v6145 = vadd.f32 %v5852, %v6061
        %v6146 = vadd.f32 %v5853, %v6064
        %v6147 = vadd.f32 %v5854, %v6069
        %v6148 = vadd.f32 %v5855, %v6072
        %v6149 = vadd.f32 %v5856, %v6077
        %v6150 = vadd.f32 %v5857, %v6080
        %v6151 = vadd.f32 %v5858, %v6085
        %v6152 = vadd.f32 %v5859, %v6088
        %v6153 = vadd.f32 %v5860, %v6093
        %v6154 = vadd.f32 %v5861, %v6096
        %v6155 = vadd.f32 %v5862, %v6101
        %v6156 = vadd.f32 %v5863, %v6104
        %v6157 = vadd.f32 %v5864, %v6109
        %v6158 = vadd.f32 %v5865, %v6112
        %v6159 = vadd.f32 %v5866, %v6117
        %v6160 = vadd.f32 %v5867, %v6120
        %v6161 = vadd.f32 %v5868, %v6125
        %v6162 = vadd.f32 %v5869, %v6128
        %v6163 = vmax.f32 %v6131, 0.0
        %v6164 = vmax.f32 %v6132, 0.0
        %v6165 = vmax.f32 %v6133, 0.0
        %v6166 = vmax.f32 %v6134, 0.0
        %v6167 = vmax.f32 %v6135, 0.0
        %v6168 = vmax.f32 %v6136, 0.0
        %v6169 = vmax.f32 %v6137, 0.0
        %v6170 = vmax.f32 %v6138, 0.0
        %v6171 = vmax.f32 %v6139, 0.0
        %v6172 = vmax.f32 %v6140, 0.0
        %v6173 = vmax.f32 %v6141, 0.0
        %v6174 = vmax.f32 %v6142, 0.0
        %v6175 = vmax.f32 %v6143, 0.0
        %v6176 = vmax.f32 %v6144, 0.0
        %v6177 = vmax.f32 %v6145, 0.0
        %v6178 = vmax.f32 %v6146, 0.0
        %v6179 = vmax.f32 %v6147, 0.0
        %v6180 = vmax.f32 %v6148, 0.0
        %v6181 = vmax.f32 %v6149, 0.0
        %v6182 = vmax.f32 %v6150, 0.0
        %v6183 = vmax.f32 %v6151, 0.0
        %v6184 = vmax.f32 %v6152, 0.0
        %v6185 = vmax.f32 %v6153, 0.0
        %v6186 = vmax.f32 %v6154, 0.0
        %v6187 = vmax.f32 %v6155, 0.0
        %v6188 = vmax.f32 %v6156, 0.0
        %v6189 = vmax.f32 %v6157, 0.0
        %v6190 = vmax.f32 %v6158, 0.0
        %v6191 = vmax.f32 %v6159, 0.0
        %v6192 = vmax.f32 %v6160, 0.0
        %v6193 = vmax.f32 %v6161, 0.0
        %v6194 = vmax.f32 %v6162, 0.0
        %v6195 = vpack.c.bf16 %v6164, %v6163
        %v6196 = vpack.c.bf16 %v6166, %v6165
        %v6197 = vpack.c.bf16 %v6168, %v6167
        %v6198 = vpack.c.bf16 %v6170, %v6169
        %v6199 = vpack.c.bf16 %v6172, %v6171
        %v6200 = vpack.c.bf16 %v6174, %v6173
        %v6201 = vpack.c.bf16 %v6176, %v6175
        %v6202 = vpack.c.bf16 %v6178, %v6177
        %v6203 = vpack.c.bf16 %v6180, %v6179
        %v6204 = vpack.c.bf16 %v6182, %v6181
        %v6205 = vpack.c.bf16 %v6184, %v6183
        %v6206 = vpack.c.bf16 %v6186, %v6185
        %v6207 = vpack.c.bf16 %v6188, %v6187
        %v6208 = vpack.c.bf16 %v6190, %v6189
        %v6209 = vpack.c.bf16 %v6192, %v6191
        %v6210 = vpack.c.bf16 %v6194, %v6193
        %v6227 = vunpack.c.l.b16 %v6195
        %v6228 = vunpack.c.h.b16 %v6195
        %v6229 = vunpack.c.l.b16 %v6196
        %v6230 = vunpack.c.h.b16 %v6196
        %v6231 = vunpack.c.l.b16 %v6197
        %v6232 = vunpack.c.h.b16 %v6197
        %v6233 = vunpack.c.l.b16 %v6198
        %v6234 = vunpack.c.h.b16 %v6198
        %v6235 = vunpack.c.l.b16 %v6199
        %v6236 = vunpack.c.h.b16 %v6199
        %v6237 = vunpack.c.l.b16 %v6200
        %v6238 = vunpack.c.h.b16 %v6200
        %v6239 = vunpack.c.l.b16 %v6201
        %v6240 = vunpack.c.h.b16 %v6201
        %v6241 = vunpack.c.l.b16 %v6202
        %v6242 = vunpack.c.h.b16 %v6202
        %v6243 = vunpack.c.l.b16 %v6203
        %v6244 = vunpack.c.h.b16 %v6203
        %v6245 = vunpack.c.l.b16 %v6204
        %v6246 = vunpack.c.h.b16 %v6204
        %v6247 = vunpack.c.l.b16 %v6205
        %v6248 = vunpack.c.h.b16 %v6205
        %v6249 = vunpack.c.l.b16 %v6206
        %v6250 = vunpack.c.h.b16 %v6206
        %v6251 = vunpack.c.l.b16 %v6207
        %v6252 = vunpack.c.h.b16 %v6207
        %v6253 = vunpack.c.l.b16 %v6208
        %v6254 = vunpack.c.h.b16 %v6208
        %v6255 = vunpack.c.l.b16 %v6209
        %v6256 = vunpack.c.h.b16 %v6209
        %v6257 = vunpack.c.l.b16 %v6210
        %v6258 = vunpack.c.h.b16 %v6210
        %v6259 = vpack.c.b16 %v6227, %v6227
        %v6260 = vpack.c.b16 %v6228, %v6228
        %v6261 = vpack.c.b16 %v6229, %v6229
        %v6262 = vpack.c.b16 %v6230, %v6230
        %v6263 = vpack.c.b16 %v6231, %v6231
        %v6264 = vpack.c.b16 %v6232, %v6232
        %v6265 = vpack.c.b16 %v6233, %v6233
        %v6266 = vpack.c.b16 %v6234, %v6234
        %v6267 = vpack.c.b16 %v6235, %v6235
        %v6268 = vpack.c.b16 %v6236, %v6236
        %v6269 = vpack.c.b16 %v6237, %v6237
        %v6270 = vpack.c.b16 %v6238, %v6238
        %v6271 = vpack.c.b16 %v6239, %v6239
        %v6272 = vpack.c.b16 %v6240, %v6240
        %v6273 = vpack.c.b16 %v6241, %v6241
        %v6274 = vpack.c.b16 %v6242, %v6242
        %v6275 = vpack.c.b16 %v6243, %v6243
        %v6276 = vpack.c.b16 %v6244, %v6244
        %v6277 = vpack.c.b16 %v6245, %v6245
        %v6278 = vpack.c.b16 %v6246, %v6246
        %v6279 = vpack.c.b16 %v6247, %v6247
        %v6280 = vpack.c.b16 %v6248, %v6248
        %v6281 = vpack.c.b16 %v6249, %v6249
        %v6282 = vpack.c.b16 %v6250, %v6250
        %v6283 = vpack.c.b16 %v6251, %v6251
        %v6284 = vpack.c.b16 %v6252, %v6252
        %v6285 = vpack.c.b16 %v6253, %v6253
        %v6286 = vpack.c.b16 %v6254, %v6254
        %v6287 = vpack.c.b16 %v6255, %v6255
        %v6288 = vpack.c.b16 %v6256, %v6256
        %v6289 = vpack.c.b16 %v6257, %v6257
        %v6290 = vpack.c.b16 %v6258, %v6258
        %v6292 = vshrl.u32 %v6259, 16
        %v6294 = vrot.slane %v6292, 7
        %v6295 = vshll.u32 %v6259, 16
        %v6297 = vor.u32 %v6294, %v6295
        %v6298 = vrot.slane %v6294, 4
        %v6300 = vshrl.u32 %v6260, 16
        %v6302 = vrot.slane %v6300, 7
        %v6303 = vshll.u32 %v6260, 16
        %v6305 = vor.u32 %v6302, %v6303
        %v6306 = vsel %vm429, %v6298, %v6305
        %v6307 = vrot.slane %v6302, 4
        %v6309 = vshrl.u32 %v6261, 16
        %v6311 = vrot.slane %v6309, 7
        %v6312 = vshll.u32 %v6261, 16
        %v6314 = vor.u32 %v6311, %v6312
        %v6315 = vrot.slane %v6311, 4
        %v6317 = vshrl.u32 %v6262, 16
        %v6319 = vrot.slane %v6317, 7
        %v6320 = vshll.u32 %v6262, 16
        %v6322 = vor.u32 %v6319, %v6320
        %v6323 = vsel %vm429, %v6315, %v6322
        %v6324 = vrot.slane %v6319, 4
        %v6326 = vshrl.u32 %v6263, 16
        %v6328 = vrot.slane %v6326, 7
        %v6329 = vshll.u32 %v6263, 16
        %v6331 = vor.u32 %v6328, %v6329
        %v6332 = vrot.slane %v6328, 4
        %v6334 = vshrl.u32 %v6264, 16
        %v6336 = vrot.slane %v6334, 7
        %v6337 = vshll.u32 %v6264, 16
        %v6339 = vor.u32 %v6336, %v6337
        %v6340 = vsel %vm429, %v6332, %v6339
        %v6341 = vrot.slane %v6336, 4
        %v6343 = vshrl.u32 %v6265, 16
        %v6345 = vrot.slane %v6343, 7
        %v6346 = vshll.u32 %v6265, 16
        %v6348 = vor.u32 %v6345, %v6346
        %v6349 = vrot.slane %v6345, 4
        %v6351 = vshrl.u32 %v6266, 16
        %v6353 = vrot.slane %v6351, 7
        %v6354 = vshll.u32 %v6266, 16
        %v6356 = vor.u32 %v6353, %v6354
        %v6357 = vsel %vm429, %v6349, %v6356
        %v6358 = vrot.slane %v6353, 4
        %v6360 = vshrl.u32 %v6267, 16
        %v6362 = vrot.slane %v6360, 7
        %v6363 = vshll.u32 %v6267, 16
        %v6365 = vor.u32 %v6362, %v6363
        %v6366 = vrot.slane %v6362, 4
        %v6368 = vshrl.u32 %v6268, 16
        %v6370 = vrot.slane %v6368, 7
        %v6371 = vshll.u32 %v6268, 16
        %v6373 = vor.u32 %v6370, %v6371
        %v6374 = vsel %vm429, %v6366, %v6373
        %v6375 = vrot.slane %v6370, 4
        %v6377 = vshrl.u32 %v6269, 16
        %v6379 = vrot.slane %v6377, 7
        %v6380 = vshll.u32 %v6269, 16
        %v6382 = vor.u32 %v6379, %v6380
        %v6383 = vrot.slane %v6379, 4
        %v6385 = vshrl.u32 %v6270, 16
        %v6387 = vrot.slane %v6385, 7
        %v6388 = vshll.u32 %v6270, 16
        %v6390 = vor.u32 %v6387, %v6388
        %v6391 = vsel %vm429, %v6383, %v6390
        %v6392 = vrot.slane %v6387, 4
        %v6394 = vshrl.u32 %v6271, 16
        %v6396 = vrot.slane %v6394, 7
        %v6397 = vshll.u32 %v6271, 16
        %v6399 = vor.u32 %v6396, %v6397
        %v6400 = vrot.slane %v6396, 4
        %v6402 = vshrl.u32 %v6272, 16
        %v6404 = vrot.slane %v6402, 7
        %v6405 = vshll.u32 %v6272, 16
        %v6407 = vor.u32 %v6404, %v6405
        %v6408 = vsel %vm429, %v6400, %v6407
        %v6409 = vrot.slane %v6404, 4
        %v6411 = vshrl.u32 %v6273, 16
        %v6413 = vrot.slane %v6411, 7
        %v6414 = vshll.u32 %v6273, 16
        %v6416 = vor.u32 %v6413, %v6414
        %v6417 = vrot.slane %v6413, 4
        %v6419 = vshrl.u32 %v6274, 16
        %v6421 = vrot.slane %v6419, 7
        %v6422 = vshll.u32 %v6274, 16
        %v6424 = vor.u32 %v6421, %v6422
        %v6425 = vsel %vm429, %v6417, %v6424
        %v6426 = vrot.slane %v6421, 4
        %v6428 = vshrl.u32 %v6275, 16
        %v6430 = vrot.slane %v6428, 7
        %v6431 = vshll.u32 %v6275, 16
        %v6433 = vor.u32 %v6430, %v6431
        %v6434 = vrot.slane %v6430, 4
        %v6436 = vshrl.u32 %v6276, 16
        %v6438 = vrot.slane %v6436, 7
        %v6439 = vshll.u32 %v6276, 16
        %v6441 = vor.u32 %v6438, %v6439
        %v6442 = vsel %vm429, %v6434, %v6441
        %v6443 = vrot.slane %v6438, 4
        %v6445 = vshrl.u32 %v6277, 16
        %v6447 = vrot.slane %v6445, 7
        %v6448 = vshll.u32 %v6277, 16
        %v6450 = vor.u32 %v6447, %v6448
        %v6451 = vrot.slane %v6447, 4
        %v6453 = vshrl.u32 %v6278, 16
        %v6455 = vrot.slane %v6453, 7
        %v6456 = vshll.u32 %v6278, 16
        %v6458 = vor.u32 %v6455, %v6456
        %v6459 = vsel %vm429, %v6451, %v6458
        %v6460 = vrot.slane %v6455, 4
        %v6462 = vshrl.u32 %v6279, 16
        %v6464 = vrot.slane %v6462, 7
        %v6465 = vshll.u32 %v6279, 16
        %v6467 = vor.u32 %v6464, %v6465
        %v6468 = vrot.slane %v6464, 4
        %v6470 = vshrl.u32 %v6280, 16
        %v6472 = vrot.slane %v6470, 7
        %v6473 = vshll.u32 %v6280, 16
        %v6475 = vor.u32 %v6472, %v6473
        %v6476 = vsel %vm429, %v6468, %v6475
        %v6477 = vrot.slane %v6472, 4
        %v6479 = vshrl.u32 %v6281, 16
        %v6481 = vrot.slane %v6479, 7
        %v6482 = vshll.u32 %v6281, 16
        %v6484 = vor.u32 %v6481, %v6482
        %v6485 = vrot.slane %v6481, 4
        %v6487 = vshrl.u32 %v6282, 16
        %v6489 = vrot.slane %v6487, 7
        %v6490 = vshll.u32 %v6282, 16
        %v6492 = vor.u32 %v6489, %v6490
        %v6493 = vsel %vm429, %v6485, %v6492
        %v6494 = vrot.slane %v6489, 4
        %v6496 = vshrl.u32 %v6283, 16
        %v6498 = vrot.slane %v6496, 7
        %v6499 = vshll.u32 %v6283, 16
        %v6501 = vor.u32 %v6498, %v6499
        %v6502 = vrot.slane %v6498, 4
        %v6504 = vshrl.u32 %v6284, 16
        %v6506 = vrot.slane %v6504, 7
        %v6507 = vshll.u32 %v6284, 16
        %v6509 = vor.u32 %v6506, %v6507
        %v6510 = vsel %vm429, %v6502, %v6509
        %v6511 = vrot.slane %v6506, 4
        %v6513 = vshrl.u32 %v6285, 16
        %v6515 = vrot.slane %v6513, 7
        %v6516 = vshll.u32 %v6285, 16
        %v6518 = vor.u32 %v6515, %v6516
        %v6519 = vrot.slane %v6515, 4
        %v6521 = vshrl.u32 %v6286, 16
        %v6523 = vrot.slane %v6521, 7
        %v6524 = vshll.u32 %v6286, 16
        %v6526 = vor.u32 %v6523, %v6524
        %v6527 = vsel %vm429, %v6519, %v6526
        %v6528 = vrot.slane %v6523, 4
        %v6530 = vshrl.u32 %v6287, 16
        %v6532 = vrot.slane %v6530, 7
        %v6533 = vshll.u32 %v6287, 16
        %v6535 = vor.u32 %v6532, %v6533
        %v6536 = vrot.slane %v6532, 4
        %v6538 = vshrl.u32 %v6288, 16
        %v6540 = vrot.slane %v6538, 7
        %v6541 = vshll.u32 %v6288, 16
        %v6543 = vor.u32 %v6540, %v6541
        %v6544 = vsel %vm429, %v6536, %v6543
        %v6545 = vrot.slane %v6540, 4
        %v6547 = vshrl.u32 %v6289, 16
        %v6549 = vrot.slane %v6547, 7
        %v6550 = vshll.u32 %v6289, 16
        %v6552 = vor.u32 %v6549, %v6550
        %v6553 = vrot.slane %v6549, 4
        %v6555 = vshrl.u32 %v6290, 16
        %v6557 = vrot.slane %v6555, 7
        %v6558 = vshll.u32 %v6290, 16
        %v6560 = vor.u32 %v6557, %v6558
        %v6561 = vsel %vm429, %v6553, %v6560
        %v6562 = vrot.slane %v6557, 4
        %v6611 = vld [vmem:[%s750] sm:$0xf]
        %v6612 = vsel %vm3722, %v6297, %v6611
        %6613 = vst [vmem:[%s750] sm:$0xf] %v6612
        %6614 = vst.msk [vmem:[%s750 + $0x4] sm:$0xf] %vm3726, %v6306
        %v6615 = vld [vmem:[%s750 + $0x8] sm:$0x1]
        %v6616 = vsel %vm3729, %v6307, %v6615
        %6617 = vst [vmem:[%s750 + $0x8] sm:$0x1] %v6616
        %v6618 = vld [vmem:[%s750 + $0xc] sm:$0xf]
        %v6619 = vsel %vm3722, %v6314, %v6618
        %6620 = vst [vmem:[%s750 + $0xc] sm:$0xf] %v6619
        %6621 = vst.msk [vmem:[%s750 + $0x10] sm:$0xf] %vm3726, %v6323
        %v6622 = vld [vmem:[%s750 + $0x14] sm:$0x1]
        %v6623 = vsel %vm3729, %v6324, %v6622
        %6624 = vst [vmem:[%s750 + $0x14] sm:$0x1] %v6623
        %v6625 = vld [vmem:[%s750 + $0x18] sm:$0xf]
        %v6626 = vsel %vm3722, %v6331, %v6625
        %6627 = vst [vmem:[%s750 + $0x18] sm:$0xf] %v6626
        %6628 = vst.msk [vmem:[%s750 + $0x1c] sm:$0xf] %vm3726, %v6340
        %v6629 = vld [vmem:[%s750 + $0x20] sm:$0x1]
        %v6630 = vsel %vm3729, %v6341, %v6629
        %6631 = vst [vmem:[%s750 + $0x20] sm:$0x1] %v6630
        %v6632 = vld [vmem:[%s750 + $0x24] sm:$0xf]
        %v6633 = vsel %vm3722, %v6348, %v6632
        %6634 = vst [vmem:[%s750 + $0x24] sm:$0xf] %v6633
        %6635 = vst.msk [vmem:[%s750 + $0x28] sm:$0xf] %vm3726, %v6357
        %v6636 = vld [vmem:[%s750 + $0x2c] sm:$0x1]
        %v6637 = vsel %vm3729, %v6358, %v6636
        %6638 = vst [vmem:[%s750 + $0x2c] sm:$0x1] %v6637
        %v6639 = vld [vmem:[%s750 + $0x30] sm:$0xf]
        %v6640 = vsel %vm3722, %v6365, %v6639
        %6641 = vst [vmem:[%s750 + $0x30] sm:$0xf] %v6640
        %6642 = vst.msk [vmem:[%s750 + $0x34] sm:$0xf] %vm3726, %v6374
        %v6643 = vld [vmem:[%s750 + $0x38] sm:$0x1]
        %v6644 = vsel %vm3729, %v6375, %v6643
        %6645 = vst [vmem:[%s750 + $0x38] sm:$0x1] %v6644
        %v6646 = vld [vmem:[%s750 + $0x3c] sm:$0xf]
        %v6647 = vsel %vm3722, %v6382, %v6646
        %6648 = vst [vmem:[%s750 + $0x3c] sm:$0xf] %v6647
        %6649 = vst.msk [vmem:[%s750 + $0x40] sm:$0xf] %vm3726, %v6391
        %v6650 = vld [vmem:[%s750 + $0x44] sm:$0x1]
        %v6651 = vsel %vm3729, %v6392, %v6650
        %6652 = vst [vmem:[%s750 + $0x44] sm:$0x1] %v6651
        %v6653 = vld [vmem:[%s750 + $0x48] sm:$0xf]
        %v6654 = vsel %vm3722, %v6399, %v6653
        %6655 = vst [vmem:[%s750 + $0x48] sm:$0xf] %v6654
        %6656 = vst.msk [vmem:[%s750 + $0x4c] sm:$0xf] %vm3726, %v6408
        %v6657 = vld [vmem:[%s750 + $0x50] sm:$0x1]
        %v6658 = vsel %vm3729, %v6409, %v6657
        %6659 = vst [vmem:[%s750 + $0x50] sm:$0x1] %v6658
        %v6660 = vld [vmem:[%s750 + $0x54] sm:$0xf]
        %v6661 = vsel %vm3722, %v6416, %v6660
        %6662 = vst [vmem:[%s750 + $0x54] sm:$0xf] %v6661
        %6663 = vst.msk [vmem:[%s750 + $0x58] sm:$0xf] %vm3726, %v6425
        %v6664 = vld [vmem:[%s750 + $0x5c] sm:$0x1]
        %v6665 = vsel %vm3729, %v6426, %v6664
        %6666 = vst [vmem:[%s750 + $0x5c] sm:$0x1] %v6665
        %v6667 = vld [vmem:[%s750 + $0x60] sm:$0xf]
        %v6668 = vsel %vm3722, %v6433, %v6667
        %6669 = vst [vmem:[%s750 + $0x60] sm:$0xf] %v6668
        %6670 = vst.msk [vmem:[%s750 + $0x64] sm:$0xf] %vm3726, %v6442
        %v6671 = vld [vmem:[%s750 + $0x68] sm:$0x1]
        %v6672 = vsel %vm3729, %v6443, %v6671
        %6673 = vst [vmem:[%s750 + $0x68] sm:$0x1] %v6672
        %v6674 = vld [vmem:[%s750 + $0x6c] sm:$0xf]
        %v6675 = vsel %vm3722, %v6450, %v6674
        %6676 = vst [vmem:[%s750 + $0x6c] sm:$0xf] %v6675
        %6677 = vst.msk [vmem:[%s750 + $0x70] sm:$0xf] %vm3726, %v6459
        %v6678 = vld [vmem:[%s750 + $0x74] sm:$0x1]
        %v6679 = vsel %vm3729, %v6460, %v6678
        %6680 = vst [vmem:[%s750 + $0x74] sm:$0x1] %v6679
        %v6681 = vld [vmem:[%s750 + $0x78] sm:$0xf]
        %v6682 = vsel %vm3722, %v6467, %v6681
        %6683 = vst [vmem:[%s750 + $0x78] sm:$0xf] %v6682
        %6684 = vst.msk [vmem:[%s750 + $0x7c] sm:$0xf] %vm3726, %v6476
        %v6685 = vld [vmem:[%s750 + $0x80] sm:$0x1]
        %v6686 = vsel %vm3729, %v6477, %v6685
        %6687 = vst [vmem:[%s750 + $0x80] sm:$0x1] %v6686
        %v6688 = vld [vmem:[%s750 + $0x84] sm:$0xf]
        %v6689 = vsel %vm3722, %v6484, %v6688
        %6690 = vst [vmem:[%s750 + $0x84] sm:$0xf] %v6689
        %6691 = vst.msk [vmem:[%s750 + $0x88] sm:$0xf] %vm3726, %v6493
        %v6692 = vld [vmem:[%s750 + $0x8c] sm:$0x1]
        %v6693 = vsel %vm3729, %v6494, %v6692
        %6694 = vst [vmem:[%s750 + $0x8c] sm:$0x1] %v6693
        %v6695 = vld [vmem:[%s750 + $0x90] sm:$0xf]
        %v6696 = vsel %vm3722, %v6501, %v6695
        %6697 = vst [vmem:[%s750 + $0x90] sm:$0xf] %v6696
        %6698 = vst.msk [vmem:[%s750 + $0x94] sm:$0xf] %vm3726, %v6510
        %v6699 = vld [vmem:[%s750 + $0x98] sm:$0x1]
        %v6700 = vsel %vm3729, %v6511, %v6699
        %6701 = vst [vmem:[%s750 + $0x98] sm:$0x1] %v6700
        %v6702 = vld [vmem:[%s750 + $0x9c] sm:$0xf]
        %v6703 = vsel %vm3722, %v6518, %v6702
        %6704 = vst [vmem:[%s750 + $0x9c] sm:$0xf] %v6703
        %6705 = vst.msk [vmem:[%s750 + $0xa0] sm:$0xf] %vm3726, %v6527
        %v6706 = vld [vmem:[%s750 + $0xa4] sm:$0x1]
        %v6707 = vsel %vm3729, %v6528, %v6706
        %6708 = vst [vmem:[%s750 + $0xa4] sm:$0x1] %v6707
        %v6709 = vld [vmem:[%s750 + $0xa8] sm:$0xf]
        %v6710 = vsel %vm3722, %v6535, %v6709
        %6711 = vst [vmem:[%s750 + $0xa8] sm:$0xf] %v6710
        %6712 = vst.msk [vmem:[%s750 + $0xac] sm:$0xf] %vm3726, %v6544
        %v6713 = vld [vmem:[%s750 + $0xb0] sm:$0x1]
        %v6714 = vsel %vm3729, %v6545, %v6713
        %6715 = vst [vmem:[%s750 + $0xb0] sm:$0x1] %v6714
        %v6716 = vld [vmem:[%s750 + $0xb4] sm:$0xf]
        %v6717 = vsel %vm3722, %v6552, %v6716
        %6718 = vst [vmem:[%s750 + $0xb4] sm:$0xf] %v6717
        %6719 = vst.msk [vmem:[%s750 + $0xb8] sm:$0xf] %vm3726, %v6561
        %v6720 = vld [vmem:[%s750 + $0xbc] sm:$0x1]
        %v6721 = vsel %vm3729, %v6562, %v6720
        %6722 = vst [vmem:[%s750 + $0xbc] sm:$0x1] %v6721
        %v6723 = vld [vmem:[#allocation2] sm:$0xf]
        %v6724 = vsel %vm3722, %v6314, %v6723
        %6725 = vst [vmem:[#allocation2] sm:$0xf] %v6724
        %6726 = vst.msk [vmem:[#allocation2 + $0x4] sm:$0xf] %vm3726, %v6323
        %v6727 = vld [vmem:[#allocation2 + $0x8] sm:$0x1]
        %v6728 = vsel %vm3729, %v6324, %v6727
        %6729 = vst [vmem:[#allocation2 + $0x8] sm:$0x1] %v6728
        %v6730 = vld [vmem:[%s873] sm:$0xf]
        %v6731 = vsel %vm3722, %v6535, %v6730
        %6732 = vst [vmem:[%s873] sm:$0xf] %v6731
        %6733 = vst.msk [vmem:[%s873 + $0x4] sm:$0xf] %vm3726, %v6544
        %v6734 = vld [vmem:[%s873 + $0x8] sm:$0x1]
        %v6735 = vsel %vm3729, %v6545, %v6734
        %6736 = vst [vmem:[%s873 + $0x8] sm:$0x1] %v6735
        %v6737 = vld [vmem:[#allocation2] sm:$0x2]
        %v6738 = vld [vmem:[#allocation2 + $0xc] sm:$0x2]
        %v6739 = vld [vmem:[#allocation2 + $0x18] sm:$0x2]
        %v6740 = vld [vmem:[#allocation2 + $0x24] sm:$0x2]
        %v6741 = vld [vmem:[#allocation2 + $0x30] sm:$0x2]
        %v6742 = vld [vmem:[#allocation2 + $0x3c] sm:$0x2]
        %v6743 = vld [vmem:[#allocation2 + $0x48] sm:$0x2]
        %v6744 = vld [vmem:[#allocation2 + $0x54] sm:$0x2]
        %v6745 = vld [vmem:[#allocation2 + $0x60] sm:$0x2]
        %v6746 = vld [vmem:[#allocation2 + $0x6c] sm:$0x2]
        %v6747 = vld [vmem:[#allocation2 + $0x78] sm:$0x2]
        %v6748 = vld [vmem:[#allocation2 + $0x84] sm:$0x2]
        %v6749 = vld [vmem:[#allocation2 + $0x90] sm:$0x2]
        %v6750 = vld [vmem:[#allocation2 + $0x9c] sm:$0x2]
        %v6751 = vld [vmem:[#allocation2 + $0xa8] sm:$0x2]
        %v6752 = vld [vmem:[#allocation2 + $0xb4] sm:$0x2]
        %v6753 = vld [vmem:[#allocation2 + $0xc0] sm:$0x2]
        %v6754 = vld [vmem:[#allocation2 + $0xcc] sm:$0x2]
        %v6773 = vrot.slane %v6737, 5
        %v6774 = vrot.slane %v6773, 4
        %v6775 = vrot.slane %v6738, 5
        %v6776 = vrot.slane %v6775, 4
        %v6777 = vrot.slane %v6739, 5
        %v6778 = vrot.slane %v6777, 4
        %v6779 = vrot.slane %v6740, 5
        %v6780 = vrot.slane %v6779, 4
        %v6781 = vrot.slane %v6741, 5
        %v6782 = vrot.slane %v6781, 4
        %v6783 = vrot.slane %v6742, 5
        %v6784 = vrot.slane %v6783, 4
        %v6785 = vrot.slane %v6743, 5
        %v6786 = vrot.slane %v6785, 4
        %v6787 = vrot.slane %v6744, 5
        %v6788 = vrot.slane %v6787, 4
        %v6789 = vrot.slane %v6745, 5
        %v6790 = vrot.slane %v6789, 4
        %v6791 = vrot.slane %v6746, 5
        %v6792 = vrot.slane %v6791, 4
        %v6793 = vrot.slane %v6747, 5
        %v6794 = vrot.slane %v6793, 4
        %v6795 = vrot.slane %v6748, 5
        %v6796 = vrot.slane %v6795, 4
        %v6797 = vrot.slane %v6749, 5
        %v6798 = vrot.slane %v6797, 4
        %v6799 = vrot.slane %v6750, 5
        %v6800 = vrot.slane %v6799, 4
        %v6801 = vrot.slane %v6751, 5
        %v6802 = vrot.slane %v6801, 4
        %v6803 = vrot.slane %v6752, 5
        %v6804 = vrot.slane %v6803, 4
        %v6805 = vrot.slane %v6753, 5
        %v6806 = vrot.slane %v6805, 4
        %v6807 = vrot.slane %v6754, 5
        %v6808 = vrot.slane %v6807, 4
        %v6827 = vld [vmem:[#allocation2] sm:$0x1]
        %v6828 = vsel %vm3729, %v6774, %v6827
        %6829 = vst [vmem:[#allocation2] sm:$0x1] %v6828
        %v6830 = vld [vmem:[#allocation2 + $0xc] sm:$0x1]
        %v6831 = vsel %vm3729, %v6776, %v6830
        %6832 = vst [vmem:[#allocation2 + $0xc] sm:$0x1] %v6831
        %v6833 = vld [vmem:[#allocation2 + $0x18] sm:$0x1]
        %v6834 = vsel %vm3729, %v6778, %v6833
        %6835 = vst [vmem:[#allocation2 + $0x18] sm:$0x1] %v6834
        %v6836 = vld [vmem:[#allocation2 + $0x24] sm:$0x1]
        %v6837 = vsel %vm3729, %v6780, %v6836
        %6838 = vst [vmem:[#allocation2 + $0x24] sm:$0x1] %v6837
        %v6839 = vld [vmem:[#allocation2 + $0x30] sm:$0x1]
        %v6840 = vsel %vm3729, %v6782, %v6839
        %6841 = vst [vmem:[#allocation2 + $0x30] sm:$0x1] %v6840
        %v6842 = vld [vmem:[#allocation2 + $0x3c] sm:$0x1]
        %v6843 = vsel %vm3729, %v6784, %v6842
        %6844 = vst [vmem:[#allocation2 + $0x3c] sm:$0x1] %v6843
        %v6845 = vld [vmem:[#allocation2 + $0x48] sm:$0x1]
        %v6846 = vsel %vm3729, %v6786, %v6845
        %6847 = vst [vmem:[#allocation2 + $0x48] sm:$0x1] %v6846
        %v6848 = vld [vmem:[#allocation2 + $0x54] sm:$0x1]
        %v6849 = vsel %vm3729, %v6788, %v6848
        %6850 = vst [vmem:[#allocation2 + $0x54] sm:$0x1] %v6849
        %v6851 = vld [vmem:[#allocation2 + $0x60] sm:$0x1]
        %v6852 = vsel %vm3729, %v6790, %v6851
        %6853 = vst [vmem:[#allocation2 + $0x60] sm:$0x1] %v6852
        %v6854 = vld [vmem:[#allocation2 + $0x6c] sm:$0x1]
        %v6855 = vsel %vm3729, %v6792, %v6854
        %6856 = vst [vmem:[#allocation2 + $0x6c] sm:$0x1] %v6855
        %v6857 = vld [vmem:[#allocation2 + $0x78] sm:$0x1]
        %v6858 = vsel %vm3729, %v6794, %v6857
        %6859 = vst [vmem:[#allocation2 + $0x78] sm:$0x1] %v6858
        %v6860 = vld [vmem:[#allocation2 + $0x84] sm:$0x1]
        %v6861 = vsel %vm3729, %v6796, %v6860
        %6862 = vst [vmem:[#allocation2 + $0x84] sm:$0x1] %v6861
        %v6863 = vld [vmem:[#allocation2 + $0x90] sm:$0x1]
        %v6864 = vsel %vm3729, %v6798, %v6863
        %6865 = vst [vmem:[#allocation2 + $0x90] sm:$0x1] %v6864
        %v6866 = vld [vmem:[#allocation2 + $0x9c] sm:$0x1]
        %v6867 = vsel %vm3729, %v6800, %v6866
        %6868 = vst [vmem:[#allocation2 + $0x9c] sm:$0x1] %v6867
        %v6869 = vld [vmem:[#allocation2 + $0xa8] sm:$0x1]
        %v6870 = vsel %vm3729, %v6802, %v6869
        %6871 = vst [vmem:[#allocation2 + $0xa8] sm:$0x1] %v6870
        %v6872 = vld [vmem:[#allocation2 + $0xb4] sm:$0x1]
        %v6873 = vsel %vm3729, %v6804, %v6872
        %6874 = vst [vmem:[#allocation2 + $0xb4] sm:$0x1] %v6873
        %v6875 = vld [vmem:[#allocation2 + $0xc0] sm:$0x1]
        %v6876 = vsel %vm3729, %v6806, %v6875
        %6877 = vst [vmem:[#allocation2 + $0xc0] sm:$0x1] %v6876
        %v6878 = vld [vmem:[#allocation2 + $0xcc] sm:$0x1]
        %v6879 = vsel %vm3729, %v6808, %v6878
        %6880 = vst [vmem:[#allocation2 + $0xcc] sm:$0x1] %v6879
        %v6881 = vld [vmem:[#allocation2 + $0x4] sm:$0x8]
        %v6882 = vld [vmem:[#allocation2 + $0x10] sm:$0x8]
        %v6883 = vld [vmem:[#allocation2 + $0x1c] sm:$0x8]
        %v6884 = vld [vmem:[#allocation2 + $0x28] sm:$0x8]
        %v6885 = vld [vmem:[#allocation2 + $0x34] sm:$0x8]
        %v6886 = vld [vmem:[#allocation2 + $0x40] sm:$0x8]
        %v6887 = vld [vmem:[#allocation2 + $0x4c] sm:$0x8]
        %v6888 = vld [vmem:[#allocation2 + $0x58] sm:$0x8]
        %v6889 = vld [vmem:[#allocation2 + $0x64] sm:$0x8]
        %v6890 = vld [vmem:[#allocation2 + $0x70] sm:$0x8]
        %v6891 = vld [vmem:[#allocation2 + $0x7c] sm:$0x8]
        %v6892 = vld [vmem:[#allocation2 + $0x88] sm:$0x8]
        %v6893 = vld [vmem:[#allocation2 + $0x94] sm:$0x8]
        %v6894 = vld [vmem:[#allocation2 + $0xa0] sm:$0x8]
        %v6895 = vld [vmem:[#allocation2 + $0xac] sm:$0x8]
        %v6896 = vld [vmem:[#allocation2 + $0xb8] sm:$0x8]
        %v6897 = vld [vmem:[#allocation2 + $0xc4] sm:$0x8]
        %v6898 = vld [vmem:[#allocation2 + $0xd0] sm:$0x8]
        %v6917 = vrot.slane %v6881, 7
        %v6918 = vrot.slane %v6917, 4
        %v6919 = vrot.slane %v6882, 7
        %v6920 = vrot.slane %v6919, 4
        %v6921 = vrot.slane %v6883, 7
        %v6922 = vrot.slane %v6921, 4
        %v6923 = vrot.slane %v6884, 7
        %v6924 = vrot.slane %v6923, 4
        %v6925 = vrot.slane %v6885, 7
        %v6926 = vrot.slane %v6925, 4
        %v6927 = vrot.slane %v6886, 7
        %v6928 = vrot.slane %v6927, 4
        %v6929 = vrot.slane %v6887, 7
        %v6930 = vrot.slane %v6929, 4
        %v6931 = vrot.slane %v6888, 7
        %v6932 = vrot.slane %v6931, 4
        %v6933 = vrot.slane %v6889, 7
        %v6934 = vrot.slane %v6933, 4
        %v6935 = vrot.slane %v6890, 7
        %v6936 = vrot.slane %v6935, 4
        %v6937 = vrot.slane %v6891, 7
        %v6938 = vrot.slane %v6937, 4
        %v6939 = vrot.slane %v6892, 7
        %v6940 = vrot.slane %v6939, 4
        %v6941 = vrot.slane %v6893, 7
        %v6942 = vrot.slane %v6941, 4
        %v6943 = vrot.slane %v6894, 7
        %v6944 = vrot.slane %v6943, 4
        %v6945 = vrot.slane %v6895, 7
        %v6946 = vrot.slane %v6945, 4
        %v6947 = vrot.slane %v6896, 7
        %v6948 = vrot.slane %v6947, 4
        %v6949 = vrot.slane %v6897, 7
        %v6950 = vrot.slane %v6949, 4
        %v6951 = vrot.slane %v6898, 7
        %v6952 = vrot.slane %v6951, 4
        %v6971 = vld [vmem:[#allocation2 + $0x8] sm:$0x1]
        %v6972 = vsel %vm4086, %v6918, %v6971
        %6973 = vst [vmem:[#allocation2 + $0x8] sm:$0x1] %v6972
        %v6974 = vld [vmem:[#allocation2 + $0x14] sm:$0x1]
        %v6975 = vsel %vm4086, %v6920, %v6974
        %6976 = vst [vmem:[#allocation2 + $0x14] sm:$0x1] %v6975
        %v6977 = vld [vmem:[#allocation2 + $0x20] sm:$0x1]
        %v6978 = vsel %vm4086, %v6922, %v6977
        %6979 = vst [vmem:[#allocation2 + $0x20] sm:$0x1] %v6978
        %v6980 = vld [vmem:[#allocation2 + $0x2c] sm:$0x1]
        %v6981 = vsel %vm4086, %v6924, %v6980
        %6982 = vst [vmem:[#allocation2 + $0x2c] sm:$0x1] %v6981
        %v6983 = vld [vmem:[#allocation2 + $0x38] sm:$0x1]
        %v6984 = vsel %vm4086, %v6926, %v6983
        %6985 = vst [vmem:[#allocation2 + $0x38] sm:$0x1] %v6984
        %v6986 = vld [vmem:[#allocation2 + $0x44] sm:$0x1]
        %v6987 = vsel %vm4086, %v6928, %v6986
        %6988 = vst [vmem:[#allocation2 + $0x44] sm:$0x1] %v6987
        %v6989 = vld [vmem:[#allocation2 + $0x50] sm:$0x1]
        %v6990 = vsel %vm4086, %v6930, %v6989
        %6991 = vst [vmem:[#allocation2 + $0x50] sm:$0x1] %v6990
        %v6992 = vld [vmem:[#allocation2 + $0x5c] sm:$0x1]
        %v6993 = vsel %vm4086, %v6932, %v6992
        %6994 = vst [vmem:[#allocation2 + $0x5c] sm:$0x1] %v6993
        %v6995 = vld [vmem:[#allocation2 + $0x68] sm:$0x1]
        %v6996 = vsel %vm4086, %v6934, %v6995
        %6997 = vst [vmem:[#allocation2 + $0x68] sm:$0x1] %v6996
        %v6998 = vld [vmem:[#allocation2 + $0x74] sm:$0x1]
        %v6999 = vsel %vm4086, %v6936, %v6998
        %7000 = vst [vmem:[#allocation2 + $0x74] sm:$0x1] %v6999
        %v7001 = vld [vmem:[#allocation2 + $0x80] sm:$0x1]
        %v7002 = vsel %vm4086, %v6938, %v7001
        %7003 = vst [vmem:[#allocation2 + $0x80] sm:$0x1] %v7002
        %v7004 = vld [vmem:[#allocation2 + $0x8c] sm:$0x1]
        %v7005 = vsel %vm4086, %v6940, %v7004
        %7006 = vst [vmem:[#allocation2 + $0x8c] sm:$0x1] %v7005
        %v7007 = vld [vmem:[#allocation2 + $0x98] sm:$0x1]
        %v7008 = vsel %vm4086, %v6942, %v7007
        %7009 = vst [vmem:[#allocation2 + $0x98] sm:$0x1] %v7008
        %v7010 = vld [vmem:[#allocation2 + $0xa4] sm:$0x1]
        %v7011 = vsel %vm4086, %v6944, %v7010
        %7012 = vst [vmem:[#allocation2 + $0xa4] sm:$0x1] %v7011
        %v7013 = vld [vmem:[#allocation2 + $0xb0] sm:$0x1]
        %v7014 = vsel %vm4086, %v6946, %v7013
        %7015 = vst [vmem:[#allocation2 + $0xb0] sm:$0x1] %v7014
        %v7016 = vld [vmem:[#allocation2 + $0xbc] sm:$0x1]
        %v7017 = vsel %vm4086, %v6948, %v7016
        %7018 = vst [vmem:[#allocation2 + $0xbc] sm:$0x1] %v7017
        %v7019 = vld [vmem:[#allocation2 + $0xc8] sm:$0x1]
        %v7020 = vsel %vm4086, %v6950, %v7019
        %7021 = vst [vmem:[#allocation2 + $0xc8] sm:$0x1] %v7020
        %v7022 = vld [vmem:[#allocation2 + $0xd4] sm:$0x1]
        %v7023 = vsel %vm4086, %v6952, %v7022
        %7024 = vst [vmem:[#allocation2 + $0xd4] sm:$0x1] %v7023
        %v7025 = vld [vmem:[#allocation2] sm:$0xf]
        %v7026 = vld [vmem:[#allocation2 + $0x4] sm:$0xf]
        %v7027 = vld [vmem:[#allocation2 + $0xc] sm:$0xf]
        %v7028 = vld [vmem:[#allocation2 + $0x10] sm:$0xf]
        %v7029 = vld [vmem:[#allocation2 + $0x18] sm:$0xf]
        %v7030 = vld [vmem:[#allocation2 + $0x1c] sm:$0xf]
        %v7031 = vld [vmem:[#allocation2 + $0x24] sm:$0xf]
        %v7032 = vld [vmem:[#allocation2 + $0x28] sm:$0xf]
        %v7033 = vld [vmem:[#allocation2 + $0x30] sm:$0xf]
        %v7034 = vld [vmem:[#allocation2 + $0x34] sm:$0xf]
        %v7035 = vld [vmem:[#allocation2 + $0x3c] sm:$0xf]
        %v7036 = vld [vmem:[#allocation2 + $0x40] sm:$0xf]
        %v7037 = vld [vmem:[#allocation2 + $0x48] sm:$0xf]
        %v7038 = vld [vmem:[#allocation2 + $0x4c] sm:$0xf]
        %v7039 = vld [vmem:[#allocation2 + $0x54] sm:$0xf]
        %v7040 = vld [vmem:[#allocation2 + $0x58] sm:$0xf]
        %v7041 = vld [vmem:[#allocation2 + $0x60] sm:$0xf]
        %v7042 = vld [vmem:[#allocation2 + $0x64] sm:$0xf]
        %v7043 = vld [vmem:[#allocation2 + $0x6c] sm:$0xf]
        %v7044 = vld [vmem:[#allocation2 + $0x70] sm:$0xf]
        %v7045 = vld [vmem:[#allocation2 + $0x78] sm:$0xf]
        %v7046 = vld [vmem:[#allocation2 + $0x7c] sm:$0xf]
        %v7047 = vld [vmem:[#allocation2 + $0x84] sm:$0xf]
        %v7048 = vld [vmem:[#allocation2 + $0x88] sm:$0xf]
        %v7049 = vld [vmem:[#allocation2 + $0x90] sm:$0xf]
        %v7050 = vld [vmem:[#allocation2 + $0x94] sm:$0xf]
        %v7051 = vld [vmem:[#allocation2 + $0x9c] sm:$0xf]
        %v7052 = vld [vmem:[#allocation2 + $0xa0] sm:$0xf]
        %v7053 = vld [vmem:[#allocation2 + $0xa8] sm:$0xf]
        %v7054 = vld [vmem:[#allocation2 + $0xac] sm:$0xf]
        %v7055 = vld [vmem:[#allocation2 + $0xb4] sm:$0xf]
        %v7056 = vld [vmem:[#allocation2 + $0xb8] sm:$0xf]
        %v7057 = vld [vmem:[#allocation2 + $0xc0] sm:$0xf]
        %v7058 = vld [vmem:[#allocation2 + $0xc4] sm:$0xf]
        %v7059 = vld [vmem:[#allocation2 + $0xcc] sm:$0xf]
        %v7060 = vld [vmem:[#allocation2 + $0xd0] sm:$0xf]
        %v7097 = vunpack.c.l.b16 %v7025
        %v7098 = vunpack.c.l.b16 %v7026
        %v7099 = vunpack.c.l.b16 %v7027
        %v7100 = vunpack.c.l.b16 %v7028
        %v7101 = vunpack.c.l.b16 %v7029
        %v7102 = vunpack.c.l.b16 %v7030
        %v7103 = vunpack.c.l.b16 %v7031
        %v7104 = vunpack.c.l.b16 %v7032
        %v7105 = vunpack.c.l.b16 %v7033
        %v7106 = vunpack.c.l.b16 %v7034
        %v7107 = vunpack.c.l.b16 %v7035
        %v7108 = vunpack.c.l.b16 %v7036
        %v7109 = vunpack.c.l.b16 %v7037
        %v7110 = vunpack.c.l.b16 %v7038
        %v7111 = vunpack.c.l.b16 %v7039
        %v7112 = vunpack.c.l.b16 %v7040
        %v7113 = vunpack.c.l.b16 %v7041
        %v7114 = vunpack.c.l.b16 %v7042
        %v7115 = vunpack.c.l.b16 %v7043
        %v7116 = vunpack.c.l.b16 %v7044
        %v7117 = vunpack.c.l.b16 %v7045
        %v7118 = vunpack.c.l.b16 %v7046
        %v7119 = vunpack.c.l.b16 %v7047
        %v7120 = vunpack.c.l.b16 %v7048
        %v7121 = vunpack.c.l.b16 %v7049
        %v7122 = vunpack.c.l.b16 %v7050
        %v7123 = vunpack.c.l.b16 %v7051
        %v7124 = vunpack.c.l.b16 %v7052
        %v7125 = vunpack.c.l.b16 %v7053
        %v7126 = vunpack.c.l.b16 %v7054
        %v7127 = vunpack.c.l.b16 %v7055
        %v7128 = vunpack.c.l.b16 %v7056
        %v7129 = vunpack.c.l.b16 %v7057
        %v7130 = vunpack.c.l.b16 %v7058
        %v7131 = vunpack.c.l.b16 %v7059
        %v7132 = vunpack.c.l.b16 %v7060
        %v7133 = vpack.c.b16 %v7098, %v7097
        %v7134 = vpack.c.b16 %v7100, %v7099
        %v7135 = vpack.c.b16 %v7102, %v7101
        %v7136 = vpack.c.b16 %v7104, %v7103
        %v7137 = vpack.c.b16 %v7106, %v7105
        %v7138 = vpack.c.b16 %v7108, %v7107
        %v7139 = vpack.c.b16 %v7110, %v7109
        %v7140 = vpack.c.b16 %v7112, %v7111
        %v7141 = vpack.c.b16 %v7114, %v7113
        %v7142 = vpack.c.b16 %v7116, %v7115
        %v7143 = vpack.c.b16 %v7118, %v7117
        %v7144 = vpack.c.b16 %v7120, %v7119
        %v7145 = vpack.c.b16 %v7122, %v7121
        %v7146 = vpack.c.b16 %v7124, %v7123
        %v7147 = vpack.c.b16 %v7126, %v7125
        %v7148 = vpack.c.b16 %v7128, %v7127
        %v7149 = vpack.c.b16 %v7130, %v7129
        %v7150 = vpack.c.b16 %v7132, %v7131
        %7169 = vst.msk [vmem:[#allocation3] sm:$0xff] %vm3153, %v7133
        %7170 = vst.msk [vmem:[#allocation3 + $0x8] sm:$0xff] %vm3153, %v7134
        %7171 = vst.msk [vmem:[#allocation3 + $0x10] sm:$0xff] %vm3153, %v7135
        %7172 = vst.msk [vmem:[#allocation3 + $0x18] sm:$0xff] %vm3153, %v7136
        %7173 = vst.msk [vmem:[#allocation3 + $0x20] sm:$0xff] %vm3153, %v7137
        %7174 = vst.msk [vmem:[#allocation3 + $0x28] sm:$0xff] %vm3153, %v7138
        %7175 = vst.msk [vmem:[#allocation3 + $0x30] sm:$0xff] %vm3153, %v7139
        %7176 = vst.msk [vmem:[#allocation3 + $0x38] sm:$0xff] %vm3153, %v7140
        %7177 = vst.msk [vmem:[#allocation3 + $0x40] sm:$0xff] %vm3153, %v7141
        %7178 = vst.msk [vmem:[#allocation3 + $0x48] sm:$0xff] %vm3153, %v7142
        %7179 = vst.msk [vmem:[#allocation3 + $0x50] sm:$0xff] %vm3153, %v7143
        %7180 = vst.msk [vmem:[#allocation3 + $0x58] sm:$0xff] %vm3153, %v7144
        %7181 = vst.msk [vmem:[#allocation3 + $0x60] sm:$0xff] %vm3153, %v7145
        %7182 = vst.msk [vmem:[#allocation3 + $0x68] sm:$0xff] %vm3153, %v7146
        %7183 = vst.msk [vmem:[#allocation3 + $0x70] sm:$0xff] %vm3153, %v7147
        %7184 = vst.msk [vmem:[#allocation3 + $0x78] sm:$0xff] %vm3153, %v7148
        %7185 = vst.msk [vmem:[#allocation3 + $0x80] sm:$0xff] %vm3153, %v7149
        %7186 = vst.msk [vmem:[#allocation3 + $0x88] sm:$0xff] %vm3153, %v7150
        %v7187 = vld [vmem:[#allocation2] sm:$0xf]
        %v7188 = vld [vmem:[#allocation2 + $0x4] sm:$0xf]
        %v7189 = vld [vmem:[#allocation2 + $0x8] sm:$0x1]
        %v7190 = vld [vmem:[#allocation2 + $0xc] sm:$0xf]
        %v7191 = vld [vmem:[#allocation2 + $0x10] sm:$0xf]
        %v7192 = vld [vmem:[#allocation2 + $0x14] sm:$0x1]
        %v7193 = vld [vmem:[#allocation2 + $0x18] sm:$0xf]
        %v7194 = vld [vmem:[#allocation2 + $0x1c] sm:$0xf]
        %v7195 = vld [vmem:[#allocation2 + $0x20] sm:$0x1]
        %v7196 = vld [vmem:[#allocation2 + $0x24] sm:$0xf]
        %v7197 = vld [vmem:[#allocation2 + $0x28] sm:$0xf]
        %v7198 = vld [vmem:[#allocation2 + $0x2c] sm:$0x1]
        %v7199 = vld [vmem:[#allocation2 + $0x30] sm:$0xf]
        %v7200 = vld [vmem:[#allocation2 + $0x34] sm:$0xf]
        %v7201 = vld [vmem:[#allocation2 + $0x38] sm:$0x1]
        %v7202 = vld [vmem:[#allocation2 + $0x3c] sm:$0xf]
        %v7203 = vld [vmem:[#allocation2 + $0x40] sm:$0xf]
        %v7204 = vld [vmem:[#allocation2 + $0x44] sm:$0x1]
        %v7205 = vld [vmem:[#allocation2 + $0x48] sm:$0xf]
        %v7206 = vld [vmem:[#allocation2 + $0x4c] sm:$0xf]
        %v7207 = vld [vmem:[#allocation2 + $0x50] sm:$0x1]
        %v7208 = vld [vmem:[#allocation2 + $0x54] sm:$0xf]
        %v7209 = vld [vmem:[#allocation2 + $0x58] sm:$0xf]
        %v7210 = vld [vmem:[#allocation2 + $0x5c] sm:$0x1]
        %v7211 = vld [vmem:[#allocation2 + $0x60] sm:$0xf]
        %v7212 = vld [vmem:[#allocation2 + $0x64] sm:$0xf]
        %v7213 = vld [vmem:[#allocation2 + $0x68] sm:$0x1]
        %v7214 = vld [vmem:[#allocation2 + $0x6c] sm:$0xf]
        %v7215 = vld [vmem:[#allocation2 + $0x70] sm:$0xf]
        %v7216 = vld [vmem:[#allocation2 + $0x74] sm:$0x1]
        %v7217 = vld [vmem:[#allocation2 + $0x78] sm:$0xf]
        %v7218 = vld [vmem:[#allocation2 + $0x7c] sm:$0xf]
        %v7219 = vld [vmem:[#allocation2 + $0x80] sm:$0x1]
        %v7220 = vld [vmem:[#allocation2 + $0x84] sm:$0xf]
        %v7221 = vld [vmem:[#allocation2 + $0x88] sm:$0xf]
        %v7222 = vld [vmem:[#allocation2 + $0x8c] sm:$0x1]
        %v7223 = vld [vmem:[#allocation2 + $0x90] sm:$0xf]
        %v7224 = vld [vmem:[#allocation2 + $0x94] sm:$0xf]
        %v7225 = vld [vmem:[#allocation2 + $0x98] sm:$0x1]
        %v7226 = vld [vmem:[#allocation2 + $0x9c] sm:$0xf]
        %v7227 = vld [vmem:[#allocation2 + $0xa0] sm:$0xf]
        %v7228 = vld [vmem:[#allocation2 + $0xa4] sm:$0x1]
        %v7229 = vld [vmem:[#allocation2 + $0xa8] sm:$0xf]
        %v7230 = vld [vmem:[#allocation2 + $0xac] sm:$0xf]
        %v7231 = vld [vmem:[#allocation2 + $0xb0] sm:$0x1]
        %v7232 = vld [vmem:[#allocation2 + $0xb4] sm:$0xf]
        %v7233 = vld [vmem:[#allocation2 + $0xb8] sm:$0xf]
        %v7234 = vld [vmem:[#allocation2 + $0xbc] sm:$0x1]
        %v7235 = vld [vmem:[#allocation2 + $0xc0] sm:$0xf]
        %v7236 = vld [vmem:[#allocation2 + $0xc4] sm:$0xf]
        %v7237 = vld [vmem:[#allocation2 + $0xc8] sm:$0x1]
        %v7238 = vld [vmem:[#allocation2 + $0xcc] sm:$0xf]
        %v7239 = vld [vmem:[#allocation2 + $0xd0] sm:$0xf]
        %v7240 = vld [vmem:[#allocation2 + $0xd4] sm:$0x1]
        %v7242 = vshrl.u32 %v7187, 16
        %v7244 = vrot.slane %v7242, 4
        %v7245 = vshll.u32 %v7187, 16
        %v7247 = vrot.slane %v7245, 5
        %v7248 = vor.u32 %v7244, %v7247
        %v7249 = vrot.slane %v7248, 4
        %v7251 = vshll.u32 %v7188, 16
        %v7253 = vrot.slane %v7251, 5
        %v7254 = vsel %vm1205, %v7249, %v7253
        %v7255 = vshrl.u32 %v7188, 16
        %v7257 = vrot.slane %v7255, 4
        %v7258 = vor.u32 %v7257, %v7253
        %v7259 = vrot.slane %v7258, 4
        %v7261 = vshll.u32 %v7189, 16
        %v7263 = vrot.slane %v7261, 5
        %v7264 = vsel %vm1205, %v7259, %v7263
        %v7266 = vshrl.u32 %v7190, 16
        %v7268 = vrot.slane %v7266, 4
        %v7269 = vshll.u32 %v7190, 16
        %v7271 = vrot.slane %v7269, 5
        %v7272 = vor.u32 %v7268, %v7271
        %v7273 = vrot.slane %v7272, 4
        %v7275 = vshll.u32 %v7191, 16
        %v7277 = vrot.slane %v7275, 5
        %v7278 = vsel %vm1205, %v7273, %v7277
        %v7279 = vshrl.u32 %v7191, 16
        %v7281 = vrot.slane %v7279, 4
        %v7282 = vor.u32 %v7281, %v7277
        %v7283 = vrot.slane %v7282, 4
        %v7285 = vshll.u32 %v7192, 16
        %v7287 = vrot.slane %v7285, 5
        %v7288 = vsel %vm1205, %v7283, %v7287
        %v7290 = vshrl.u32 %v7193, 16
        %v7292 = vrot.slane %v7290, 4
        %v7293 = vshll.u32 %v7193, 16
        %v7295 = vrot.slane %v7293, 5
        %v7296 = vor.u32 %v7292, %v7295
        %v7297 = vrot.slane %v7296, 4
        %v7299 = vshll.u32 %v7194, 16
        %v7301 = vrot.slane %v7299, 5
        %v7302 = vsel %vm1205, %v7297, %v7301
        %v7303 = vshrl.u32 %v7194, 16
        %v7305 = vrot.slane %v7303, 4
        %v7306 = vor.u32 %v7305, %v7301
        %v7307 = vrot.slane %v7306, 4
        %v7309 = vshll.u32 %v7195, 16
        %v7311 = vrot.slane %v7309, 5
        %v7312 = vsel %vm1205, %v7307, %v7311
        %v7314 = vshrl.u32 %v7196, 16
        %v7316 = vrot.slane %v7314, 4
        %v7317 = vshll.u32 %v7196, 16
        %v7319 = vrot.slane %v7317, 5
        %v7320 = vor.u32 %v7316, %v7319
        %v7321 = vrot.slane %v7320, 4
        %v7323 = vshll.u32 %v7197, 16
        %v7325 = vrot.slane %v7323, 5
        %v7326 = vsel %vm1205, %v7321, %v7325
        %v7327 = vshrl.u32 %v7197, 16
        %v7329 = vrot.slane %v7327, 4
        %v7330 = vor.u32 %v7329, %v7325
        %v7331 = vrot.slane %v7330, 4
        %v7333 = vshll.u32 %v7198, 16
        %v7335 = vrot.slane %v7333, 5
        %v7336 = vsel %vm1205, %v7331, %v7335
        %v7338 = vshrl.u32 %v7199, 16
        %v7340 = vrot.slane %v7338, 4
        %v7341 = vshll.u32 %v7199, 16
        %v7343 = vrot.slane %v7341, 5
        %v7344 = vor.u32 %v7340, %v7343
        %v7345 = vrot.slane %v7344, 4
        %v7347 = vshll.u32 %v7200, 16
        %v7349 = vrot.slane %v7347, 5
        %v7350 = vsel %vm1205, %v7345, %v7349
        %v7351 = vshrl.u32 %v7200, 16
        %v7353 = vrot.slane %v7351, 4
        %v7354 = vor.u32 %v7353, %v7349
        %v7355 = vrot.slane %v7354, 4
        %v7357 = vshll.u32 %v7201, 16
        %v7359 = vrot.slane %v7357, 5
        %v7360 = vsel %vm1205, %v7355, %v7359
        %v7362 = vshrl.u32 %v7202, 16
        %v7364 = vrot.slane %v7362, 4
        %v7365 = vshll.u32 %v7202, 16
        %v7367 = vrot.slane %v7365, 5
        %v7368 = vor.u32 %v7364, %v7367
        %v7369 = vrot.slane %v7368, 4
        %v7371 = vshll.u32 %v7203, 16
        %v7373 = vrot.slane %v7371, 5
        %v7374 = vsel %vm1205, %v7369, %v7373
        %v7375 = vshrl.u32 %v7203, 16
        %v7377 = vrot.slane %v7375, 4
        %v7378 = vor.u32 %v7377, %v7373
        %v7379 = vrot.slane %v7378, 4
        %v7381 = vshll.u32 %v7204, 16
        %v7383 = vrot.slane %v7381, 5
        %v7384 = vsel %vm1205, %v7379, %v7383
        %v7386 = vshrl.u32 %v7205, 16
        %v7388 = vrot.slane %v7386, 4
        %v7389 = vshll.u32 %v7205, 16
        %v7391 = vrot.slane %v7389, 5
        %v7392 = vor.u32 %v7388, %v7391
        %v7393 = vrot.slane %v7392, 4
        %v7395 = vshll.u32 %v7206, 16
        %v7397 = vrot.slane %v7395, 5
        %v7398 = vsel %vm1205, %v7393, %v7397
        %v7399 = vshrl.u32 %v7206, 16
        %v7401 = vrot.slane %v7399, 4
        %v7402 = vor.u32 %v7401, %v7397
        %v7403 = vrot.slane %v7402, 4
        %v7405 = vshll.u32 %v7207, 16
        %v7407 = vrot.slane %v7405, 5
        %v7408 = vsel %vm1205, %v7403, %v7407
        %v7410 = vshrl.u32 %v7208, 16
        %v7412 = vrot.slane %v7410, 4
        %v7413 = vshll.u32 %v7208, 16
        %v7415 = vrot.slane %v7413, 5
        %v7416 = vor.u32 %v7412, %v7415
        %v7417 = vrot.slane %v7416, 4
        %v7419 = vshll.u32 %v7209, 16
        %v7421 = vrot.slane %v7419, 5
        %v7422 = vsel %vm1205, %v7417, %v7421
        %v7423 = vshrl.u32 %v7209, 16
        %v7425 = vrot.slane %v7423, 4
        %v7426 = vor.u32 %v7425, %v7421
        %v7427 = vrot.slane %v7426, 4
        %v7429 = vshll.u32 %v7210, 16
        %v7431 = vrot.slane %v7429, 5
        %v7432 = vsel %vm1205, %v7427, %v7431
        %v7434 = vshrl.u32 %v7211, 16
        %v7436 = vrot.slane %v7434, 4
        %v7437 = vshll.u32 %v7211, 16
        %v7439 = vrot.slane %v7437, 5
        %v7440 = vor.u32 %v7436, %v7439
        %v7441 = vrot.slane %v7440, 4
        %v7443 = vshll.u32 %v7212, 16
        %v7445 = vrot.slane %v7443, 5
        %v7446 = vsel %vm1205, %v7441, %v7445
        %v7447 = vshrl.u32 %v7212, 16
        %v7449 = vrot.slane %v7447, 4
        %v7450 = vor.u32 %v7449, %v7445
        %v7451 = vrot.slane %v7450, 4
        %v7453 = vshll.u32 %v7213, 16
        %v7455 = vrot.slane %v7453, 5
        %v7456 = vsel %vm1205, %v7451, %v7455
        %v7458 = vshrl.u32 %v7214, 16
        %v7460 = vrot.slane %v7458, 4
        %v7461 = vshll.u32 %v7214, 16
        %v7463 = vrot.slane %v7461, 5
        %v7464 = vor.u32 %v7460, %v7463
        %v7465 = vrot.slane %v7464, 4
        %v7467 = vshll.u32 %v7215, 16
        %v7469 = vrot.slane %v7467, 5
        %v7470 = vsel %vm1205, %v7465, %v7469
        %v7471 = vshrl.u32 %v7215, 16
        %v7473 = vrot.slane %v7471, 4
        %v7474 = vor.u32 %v7473, %v7469
        %v7475 = vrot.slane %v7474, 4
        %v7477 = vshll.u32 %v7216, 16
        %v7479 = vrot.slane %v7477, 5
        %v7480 = vsel %vm1205, %v7475, %v7479
        %v7482 = vshrl.u32 %v7217, 16
        %v7484 = vrot.slane %v7482, 4
        %v7485 = vshll.u32 %v7217, 16
        %v7487 = vrot.slane %v7485, 5
        %v7488 = vor.u32 %v7484, %v7487
        %v7489 = vrot.slane %v7488, 4
        %v7491 = vshll.u32 %v7218, 16
        %v7493 = vrot.slane %v7491, 5
        %v7494 = vsel %vm1205, %v7489, %v7493
        %v7495 = vshrl.u32 %v7218, 16
        %v7497 = vrot.slane %v7495, 4
        %v7498 = vor.u32 %v7497, %v7493
        %v7499 = vrot.slane %v7498, 4
        %v7501 = vshll.u32 %v7219, 16
        %v7503 = vrot.slane %v7501, 5
        %v7504 = vsel %vm1205, %v7499, %v7503
        %v7506 = vshrl.u32 %v7220, 16
        %v7508 = vrot.slane %v7506, 4
        %v7509 = vshll.u32 %v7220, 16
        %v7511 = vrot.slane %v7509, 5
        %v7512 = vor.u32 %v7508, %v7511
        %v7513 = vrot.slane %v7512, 4
        %v7515 = vshll.u32 %v7221, 16
        %v7517 = vrot.slane %v7515, 5
        %v7518 = vsel %vm1205, %v7513, %v7517
        %v7519 = vshrl.u32 %v7221, 16
        %v7521 = vrot.slane %v7519, 4
        %v7522 = vor.u32 %v7521, %v7517
        %v7523 = vrot.slane %v7522, 4
        %v7525 = vshll.u32 %v7222, 16
        %v7527 = vrot.slane %v7525, 5
        %v7528 = vsel %vm1205, %v7523, %v7527
        %v7530 = vshrl.u32 %v7223, 16
        %v7532 = vrot.slane %v7530, 4
        %v7533 = vshll.u32 %v7223, 16
        %v7535 = vrot.slane %v7533, 5
        %v7536 = vor.u32 %v7532, %v7535
        %v7537 = vrot.slane %v7536, 4
        %v7539 = vshll.u32 %v7224, 16
        %v7541 = vrot.slane %v7539, 5
        %v7542 = vsel %vm1205, %v7537, %v7541
        %v7543 = vshrl.u32 %v7224, 16
        %v7545 = vrot.slane %v7543, 4
        %v7546 = vor.u32 %v7545, %v7541
        %v7547 = vrot.slane %v7546, 4
        %v7549 = vshll.u32 %v7225, 16
        %v7551 = vrot.slane %v7549, 5
        %v7552 = vsel %vm1205, %v7547, %v7551
        %v7554 = vshrl.u32 %v7226, 16
        %v7556 = vrot.slane %v7554, 4
        %v7557 = vshll.u32 %v7226, 16
        %v7559 = vrot.slane %v7557, 5
        %v7560 = vor.u32 %v7556, %v7559
        %v7561 = vrot.slane %v7560, 4
        %v7563 = vshll.u32 %v7227, 16
        %v7565 = vrot.slane %v7563, 5
        %v7566 = vsel %vm1205, %v7561, %v7565
        %v7567 = vshrl.u32 %v7227, 16
        %v7569 = vrot.slane %v7567, 4
        %v7570 = vor.u32 %v7569, %v7565
        %v7571 = vrot.slane %v7570, 4
        %v7573 = vshll.u32 %v7228, 16
        %v7575 = vrot.slane %v7573, 5
        %v7576 = vsel %vm1205, %v7571, %v7575
        %v7578 = vshrl.u32 %v7229, 16
        %v7580 = vrot.slane %v7578, 4
        %v7581 = vshll.u32 %v7229, 16
        %v7583 = vrot.slane %v7581, 5
        %v7584 = vor.u32 %v7580, %v7583
        %v7585 = vrot.slane %v7584, 4
        %v7587 = vshll.u32 %v7230, 16
        %v7589 = vrot.slane %v7587, 5
        %v7590 = vsel %vm1205, %v7585, %v7589
        %v7591 = vshrl.u32 %v7230, 16
        %v7593 = vrot.slane %v7591, 4
        %v7594 = vor.u32 %v7593, %v7589
        %v7595 = vrot.slane %v7594, 4
        %v7597 = vshll.u32 %v7231, 16
        %v7599 = vrot.slane %v7597, 5
        %v7600 = vsel %vm1205, %v7595, %v7599
        %v7602 = vshrl.u32 %v7232, 16
        %v7604 = vrot.slane %v7602, 4
        %v7605 = vshll.u32 %v7232, 16
        %v7607 = vrot.slane %v7605, 5
        %v7608 = vor.u32 %v7604, %v7607
        %v7609 = vrot.slane %v7608, 4
        %v7611 = vshll.u32 %v7233, 16
        %v7613 = vrot.slane %v7611, 5
        %v7614 = vsel %vm1205, %v7609, %v7613
        %v7615 = vshrl.u32 %v7233, 16
        %v7617 = vrot.slane %v7615, 4
        %v7618 = vor.u32 %v7617, %v7613
        %v7619 = vrot.slane %v7618, 4
        %v7621 = vshll.u32 %v7234, 16
        %v7623 = vrot.slane %v7621, 5
        %v7624 = vsel %vm1205, %v7619, %v7623
        %v7626 = vshrl.u32 %v7235, 16
        %v7628 = vrot.slane %v7626, 4
        %v7629 = vshll.u32 %v7235, 16
        %v7631 = vrot.slane %v7629, 5
        %v7632 = vor.u32 %v7628, %v7631
        %v7633 = vrot.slane %v7632, 4
        %v7635 = vshll.u32 %v7236, 16
        %v7637 = vrot.slane %v7635, 5
        %v7638 = vsel %vm1205, %v7633, %v7637
        %v7639 = vshrl.u32 %v7236, 16
        %v7641 = vrot.slane %v7639, 4
        %v7642 = vor.u32 %v7641, %v7637
        %v7643 = vrot.slane %v7642, 4
        %v7645 = vshll.u32 %v7237, 16
        %v7647 = vrot.slane %v7645, 5
        %v7648 = vsel %vm1205, %v7643, %v7647
        %v7650 = vshrl.u32 %v7238, 16
        %v7652 = vrot.slane %v7650, 4
        %v7653 = vshll.u32 %v7238, 16
        %v7655 = vrot.slane %v7653, 5
        %v7656 = vor.u32 %v7652, %v7655
        %v7657 = vrot.slane %v7656, 4
        %v7659 = vshll.u32 %v7239, 16
        %v7661 = vrot.slane %v7659, 5
        %v7662 = vsel %vm1205, %v7657, %v7661
        %v7663 = vshrl.u32 %v7239, 16
        %v7665 = vrot.slane %v7663, 4
        %v7666 = vor.u32 %v7665, %v7661
        %v7667 = vrot.slane %v7666, 4
        %v7669 = vshll.u32 %v7240, 16
        %v7671 = vrot.slane %v7669, 5
        %v7672 = vsel %vm1205, %v7667, %v7671
        %v7673 = vunpack.c.l.b16 %v7254
        %v7674 = vunpack.c.l.b16 %v7264
        %v7675 = vunpack.c.l.b16 %v7278
        %v7676 = vunpack.c.l.b16 %v7288
        %v7677 = vunpack.c.l.b16 %v7302
        %v7678 = vunpack.c.l.b16 %v7312
        %v7679 = vunpack.c.l.b16 %v7326
        %v7680 = vunpack.c.l.b16 %v7336
        %v7681 = vunpack.c.l.b16 %v7350
        %v7682 = vunpack.c.l.b16 %v7360
        %v7683 = vunpack.c.l.b16 %v7374
        %v7684 = vunpack.c.l.b16 %v7384
        %v7685 = vunpack.c.l.b16 %v7398
        %v7686 = vunpack.c.l.b16 %v7408
        %v7687 = vunpack.c.l.b16 %v7422
        %v7688 = vunpack.c.l.b16 %v7432
        %v7689 = vunpack.c.l.b16 %v7446
        %v7690 = vunpack.c.l.b16 %v7456
        %v7691 = vunpack.c.l.b16 %v7470
        %v7692 = vunpack.c.l.b16 %v7480
        %v7693 = vunpack.c.l.b16 %v7494
        %v7694 = vunpack.c.l.b16 %v7504
        %v7695 = vunpack.c.l.b16 %v7518
        %v7696 = vunpack.c.l.b16 %v7528
        %v7697 = vunpack.c.l.b16 %v7542
        %v7698 = vunpack.c.l.b16 %v7552
        %v7699 = vunpack.c.l.b16 %v7566
        %v7700 = vunpack.c.l.b16 %v7576
        %v7701 = vunpack.c.l.b16 %v7590
        %v7702 = vunpack.c.l.b16 %v7600
        %v7703 = vunpack.c.l.b16 %v7614
        %v7704 = vunpack.c.l.b16 %v7624
        %v7705 = vunpack.c.l.b16 %v7638
        %v7706 = vunpack.c.l.b16 %v7648
        %v7707 = vunpack.c.l.b16 %v7662
        %v7708 = vunpack.c.l.b16 %v7672
        %v7709 = vpack.c.b16 %v7674, %v7673
        %v7710 = vpack.c.b16 %v7676, %v7675
        %v7711 = vpack.c.b16 %v7678, %v7677
        %v7712 = vpack.c.b16 %v7680, %v7679
        %v7713 = vpack.c.b16 %v7682, %v7681
        %v7714 = vpack.c.b16 %v7684, %v7683
        %v7715 = vpack.c.b16 %v7686, %v7685
        %v7716 = vpack.c.b16 %v7688, %v7687
        %v7717 = vpack.c.b16 %v7690, %v7689
        %v7718 = vpack.c.b16 %v7692, %v7691
        %v7719 = vpack.c.b16 %v7694, %v7693
        %v7720 = vpack.c.b16 %v7696, %v7695
        %v7721 = vpack.c.b16 %v7698, %v7697
        %v7722 = vpack.c.b16 %v7700, %v7699
        %v7723 = vpack.c.b16 %v7702, %v7701
        %v7724 = vpack.c.b16 %v7704, %v7703
        %v7725 = vpack.c.b16 %v7706, %v7705
        %v7726 = vpack.c.b16 %v7708, %v7707
        %7727 = vrot.lane.b32.xlu0 %v7709, 32
        %v7728 = vpop.permute.xlu0 %7727
        %7729 = vrot.lane.b32.xlu0 %v7710, 32
        %v7730 = vpop.permute.xlu0 %7729
        %7731 = vrot.lane.b32.xlu0 %v7711, 32
        %v7732 = vpop.permute.xlu0 %7731
        %7733 = vrot.lane.b32.xlu0 %v7712, 32
        %v7734 = vpop.permute.xlu0 %7733
        %7735 = vrot.lane.b32.xlu0 %v7713, 32
        %v7736 = vpop.permute.xlu0 %7735
        %7737 = vrot.lane.b32.xlu0 %v7714, 32
        %v7738 = vpop.permute.xlu0 %7737
        %7739 = vrot.lane.b32.xlu0 %v7715, 32
        %v7740 = vpop.permute.xlu0 %7739
        %7741 = vrot.lane.b32.xlu0 %v7716, 32
        %v7742 = vpop.permute.xlu0 %7741
        %7743 = vrot.lane.b32.xlu0 %v7717, 32
        %v7744 = vpop.permute.xlu0 %7743
        %7745 = vrot.lane.b32.xlu0 %v7718, 32
        %v7746 = vpop.permute.xlu0 %7745
        %7747 = vrot.lane.b32.xlu0 %v7719, 32
        %v7748 = vpop.permute.xlu0 %7747
        %7749 = vrot.lane.b32.xlu0 %v7720, 32
        %v7750 = vpop.permute.xlu0 %7749
        %7751 = vrot.lane.b32.xlu0 %v7721, 32
        %v7752 = vpop.permute.xlu0 %7751
        %7753 = vrot.lane.b32.xlu0 %v7722, 32
        %v7754 = vpop.permute.xlu0 %7753
        %7755 = vrot.lane.b32.xlu0 %v7723, 32
        %v7756 = vpop.permute.xlu0 %7755
        %7757 = vrot.lane.b32.xlu0 %v7724, 32
        %v7758 = vpop.permute.xlu0 %7757
        %7759 = vrot.lane.b32.xlu0 %v7725, 32
        %v7760 = vpop.permute.xlu0 %7759
        %7761 = vrot.lane.b32.xlu0 %v7726, 32
        %v7762 = vpop.permute.xlu0 %7761
        %7781 = vst.msk [vmem:[#allocation3] sm:$0xff] %vm4897, %v7728
        %7782 = vst.msk [vmem:[#allocation3 + $0x8] sm:$0xff] %vm4897, %v7730
        %7783 = vst.msk [vmem:[#allocation3 + $0x10] sm:$0xff] %vm4897, %v7732
        %7784 = vst.msk [vmem:[#allocation3 + $0x18] sm:$0xff] %vm4897, %v7734
        %7785 = vst.msk [vmem:[#allocation3 + $0x20] sm:$0xff] %vm4897, %v7736
        %7786 = vst.msk [vmem:[#allocation3 + $0x28] sm:$0xff] %vm4897, %v7738
        %7787 = vst.msk [vmem:[#allocation3 + $0x30] sm:$0xff] %vm4897, %v7740
        %7788 = vst.msk [vmem:[#allocation3 + $0x38] sm:$0xff] %vm4897, %v7742
        %7789 = vst.msk [vmem:[#allocation3 + $0x40] sm:$0xff] %vm4897, %v7744
        %7790 = vst.msk [vmem:[#allocation3 + $0x48] sm:$0xff] %vm4897, %v7746
        %7791 = vst.msk [vmem:[#allocation3 + $0x50] sm:$0xff] %vm4897, %v7748
        %7792 = vst.msk [vmem:[#allocation3 + $0x58] sm:$0xff] %vm4897, %v7750
        %7793 = vst.msk [vmem:[#allocation3 + $0x60] sm:$0xff] %vm4897, %v7752
        %7794 = vst.msk [vmem:[#allocation3 + $0x68] sm:$0xff] %vm4897, %v7754
        %7795 = vst.msk [vmem:[#allocation3 + $0x70] sm:$0xff] %vm4897, %v7756
        %7796 = vst.msk [vmem:[#allocation3 + $0x78] sm:$0xff] %vm4897, %v7758
        %7797 = vst.msk [vmem:[#allocation3 + $0x80] sm:$0xff] %vm4897, %v7760
        %7798 = vst.msk [vmem:[#allocation3 + $0x88] sm:$0xff] %vm4897, %v7762
        %v7799 = vld [vmem:[#allocation2] sm:$0xe]
        %v7800 = vld [vmem:[#allocation2 + $0x4] sm:$0xf]
        %v7801 = vld [vmem:[#allocation2 + $0x8] sm:$0x1]
        %v7802 = vld [vmem:[#allocation2 + $0xc] sm:$0xe]
        %v7803 = vld [vmem:[#allocation2 + $0x10] sm:$0xf]
        %v7804 = vld [vmem:[#allocation2 + $0x14] sm:$0x1]
        %v7805 = vld [vmem:[#allocation2 + $0x18] sm:$0xe]
        %v7806 = vld [vmem:[#allocation2 + $0x1c] sm:$0xf]
        %v7807 = vld [vmem:[#allocation2 + $0x20] sm:$0x1]
        %v7808 = vld [vmem:[#allocation2 + $0x24] sm:$0xe]
        %v7809 = vld [vmem:[#allocation2 + $0x28] sm:$0xf]
        %v7810 = vld [vmem:[#allocation2 + $0x2c] sm:$0x1]
        %v7811 = vld [vmem:[#allocation2 + $0x30] sm:$0xe]
        %v7812 = vld [vmem:[#allocation2 + $0x34] sm:$0xf]
        %v7813 = vld [vmem:[#allocation2 + $0x38] sm:$0x1]
        %v7814 = vld [vmem:[#allocation2 + $0x3c] sm:$0xe]
        %v7815 = vld [vmem:[#allocation2 + $0x40] sm:$0xf]
        %v7816 = vld [vmem:[#allocation2 + $0x44] sm:$0x1]
        %v7817 = vld [vmem:[#allocation2 + $0x48] sm:$0xe]
        %v7818 = vld [vmem:[#allocation2 + $0x4c] sm:$0xf]
        %v7819 = vld [vmem:[#allocation2 + $0x50] sm:$0x1]
        %v7820 = vld [vmem:[#allocation2 + $0x54] sm:$0xe]
        %v7821 = vld [vmem:[#allocation2 + $0x58] sm:$0xf]
        %v7822 = vld [vmem:[#allocation2 + $0x5c] sm:$0x1]
        %v7823 = vld [vmem:[#allocation2 + $0x60] sm:$0xe]
        %v7824 = vld [vmem:[#allocation2 + $0x64] sm:$0xf]
        %v7825 = vld [vmem:[#allocation2 + $0x68] sm:$0x1]
        %v7826 = vld [vmem:[#allocation2 + $0x6c] sm:$0xe]
        %v7827 = vld [vmem:[#allocation2 + $0x70] sm:$0xf]
        %v7828 = vld [vmem:[#allocation2 + $0x74] sm:$0x1]
        %v7829 = vld [vmem:[#allocation2 + $0x78] sm:$0xe]
        %v7830 = vld [vmem:[#allocation2 + $0x7c] sm:$0xf]
        %v7831 = vld [vmem:[#allocation2 + $0x80] sm:$0x1]
        %v7832 = vld [vmem:[#allocation2 + $0x84] sm:$0xe]
        %v7833 = vld [vmem:[#allocation2 + $0x88] sm:$0xf]
        %v7834 = vld [vmem:[#allocation2 + $0x8c] sm:$0x1]
        %v7835 = vld [vmem:[#allocation2 + $0x90] sm:$0xe]
        %v7836 = vld [vmem:[#allocation2 + $0x94] sm:$0xf]
        %v7837 = vld [vmem:[#allocation2 + $0x98] sm:$0x1]
        %v7838 = vld [vmem:[#allocation2 + $0x9c] sm:$0xe]
        %v7839 = vld [vmem:[#allocation2 + $0xa0] sm:$0xf]
        %v7840 = vld [vmem:[#allocation2 + $0xa4] sm:$0x1]
        %v7841 = vld [vmem:[#allocation2 + $0xa8] sm:$0xe]
        %v7842 = vld [vmem:[#allocation2 + $0xac] sm:$0xf]
        %v7843 = vld [vmem:[#allocation2 + $0xb0] sm:$0x1]
        %v7844 = vld [vmem:[#allocation2 + $0xb4] sm:$0xe]
        %v7845 = vld [vmem:[#allocation2 + $0xb8] sm:$0xf]
        %v7846 = vld [vmem:[#allocation2 + $0xbc] sm:$0x1]
        %v7847 = vld [vmem:[#allocation2 + $0xc0] sm:$0xe]
        %v7848 = vld [vmem:[#allocation2 + $0xc4] sm:$0xf]
        %v7849 = vld [vmem:[#allocation2 + $0xc8] sm:$0x1]
        %v7850 = vld [vmem:[#allocation2 + $0xcc] sm:$0xe]
        %v7851 = vld [vmem:[#allocation2 + $0xd0] sm:$0xf]
        %v7852 = vld [vmem:[#allocation2 + $0xd4] sm:$0x1]
        %v7907 = vrot.slane %v7799, 5
        %v7908 = vrot.slane %v7907, 4
        %v7909 = vrot.slane %v7800, 5
        %v7910 = vsel %vm1875, %v7908, %v7909
        %v7911 = vrot.slane %v7909, 4
        %v7912 = vrot.slane %v7801, 5
        %v7913 = vsel %vm1875, %v7911, %v7912
        %v7914 = vrot.slane %v7802, 5
        %v7915 = vrot.slane %v7914, 4
        %v7916 = vrot.slane %v7803, 5
        %v7917 = vsel %vm1875, %v7915, %v7916
        %v7918 = vrot.slane %v7916, 4
        %v7919 = vrot.slane %v7804, 5
        %v7920 = vsel %vm1875, %v7918, %v7919
        %v7921 = vrot.slane %v7805, 5
        %v7922 = vrot.slane %v7921, 4
        %v7923 = vrot.slane %v7806, 5
        %v7924 = vsel %vm1875, %v7922, %v7923
        %v7925 = vrot.slane %v7923, 4
        %v7926 = vrot.slane %v7807, 5
        %v7927 = vsel %vm1875, %v7925, %v7926
        %v7928 = vrot.slane %v7808, 5
        %v7929 = vrot.slane %v7928, 4
        %v7930 = vrot.slane %v7809, 5
        %v7931 = vsel %vm1875, %v7929, %v7930
        %v7932 = vrot.slane %v7930, 4
        %v7933 = vrot.slane %v7810, 5
        %v7934 = vsel %vm1875, %v7932, %v7933
        %v7935 = vrot.slane %v7811, 5
        %v7936 = vrot.slane %v7935, 4
        %v7937 = vrot.slane %v7812, 5
        %v7938 = vsel %vm1875, %v7936, %v7937
        %v7939 = vrot.slane %v7937, 4
        %v7940 = vrot.slane %v7813, 5
        %v7941 = vsel %vm1875, %v7939, %v7940
        %v7942 = vrot.slane %v7814, 5
        %v7943 = vrot.slane %v7942, 4
        %v7944 = vrot.slane %v7815, 5
        %v7945 = vsel %vm1875, %v7943, %v7944
        %v7946 = vrot.slane %v7944, 4
        %v7947 = vrot.slane %v7816, 5
        %v7948 = vsel %vm1875, %v7946, %v7947
        %v7949 = vrot.slane %v7817, 5
        %v7950 = vrot.slane %v7949, 4
        %v7951 = vrot.slane %v7818, 5
        %v7952 = vsel %vm1875, %v7950, %v7951
        %v7953 = vrot.slane %v7951, 4
        %v7954 = vrot.slane %v7819, 5
        %v7955 = vsel %vm1875, %v7953, %v7954
        %v7956 = vrot.slane %v7820, 5
        %v7957 = vrot.slane %v7956, 4
        %v7958 = vrot.slane %v7821, 5
        %v7959 = vsel %vm1875, %v7957, %v7958
        %v7960 = vrot.slane %v7958, 4
        %v7961 = vrot.slane %v7822, 5
        %v7962 = vsel %vm1875, %v7960, %v7961
        %v7963 = vrot.slane %v7823, 5
        %v7964 = vrot.slane %v7963, 4
        %v7965 = vrot.slane %v7824, 5
        %v7966 = vsel %vm1875, %v7964, %v7965
        %v7967 = vrot.slane %v7965, 4
        %v7968 = vrot.slane %v7825, 5
        %v7969 = vsel %vm1875, %v7967, %v7968
        %v7970 = vrot.slane %v7826, 5
        %v7971 = vrot.slane %v7970, 4
        %v7972 = vrot.slane %v7827, 5
        %v7973 = vsel %vm1875, %v7971, %v7972
        %v7974 = vrot.slane %v7972, 4
        %v7975 = vrot.slane %v7828, 5
        %v7976 = vsel %vm1875, %v7974, %v7975
        %v7977 = vrot.slane %v7829, 5
        %v7978 = vrot.slane %v7977, 4
        %v7979 = vrot.slane %v7830, 5
        %v7980 = vsel %vm1875, %v7978, %v7979
        %v7981 = vrot.slane %v7979, 4
        %v7982 = vrot.slane %v7831, 5
        %v7983 = vsel %vm1875, %v7981, %v7982
        %v7984 = vrot.slane %v7832, 5
        %v7985 = vrot.slane %v7984, 4
        %v7986 = vrot.slane %v7833, 5
        %v7987 = vsel %vm1875, %v7985, %v7986
        %v7988 = vrot.slane %v7986, 4
        %v7989 = vrot.slane %v7834, 5
        %v7990 = vsel %vm1875, %v7988, %v7989
        %v7991 = vrot.slane %v7835, 5
        %v7992 = vrot.slane %v7991, 4
        %v7993 = vrot.slane %v7836, 5
        %v7994 = vsel %vm1875, %v7992, %v7993
        %v7995 = vrot.slane %v7993, 4
        %v7996 = vrot.slane %v7837, 5
        %v7997 = vsel %vm1875, %v7995, %v7996
        %v7998 = vrot.slane %v7838, 5
        %v7999 = vrot.slane %v7998, 4
        %v8000 = vrot.slane %v7839, 5
        %v8001 = vsel %vm1875, %v7999, %v8000
        %v8002 = vrot.slane %v8000, 4
        %v8003 = vrot.slane %v7840, 5
        %v8004 = vsel %vm1875, %v8002, %v8003
        %v8005 = vrot.slane %v7841, 5
        %v8006 = vrot.slane %v8005, 4
        %v8007 = vrot.slane %v7842, 5
        %v8008 = vsel %vm1875, %v8006, %v8007
        %v8009 = vrot.slane %v8007, 4
        %v8010 = vrot.slane %v7843, 5
        %v8011 = vsel %vm1875, %v8009, %v8010
        %v8012 = vrot.slane %v7844, 5
        %v8013 = vrot.slane %v8012, 4
        %v8014 = vrot.slane %v7845, 5
        %v8015 = vsel %vm1875, %v8013, %v8014
        %v8016 = vrot.slane %v8014, 4
        %v8017 = vrot.slane %v7846, 5
        %v8018 = vsel %vm1875, %v8016, %v8017
        %v8019 = vrot.slane %v7847, 5
        %v8020 = vrot.slane %v8019, 4
        %v8021 = vrot.slane %v7848, 5
        %v8022 = vsel %vm1875, %v8020, %v8021
        %v8023 = vrot.slane %v8021, 4
        %v8024 = vrot.slane %v7849, 5
        %v8025 = vsel %vm1875, %v8023, %v8024
        %v8026 = vrot.slane %v7850, 5
        %v8027 = vrot.slane %v8026, 4
        %v8028 = vrot.slane %v7851, 5
        %v8029 = vsel %vm1875, %v8027, %v8028
        %v8030 = vrot.slane %v8028, 4
        %v8031 = vrot.slane %v7852, 5
        %v8032 = vsel %vm1875, %v8030, %v8031
        %v8033 = vunpack.c.l.b16 %v7910
        %v8034 = vunpack.c.l.b16 %v7913
        %v8035 = vunpack.c.l.b16 %v7917
        %v8036 = vunpack.c.l.b16 %v7920
        %v8037 = vunpack.c.l.b16 %v7924
        %v8038 = vunpack.c.l.b16 %v7927
        %v8039 = vunpack.c.l.b16 %v7931
        %v8040 = vunpack.c.l.b16 %v7934
        %v8041 = vunpack.c.l.b16 %v7938
        %v8042 = vunpack.c.l.b16 %v7941
        %v8043 = vunpack.c.l.b16 %v7945
        %v8044 = vunpack.c.l.b16 %v7948
        %v8045 = vunpack.c.l.b16 %v7952
        %v8046 = vunpack.c.l.b16 %v7955
        %v8047 = vunpack.c.l.b16 %v7959
        %v8048 = vunpack.c.l.b16 %v7962
        %v8049 = vunpack.c.l.b16 %v7966
        %v8050 = vunpack.c.l.b16 %v7969
        %v8051 = vunpack.c.l.b16 %v7973
        %v8052 = vunpack.c.l.b16 %v7976
        %v8053 = vunpack.c.l.b16 %v7980
        %v8054 = vunpack.c.l.b16 %v7983
        %v8055 = vunpack.c.l.b16 %v7987
        %v8056 = vunpack.c.l.b16 %v7990
        %v8057 = vunpack.c.l.b16 %v7994
        %v8058 = vunpack.c.l.b16 %v7997
        %v8059 = vunpack.c.l.b16 %v8001
        %v8060 = vunpack.c.l.b16 %v8004
        %v8061 = vunpack.c.l.b16 %v8008
        %v8062 = vunpack.c.l.b16 %v8011
        %v8063 = vunpack.c.l.b16 %v8015
        %v8064 = vunpack.c.l.b16 %v8018
        %v8065 = vunpack.c.l.b16 %v8022
        %v8066 = vunpack.c.l.b16 %v8025
        %v8067 = vunpack.c.l.b16 %v8029
        %v8068 = vunpack.c.l.b16 %v8032
        %v8069 = vpack.c.b16 %v8034, %v8033
        %v8070 = vpack.c.b16 %v8036, %v8035
        %v8071 = vpack.c.b16 %v8038, %v8037
        %v8072 = vpack.c.b16 %v8040, %v8039
        %v8073 = vpack.c.b16 %v8042, %v8041
        %v8074 = vpack.c.b16 %v8044, %v8043
        %v8075 = vpack.c.b16 %v8046, %v8045
        %v8076 = vpack.c.b16 %v8048, %v8047
        %v8077 = vpack.c.b16 %v8050, %v8049
        %v8078 = vpack.c.b16 %v8052, %v8051
        %v8079 = vpack.c.b16 %v8054, %v8053
        %v8080 = vpack.c.b16 %v8056, %v8055
        %v8081 = vpack.c.b16 %v8058, %v8057
        %v8082 = vpack.c.b16 %v8060, %v8059
        %v8083 = vpack.c.b16 %v8062, %v8061
        %v8084 = vpack.c.b16 %v8064, %v8063
        %v8085 = vpack.c.b16 %v8066, %v8065
        %v8086 = vpack.c.b16 %v8068, %v8067
        %8087 = vrot.lane.b32.xlu0 %v8069, 64
        %v8088 = vpop.permute.xlu0 %8087
        %8089 = vrot.lane.b32.xlu0 %v8070, 64
        %v8090 = vpop.permute.xlu0 %8089
        %8091 = vrot.lane.b32.xlu0 %v8071, 64
        %v8092 = vpop.permute.xlu0 %8091
        %8093 = vrot.lane.b32.xlu0 %v8072, 64
        %v8094 = vpop.permute.xlu0 %8093
        %8095 = vrot.lane.b32.xlu0 %v8073, 64
        %v8096 = vpop.permute.xlu0 %8095
        %8097 = vrot.lane.b32.xlu0 %v8074, 64
        %v8098 = vpop.permute.xlu0 %8097
        %8099 = vrot.lane.b32.xlu0 %v8075, 64
        %v8100 = vpop.permute.xlu0 %8099
        %8101 = vrot.lane.b32.xlu0 %v8076, 64
        %v8102 = vpop.permute.xlu0 %8101
        %8103 = vrot.lane.b32.xlu0 %v8077, 64
        %v8104 = vpop.permute.xlu0 %8103
        %8105 = vrot.lane.b32.xlu0 %v8078, 64
        %v8106 = vpop.permute.xlu0 %8105
        %8107 = vrot.lane.b32.xlu0 %v8079, 64
        %v8108 = vpop.permute.xlu0 %8107
        %8109 = vrot.lane.b32.xlu0 %v8080, 64
        %v8110 = vpop.permute.xlu0 %8109
        %8111 = vrot.lane.b32.xlu0 %v8081, 64
        %v8112 = vpop.permute.xlu0 %8111
        %8113 = vrot.lane.b32.xlu0 %v8082, 64
        %v8114 = vpop.permute.xlu0 %8113
        %8115 = vrot.lane.b32.xlu0 %v8083, 64
        %v8116 = vpop.permute.xlu0 %8115
        %8117 = vrot.lane.b32.xlu0 %v8084, 64
        %v8118 = vpop.permute.xlu0 %8117
        %8119 = vrot.lane.b32.xlu0 %v8085, 64
        %v8120 = vpop.permute.xlu0 %8119
        %8121 = vrot.lane.b32.xlu0 %v8086, 64
        %v8122 = vpop.permute.xlu0 %8121
        %8141 = vst.msk [vmem:[#allocation3] sm:$0xff] %vm5258, %v8088
        %8142 = vst.msk [vmem:[#allocation3 + $0x8] sm:$0xff] %vm5258, %v8090
        %8143 = vst.msk [vmem:[#allocation3 + $0x10] sm:$0xff] %vm5258, %v8092
        %8144 = vst.msk [vmem:[#allocation3 + $0x18] sm:$0xff] %vm5258, %v8094
        %8145 = vst.msk [vmem:[#allocation3 + $0x20] sm:$0xff] %vm5258, %v8096
        %8146 = vst.msk [vmem:[#allocation3 + $0x28] sm:$0xff] %vm5258, %v8098
        %8147 = vst.msk [vmem:[#allocation3 + $0x30] sm:$0xff] %vm5258, %v8100
        %8148 = vst.msk [vmem:[#allocation3 + $0x38] sm:$0xff] %vm5258, %v8102
        %8149 = vst.msk [vmem:[#allocation3 + $0x40] sm:$0xff] %vm5258, %v8104
        %8150 = vst.msk [vmem:[#allocation3 + $0x48] sm:$0xff] %vm5258, %v8106
        %8151 = vst.msk [vmem:[#allocation3 + $0x50] sm:$0xff] %vm5258, %v8108
        %8152 = vst.msk [vmem:[#allocation3 + $0x58] sm:$0xff] %vm5258, %v8110
        %8153 = vst.msk [vmem:[#allocation3 + $0x60] sm:$0xff] %vm5258, %v8112
        %8154 = vst.msk [vmem:[#allocation3 + $0x68] sm:$0xff] %vm5258, %v8114
        %8155 = vst.msk [vmem:[#allocation3 + $0x70] sm:$0xff] %vm5258, %v8116
        %8156 = vst.msk [vmem:[#allocation3 + $0x78] sm:$0xff] %vm5258, %v8118
        %8157 = vst.msk [vmem:[#allocation3 + $0x80] sm:$0xff] %vm5258, %v8120
        %8158 = vst.msk [vmem:[#allocation3 + $0x88] sm:$0xff] %vm5258, %v8122
        %v8159 = vld [vmem:[#allocation3] sm:$0xff]
        %v8160 = vld [vmem:[#allocation3 + $0x8] sm:$0xff]
        %v8161 = vld [vmem:[#allocation3 + $0x10] sm:$0xff]
        %v8162 = vld [vmem:[#allocation3 + $0x18] sm:$0xff]
        %v8163 = vld [vmem:[#allocation3 + $0x20] sm:$0xff]
        %v8164 = vld [vmem:[#allocation3 + $0x28] sm:$0xff]
        %v8165 = vld [vmem:[#allocation3 + $0x30] sm:$0xff]
        %v8166 = vld [vmem:[#allocation3 + $0x38] sm:$0xff]
        %v8167 = vld [vmem:[#allocation3 + $0x40] sm:$0xff]
        %v8168 = vld [vmem:[#allocation3 + $0x48] sm:$0xff]
        %v8169 = vld [vmem:[#allocation3 + $0x50] sm:$0xff]
        %v8170 = vld [vmem:[#allocation3 + $0x58] sm:$0xff]
        %v8171 = vld [vmem:[#allocation3 + $0x60] sm:$0xff]
        %v8172 = vld [vmem:[#allocation3 + $0x68] sm:$0xff]
        %v8173 = vld [vmem:[#allocation3 + $0x70] sm:$0xff]
        %v8174 = vld [vmem:[#allocation3 + $0x78] sm:$0xff]
        %v8187 = vunpack.c.l.b16 %v3235
        %v8188 = vunpack.c.l.b16 %v3236
        %v8189 = vunpack.c.l.b16 %v3237
        %v8190 = vunpack.c.l.b16 %v3238
        %v8191 = vunpack.c.l.b16 %v3239
        %v8192 = vunpack.c.l.b16 %v3240
        %v8193 = vunpack.c.l.b16 %v3241
        %v8194 = vunpack.c.l.b16 %v3242
        %v8195 = vunpack.c.l.b16 %v3243
        %v8196 = vunpack.c.l.b16 %v3244
        %v8197 = vunpack.c.l.b16 %v3245
        %v8198 = vunpack.c.l.b16 %v3246
        %v8199 = vpack.c.b16 %v8188, %v8187
        %v8200 = vpack.c.b16 %v8190, %v8189
        %v8201 = vpack.c.b16 %v8192, %v8191
        %v8202 = vpack.c.b16 %v8194, %v8193
        %v8203 = vpack.c.b16 %v8196, %v8195
        %v8204 = vpack.c.b16 %v8198, %v8197
        %v8212 = vsel %vm5329, %v8159, 0
        %v8215 = vsel %vm5329, %v8160, 0
        %v8218 = vsel %vm5329, %v8161, 0
        %v8221 = vsel %vm5329, %v8162, 0
        %v8224 = vsel %vm5329, %v8163, 0
        %v8227 = vsel %vm5329, %v8164, 0
        %v8230 = vsel %vm5329, %v8165, 0
        %v8233 = vsel %vm5329, %v8166, 0
        %v8236 = vsel %vm5329, %v8167, 0
        %v8239 = vsel %vm5329, %v8168, 0
        %v8242 = vsel %vm5329, %v8169, 0
        %v8245 = vsel %vm5329, %v8170, 0
        %v8248 = vsel %vm5329, %v8171, 0
        %v8251 = vsel %vm5329, %v8172, 0
        %v8254 = vsel %vm5329, %v8173, 0
        %v8257 = vsel %vm5329, %v8174, 0
        %8259 = vmatprep.subr.bf16.mxu0 0
        %8260 = vmatpush1.bf16.msra.mxu0 %v8199
        %8261 = vmatprep.subr.bf16.mxu0 0
        %8262 = vmatpush1.bf16.msra.mxu0 %v8200
        %8263 = vmatprep.subr.bf16.mxu0 0
        %8264 = vmatpush1.bf16.msra.mxu0 %v8201
        %8265 = vmatprep.subr.bf16.mxu0 0
        %8266 = vmatpush1.bf16.msra.mxu0 %v8202
        %8267 = vmatprep.subr.bf16.mxu0 0
        %8268 = vmatpush1.bf16.msra.mxu0 %v8203
        %8269 = vmatprep.subr.bf16.mxu0 0
        %8270 = vmatpush1.bf16.msra.mxu0 %v8204
        %8271 = vmatprep.subr.bf16.mxu0 0
        %8272 = vmatpush1.bf16.msra.mxu0 0
        %8273 = vmatprep.subr.bf16.mxu0 0
        %8274 = vmatpush1.bf16.msra.mxu0 0
        %8275 = vmatprep.subr.bf16.mxu0 0
        %8276 = vmatpush1.bf16.msra.mxu0 0
        %8277 = vmatprep.subr.bf16.mxu0 0
        %8278 = vmatpush1.bf16.msra.mxu0 0
        %8279 = vmatprep.subr.bf16.mxu0 0
        %8280 = vmatpush1.bf16.msra.mxu0 0
        %8281 = vmatprep.subr.bf16.mxu0 0
        %8282 = vmatpush1.bf16.msra.mxu0 0
        %8283 = vmatprep.subr.bf16.mxu0 0
        %8284 = vmatpush1.bf16.msra.mxu0 0
        %8285 = vmatprep.subr.bf16.mxu0 0
        %8286 = vmatpush1.bf16.msra.mxu0 0
        %8287 = vmatprep.subr.bf16.mxu0 0
        %8288 = vmatpush1.bf16.msra.mxu0 0
        %8289 = vmatprep.subr.bf16.mxu0 0
        %8290 = vmatpush1.bf16.msra.mxu0 0
        %8291 = vmatprep.mubr.bf16.mxu0 0
        %8292 = vmatmul.mubr.bf16.gmra.mrb[0].mxu0 %v8212
        %v8293 = vpop.f32.mrb[0].mxu0
        %v8294 = vadd.f32 0.0, %v8293
        %v8295 = vpop.f32.mrb[0].mxu0
        %v8296 = vpop.f32.mrb[0].mxu0
        %v8297 = vadd.f32 0.0, %v8296
        %v8298 = vpop.f32.mrb[0].mxu0
        %8299 = vmatprep.mubr.bf16.mxu0 0
        %8300 = vmatmul.mubr.bf16.gmra.mrb[0].mxu0 %v8215
        %v8301 = vpop.f32.mrb[0].mxu0
        %v8302 = vadd.f32 0.0, %v8301
        %v8303 = vpop.f32.mrb[0].mxu0
        %v8304 = vpop.f32.mrb[0].mxu0
        %v8305 = vadd.f32 0.0, %v8304
        %v8306 = vpop.f32.mrb[0].mxu0
        %8307 = vmatprep.mubr.bf16.mxu0 0
        %8308 = vmatmul.mubr.bf16.gmra.mrb[0].mxu0 %v8218
        %v8309 = vpop.f32.mrb[0].mxu0
        %v8310 = vadd.f32 0.0, %v8309
        %v8311 = vpop.f32.mrb[0].mxu0
        %v8312 = vpop.f32.mrb[0].mxu0
        %v8313 = vadd.f32 0.0, %v8312
        %v8314 = vpop.f32.mrb[0].mxu0
        %8315 = vmatprep.mubr.bf16.mxu0 0
        %8316 = vmatmul.mubr.bf16.gmra.mrb[0].mxu0 %v8221
        %v8317 = vpop.f32.mrb[0].mxu0
        %v8318 = vadd.f32 0.0, %v8317
        %v8319 = vpop.f32.mrb[0].mxu0
        %v8320 = vpop.f32.mrb[0].mxu0
        %v8321 = vadd.f32 0.0, %v8320
        %v8322 = vpop.f32.mrb[0].mxu0
        %8323 = vmatprep.mubr.bf16.mxu0 0
        %8324 = vmatmul.mubr.bf16.gmra.mrb[0].mxu0 %v8224
        %v8325 = vpop.f32.mrb[0].mxu0
        %v8326 = vadd.f32 0.0, %v8325
        %v8327 = vpop.f32.mrb[0].mxu0
        %v8328 = vpop.f32.mrb[0].mxu0
        %v8329 = vadd.f32 0.0, %v8328
        %v8330 = vpop.f32.mrb[0].mxu0
        %8331 = vmatprep.mubr.bf16.mxu0 0
        %8332 = vmatmul.mubr.bf16.gmra.mrb[0].mxu0 %v8227
        %v8333 = vpop.f32.mrb[0].mxu0
        %v8334 = vadd.f32 0.0, %v8333
        %v8335 = vpop.f32.mrb[0].mxu0
        %v8336 = vpop.f32.mrb[0].mxu0
        %v8337 = vadd.f32 0.0, %v8336
        %v8338 = vpop.f32.mrb[0].mxu0
        %8339 = vmatprep.mubr.bf16.mxu0 0
        %8340 = vmatmul.mubr.bf16.gmra.mrb[0].mxu0 %v8230
        %v8341 = vpop.f32.mrb[0].mxu0
        %v8342 = vadd.f32 0.0, %v8341
        %v8343 = vpop.f32.mrb[0].mxu0
        %v8344 = vpop.f32.mrb[0].mxu0
        %v8345 = vadd.f32 0.0, %v8344
        %v8346 = vpop.f32.mrb[0].mxu0
        %8347 = vmatprep.mubr.bf16.mxu0 0
        %8348 = vmatmul.mubr.bf16.gmra.mrb[0].mxu0 %v8233
        %v8349 = vpop.f32.mrb[0].mxu0
        %v8350 = vadd.f32 0.0, %v8349
        %v8351 = vpop.f32.mrb[0].mxu0
        %v8352 = vpop.f32.mrb[0].mxu0
        %v8353 = vadd.f32 0.0, %v8352
        %v8354 = vpop.f32.mrb[0].mxu0
        %8355 = vmatprep.mubr.bf16.mxu0 0
        %8356 = vmatmul.mubr.bf16.gmra.mrb[0].mxu0 %v8236
        %v8357 = vpop.f32.mrb[0].mxu0
        %v8358 = vadd.f32 0.0, %v8357
        %v8359 = vpop.f32.mrb[0].mxu0
        %v8360 = vpop.f32.mrb[0].mxu0
        %v8361 = vadd.f32 0.0, %v8360
        %v8362 = vpop.f32.mrb[0].mxu0
        %8363 = vmatprep.mubr.bf16.mxu0 0
        %8364 = vmatmul.mubr.bf16.gmra.mrb[0].mxu0 %v8239
        %v8365 = vpop.f32.mrb[0].mxu0
        %v8366 = vadd.f32 0.0, %v8365
        %v8367 = vpop.f32.mrb[0].mxu0
        %v8368 = vpop.f32.mrb[0].mxu0
        %v8369 = vadd.f32 0.0, %v8368
        %v8370 = vpop.f32.mrb[0].mxu0
        %8371 = vmatprep.mubr.bf16.mxu0 0
        %8372 = vmatmul.mubr.bf16.gmra.mrb[0].mxu0 %v8242
        %v8373 = vpop.f32.mrb[0].mxu0
        %v8374 = vadd.f32 0.0, %v8373
        %v8375 = vpop.f32.mrb[0].mxu0
        %v8376 = vpop.f32.mrb[0].mxu0
        %v8377 = vadd.f32 0.0, %v8376
        %v8378 = vpop.f32.mrb[0].mxu0
        %8379 = vmatprep.mubr.bf16.mxu0 0
        %8380 = vmatmul.mubr.bf16.gmra.mrb[0].mxu0 %v8245
        %v8381 = vpop.f32.mrb[0].mxu0
        %v8382 = vadd.f32 0.0, %v8381
        %v8383 = vpop.f32.mrb[0].mxu0
        %v8384 = vpop.f32.mrb[0].mxu0
        %v8385 = vadd.f32 0.0, %v8384
        %v8386 = vpop.f32.mrb[0].mxu0
        %8387 = vmatprep.mubr.bf16.mxu0 0
        %8388 = vmatmul.mubr.bf16.gmra.mrb[0].mxu0 %v8248
        %v8389 = vpop.f32.mrb[0].mxu0
        %v8390 = vadd.f32 0.0, %v8389
        %v8391 = vpop.f32.mrb[0].mxu0
        %v8392 = vpop.f32.mrb[0].mxu0
        %v8393 = vadd.f32 0.0, %v8392
        %v8394 = vpop.f32.mrb[0].mxu0
        %8395 = vmatprep.mubr.bf16.mxu0 0
        %8396 = vmatmul.mubr.bf16.gmra.mrb[0].mxu0 %v8251
        %v8397 = vpop.f32.mrb[0].mxu0
        %v8398 = vadd.f32 0.0, %v8397
        %v8399 = vpop.f32.mrb[0].mxu0
        %v8400 = vpop.f32.mrb[0].mxu0
        %v8401 = vadd.f32 0.0, %v8400
        %v8402 = vpop.f32.mrb[0].mxu0
        %8403 = vmatprep.mubr.bf16.mxu0 0
        %8404 = vmatmul.mubr.bf16.gmra.mrb[0].mxu0 %v8254
        %v8405 = vpop.f32.mrb[0].mxu0
        %v8406 = vadd.f32 0.0, %v8405
        %v8407 = vpop.f32.mrb[0].mxu0
        %v8408 = vpop.f32.mrb[0].mxu0
        %v8409 = vadd.f32 0.0, %v8408
        %v8410 = vpop.f32.mrb[0].mxu0
        %8411 = vmatprep.mubr.bf16.mxu0 0
        %8412 = vmatmul.mubr.bf16.gmra.mrb[0].mxu0 %v8257
        %v8413 = vpop.f32.mrb[0].mxu0
        %v8414 = vadd.f32 0.0, %v8413
        %v8415 = vpop.f32.mrb[0].mxu0
        %v8416 = vpop.f32.mrb[0].mxu0
        %v8417 = vadd.f32 0.0, %v8416
        %v8418 = vpop.f32.mrb[0].mxu0
        %8419 = vdwg.mxu0
        %v8421 = vlaneseq
        %v8422 = vshrl.u32 %v8421, 7
        %v8423 = vsub.s32 0, %v8422
        %v8424 = vrot.slane %v3272, %v8423
        %v8426 = vadd.f32 %v8424, %v8294
        %v8427 = vadd.f32 %v8424, %v8297
        %v8428 = vadd.f32 %v8424, %v8302
        %v8429 = vadd.f32 %v8424, %v8305
        %v8430 = vadd.f32 %v8424, %v8310
        %v8431 = vadd.f32 %v8424, %v8313
        %v8432 = vadd.f32 %v8424, %v8318
        %v8433 = vadd.f32 %v8424, %v8321
        %v8434 = vadd.f32 %v8424, %v8326
        %v8435 = vadd.f32 %v8424, %v8329
        %v8436 = vadd.f32 %v8424, %v8334
        %v8437 = vadd.f32 %v8424, %v8337
        %v8438 = vadd.f32 %v8424, %v8342
        %v8439 = vadd.f32 %v8424, %v8345
        %v8440 = vadd.f32 %v8424, %v8350
        %v8441 = vadd.f32 %v8424, %v8353
        %v8442 = vadd.f32 %v8424, %v8358
        %v8443 = vadd.f32 %v8424, %v8361
        %v8444 = vadd.f32 %v8424, %v8366
        %v8445 = vadd.f32 %v8424, %v8369
        %v8446 = vadd.f32 %v8424, %v8374
        %v8447 = vadd.f32 %v8424, %v8377
        %v8448 = vadd.f32 %v8424, %v8382
        %v8449 = vadd.f32 %v8424, %v8385
        %v8450 = vadd.f32 %v8424, %v8390
        %v8451 = vadd.f32 %v8424, %v8393
        %v8452 = vadd.f32 %v8424, %v8398
        %v8453 = vadd.f32 %v8424, %v8401
        %v8454 = vadd.f32 %v8424, %v8406
        %v8455 = vadd.f32 %v8424, %v8409
        %v8456 = vadd.f32 %v8424, %v8414
        %v8457 = vadd.f32 %v8424, %v8417
        %v8458 = vld [vmem:[#allocation3 + $0x8] sm:$0xff]
        %v8459 = vld [vmem:[#allocation3 + $0x10] sm:$0xff]
        %v8460 = vld [vmem:[#allocation3 + $0x18] sm:$0xff]
        %v8461 = vld [vmem:[#allocation3 + $0x20] sm:$0xff]
        %v8462 = vld [vmem:[#allocation3 + $0x28] sm:$0xff]
        %v8463 = vld [vmem:[#allocation3 + $0x30] sm:$0xff]
        %v8464 = vld [vmem:[#allocation3 + $0x38] sm:$0xff]
        %v8465 = vld [vmem:[#allocation3 + $0x40] sm:$0xff]
        %v8466 = vld [vmem:[#allocation3 + $0x48] sm:$0xff]
        %v8467 = vld [vmem:[#allocation3 + $0x50] sm:$0xff]
        %v8468 = vld [vmem:[#allocation3 + $0x58] sm:$0xff]
        %v8469 = vld [vmem:[#allocation3 + $0x60] sm:$0xff]
        %v8470 = vld [vmem:[#allocation3 + $0x68] sm:$0xff]
        %v8471 = vld [vmem:[#allocation3 + $0x70] sm:$0xff]
        %v8472 = vld [vmem:[#allocation3 + $0x78] sm:$0xff]
        %v8473 = vld [vmem:[#allocation3 + $0x80] sm:$0xff]
        %v8486 = vunpack.c.l.b16 %v3247
        %v8487 = vunpack.c.l.b16 %v3248
        %v8488 = vunpack.c.l.b16 %v3249
        %v8489 = vunpack.c.l.b16 %v3250
        %v8490 = vunpack.c.l.b16 %v3251
        %v8491 = vunpack.c.l.b16 %v3252
        %v8492 = vunpack.c.l.b16 %v3253
        %v8493 = vunpack.c.l.b16 %v3254
        %v8494 = vunpack.c.l.b16 %v3255
        %v8495 = vunpack.c.l.b16 %v3256
        %v8496 = vunpack.c.l.b16 %v3257
        %v8497 = vunpack.c.l.b16 %v3258
        %v8498 = vpack.c.b16 %v8487, %v8486
        %v8499 = vpack.c.b16 %v8489, %v8488
        %v8500 = vpack.c.b16 %v8491, %v8490
        %v8501 = vpack.c.b16 %v8493, %v8492
        %v8502 = vpack.c.b16 %v8495, %v8494
        %v8503 = vpack.c.b16 %v8497, %v8496
        %v8511 = vsel %vm5329, %v8458, 0
        %v8514 = vsel %vm5329, %v8459, 0
        %v8517 = vsel %vm5329, %v8460, 0
        %v8520 = vsel %vm5329, %v8461, 0
        %v8523 = vsel %vm5329, %v8462, 0
        %v8526 = vsel %vm5329, %v8463, 0
        %v8529 = vsel %vm5329, %v8464, 0
        %v8532 = vsel %vm5329, %v8465, 0
        %v8535 = vsel %vm5329, %v8466, 0
        %v8538 = vsel %vm5329, %v8467, 0
        %v8541 = vsel %vm5329, %v8468, 0
        %v8544 = vsel %vm5329, %v8469, 0
        %v8547 = vsel %vm5329, %v8470, 0
        %v8550 = vsel %vm5329, %v8471, 0
        %v8553 = vsel %vm5329, %v8472, 0
        %v8556 = vsel %vm5329, %v8473, 0
        %8558 = vmatprep.subr.bf16.mxu0 0
        %8559 = vmatpush1.bf16.msra.mxu0 %v8498
        %8560 = vmatprep.subr.bf16.mxu0 0
        %8561 = vmatpush1.bf16.msra.mxu0 %v8499
        %8562 = vmatprep.subr.bf16.mxu0 0
        %8563 = vmatpush1.bf16.msra.mxu0 %v8500
        %8564 = vmatprep.subr.bf16.mxu0 0
        %8565 = vmatpush1.bf16.msra.mxu0 %v8501
        %8566 = vmatprep.subr.bf16.mxu0 0
        %8567 = vmatpush1.bf16.msra.mxu0 %v8502
        %8568 = vmatprep.subr.bf16.mxu0 0
        %8569 = vmatpush1.bf16.msra.mxu0 %v8503
        %8570 = vmatprep.subr.bf16.mxu0 0
        %8571 = vmatpush1.bf16.msra.mxu0 0
        %8572 = vmatprep.subr.bf16.mxu0 0
        %8573 = vmatpush1.bf16.msra.mxu0 0
        %8574 = vmatprep.subr.bf16.mxu0 0
        %8575 = vmatpush1.bf16.msra.mxu0 0
        %8576 = vmatprep.subr.bf16.mxu0 0
        %8577 = vmatpush1.bf16.msra.mxu0 0
        %8578 = vmatprep.subr.bf16.mxu0 0
        %8579 = vmatpush1.bf16.msra.mxu0 0
        %8580 = vmatprep.subr.bf16.mxu0 0
        %8581 = vmatpush1.bf16.msra.mxu0 0
        %8582 = vmatprep.subr.bf16.mxu0 0
        %8583 = vmatpush1.bf16.msra.mxu0 0
        %8584 = vmatprep.subr.bf16.mxu0 0
        %8585 = vmatpush1.bf16.msra.mxu0 0
        %8586 = vmatprep.subr.bf16.mxu0 0
        %8587 = vmatpush1.bf16.msra.mxu0 0
        %8588 = vmatprep.subr.bf16.mxu0 0
        %8589 = vmatpush1.bf16.msra.mxu0 0
        %8590 = vmatprep.mubr.bf16.mxu0 0
        %8591 = vmatmul.mubr.bf16.gmra.mrb[0].mxu0 %v8511
        %v8592 = vpop.f32.mrb[0].mxu0
        %v8593 = vadd.f32 0.0, %v8592
        %v8594 = vpop.f32.mrb[0].mxu0
        %v8595 = vpop.f32.mrb[0].mxu0
        %v8596 = vadd.f32 0.0, %v8595
        %v8597 = vpop.f32.mrb[0].mxu0
        %8598 = vmatprep.mubr.bf16.mxu0 0
        %8599 = vmatmul.mubr.bf16.gmra.mrb[0].mxu0 %v8514
        %v8600 = vpop.f32.mrb[0].mxu0
        %v8601 = vadd.f32 0.0, %v8600
        %v8602 = vpop.f32.mrb[0].mxu0
        %v8603 = vpop.f32.mrb[0].mxu0
        %v8604 = vadd.f32 0.0, %v8603
        %v8605 = vpop.f32.mrb[0].mxu0
        %8606 = vmatprep.mubr.bf16.mxu0 0
        %8607 = vmatmul.mubr.bf16.gmra.mrb[0].mxu0 %v8517
        %v8608 = vpop.f32.mrb[0].mxu0
        %v8609 = vadd.f32 0.0, %v8608
        %v8610 = vpop.f32.mrb[0].mxu0
        %v8611 = vpop.f32.mrb[0].mxu0
        %v8612 = vadd.f32 0.0, %v8611
        %v8613 = vpop.f32.mrb[0].mxu0
        %8614 = vmatprep.mubr.bf16.mxu0 0
        %8615 = vmatmul.mubr.bf16.gmra.mrb[0].mxu0 %v8520
        %v8616 = vpop.f32.mrb[0].mxu0
        %v8617 = vadd.f32 0.0, %v8616
        %v8618 = vpop.f32.mrb[0].mxu0
        %v8619 = vpop.f32.mrb[0].mxu0
        %v8620 = vadd.f32 0.0, %v8619
        %v8621 = vpop.f32.mrb[0].mxu0
        %8622 = vmatprep.mubr.bf16.mxu0 0
        %8623 = vmatmul.mubr.bf16.gmra.mrb[0].mxu0 %v8523
        %v8624 = vpop.f32.mrb[0].mxu0
        %v8625 = vadd.f32 0.0, %v8624
        %v8626 = vpop.f32.mrb[0].mxu0
        %v8627 = vpop.f32.mrb[0].mxu0
        %v8628 = vadd.f32 0.0, %v8627
        %v8629 = vpop.f32.mrb[0].mxu0
        %8630 = vmatprep.mubr.bf16.mxu0 0
        %8631 = vmatmul.mubr.bf16.gmra.mrb[0].mxu0 %v8526
        %v8632 = vpop.f32.mrb[0].mxu0
        %v8633 = vadd.f32 0.0, %v8632
        %v8634 = vpop.f32.mrb[0].mxu0
        %v8635 = vpop.f32.mrb[0].mxu0
        %v8636 = vadd.f32 0.0, %v8635
        %v8637 = vpop.f32.mrb[0].mxu0
        %8638 = vmatprep.mubr.bf16.mxu0 0
        %8639 = vmatmul.mubr.bf16.gmra.mrb[0].mxu0 %v8529
        %v8640 = vpop.f32.mrb[0].mxu0
        %v8641 = vadd.f32 0.0, %v8640
        %v8642 = vpop.f32.mrb[0].mxu0
        %v8643 = vpop.f32.mrb[0].mxu0
        %v8644 = vadd.f32 0.0, %v8643
        %v8645 = vpop.f32.mrb[0].mxu0
        %8646 = vmatprep.mubr.bf16.mxu0 0
        %8647 = vmatmul.mubr.bf16.gmra.mrb[0].mxu0 %v8532
        %v8648 = vpop.f32.mrb[0].mxu0
        %v8649 = vadd.f32 0.0, %v8648
        %v8650 = vpop.f32.mrb[0].mxu0
        %v8651 = vpop.f32.mrb[0].mxu0
        %v8652 = vadd.f32 0.0, %v8651
        %v8653 = vpop.f32.mrb[0].mxu0
        %8654 = vmatprep.mubr.bf16.mxu0 0
        %8655 = vmatmul.mubr.bf16.gmra.mrb[0].mxu0 %v8535
        %v8656 = vpop.f32.mrb[0].mxu0
        %v8657 = vadd.f32 0.0, %v8656
        %v8658 = vpop.f32.mrb[0].mxu0
        %v8659 = vpop.f32.mrb[0].mxu0
        %v8660 = vadd.f32 0.0, %v8659
        %v8661 = vpop.f32.mrb[0].mxu0
        %8662 = vmatprep.mubr.bf16.mxu0 0
        %8663 = vmatmul.mubr.bf16.gmra.mrb[0].mxu0 %v8538
        %v8664 = vpop.f32.mrb[0].mxu0
        %v8665 = vadd.f32 0.0, %v8664
        %v8666 = vpop.f32.mrb[0].mxu0
        %v8667 = vpop.f32.mrb[0].mxu0
        %v8668 = vadd.f32 0.0, %v8667
        %v8669 = vpop.f32.mrb[0].mxu0
        %8670 = vmatprep.mubr.bf16.mxu0 0
        %8671 = vmatmul.mubr.bf16.gmra.mrb[0].mxu0 %v8541
        %v8672 = vpop.f32.mrb[0].mxu0
        %v8673 = vadd.f32 0.0, %v8672
        %v8674 = vpop.f32.mrb[0].mxu0
        %v8675 = vpop.f32.mrb[0].mxu0
        %v8676 = vadd.f32 0.0, %v8675
        %v8677 = vpop.f32.mrb[0].mxu0
        %8678 = vmatprep.mubr.bf16.mxu0 0
        %8679 = vmatmul.mubr.bf16.gmra.mrb[0].mxu0 %v8544
        %v8680 = vpop.f32.mrb[0].mxu0
        %v8681 = vadd.f32 0.0, %v8680
        %v8682 = vpop.f32.mrb[0].mxu0
        %v8683 = vpop.f32.mrb[0].mxu0
        %v8684 = vadd.f32 0.0, %v8683
        %v8685 = vpop.f32.mrb[0].mxu0
        %8686 = vmatprep.mubr.bf16.mxu0 0
        %8687 = vmatmul.mubr.bf16.gmra.mrb[0].mxu0 %v8547
        %v8688 = vpop.f32.mrb[0].mxu0
        %v8689 = vadd.f32 0.0, %v8688
        %v8690 = vpop.f32.mrb[0].mxu0
        %v8691 = vpop.f32.mrb[0].mxu0
        %v8692 = vadd.f32 0.0, %v8691
        %v8693 = vpop.f32.mrb[0].mxu0
        %8694 = vmatprep.mubr.bf16.mxu0 0
        %8695 = vmatmul.mubr.bf16.gmra.mrb[0].mxu0 %v8550
        %v8696 = vpop.f32.mrb[0].mxu0
        %v8697 = vadd.f32 0.0, %v8696
        %v8698 = vpop.f32.mrb[0].mxu0
        %v8699 = vpop.f32.mrb[0].mxu0
        %v8700 = vadd.f32 0.0, %v8699
        %v8701 = vpop.f32.mrb[0].mxu0
        %8702 = vmatprep.mubr.bf16.mxu0 0
        %8703 = vmatmul.mubr.bf16.gmra.mrb[0].mxu0 %v8553
        %v8704 = vpop.f32.mrb[0].mxu0
        %v8705 = vadd.f32 0.0, %v8704
        %v8706 = vpop.f32.mrb[0].mxu0
        %v8707 = vpop.f32.mrb[0].mxu0
        %v8708 = vadd.f32 0.0, %v8707
        %v8709 = vpop.f32.mrb[0].mxu0
        %8710 = vmatprep.mubr.bf16.mxu0 0
        %8711 = vmatmul.mubr.bf16.gmra.mrb[0].mxu0 %v8556
        %v8712 = vpop.f32.mrb[0].mxu0
        %v8713 = vadd.f32 0.0, %v8712
        %v8714 = vpop.f32.mrb[0].mxu0
        %v8715 = vpop.f32.mrb[0].mxu0
        %v8716 = vadd.f32 0.0, %v8715
        %v8717 = vpop.f32.mrb[0].mxu0
        %8718 = vdwg.mxu0
        %v8719 = vadd.f32 %v8426, %v8593
        %v8720 = vadd.f32 %v8427, %v8596
        %v8721 = vadd.f32 %v8428, %v8601
        %v8722 = vadd.f32 %v8429, %v8604
        %v8723 = vadd.f32 %v8430, %v8609
        %v8724 = vadd.f32 %v8431, %v8612
        %v8725 = vadd.f32 %v8432, %v8617
        %v8726 = vadd.f32 %v8433, %v8620
        %v8727 = vadd.f32 %v8434, %v8625
        %v8728 = vadd.f32 %v8435, %v8628
        %v8729 = vadd.f32 %v8436, %v8633
        %v8730 = vadd.f32 %v8437, %v8636
        %v8731 = vadd.f32 %v8438, %v8641
        %v8732 = vadd.f32 %v8439, %v8644
        %v8733 = vadd.f32 %v8440, %v8649
        %v8734 = vadd.f32 %v8441, %v8652
        %v8735 = vadd.f32 %v8442, %v8657
        %v8736 = vadd.f32 %v8443, %v8660
        %v8737 = vadd.f32 %v8444, %v8665
        %v8738 = vadd.f32 %v8445, %v8668
        %v8739 = vadd.f32 %v8446, %v8673
        %v8740 = vadd.f32 %v8447, %v8676
        %v8741 = vadd.f32 %v8448, %v8681
        %v8742 = vadd.f32 %v8449, %v8684
        %v8743 = vadd.f32 %v8450, %v8689
        %v8744 = vadd.f32 %v8451, %v8692
        %v8745 = vadd.f32 %v8452, %v8697
        %v8746 = vadd.f32 %v8453, %v8700
        %v8747 = vadd.f32 %v8454, %v8705
        %v8748 = vadd.f32 %v8455, %v8708
        %v8749 = vadd.f32 %v8456, %v8713
        %v8750 = vadd.f32 %v8457, %v8716
        %v8751 = vld [vmem:[#allocation3 + $0x10] sm:$0xff]
        %v8752 = vld [vmem:[#allocation3 + $0x18] sm:$0xff]
        %v8753 = vld [vmem:[#allocation3 + $0x20] sm:$0xff]
        %v8754 = vld [vmem:[#allocation3 + $0x28] sm:$0xff]
        %v8755 = vld [vmem:[#allocation3 + $0x30] sm:$0xff]
        %v8756 = vld [vmem:[#allocation3 + $0x38] sm:$0xff]
        %v8757 = vld [vmem:[#allocation3 + $0x40] sm:$0xff]
        %v8758 = vld [vmem:[#allocation3 + $0x48] sm:$0xff]
        %v8759 = vld [vmem:[#allocation3 + $0x50] sm:$0xff]
        %v8760 = vld [vmem:[#allocation3 + $0x58] sm:$0xff]
        %v8761 = vld [vmem:[#allocation3 + $0x60] sm:$0xff]
        %v8762 = vld [vmem:[#allocation3 + $0x68] sm:$0xff]
        %v8763 = vld [vmem:[#allocation3 + $0x70] sm:$0xff]
        %v8764 = vld [vmem:[#allocation3 + $0x78] sm:$0xff]
        %v8765 = vld [vmem:[#allocation3 + $0x80] sm:$0xff]
        %v8766 = vld [vmem:[#allocation3 + $0x88] sm:$0xff]
        %v8779 = vunpack.c.l.b16 %v3259
        %v8780 = vunpack.c.l.b16 %v3260
        %v8781 = vunpack.c.l.b16 %v3261
        %v8782 = vunpack.c.l.b16 %v3262
        %v8783 = vunpack.c.l.b16 %v3263
        %v8784 = vunpack.c.l.b16 %v3264
        %v8785 = vunpack.c.l.b16 %v3265
        %v8786 = vunpack.c.l.b16 %v3266
        %v8787 = vunpack.c.l.b16 %v3267
        %v8788 = vunpack.c.l.b16 %v3268
        %v8789 = vunpack.c.l.b16 %v3269
        %v8790 = vunpack.c.l.b16 %v3270
        %v8791 = vpack.c.b16 %v8780, %v8779
        %v8792 = vpack.c.b16 %v8782, %v8781
        %v8793 = vpack.c.b16 %v8784, %v8783
        %v8794 = vpack.c.b16 %v8786, %v8785
        %v8795 = vpack.c.b16 %v8788, %v8787
        %v8796 = vpack.c.b16 %v8790, %v8789
        %v8804 = vsel %vm5329, %v8751, 0
        %v8807 = vsel %vm5329, %v8752, 0
        %v8810 = vsel %vm5329, %v8753, 0
        %v8813 = vsel %vm5329, %v8754, 0
        %v8816 = vsel %vm5329, %v8755, 0
        %v8819 = vsel %vm5329, %v8756, 0
        %v8822 = vsel %vm5329, %v8757, 0
        %v8825 = vsel %vm5329, %v8758, 0
        %v8828 = vsel %vm5329, %v8759, 0
        %v8831 = vsel %vm5329, %v8760, 0
        %v8834 = vsel %vm5329, %v8761, 0
        %v8837 = vsel %vm5329, %v8762, 0
        %v8840 = vsel %vm5329, %v8763, 0
        %v8843 = vsel %vm5329, %v8764, 0
        %v8846 = vsel %vm5329, %v8765, 0
        %v8849 = vsel %vm5329, %v8766, 0
        %8851 = vmatprep.subr.bf16.mxu0 0
        %8852 = vmatpush1.bf16.msra.mxu0 %v8791
        %8853 = vmatprep.subr.bf16.mxu0 0
        %8854 = vmatpush1.bf16.msra.mxu0 %v8792
        %8855 = vmatprep.subr.bf16.mxu0 0
        %8856 = vmatpush1.bf16.msra.mxu0 %v8793
        %8857 = vmatprep.subr.bf16.mxu0 0
        %8858 = vmatpush1.bf16.msra.mxu0 %v8794
        %8859 = vmatprep.subr.bf16.mxu0 0
        %8860 = vmatpush1.bf16.msra.mxu0 %v8795
        %8861 = vmatprep.subr.bf16.mxu0 0
        %8862 = vmatpush1.bf16.msra.mxu0 %v8796
        %8863 = vmatprep.subr.bf16.mxu0 0
        %8864 = vmatpush1.bf16.msra.mxu0 0
        %8865 = vmatprep.subr.bf16.mxu0 0
        %8866 = vmatpush1.bf16.msra.mxu0 0
        %8867 = vmatprep.subr.bf16.mxu0 0
        %8868 = vmatpush1.bf16.msra.mxu0 0
        %8869 = vmatprep.subr.bf16.mxu0 0
        %8870 = vmatpush1.bf16.msra.mxu0 0
        %8871 = vmatprep.subr.bf16.mxu0 0
        %8872 = vmatpush1.bf16.msra.mxu0 0
        %8873 = vmatprep.subr.bf16.mxu0 0
        %8874 = vmatpush1.bf16.msra.mxu0 0
        %8875 = vmatprep.subr.bf16.mxu0 0
        %8876 = vmatpush1.bf16.msra.mxu0 0
        %8877 = vmatprep.subr.bf16.mxu0 0
        %8878 = vmatpush1.bf16.msra.mxu0 0
        %8879 = vmatprep.subr.bf16.mxu0 0
        %8880 = vmatpush1.bf16.msra.mxu0 0
        %8881 = vmatprep.subr.bf16.mxu0 0
        %8882 = vmatpush1.bf16.msra.mxu0 0
        %8883 = vmatprep.mubr.bf16.mxu0 0
        %8884 = vmatmul.mubr.bf16.gmra.mrb[0].mxu0 %v8804
        %v8885 = vpop.f32.mrb[0].mxu0
        %v8886 = vadd.f32 0.0, %v8885
        %v8887 = vpop.f32.mrb[0].mxu0
        %v8888 = vpop.f32.mrb[0].mxu0
        %v8889 = vadd.f32 0.0, %v8888
        %v8890 = vpop.f32.mrb[0].mxu0
        %8891 = vmatprep.mubr.bf16.mxu0 0
        %8892 = vmatmul.mubr.bf16.gmra.mrb[0].mxu0 %v8807
        %v8893 = vpop.f32.mrb[0].mxu0
        %v8894 = vadd.f32 0.0, %v8893
        %v8895 = vpop.f32.mrb[0].mxu0
        %v8896 = vpop.f32.mrb[0].mxu0
        %v8897 = vadd.f32 0.0, %v8896
        %v8898 = vpop.f32.mrb[0].mxu0
        %8899 = vmatprep.mubr.bf16.mxu0 0
        %8900 = vmatmul.mubr.bf16.gmra.mrb[0].mxu0 %v8810
        %v8901 = vpop.f32.mrb[0].mxu0
        %v8902 = vadd.f32 0.0, %v8901
        %v8903 = vpop.f32.mrb[0].mxu0
        %v8904 = vpop.f32.mrb[0].mxu0
        %v8905 = vadd.f32 0.0, %v8904
        %v8906 = vpop.f32.mrb[0].mxu0
        %8907 = vmatprep.mubr.bf16.mxu0 0
        %8908 = vmatmul.mubr.bf16.gmra.mrb[0].mxu0 %v8813
        %v8909 = vpop.f32.mrb[0].mxu0
        %v8910 = vadd.f32 0.0, %v8909
        %v8911 = vpop.f32.mrb[0].mxu0
        %v8912 = vpop.f32.mrb[0].mxu0
        %v8913 = vadd.f32 0.0, %v8912
        %v8914 = vpop.f32.mrb[0].mxu0
        %8915 = vmatprep.mubr.bf16.mxu0 0
        %8916 = vmatmul.mubr.bf16.gmra.mrb[0].mxu0 %v8816
        %v8917 = vpop.f32.mrb[0].mxu0
        %v8918 = vadd.f32 0.0, %v8917
        %v8919 = vpop.f32.mrb[0].mxu0
        %v8920 = vpop.f32.mrb[0].mxu0
        %v8921 = vadd.f32 0.0, %v8920
        %v8922 = vpop.f32.mrb[0].mxu0
        %8923 = vmatprep.mubr.bf16.mxu0 0
        %8924 = vmatmul.mubr.bf16.gmra.mrb[0].mxu0 %v8819
        %v8925 = vpop.f32.mrb[0].mxu0
        %v8926 = vadd.f32 0.0, %v8925
        %v8927 = vpop.f32.mrb[0].mxu0
        %v8928 = vpop.f32.mrb[0].mxu0
        %v8929 = vadd.f32 0.0, %v8928
        %v8930 = vpop.f32.mrb[0].mxu0
        %8931 = vmatprep.mubr.bf16.mxu0 0
        %8932 = vmatmul.mubr.bf16.gmra.mrb[0].mxu0 %v8822
        %v8933 = vpop.f32.mrb[0].mxu0
        %v8934 = vadd.f32 0.0, %v8933
        %v8935 = vpop.f32.mrb[0].mxu0
        %v8936 = vpop.f32.mrb[0].mxu0
        %v8937 = vadd.f32 0.0, %v8936
        %v8938 = vpop.f32.mrb[0].mxu0
        %8939 = vmatprep.mubr.bf16.mxu0 0
        %8940 = vmatmul.mubr.bf16.gmra.mrb[0].mxu0 %v8825
        %v8941 = vpop.f32.mrb[0].mxu0
        %v8942 = vadd.f32 0.0, %v8941
        %v8943 = vpop.f32.mrb[0].mxu0
        %v8944 = vpop.f32.mrb[0].mxu0
        %v8945 = vadd.f32 0.0, %v8944
        %v8946 = vpop.f32.mrb[0].mxu0
        %8947 = vmatprep.mubr.bf16.mxu0 0
        %8948 = vmatmul.mubr.bf16.gmra.mrb[0].mxu0 %v8828
        %v8949 = vpop.f32.mrb[0].mxu0
        %v8950 = vadd.f32 0.0, %v8949
        %v8951 = vpop.f32.mrb[0].mxu0
        %v8952 = vpop.f32.mrb[0].mxu0
        %v8953 = vadd.f32 0.0, %v8952
        %v8954 = vpop.f32.mrb[0].mxu0
        %8955 = vmatprep.mubr.bf16.mxu0 0
        %8956 = vmatmul.mubr.bf16.gmra.mrb[0].mxu0 %v8831
        %v8957 = vpop.f32.mrb[0].mxu0
        %v8958 = vadd.f32 0.0, %v8957
        %v8959 = vpop.f32.mrb[0].mxu0
        %v8960 = vpop.f32.mrb[0].mxu0
        %v8961 = vadd.f32 0.0, %v8960
        %v8962 = vpop.f32.mrb[0].mxu0
        %8963 = vmatprep.mubr.bf16.mxu0 0
        %8964 = vmatmul.mubr.bf16.gmra.mrb[0].mxu0 %v8834
        %v8965 = vpop.f32.mrb[0].mxu0
        %v8966 = vadd.f32 0.0, %v8965
        %v8967 = vpop.f32.mrb[0].mxu0
        %v8968 = vpop.f32.mrb[0].mxu0
        %v8969 = vadd.f32 0.0, %v8968
        %v8970 = vpop.f32.mrb[0].mxu0
        %8971 = vmatprep.mubr.bf16.mxu0 0
        %8972 = vmatmul.mubr.bf16.gmra.mrb[0].mxu0 %v8837
        %v8973 = vpop.f32.mrb[0].mxu0
        %v8974 = vadd.f32 0.0, %v8973
        %v8975 = vpop.f32.mrb[0].mxu0
        %v8976 = vpop.f32.mrb[0].mxu0
        %v8977 = vadd.f32 0.0, %v8976
        %v8978 = vpop.f32.mrb[0].mxu0
        %8979 = vmatprep.mubr.bf16.mxu0 0
        %8980 = vmatmul.mubr.bf16.gmra.mrb[0].mxu0 %v8840
        %v8981 = vpop.f32.mrb[0].mxu0
        %v8982 = vadd.f32 0.0, %v8981
        %v8983 = vpop.f32.mrb[0].mxu0
        %v8984 = vpop.f32.mrb[0].mxu0
        %v8985 = vadd.f32 0.0, %v8984
        %v8986 = vpop.f32.mrb[0].mxu0
        %8987 = vmatprep.mubr.bf16.mxu0 0
        %8988 = vmatmul.mubr.bf16.gmra.mrb[0].mxu0 %v8843
        %v8989 = vpop.f32.mrb[0].mxu0
        %v8990 = vadd.f32 0.0, %v8989
        %v8991 = vpop.f32.mrb[0].mxu0
        %v8992 = vpop.f32.mrb[0].mxu0
        %v8993 = vadd.f32 0.0, %v8992
        %v8994 = vpop.f32.mrb[0].mxu0
        %8995 = vmatprep.mubr.bf16.mxu0 0
        %8996 = vmatmul.mubr.bf16.gmra.mrb[0].mxu0 %v8846
        %v8997 = vpop.f32.mrb[0].mxu0
        %v8998 = vadd.f32 0.0, %v8997
        %v8999 = vpop.f32.mrb[0].mxu0
        %v9000 = vpop.f32.mrb[0].mxu0
        %v9001 = vadd.f32 0.0, %v9000
        %v9002 = vpop.f32.mrb[0].mxu0
        %9003 = vmatprep.mubr.bf16.mxu0 0
        %9004 = vmatmul.mubr.bf16.gmra.mrb[0].mxu0 %v8849
        %v9005 = vpop.f32.mrb[0].mxu0
        %v9006 = vadd.f32 0.0, %v9005
        %v9007 = vpop.f32.mrb[0].mxu0
        %v9008 = vpop.f32.mrb[0].mxu0
        %v9009 = vadd.f32 0.0, %v9008
        %v9010 = vpop.f32.mrb[0].mxu0
        %9011 = vdwg.mxu0
        %v9012 = vadd.f32 %v8719, %v8886
        %v9013 = vadd.f32 %v8720, %v8889
        %v9014 = vadd.f32 %v8721, %v8894
        %v9015 = vadd.f32 %v8722, %v8897
        %v9016 = vadd.f32 %v8723, %v8902
        %v9017 = vadd.f32 %v8724, %v8905
        %v9018 = vadd.f32 %v8725, %v8910
        %v9019 = vadd.f32 %v8726, %v8913
        %v9020 = vadd.f32 %v8727, %v8918
        %v9021 = vadd.f32 %v8728, %v8921
        %v9022 = vadd.f32 %v8729, %v8926
        %v9023 = vadd.f32 %v8730, %v8929
        %v9024 = vadd.f32 %v8731, %v8934
        %v9025 = vadd.f32 %v8732, %v8937
        %v9026 = vadd.f32 %v8733, %v8942
        %v9027 = vadd.f32 %v8734, %v8945
        %v9028 = vadd.f32 %v8735, %v8950
        %v9029 = vadd.f32 %v8736, %v8953
        %v9030 = vadd.f32 %v8737, %v8958
        %v9031 = vadd.f32 %v8738, %v8961
        %v9032 = vadd.f32 %v8739, %v8966
        %v9033 = vadd.f32 %v8740, %v8969
        %v9034 = vadd.f32 %v8741, %v8974
        %v9035 = vadd.f32 %v8742, %v8977
        %v9036 = vadd.f32 %v8743, %v8982
        %v9037 = vadd.f32 %v8744, %v8985
        %v9038 = vadd.f32 %v8745, %v8990
        %v9039 = vadd.f32 %v8746, %v8993
        %v9040 = vadd.f32 %v8747, %v8998
        %v9041 = vadd.f32 %v8748, %v9001
        %v9042 = vadd.f32 %v8749, %v9006
        %v9043 = vadd.f32 %v8750, %v9009
        %v9044 = vmul.f32 %v9012, 0.1
        %v9045 = vmul.f32 %v9013, 0.1
        %v9046 = vmul.f32 %v9014, 0.1
        %v9047 = vmul.f32 %v9015, 0.1
        %v9048 = vmul.f32 %v9016, 0.1
        %v9049 = vmul.f32 %v9017, 0.1
        %v9050 = vmul.f32 %v9018, 0.1
        %v9051 = vmul.f32 %v9019, 0.1
        %v9052 = vmul.f32 %v9020, 0.1
        %v9053 = vmul.f32 %v9021, 0.1
        %v9054 = vmul.f32 %v9022, 0.1
        %v9055 = vmul.f32 %v9023, 0.1
        %v9056 = vmul.f32 %v9024, 0.1
        %v9057 = vmul.f32 %v9025, 0.1
        %v9058 = vmul.f32 %v9026, 0.1
        %v9059 = vmul.f32 %v9027, 0.1
        %v9060 = vmul.f32 %v9028, 0.1
        %v9061 = vmul.f32 %v9029, 0.1
        %v9062 = vmul.f32 %v9030, 0.1
        %v9063 = vmul.f32 %v9031, 0.1
        %v9064 = vmul.f32 %v9032, 0.1
        %v9065 = vmul.f32 %v9033, 0.1
        %v9066 = vmul.f32 %v9034, 0.1
        %v9067 = vmul.f32 %v9035, 0.1
        %v9068 = vmul.f32 %v9036, 0.1
        %v9069 = vmul.f32 %v9037, 0.1
        %v9070 = vmul.f32 %v9038, 0.1
        %v9071 = vmul.f32 %v9039, 0.1
        %v9072 = vmul.f32 %v9040, 0.1
        %v9073 = vmul.f32 %v9041, 0.1
        %v9074 = vmul.f32 %v9042, 0.1
        %v9075 = vmul.f32 %v9043, 0.1
        %v9076 = vadd.f32 %v9044, %v3273
        %v9077 = vadd.f32 %v9045, %v3274
        %v9078 = vadd.f32 %v9046, %v3275
        %v9079 = vadd.f32 %v9047, %v3276
        %v9080 = vadd.f32 %v9048, %v3277
        %v9081 = vadd.f32 %v9049, %v3278
        %v9082 = vadd.f32 %v9050, %v3279
        %v9083 = vadd.f32 %v9051, %v3280
        %v9084 = vadd.f32 %v9052, %v3281
        %v9085 = vadd.f32 %v9053, %v3282
        %v9086 = vadd.f32 %v9054, %v3283
        %v9087 = vadd.f32 %v9055, %v3284
        %v9088 = vadd.f32 %v9056, %v3285
        %v9089 = vadd.f32 %v9057, %v3286
        %v9090 = vadd.f32 %v9058, %v3287
        %v9091 = vadd.f32 %v9059, %v3288
        %v9092 = vadd.f32 %v9060, %v3289
        %v9093 = vadd.f32 %v9061, %v3290
        %v9094 = vadd.f32 %v9062, %v3291
        %v9095 = vadd.f32 %v9063, %v3292
        %v9096 = vadd.f32 %v9064, %v3293
        %v9097 = vadd.f32 %v9065, %v3294
        %v9098 = vadd.f32 %v9066, %v3295
        %v9099 = vadd.f32 %v9067, %v3296
        %v9100 = vadd.f32 %v9068, %v3297
        %v9101 = vadd.f32 %v9069, %v3298
        %v9102 = vadd.f32 %v9070, %v3299
        %v9103 = vadd.f32 %v9071, %v3300
        %v9104 = vadd.f32 %v9072, %v3301
        %v9105 = vadd.f32 %v9073, %v3302
        %v9106 = vadd.f32 %v9074, %v3303
        %v9107 = vadd.f32 %v9075, %v3304
        %9108 = vst.msk [vmem:[%s278] sm:$0xff] %vm3153, %v9076
        %9109 = vst.msk [vmem:[%s278 + $0x8] sm:$0xff] %vm3153, %v9077
        %9110 = vst.msk [vmem:[%s278 + $0x10] sm:$0xff] %vm3153, %v9078
        %9111 = vst.msk [vmem:[%s278 + $0x18] sm:$0xff] %vm3153, %v9079
        %9112 = vst.msk [vmem:[%s278 + $0x20] sm:$0xff] %vm3153, %v9080
        %9113 = vst.msk [vmem:[%s278 + $0x28] sm:$0xff] %vm3153, %v9081
        %9114 = vst.msk [vmem:[%s278 + $0x30] sm:$0xff] %vm3153, %v9082
        %9115 = vst.msk [vmem:[%s278 + $0x38] sm:$0xff] %vm3153, %v9083
        %9116 = vst.msk [vmem:[%s278 + $0x40] sm:$0xff] %vm3153, %v9084
        %9117 = vst.msk [vmem:[%s278 + $0x48] sm:$0xff] %vm3153, %v9085
        %9118 = vst.msk [vmem:[%s278 + $0x50] sm:$0xff] %vm3153, %v9086
        %9119 = vst.msk [vmem:[%s278 + $0x58] sm:$0xff] %vm3153, %v9087
        %9120 = vst.msk [vmem:[%s278 + $0x60] sm:$0xff] %vm3153, %v9088
        %9121 = vst.msk [vmem:[%s278 + $0x68] sm:$0xff] %vm3153, %v9089
        %9122 = vst.msk [vmem:[%s278 + $0x70] sm:$0xff] %vm3153, %v9090
        %9123 = vst.msk [vmem:[%s278 + $0x78] sm:$0xff] %vm3153, %v9091
        %9124 = vst.msk [vmem:[%s278 + $0x80] sm:$0xff] %vm3153, %v9092
        %9125 = vst.msk [vmem:[%s278 + $0x88] sm:$0xff] %vm3153, %v9093
        %9126 = vst.msk [vmem:[%s278 + $0x90] sm:$0xff] %vm3153, %v9094
        %9127 = vst.msk [vmem:[%s278 + $0x98] sm:$0xff] %vm3153, %v9095
        %9128 = vst.msk [vmem:[%s278 + $0xa0] sm:$0xff] %vm3153, %v9096
        %9129 = vst.msk [vmem:[%s278 + $0xa8] sm:$0xff] %vm3153, %v9097
        %9130 = vst.msk [vmem:[%s278 + $0xb0] sm:$0xff] %vm3153, %v9098
        %9131 = vst.msk [vmem:[%s278 + $0xb8] sm:$0xff] %vm3153, %v9099
        %9132 = vst.msk [vmem:[%s278 + $0xc0] sm:$0xff] %vm3153, %v9100
        %9133 = vst.msk [vmem:[%s278 + $0xc8] sm:$0xff] %vm3153, %v9101
        %9134 = vst.msk [vmem:[%s278 + $0xd0] sm:$0xff] %vm3153, %v9102
        %9135 = vst.msk [vmem:[%s278 + $0xd8] sm:$0xff] %vm3153, %v9103
        %9136 = vst.msk [vmem:[%s278 + $0xe0] sm:$0xff] %vm3153, %v9104
        %9137 = vst.msk [vmem:[%s278 + $0xe8] sm:$0xff] %vm3153, %v9105
        %9138 = vst.msk [vmem:[%s278 + $0xf0] sm:$0xff] %vm3153, %v9106
        %9139 = vst.msk [vmem:[%s278 + $0xf8] sm:$0xff] %vm3153, %v9107
      $region53: #{tpu_custom_call.1} parent=47 // loop_footer
        %s3191 = sadd.s32 1, %s3187
      $region54: #{tpu_custom_call.1} parent=47 // loop_footer_branch
        %3186 = sbr.rel target = $region50
      $region55: #{tpu_custom_call.1} parent=47 // loop_exit
        _
      %p9140 = scmp.lt.s32.totalorder %s18, 1
      %s9141 = scalar_select %p9140, %s18, 1
      %s9142 = smul.addr %s9141, 32
      %s9143 = smul.addr %s9142, 8
      %s9144 = scalar_lea.vmem %s7, %s9143
      // Predicated region
      $region56: #{tpu_custom_call.1} parent=47 // pred_check
        %p9145 = pneg %p188
      $region57: #{tpu_custom_call.1} parent=47 // pred_check_branch
        %9147 = sbr.rel (%p9145) target = $region59
      $region58: #{tpu_custom_call.1} parent=47 // pred_region
        _
      $region59: #{tpu_custom_call.1} parent=47 // pred_fallthru
        _
    $region48: #{tpu_custom_call.1} parent=5 // pred_fallthru
      _
    %p9148 = scmp.le.s32.totalorder 2, %s13
    // Predicated region
    $region60: #{tpu_custom_call.1} parent=5 // pred_check
      %p9149 = pneg %p9148
    $region61: #{tpu_custom_call.1} parent=5 // pred_check_branch
      %9151 = sbr.rel (%p9149) target = $region63
    $region62: #{tpu_custom_call.1} parent=5 // pred_region
      %s9152 = ssub.s32 %s13, 2
      // Predicated region
      $region64: #{tpu_custom_call.1} parent=62 // pred_check
        %p9153 = pneg %p194
      $region65: #{tpu_custom_call.1} parent=62 // pred_check_branch
        %9155 = sbr.rel (%p9153) target = $region67
      $region66: #{tpu_custom_call.1} parent=62 // pred_region
        %p9156 = scmp.lt.s32.totalorder %s19, 1
        %s9157 = scalar_select %p9156, %s19, 1
        %s9158 = smul.addr %s9157, 32
        %s9159 = smul.addr %s9158, 8
        %s9160 = scalar_lea.vmem %s7, %s9159
      $region67: #{tpu_custom_call.1} parent=62 // pred_fallthru
        _
    $region63: #{tpu_custom_call.1} parent=5 // pred_fallthru
      _
  $region6: #{tpu_custom_call.1} parent=0 // loop_footer
    %s17 = sadd.s32 1, %s13
  $region7: #{tpu_custom_call.1} parent=0 // loop_footer_branch
    %12 = sbr.rel target = $region3
  $region8: #{tpu_custom_call.1} parent=0 // loop_exit
    _

</llo_original>
